<compile_context>
chip_gen: v7x
topology: tpu7x:2x2x1
jax: 0.10.0
libtpu: 0.0.40
codegen_flags: <defaults>
</compile_context>

<pallas_src>
import functools

import jax
import jax.numpy as jnp
from jax.experimental import pallas as pl
from jax.experimental.pallas import tpu as pltpu

N_FEATURES = 130
N_RAW_TAGS = 29           # tags in the csv
N_FEAT_TAGS = 30          # +1 synthetic tag_29 column added in __init__
EMBED_DIM = 29            # embed_dim default (captured before the +=1)
HIDDEN = 400 + EMBED_DIM  # 429
N_TARGETS = 6
BN_EPS = 1e-5

# Lane-friendly padded sizes (multiples of 128 on the lane axis).
IN_PAD = 256              # 130 -> 256 input features
HID_PAD = 512             # 429 -> 512 hidden width
OUT_PAD = 128             # 6   -> 128 output lanes (sliced back to 6)

BATCH_ALIGN = 256         # batch tiles are multiples of 256 (fills MXU rows)
VMEM_LIMIT_BYTES = 48 * 1024 * 1024  # > v5e 16MiB default, < v7x 64MiB phys


# --------------------------------------------------------------------------
# Pallas kernel: four fused dot(+bias)(+SiLU) layers for one batch tile.
# All BN / embedding glue has been folded into the weights on the host side.
# --------------------------------------------------------------------------
def embed_fnn_kernel(
    x_ref,                      # (TB, IN_PAD)  bf16
    w1_ref, b1_ref,             # (IN_PAD, HID_PAD) bf16 , (1, HID_PAD) f32
    w2_ref, b2_ref,             # (HID_PAD, HID_PAD) bf16, (1, HID_PAD) f32
    w3_ref, b3_ref,             # (HID_PAD, HID_PAD) bf16, (1, HID_PAD) f32
    wout_ref, bout_ref,         # (HID_PAD, OUT_PAD) bf16, (1, OUT_PAD) f32
    o_ref,                      # (TB, OUT_PAD) bf16
):
    x = x_ref[...]

    z1 = jnp.dot(x, w1_ref[...], preferred_element_type=jnp.float32) + b1_ref[...]
    h1 = jax.nn.silu(z1).astype(w2_ref.dtype)          # SiLU in f32, cast for MXU

    z2 = jnp.dot(h1, w2_ref[...], preferred_element_type=jnp.float32) + b2_ref[...]
    h2 = jax.nn.silu(z2).astype(w3_ref.dtype)

    z3 = jnp.dot(h2, w3_ref[...], preferred_element_type=jnp.float32) + b3_ref[...]
    h3 = jax.nn.silu(z3).astype(wout_ref.dtype)

    out = jnp.dot(h3, wout_ref[...], preferred_element_type=jnp.float32) + bout_ref[...]
    o_ref[...] = out.astype(o_ref.dtype)               # f32 accum -> bf16 store


# --------------------------------------------------------------------------
# One-time parameter prep: fold f_emb + BN0..BN3 into weights, pad, cast.
# --------------------------------------------------------------------------
def prepare_params(p, matmul_dtype=jnp.bfloat16):
    s0a, s0b = p["s0"][:N_FEATURES], p["s0"][N_FEATURES:]
    c0a, c0b = p["c0"][:N_FEATURES], p["c0"][N_FEATURES:]
    w1a, w1b = p["w1"][:N_FEATURES], p["w1"][N_FEATURES:]

    # z1 = (x*s0a+c0a) @ w1a + ((x@femb)*s0b+c0b) @ w1b + b1
    #    = x @ (diag(s0a)@w1a + femb @ diag(s0b)@w1b) + (c0a@w1a + c0b@w1b + b1)
    w1x = s0a[:, None] * w1a + p["femb"] @ (s0b[:, None] * w1b)   # (130, 429)
    b1x = c0a @ w1a + c0b @ w1b + p["b1"]                         # (429,)

    # Fold BN1/2/3 (eval) into the producing layer: y*s + c
    w1f = w1x * p["s1"][None, :]
    b1f = b1x * p["s1"] + p["c1"]
    w2f = p["w2"] * p["s2"][None, :]
    b2f = p["b2"] * p["s2"] + p["c2"]
    w3f = p["w3"] * p["s3"][None, :]
    b3f = p["b3"] * p["s3"] + p["c3"]

    def pad2(w, rows, cols):
        out = jnp.zeros((rows, cols), jnp.float32)
        return out.at[: w.shape[0], : w.shape[1]].set(w)

    def pad1(b, n):
        out = jnp.zeros((1, n), jnp.float32)
        return out.at[0, : b.shape[0]].set(b)

    return {
        "w1": pad2(w1f, IN_PAD, HID_PAD).astype(matmul_dtype),
        "b1": pad1(b1f, HID_PAD),
        "w2": pad2(w2f, HID_PAD, HID_PAD).astype(matmul_dtype),
        "b2": pad1(b2f, HID_PAD),
        "w3": pad2(w3f, HID_PAD, HID_PAD).astype(matmul_dtype),
        "b3": pad1(b3f, HID_PAD),
        "wout": pad2(p["wout"], HID_PAD, OUT_PAD).astype(matmul_dtype),
        "bout": pad1(p["bout"], OUT_PAD),
    }


# --------------------------------------------------------------------------
# Tile selection: biggest lane-aligned tile <= tb_max, with >= 2 grid steps
# whenever the (padded) batch allows it so v7x can use both TensorCores.
# --------------------------------------------------------------------------
def _choose_tile(batch, tb_max):
    b_min = ((batch + BATCH_ALIGN - 1) // BATCH_ALIGN) * BATCH_ALIGN
    if b_min <= BATCH_ALIGN:
        tb = BATCH_ALIGN                       # tiny batch: single 256-row tile
    else:
        # half the padded batch, rounded down to a 256 multiple, capped at tb_max
        tb = min(tb_max, max(BATCH_ALIGN,
                             (b_min // (2 * BATCH_ALIGN)) * BATCH_ALIGN))
    b_pad = ((batch + tb - 1) // tb) * tb
    return tb, b_pad


# --------------------------------------------------------------------------
# Wrapper: batch-tiled grid; folded/padded params stay whole in VMEM.
# --------------------------------------------------------------------------
def embed_fnn_forward(features, prepped, *, tb_max=1024):
    x = features.reshape(-1, N_FEATURES)                         # .view(-1, 130)
    B = x.shape[0]
    tb, b_pad = _choose_tile(B, tb_max)

    matmul_dtype = prepped["w1"].dtype
    # Single fused cast-then-pad (no intermediate f32 padded copy).
    xp = jnp.pad(x.astype(matmul_dtype),
                 ((0, b_pad - B), (0, IN_PAD - N_FEATURES)))

    param_order = ["w1", "b1", "w2", "b2", "w3", "b3", "wout", "bout"]
    param_args = [prepped[k] for k in param_order]

    def full_spec(shape):
        # whole-array block, same for every grid step (constant index_map)
        return pl.BlockSpec(shape, lambda i: (0,) * len(shape))

    in_specs = [pl.BlockSpec((tb, IN_PAD), lambda i: (i, 0))]
    in_specs += [full_spec(p.shape) for p in param_args]
    out_spec = pl.BlockSpec((tb, OUT_PAD), lambda i: (i, 0))

    out = pl.pallas_call(
        embed_fnn_kernel,
        out_shape=jax.ShapeDtypeStruct((b_pad, OUT_PAD), matmul_dtype),
        grid=(b_pad // tb,),
        in_specs=in_specs,
        out_specs=out_spec,
        compiler_params=pltpu.CompilerParams(
            dimension_semantics=("parallel",),
            vmem_limit_bytes=VMEM_LIMIT_BYTES),
    )(xp, *param_args)

    return out[:B, :N_TARGETS].astype(jnp.float32)


# --------------------------------------------------------------------------
# Deterministic raw parameter construction (synthetic; mirrors __init__).
# BatchNorms are represented by their eval-mode folded (scale, bias).
# --------------------------------------------------------------------------
def init_params(key):
    ks = jax.random.split(key, 12)

    def linear(k, fan_in, fan_out):
        kw, kb = jax.random.split(k)
        lim = 1.0 / jnp.sqrt(jnp.float32(fan_in))
        w = jax.random.uniform(kw, (fan_in, fan_out), jnp.float32, -lim, lim)
        b = jax.random.uniform(kb, (fan_out,), jnp.float32, -lim, lim)
        return w, b

    def bn_fold(k, n):
        k1, k2, k3, k4 = jax.random.split(k, 4)
        gamma = jax.random.uniform(k1, (n,), jnp.float32, 0.5, 1.5)
        beta = 0.1 * jax.random.normal(k2, (n,), jnp.float32)
        mean = 0.1 * jax.random.normal(k3, (n,), jnp.float32)
        var = jax.random.uniform(k4, (n,), jnp.float32, 0.5, 1.5)
        scale = gamma / jnp.sqrt(var + BN_EPS)
        bias = beta - mean * scale
        return scale, bias

    # --- synthetic features_tag_matrix (130, 30): csv tags + tag_29 column ---
    tags = (jax.random.uniform(ks[0], (N_FEATURES, N_RAW_TAGS)) < 0.3
            ).astype(jnp.float32)
    rows = jnp.arange(N_FEATURES)
    tags = tags.at[rows, rows % N_RAW_TAGS].set(1.0)          # every row tagged
    tag29 = jnp.zeros((N_FEATURES, 1), jnp.float32).at[0, 0].set(1.0)
    tag_mat = jnp.concatenate([tags, tag29], axis=1)          # (130, 30)

    # --- tag embedding table: nn.Embedding(31, 29), rows 0..29 used ----------
    emb_table = jax.random.normal(ks[1], (N_FEAT_TAGS + 1, EMBED_DIM),
                                  jnp.float32)
    emb = emb_table[:N_FEAT_TAGS]                             # (30, 29)
    # features2emb(): (tag_bools @ emb) / sum(tag_bools, dim=1)
    f_emb = (tag_mat @ emb) / jnp.sum(tag_mat, axis=1, keepdims=True)  # (130,29)

    in_dim = N_FEATURES + EMBED_DIM                           # 159

    w1, b1 = linear(ks[2], in_dim, HIDDEN)
    w2, b2 = linear(ks[3], HIDDEN, HIDDEN)
    w3, b3 = linear(ks[4], HIDDEN, HIDDEN)
    wout, bout = linear(ks[5], HIDDEN, N_TARGETS)

    s0, c0 = bn_fold(ks[6], in_dim)
    s1, c1 = bn_fold(ks[7], HIDDEN)
    s2, c2 = bn_fold(ks[8], HIDDEN)
    s3, c3 = bn_fold(ks[9], HIDDEN)

    return {
        "femb": f_emb,
        "s0": s0, "c0": c0,
        "w1": w1, "b1": b1, "s1": s1, "c1": c1,
        "w2": w2, "b2": b2, "s2": s2, "c2": c2,
        "w3": w3, "b3": b3, "s3": s3, "c3": c3,
        "wout": wout, "bout": bout,
    }


# --------------------------------------------------------------------------
# Pure-JAX reference on the UNFOLDED params (f32, HIGHEST precision).
# --------------------------------------------------------------------------
def reference_forward(features, p):
    dot = functools.partial(jnp.dot, precision=jax.lax.Precision.HIGHEST)
    x = features.reshape(-1, N_FEATURES)
    x2 = dot(x, p["femb"])
    h0 = jnp.concatenate([x, x2], axis=1) * p["s0"] + p["c0"]
    h1 = jax.nn.silu((dot(h0, p["w1"]) + p["b1"]) * p["s1"] + p["c1"])
    h2 = jax.nn.silu((dot(h1, p["w2"]) + p["b2"]) * p["s2"] + p["c2"])
    h3 = jax.nn.silu((dot(h2, p["w3"]) + p["b3"]) * p["s3"] + p["c3"])
    return dot(h3, p["wout"]) + p["bout"]


if __name__ == "__main__":
    key = jax.random.PRNGKey(0)
    kp, kx1, kx2 = jax.random.split(key, 3)

    params = init_params(kp)
    prepped = prepare_params(params)                 # fold + pad + bf16 cast

    # Case 1: small demo batch (single 256-row tile internally).
    B1 = 16
    feats1 = jax.random.normal(kx1, (B1, N_FEATURES), jnp.float32)
    out1 = jax.block_until_ready(embed_fnn_forward(feats1, prepped))
    ref1 = reference_forward(feats1, params)
    assert out1.shape == (B1, N_TARGETS)
    assert bool(jnp.all(jnp.isfinite(out1)))
    err1 = float(jnp.max(jnp.abs(out1 - ref1)))
    assert err1 < 3e-2, f"mismatch vs reference (B={B1}): {err1}"

    # Case 2: non-tile-multiple batch exercising the multi-step grid path.
    B2 = 600
    feats2 = jax.random.normal(kx2, (B2, N_FEATURES), jnp.float32)
    out2 = jax.block_until_ready(embed_fnn_forward(feats2, prepped))
    ref2 = reference_forward(feats2, params)
    assert out2.shape == (B2, N_TARGETS)
    assert bool(jnp.all(jnp.isfinite(out2)))
    err2 = float(jnp.max(jnp.abs(out2 - ref2)))
    assert err2 < 3e-2, f"mismatch vs reference (B={B2}): {err2}"

    print("KERNEL_OK")
</pallas_src>

<mosaic_0001>
module attributes {stable_mosaic.version = 11 : i64} {
  func.func @embed_fnn_kernel(%arg0: i32, %arg1: memref<256x256xbf16, #tpu.memory_space<vmem>>, %arg2: memref<256x512xbf16, #tpu.memory_space<vmem>>, %arg3: memref<1x512xf32, #tpu.memory_space<vmem>>, %arg4: memref<512x512xbf16, #tpu.memory_space<vmem>>, %arg5: memref<1x512xf32, #tpu.memory_space<vmem>>, %arg6: memref<512x512xbf16, #tpu.memory_space<vmem>>, %arg7: memref<1x512xf32, #tpu.memory_space<vmem>>, %arg8: memref<512x128xbf16, #tpu.memory_space<vmem>>, %arg9: memref<1x128xf32, #tpu.memory_space<vmem>>, %arg10: memref<256x128xbf16, #tpu.memory_space<vmem>>) attributes {dimension_semantics = [#tpu.dimension_semantics<parallel>], iteration_bounds = array<i64: 1>, scalar_prefetch = 0 : i64, scratch_operands = 0 : i64, tpu.core_type = #tpu.core_type<tc>, window_params = [{transform_indices = @transform_0, window_bounds = array<i64: 256, 256>}, {pipeline_mode = #tpu.pipeline_mode<synchronous>, transform_indices = @transform_1, window_bounds = array<i64: 256, 512>}, {pipeline_mode = #tpu.pipeline_mode<synchronous>, transform_indices = @transform_2, window_bounds = array<i64: 1, 512>}, {pipeline_mode = #tpu.pipeline_mode<synchronous>, transform_indices = @transform_3, window_bounds = array<i64: 512, 512>}, {pipeline_mode = #tpu.pipeline_mode<synchronous>, transform_indices = @transform_4, window_bounds = array<i64: 1, 512>}, {pipeline_mode = #tpu.pipeline_mode<synchronous>, transform_indices = @transform_5, window_bounds = array<i64: 512, 512>}, {pipeline_mode = #tpu.pipeline_mode<synchronous>, transform_indices = @transform_6, window_bounds = array<i64: 1, 512>}, {pipeline_mode = #tpu.pipeline_mode<synchronous>, transform_indices = @transform_7, window_bounds = array<i64: 512, 128>}, {pipeline_mode = #tpu.pipeline_mode<synchronous>, transform_indices = @transform_8, window_bounds = array<i64: 1, 128>}, {transform_indices = @transform_9, window_bounds = array<i64: 256, 128>}]} {
    %c0 = arith.constant 0 : index
    %c0_0 = arith.constant 0 : index
    %0 = vector.load %arg1[%c0, %c0_0] : memref<256x256xbf16, #tpu.memory_space<vmem>>, vector<256x256xbf16>
    %c0_1 = arith.constant 0 : index
    %c0_2 = arith.constant 0 : index
    %1 = vector.load %arg2[%c0_1, %c0_2] : memref<256x512xbf16, #tpu.memory_space<vmem>>, vector<256x512xbf16>
    %cst = arith.constant dense<0.000000e+00> : vector<256x512xf32>
    %2 = tpu.matmul %0, %1, %cst {dimension_numbers = #tpu.dot_dimension_numbers<[1], [0], [0], [1], [0, 0, 1, 1], [], []>} : vector<256x256xbf16>, vector<256x512xbf16>, vector<256x512xf32> -> vector<256x512xf32>
    %c0_3 = arith.constant 0 : index
    %c0_4 = arith.constant 0 : index
    %3 = vector.load %arg3[%c0_3, %c0_4] : memref<1x512xf32, #tpu.memory_space<vmem>>, vector<1x512xf32>
    %4 = vector.broadcast %3 : vector<1x512xf32> to vector<256x512xf32>
    %5 = arith.addf %2, %4 : vector<256x512xf32>
    %6 = arith.negf %5 : vector<256x512xf32>
    %7 = math.exp %6 : vector<256x512xf32>
    %cst_5 = arith.constant 1.000000e+00 : f32
    %8 = vector.broadcast %cst_5 : f32 to vector<256x512xf32>
    %9 = arith.addf %8, %7 : vector<256x512xf32>
    %10 = arith.divf %8, %9 : vector<256x512xf32>
    %11 = arith.mulf %5, %10 : vector<256x512xf32>
    %12 = arith.truncf %11 : vector<256x512xf32> to vector<256x512xbf16>
    %c0_6 = arith.constant 0 : index
    %c0_7 = arith.constant 0 : index
    %13 = vector.load %arg4[%c0_6, %c0_7] : memref<512x512xbf16, #tpu.memory_space<vmem>>, vector<512x512xbf16>
    %cst_8 = arith.constant dense<0.000000e+00> : vector<256x512xf32>
    %14 = tpu.matmul %12, %13, %cst_8 {dimension_numbers = #tpu.dot_dimension_numbers<[1], [0], [0], [1], [0, 0, 1, 1], [], []>} : vector<256x512xbf16>, vector<512x512xbf16>, vector<256x512xf32> -> vector<256x512xf32>
    %c0_9 = arith.constant 0 : index
    %c0_10 = arith.constant 0 : index
    %15 = vector.load %arg5[%c0_9, %c0_10] : memref<1x512xf32, #tpu.memory_space<vmem>>, vector<1x512xf32>
    %16 = vector.broadcast %15 : vector<1x512xf32> to vector<256x512xf32>
    %17 = arith.addf %14, %16 : vector<256x512xf32>
    %18 = arith.negf %17 : vector<256x512xf32>
    %19 = math.exp %18 : vector<256x512xf32>
    %cst_11 = arith.constant 1.000000e+00 : f32
    %20 = vector.broadcast %cst_11 : f32 to vector<256x512xf32>
    %21 = arith.addf %20, %19 : vector<256x512xf32>
    %22 = arith.divf %20, %21 : vector<256x512xf32>
    %23 = arith.mulf %17, %22 : vector<256x512xf32>
    %24 = arith.truncf %23 : vector<256x512xf32> to vector<256x512xbf16>
    %c0_12 = arith.constant 0 : index
    %c0_13 = arith.constant 0 : index
    %25 = vector.load %arg6[%c0_12, %c0_13] : memref<512x512xbf16, #tpu.memory_space<vmem>>, vector<512x512xbf16>
    %cst_14 = arith.constant dense<0.000000e+00> : vector<256x512xf32>
    %26 = tpu.matmul %24, %25, %cst_14 {dimension_numbers = #tpu.dot_dimension_numbers<[1], [0], [0], [1], [0, 0, 1, 1], [], []>} : vector<256x512xbf16>, vector<512x512xbf16>, vector<256x512xf32> -> vector<256x512xf32>
    %c0_15 = arith.constant 0 : index
    %c0_16 = arith.constant 0 : index
    %27 = vector.load %arg7[%c0_15, %c0_16] : memref<1x512xf32, #tpu.memory_space<vmem>>, vector<1x512xf32>
    %28 = vector.broadcast %27 : vector<1x512xf32> to vector<256x512xf32>
    %29 = arith.addf %26, %28 : vector<256x512xf32>
    %30 = arith.negf %29 : vector<256x512xf32>
    %31 = math.exp %30 : vector<256x512xf32>
    %cst_17 = arith.constant 1.000000e+00 : f32
    %32 = vector.broadcast %cst_17 : f32 to vector<256x512xf32>
    %33 = arith.addf %32, %31 : vector<256x512xf32>
    %34 = arith.divf %32, %33 : vector<256x512xf32>
    %35 = arith.mulf %29, %34 : vector<256x512xf32>
    %36 = arith.truncf %35 : vector<256x512xf32> to vector<256x512xbf16>
    %c0_18 = arith.constant 0 : index
    %c0_19 = arith.constant 0 : index
    %37 = vector.load %arg8[%c0_18, %c0_19] : memref<512x128xbf16, #tpu.memory_space<vmem>>, vector<512x128xbf16>
    %cst_20 = arith.constant dense<0.000000e+00> : vector<256x128xf32>
    %38 = tpu.matmul %36, %37, %cst_20 {dimension_numbers = #tpu.dot_dimension_numbers<[1], [0], [0], [1], [0, 0, 1, 1], [], []>} : vector<256x512xbf16>, vector<512x128xbf16>, vector<256x128xf32> -> vector<256x128xf32>
    %c0_21 = arith.constant 0 : index
    %c0_22 = arith.constant 0 : index
    %39 = vector.load %arg9[%c0_21, %c0_22] : memref<1x128xf32, #tpu.memory_space<vmem>>, vector<1x128xf32>
    %40 = vector.broadcast %39 : vector<1x128xf32> to vector<256x128xf32>
    %41 = arith.addf %38, %40 : vector<256x128xf32>
    %42 = arith.truncf %41 : vector<256x128xf32> to vector<256x128xbf16>
    %c0_23 = arith.constant 0 : index
    %c0_24 = arith.constant 0 : index
    %43 = vector.load %arg10[%c0_23, %c0_24] : memref<256x128xbf16, #tpu.memory_space<vmem>>, vector<256x128xbf16>
    tpu.vector_store %arg10[%c0_23, %c0_24], %42 {strides = array<i32>} : memref<256x128xbf16, #tpu.memory_space<vmem>>, vector<256x128xbf16>,
    return
  }
  func.func @transform_0(%arg0: i32) -> (i32, i32) {
    %c0_i32 = arith.constant 0 : i32
    %c0_i32_0 = arith.constant 0 : i32
    return %arg0, %c0_i32 : i32, i32
  }
  func.func @transform_1(%arg0: i32) -> (i32, i32) {
    %c0_i32 = arith.constant 0 : i32
    %c0_i32_0 = arith.constant 0 : i32
    %c0_i32_1 = arith.constant 0 : i32
    return %c0_i32, %c0_i32_0 : i32, i32
  }
  func.func @transform_2(%arg0: i32) -> (i32, i32) {
    %c0_i32 = arith.constant 0 : i32
    %c0_i32_0 = arith.constant 0 : i32
    %c0_i32_1 = arith.constant 0 : i32
    return %c0_i32, %c0_i32_0 : i32, i32
  }
  func.func @transform_3(%arg0: i32) -> (i32, i32) {
    %c0_i32 = arith.constant 0 : i32
    %c0_i32_0 = arith.constant 0 : i32
    %c0_i32_1 = arith.constant 0 : i32
    return %c0_i32, %c0_i32_0 : i32, i32
  }
  func.func @transform_4(%arg0: i32) -> (i32, i32) {
    %c0_i32 = arith.constant 0 : i32
    %c0_i32_0 = arith.constant 0 : i32
    %c0_i32_1 = arith.constant 0 : i32
    return %c0_i32, %c0_i32_0 : i32, i32
  }
  func.func @transform_5(%arg0: i32) -> (i32, i32) {
    %c0_i32 = arith.constant 0 : i32
    %c0_i32_0 = arith.constant 0 : i32
    %c0_i32_1 = arith.constant 0 : i32
    return %c0_i32, %c0_i32_0 : i32, i32
  }
  func.func @transform_6(%arg0: i32) -> (i32, i32) {
    %c0_i32 = arith.constant 0 : i32
    %c0_i32_0 = arith.constant 0 : i32
    %c0_i32_1 = arith.constant 0 : i32
    return %c0_i32, %c0_i32_0 : i32, i32
  }
  func.func @transform_7(%arg0: i32) -> (i32, i32) {
    %c0_i32 = arith.constant 0 : i32
    %c0_i32_0 = arith.constant 0 : i32
    %c0_i32_1 = arith.constant 0 : i32
    return %c0_i32, %c0_i32_0 : i32, i32
  }
  func.func @transform_8(%arg0: i32) -> (i32, i32) {
    %c0_i32 = arith.constant 0 : i32
    %c0_i32_0 = arith.constant 0 : i32
    %c0_i32_1 = arith.constant 0 : i32
    return %c0_i32, %c0_i32_0 : i32, i32
  }
  func.func @transform_9(%arg0: i32) -> (i32, i32) {
    %c0_i32 = arith.constant 0 : i32
    %c0_i32_0 = arith.constant 0 : i32
    return %arg0, %c0_i32 : i32, i32
  }
}

</mosaic_0001>

<llo_original>
// kernel: tpu_custom_call.1
$region0: #{tpu_custom_call.1}
  #allocation0 [shape = 'u32[]', space=smem, size = 0x4, offset = 0x4, fixed_abs, tag = 'smem constant byte address 0x4 - core index']
  #allocation1 [shape = 'u32[144,128]{1,0:T(1,128)}', space=vmem, size = 0x12000, scoped, tag = 'internal scratch']
  %s0 = inlined_call_operand.hbm [shape: bf16[256,256], index: 0, kind: input, shape index: {}]
  %s1 = inlined_call_operand.hbm [shape: bf16[256,512], index: 1, kind: input, shape index: {}]
  %s2 = inlined_call_operand.vmem [shape: f32[1,512], index: 2, kind: input, shape index: {}]
  %s3 = inlined_call_operand.hbm [shape: bf16[512,512], index: 3, kind: input, shape index: {}]
  %s4 = inlined_call_operand.vmem [shape: f32[1,512], index: 4, kind: input, shape index: {}]
  %s5 = inlined_call_operand.hbm [shape: bf16[512,512], index: 5, kind: input, shape index: {}]
  %s6 = inlined_call_operand.vmem [shape: f32[1,512], index: 6, kind: input, shape index: {}]
  %s7 = inlined_call_operand.hbm [shape: bf16[512,128], index: 7, kind: input, shape index: {}]
  %s8 = inlined_call_operand.vmem [shape: f32[1,128], index: 8, kind: input, shape index: {}]
  %s9 = inlined_call_operand.hbm [shape: bf16[256,128], index: 9, kind: output, shape index: {}]
  %s10 = sld [smem:[#allocation0]]
  $region66: #{tpu_custom_call.1} parent=0
    _
  %s12 = ssub.s32 1, %s10
  %s13 = scalar_select 0, %s12, %s10
  $region1: #{tpu_custom_call.1} parent=0
    #allocation2 [shape = 'u8[131072]{0}', space=vmem, size = 0x20000, scoped, tag = 'input window, operand 0, single buffered']
    #allocation3 [shape = 's32[1]{0}', space=sflag, size = 0x4, scoped, tag = 'scoped memory for tpu_custom_call.1']
    #allocation4 [shape = 's32[1]{0}', space=sflag, size = 0x4, scoped, tag = 'scoped memory for tpu_custom_call.1']
    #allocation5 [shape = 'u8[262144]{0}', space=vmem, size = 0x40000, scoped, tag = 'input window, operand 1, single buffered']
    #allocation6 [shape = 's32[1]{0}', space=sflag, size = 0x4, scoped, tag = 'scoped memory for tpu_custom_call.1']
    #allocation7 [shape = 'u8[524288]{0}', space=vmem, size = 0x80000, scoped, tag = 'input window, operand 3, single buffered']
    #allocation8 [shape = 'u8[524288]{0}', space=vmem, size = 0x80000, scoped, tag = 'input window, operand 5, single buffered']
    #allocation9 [shape = 's32[1]{0}', space=sflag, size = 0x4, scoped, tag = 'scoped memory for tpu_custom_call.1']
    #allocation10 [shape = 'u8[131072]{0}', space=vmem, size = 0x20000, scoped, tag = 'input window, operand 7, single buffered']
    #allocation11 [shape = 'u8[65536]{0}', space=vmem, size = 0x10000, scoped, tag = 'output window, operand 0, single buffered']
    %14 = vsyncpa [#allocation3], 0
    %15 = vsyncpa [#allocation6], 0
    %16 = vsyncpa [#allocation9], 0
    %17 = vsyncpa [#allocation4], 0
    // Predicated region
    $region2: #{tpu_custom_call.1} parent=1 // pred_check
      _
    $region3: #{tpu_custom_call.1} parent=1 // pred_check_branch
      %19 = sbr.rel (0) target = $region5
    $region4: #{tpu_custom_call.1} parent=1 // pred_region
      %s21 = ssub.s32 4096, 4096
      %22 = vsyncadd [#allocation3], %s21
      %s23 = sshll.u32 [#allocation2], 4
      %s24 = int_to_ptr.vmem [resolvable:$true] %s23
      %29 = dma.hbm_to_vmem [thread:$0]  %s0, 4096, %s24, [#allocation3], 128, 128, 8
    $region5: #{tpu_custom_call.1} parent=1 // pred_fallthru
      _
    // Predicated region
    $region6: #{tpu_custom_call.1} parent=1 // pred_check
      _
    $region7: #{tpu_custom_call.1} parent=1 // pred_check_branch
      %31 = sbr.rel (0) target = $region9
    $region8: #{tpu_custom_call.1} parent=1 // pred_region
      %s33 = ssub.s32 8192, 8192
      %34 = vsyncadd [#allocation6], %s33
      %s35 = sshll.u32 [#allocation5], 4
      %s36 = int_to_ptr.vmem [resolvable:$true] %s35
      %41 = dma.hbm_to_vmem [thread:$0]  %s1, 8192, %s36, [#allocation6], 256, 256, 16
    $region9: #{tpu_custom_call.1} parent=1 // pred_fallthru
      _
    // Predicated region
    $region10: #{tpu_custom_call.1} parent=1 // pred_check
      _
    $region11: #{tpu_custom_call.1} parent=1 // pred_check_branch
      %43 = sbr.rel (0) target = $region13
    $region12: #{tpu_custom_call.1} parent=1 // pred_region
      _
    $region13: #{tpu_custom_call.1} parent=1 // pred_fallthru
      _
    // Predicated region
    $region14: #{tpu_custom_call.1} parent=1 // pred_check
      _
    $region15: #{tpu_custom_call.1} parent=1 // pred_check_branch
      %45 = sbr.rel (0) target = $region17
    $region16: #{tpu_custom_call.1} parent=1 // pred_region
      %s47 = ssub.s32 16384, 16384
      %48 = vsyncadd [#allocation6], %s47
      %s49 = sshll.u32 [#allocation7], 4
      %s50 = int_to_ptr.vmem [resolvable:$true] %s49
      %55 = dma.hbm_to_vmem [thread:$0]  %s3, 16384, %s50, [#allocation6], 256, 256, 16
    $region17: #{tpu_custom_call.1} parent=1 // pred_fallthru
      _
    // Predicated region
    $region18: #{tpu_custom_call.1} parent=1 // pred_check
      _
    $region19: #{tpu_custom_call.1} parent=1 // pred_check_branch
      %57 = sbr.rel (0) target = $region21
    $region20: #{tpu_custom_call.1} parent=1 // pred_region
      _
    $region21: #{tpu_custom_call.1} parent=1 // pred_fallthru
      _
    // Predicated region
    $region22: #{tpu_custom_call.1} parent=1 // pred_check
      _
    $region23: #{tpu_custom_call.1} parent=1 // pred_check_branch
      %59 = sbr.rel (0) target = $region25
    $region24: #{tpu_custom_call.1} parent=1 // pred_region
      %s61 = ssub.s32 16384, 16384
      %62 = vsyncadd [#allocation9], %s61
      %s63 = sshll.u32 [#allocation8], 4
      %s64 = int_to_ptr.vmem [resolvable:$true] %s63
      %69 = dma.hbm_to_vmem [thread:$0]  %s5, 16384, %s64, [#allocation9], 256, 256, 16
    $region25: #{tpu_custom_call.1} parent=1 // pred_fallthru
      _
    // Predicated region
    $region26: #{tpu_custom_call.1} parent=1 // pred_check
      _
    $region27: #{tpu_custom_call.1} parent=1 // pred_check_branch
      %71 = sbr.rel (0) target = $region29
    $region28: #{tpu_custom_call.1} parent=1 // pred_region
      _
    $region29: #{tpu_custom_call.1} parent=1 // pred_fallthru
      _
    // Predicated region
    $region30: #{tpu_custom_call.1} parent=1 // pred_check
      _
    $region31: #{tpu_custom_call.1} parent=1 // pred_check_branch
      %73 = sbr.rel (0) target = $region33
    $region32: #{tpu_custom_call.1} parent=1 // pred_region
      %s75 = ssub.s32 4096, 4096
      %76 = vsyncadd [#allocation9], %s75
      %s77 = sshll.u32 [#allocation10], 4
      %s78 = int_to_ptr.vmem [resolvable:$true] %s77
      %83 = dma.hbm_to_vmem [thread:$0]  %s7, 4096, %s78, [#allocation9], 64, 64, 4
    $region33: #{tpu_custom_call.1} parent=1 // pred_fallthru
      _
    // Predicated region
    $region34: #{tpu_custom_call.1} parent=1 // pred_check
      _
    $region35: #{tpu_custom_call.1} parent=1 // pred_check_branch
      %85 = sbr.rel (0) target = $region37
    $region36: #{tpu_custom_call.1} parent=1 // pred_region
      _
    $region37: #{tpu_custom_call.1} parent=1 // pred_fallthru
      _
    // Predicated region
    $region38: #{tpu_custom_call.1} parent=1 // pred_check
      _
    $region39: #{tpu_custom_call.1} parent=1 // pred_check_branch
      %87 = sbr.rel (0) target = $region41
    $region40: #{tpu_custom_call.1} parent=1 // pred_region
      %88 = dma.done [#allocation3], 4096
    $region41: #{tpu_custom_call.1} parent=1 // pred_fallthru
      _
    // Predicated region
    $region42: #{tpu_custom_call.1} parent=1 // pred_check
      _
    $region43: #{tpu_custom_call.1} parent=1 // pred_check_branch
      %90 = sbr.rel (0) target = $region45
    $region44: #{tpu_custom_call.1} parent=1 // pred_region
      %91 = dma.done [#allocation6], 8192
    $region45: #{tpu_custom_call.1} parent=1 // pred_fallthru
      _
    // Predicated region
    $region46: #{tpu_custom_call.1} parent=1 // pred_check
      _
    $region47: #{tpu_custom_call.1} parent=1 // pred_check_branch
      %93 = sbr.rel (0) target = $region49
    $region48: #{tpu_custom_call.1} parent=1 // pred_region
      %94 = dma.done [#allocation6], 16384
    $region49: #{tpu_custom_call.1} parent=1 // pred_fallthru
      _
    // Predicated region
    $region50: #{tpu_custom_call.1} parent=1 // pred_check
      _
    $region51: #{tpu_custom_call.1} parent=1 // pred_check_branch
      %96 = sbr.rel (0) target = $region53
    $region52: #{tpu_custom_call.1} parent=1 // pred_region
      %97 = dma.done [#allocation9], 16384
    $region53: #{tpu_custom_call.1} parent=1 // pred_fallthru
      _
    // Predicated region
    $region54: #{tpu_custom_call.1} parent=1 // pred_check
      _
    $region55: #{tpu_custom_call.1} parent=1 // pred_check_branch
      %99 = sbr.rel (0) target = $region57
    $region56: #{tpu_custom_call.1} parent=1 // pred_region
      %100 = dma.done [#allocation9], 4096
    $region57: #{tpu_custom_call.1} parent=1 // pred_fallthru
      _
    %v102 = vld [vmem:[#allocation2] sm:$0xff]
    %v103 = vld [vmem:[#allocation2 + $0x8] sm:$0xff]
    %v104 = vld [vmem:[#allocation2 + $0x10] sm:$0xff]
    %v105 = vld [vmem:[#allocation2 + $0x18] sm:$0xff]
    %v106 = vld [vmem:[#allocation2 + $0x20] sm:$0xff]
    %v107 = vld [vmem:[#allocation2 + $0x28] sm:$0xff]
    %v108 = vld [vmem:[#allocation2 + $0x30] sm:$0xff]
    %v109 = vld [vmem:[#allocation2 + $0x38] sm:$0xff]
    %v110 = vld [vmem:[#allocation2 + $0x40] sm:$0xff]
    %v111 = vld [vmem:[#allocation2 + $0x48] sm:$0xff]
    %v112 = vld [vmem:[#allocation2 + $0x50] sm:$0xff]
    %v113 = vld [vmem:[#allocation2 + $0x58] sm:$0xff]
    %v114 = vld [vmem:[#allocation2 + $0x60] sm:$0xff]
    %v115 = vld [vmem:[#allocation2 + $0x68] sm:$0xff]
    %v116 = vld [vmem:[#allocation2 + $0x70] sm:$0xff]
    %v117 = vld [vmem:[#allocation2 + $0x78] sm:$0xff]
    %v118 = vld [vmem:[#allocation2 + $0x80] sm:$0xff]
    %v119 = vld [vmem:[#allocation2 + $0x88] sm:$0xff]
    %v120 = vld [vmem:[#allocation2 + $0x90] sm:$0xff]
    %v121 = vld [vmem:[#allocation2 + $0x98] sm:$0xff]
    %v122 = vld [vmem:[#allocation2 + $0xa0] sm:$0xff]
    %v123 = vld [vmem:[#allocation2 + $0xa8] sm:$0xff]
    %v124 = vld [vmem:[#allocation2 + $0xb0] sm:$0xff]
    %v125 = vld [vmem:[#allocation2 + $0xb8] sm:$0xff]
    %v126 = vld [vmem:[#allocation2 + $0xc0] sm:$0xff]
    %v127 = vld [vmem:[#allocation2 + $0xc8] sm:$0xff]
    %v128 = vld [vmem:[#allocation2 + $0xd0] sm:$0xff]
    %v129 = vld [vmem:[#allocation2 + $0xd8] sm:$0xff]
    %v130 = vld [vmem:[#allocation2 + $0xe0] sm:$0xff]
    %v131 = vld [vmem:[#allocation2 + $0xe8] sm:$0xff]
    %v132 = vld [vmem:[#allocation2 + $0xf0] sm:$0xff]
    %v133 = vld [vmem:[#allocation2 + $0xf8] sm:$0xff]
    %v134 = vld [vmem:[#allocation5] sm:$0xff]
    %v135 = vld [vmem:[#allocation5 + $0x8] sm:$0xff]
    %v136 = vld [vmem:[#allocation5 + $0x10] sm:$0xff]
    %v137 = vld [vmem:[#allocation5 + $0x18] sm:$0xff]
    %v138 = vld [vmem:[#allocation5 + $0x20] sm:$0xff]
    %v139 = vld [vmem:[#allocation5 + $0x28] sm:$0xff]
    %v140 = vld [vmem:[#allocation5 + $0x30] sm:$0xff]
    %v141 = vld [vmem:[#allocation5 + $0x38] sm:$0xff]
    %v142 = vld [vmem:[#allocation5 + $0x40] sm:$0xff]
    %v143 = vld [vmem:[#allocation5 + $0x48] sm:$0xff]
    %v144 = vld [vmem:[#allocation5 + $0x50] sm:$0xff]
    %v145 = vld [vmem:[#allocation5 + $0x58] sm:$0xff]
    %v146 = vld [vmem:[#allocation5 + $0x60] sm:$0xff]
    %v147 = vld [vmem:[#allocation5 + $0x68] sm:$0xff]
    %v148 = vld [vmem:[#allocation5 + $0x70] sm:$0xff]
    %v149 = vld [vmem:[#allocation5 + $0x78] sm:$0xff]
    %v150 = vld [vmem:[#allocation5 + $0x80] sm:$0xff]
    %v151 = vld [vmem:[#allocation5 + $0x88] sm:$0xff]
    %v152 = vld [vmem:[#allocation5 + $0x90] sm:$0xff]
    %v153 = vld [vmem:[#allocation5 + $0x98] sm:$0xff]
    %v154 = vld [vmem:[#allocation5 + $0xa0] sm:$0xff]
    %v155 = vld [vmem:[#allocation5 + $0xa8] sm:$0xff]
    %v156 = vld [vmem:[#allocation5 + $0xb0] sm:$0xff]
    %v157 = vld [vmem:[#allocation5 + $0xb8] sm:$0xff]
    %v158 = vld [vmem:[#allocation5 + $0xc0] sm:$0xff]
    %v159 = vld [vmem:[#allocation5 + $0xc8] sm:$0xff]
    %v160 = vld [vmem:[#allocation5 + $0xd0] sm:$0xff]
    %v161 = vld [vmem:[#allocation5 + $0xd8] sm:$0xff]
    %v162 = vld [vmem:[#allocation5 + $0xe0] sm:$0xff]
    %v163 = vld [vmem:[#allocation5 + $0xe8] sm:$0xff]
    %v164 = vld [vmem:[#allocation5 + $0xf0] sm:$0xff]
    %v165 = vld [vmem:[#allocation5 + $0xf8] sm:$0xff]
    %v166 = vld [vmem:[#allocation5 + $0x100] sm:$0xff]
    %v167 = vld [vmem:[#allocation5 + $0x108] sm:$0xff]
    %v168 = vld [vmem:[#allocation5 + $0x110] sm:$0xff]
    %v169 = vld [vmem:[#allocation5 + $0x118] sm:$0xff]
    %v170 = vld [vmem:[#allocation5 + $0x120] sm:$0xff]
    %v171 = vld [vmem:[#allocation5 + $0x128] sm:$0xff]
    %v172 = vld [vmem:[#allocation5 + $0x130] sm:$0xff]
    %v173 = vld [vmem:[#allocation5 + $0x138] sm:$0xff]
    %v174 = vld [vmem:[#allocation5 + $0x140] sm:$0xff]
    %v175 = vld [vmem:[#allocation5 + $0x148] sm:$0xff]
    %v176 = vld [vmem:[#allocation5 + $0x150] sm:$0xff]
    %v177 = vld [vmem:[#allocation5 + $0x158] sm:$0xff]
    %v178 = vld [vmem:[#allocation5 + $0x160] sm:$0xff]
    %v179 = vld [vmem:[#allocation5 + $0x168] sm:$0xff]
    %v180 = vld [vmem:[#allocation5 + $0x170] sm:$0xff]
    %v181 = vld [vmem:[#allocation5 + $0x178] sm:$0xff]
    %v182 = vld [vmem:[#allocation5 + $0x180] sm:$0xff]
    %v183 = vld [vmem:[#allocation5 + $0x188] sm:$0xff]
    %v184 = vld [vmem:[#allocation5 + $0x190] sm:$0xff]
    %v185 = vld [vmem:[#allocation5 + $0x198] sm:$0xff]
    %v186 = vld [vmem:[#allocation5 + $0x1a0] sm:$0xff]
    %v187 = vld [vmem:[#allocation5 + $0x1a8] sm:$0xff]
    %v188 = vld [vmem:[#allocation5 + $0x1b0] sm:$0xff]
    %v189 = vld [vmem:[#allocation5 + $0x1b8] sm:$0xff]
    %v190 = vld [vmem:[#allocation5 + $0x1c0] sm:$0xff]
    %v191 = vld [vmem:[#allocation5 + $0x1c8] sm:$0xff]
    %v192 = vld [vmem:[#allocation5 + $0x1d0] sm:$0xff]
    %v193 = vld [vmem:[#allocation5 + $0x1d8] sm:$0xff]
    %v194 = vld [vmem:[#allocation5 + $0x1e0] sm:$0xff]
    %v195 = vld [vmem:[#allocation5 + $0x1e8] sm:$0xff]
    %v196 = vld [vmem:[#allocation5 + $0x1f0] sm:$0xff]
    %v197 = vld [vmem:[#allocation5 + $0x1f8] sm:$0xff]
    %v198 = vld [vmem:[%s2] sm:$0xf]
    %v200 = vlaneseq
    %v201 = vshrl.u32 %v200, 7
    %v202 = vsub.s32 0, %v201
    %v203 = vrot.slane %v198, %v202
    %v204 = vlaneseq
    %v205 = vshrl.u32 %v204, 7
    %v206 = vsub.s32 1, %v205
    %v207 = vrot.slane %v198, %v206
    %v208 = vlaneseq
    %v209 = vshrl.u32 %v208, 7
    %v210 = vsub.s32 2, %v209
    %v211 = vrot.slane %v198, %v210
    %v212 = vlaneseq
    %v213 = vshrl.u32 %v212, 7
    %v214 = vsub.s32 3, %v213
    %v215 = vrot.slane %v198, %v214
    %v252 = vunpack.c.l.b16 %v102
    %v253 = vunpack.c.h.b16 %v102
    %v254 = vunpack.c.l.b16 %v103
    %v255 = vunpack.c.h.b16 %v103
    %v256 = vunpack.c.l.b16 %v104
    %v257 = vunpack.c.h.b16 %v104
    %v258 = vunpack.c.l.b16 %v105
    %v259 = vunpack.c.h.b16 %v105
    %v260 = vunpack.c.l.b16 %v106
    %v261 = vunpack.c.h.b16 %v106
    %v262 = vunpack.c.l.b16 %v107
    %v263 = vunpack.c.h.b16 %v107
    %v264 = vunpack.c.l.b16 %v108
    %v265 = vunpack.c.h.b16 %v108
    %v266 = vunpack.c.l.b16 %v109
    %v267 = vunpack.c.h.b16 %v109
    %v268 = vunpack.c.l.b16 %v110
    %v269 = vunpack.c.h.b16 %v110
    %v270 = vunpack.c.l.b16 %v111
    %v271 = vunpack.c.h.b16 %v111
    %v272 = vunpack.c.l.b16 %v112
    %v273 = vunpack.c.h.b16 %v112
    %v274 = vunpack.c.l.b16 %v113
    %v275 = vunpack.c.h.b16 %v113
    %v276 = vunpack.c.l.b16 %v114
    %v277 = vunpack.c.h.b16 %v114
    %v278 = vunpack.c.l.b16 %v115
    %v279 = vunpack.c.h.b16 %v115
    %v280 = vunpack.c.l.b16 %v116
    %v281 = vunpack.c.h.b16 %v116
    %v282 = vunpack.c.l.b16 %v117
    %v283 = vunpack.c.h.b16 %v117
    %v284 = vunpack.c.l.b16 %v118
    %v285 = vunpack.c.h.b16 %v118
    %v286 = vunpack.c.l.b16 %v119
    %v287 = vunpack.c.h.b16 %v119
    %v288 = vunpack.c.l.b16 %v120
    %v289 = vunpack.c.h.b16 %v120
    %v290 = vunpack.c.l.b16 %v121
    %v291 = vunpack.c.h.b16 %v121
    %v292 = vunpack.c.l.b16 %v122
    %v293 = vunpack.c.h.b16 %v122
    %v294 = vunpack.c.l.b16 %v123
    %v295 = vunpack.c.h.b16 %v123
    %v296 = vunpack.c.l.b16 %v124
    %v297 = vunpack.c.h.b16 %v124
    %v298 = vunpack.c.l.b16 %v125
    %v299 = vunpack.c.h.b16 %v125
    %v300 = vunpack.c.l.b16 %v126
    %v301 = vunpack.c.h.b16 %v126
    %v302 = vunpack.c.l.b16 %v127
    %v303 = vunpack.c.h.b16 %v127
    %v304 = vunpack.c.l.b16 %v128
    %v305 = vunpack.c.h.b16 %v128
    %v306 = vunpack.c.l.b16 %v129
    %v307 = vunpack.c.h.b16 %v129
    %v308 = vunpack.c.l.b16 %v130
    %v309 = vunpack.c.h.b16 %v130
    %v310 = vunpack.c.l.b16 %v131
    %v311 = vunpack.c.h.b16 %v131
    %v312 = vunpack.c.l.b16 %v132
    %v313 = vunpack.c.h.b16 %v132
    %v314 = vunpack.c.l.b16 %v133
    %v315 = vunpack.c.h.b16 %v133
    %v316 = vpack.c.b16 %v254, %v252
    %v317 = vpack.c.b16 %v255, %v253
    %v318 = vpack.c.b16 %v258, %v256
    %v319 = vpack.c.b16 %v259, %v257
    %v320 = vpack.c.b16 %v262, %v260
    %v321 = vpack.c.b16 %v263, %v261
    %v322 = vpack.c.b16 %v266, %v264
    %v323 = vpack.c.b16 %v267, %v265
    %v324 = vpack.c.b16 %v270, %v268
    %v325 = vpack.c.b16 %v271, %v269
    %v326 = vpack.c.b16 %v274, %v272
    %v327 = vpack.c.b16 %v275, %v273
    %v328 = vpack.c.b16 %v278, %v276
    %v329 = vpack.c.b16 %v279, %v277
    %v330 = vpack.c.b16 %v282, %v280
    %v331 = vpack.c.b16 %v283, %v281
    %v332 = vpack.c.b16 %v286, %v284
    %v333 = vpack.c.b16 %v287, %v285
    %v334 = vpack.c.b16 %v290, %v288
    %v335 = vpack.c.b16 %v291, %v289
    %v336 = vpack.c.b16 %v294, %v292
    %v337 = vpack.c.b16 %v295, %v293
    %v338 = vpack.c.b16 %v298, %v296
    %v339 = vpack.c.b16 %v299, %v297
    %v340 = vpack.c.b16 %v302, %v300
    %v341 = vpack.c.b16 %v303, %v301
    %v342 = vpack.c.b16 %v306, %v304
    %v343 = vpack.c.b16 %v307, %v305
    %v344 = vpack.c.b16 %v310, %v308
    %v345 = vpack.c.b16 %v311, %v309
    %v346 = vpack.c.b16 %v314, %v312
    %v347 = vpack.c.b16 %v315, %v313
    %v444 = vunpack.c.l.b16 %v134
    %v445 = vunpack.c.h.b16 %v134
    %v446 = vunpack.c.l.b16 %v135
    %v447 = vunpack.c.h.b16 %v135
    %v448 = vunpack.c.l.b16 %v136
    %v449 = vunpack.c.h.b16 %v136
    %v450 = vunpack.c.l.b16 %v137
    %v451 = vunpack.c.h.b16 %v137
    %v452 = vunpack.c.l.b16 %v138
    %v453 = vunpack.c.h.b16 %v138
    %v454 = vunpack.c.l.b16 %v139
    %v455 = vunpack.c.h.b16 %v139
    %v456 = vunpack.c.l.b16 %v140
    %v457 = vunpack.c.h.b16 %v140
    %v458 = vunpack.c.l.b16 %v141
    %v459 = vunpack.c.h.b16 %v141
    %v460 = vunpack.c.l.b16 %v142
    %v461 = vunpack.c.h.b16 %v142
    %v462 = vunpack.c.l.b16 %v143
    %v463 = vunpack.c.h.b16 %v143
    %v464 = vunpack.c.l.b16 %v144
    %v465 = vunpack.c.h.b16 %v144
    %v466 = vunpack.c.l.b16 %v145
    %v467 = vunpack.c.h.b16 %v145
    %v468 = vunpack.c.l.b16 %v146
    %v469 = vunpack.c.h.b16 %v146
    %v470 = vunpack.c.l.b16 %v147
    %v471 = vunpack.c.h.b16 %v147
    %v472 = vunpack.c.l.b16 %v148
    %v473 = vunpack.c.h.b16 %v148
    %v474 = vunpack.c.l.b16 %v149
    %v475 = vunpack.c.h.b16 %v149
    %v476 = vunpack.c.l.b16 %v150
    %v477 = vunpack.c.h.b16 %v150
    %v478 = vunpack.c.l.b16 %v151
    %v479 = vunpack.c.h.b16 %v151
    %v480 = vunpack.c.l.b16 %v152
    %v481 = vunpack.c.h.b16 %v152
    %v482 = vunpack.c.l.b16 %v153
    %v483 = vunpack.c.h.b16 %v153
    %v484 = vunpack.c.l.b16 %v154
    %v485 = vunpack.c.h.b16 %v154
    %v486 = vunpack.c.l.b16 %v155
    %v487 = vunpack.c.h.b16 %v155
    %v488 = vunpack.c.l.b16 %v156
    %v489 = vunpack.c.h.b16 %v156
    %v490 = vunpack.c.l.b16 %v157
    %v491 = vunpack.c.h.b16 %v157
    %v492 = vunpack.c.l.b16 %v158
    %v493 = vunpack.c.h.b16 %v158
    %v494 = vunpack.c.l.b16 %v159
    %v495 = vunpack.c.h.b16 %v159
    %v496 = vunpack.c.l.b16 %v160
    %v497 = vunpack.c.h.b16 %v160
    %v498 = vunpack.c.l.b16 %v161
    %v499 = vunpack.c.h.b16 %v161
    %v500 = vunpack.c.l.b16 %v162
    %v501 = vunpack.c.h.b16 %v162
    %v502 = vunpack.c.l.b16 %v163
    %v503 = vunpack.c.h.b16 %v163
    %v504 = vunpack.c.l.b16 %v164
    %v505 = vunpack.c.h.b16 %v164
    %v506 = vunpack.c.l.b16 %v165
    %v507 = vunpack.c.h.b16 %v165
    %v508 = vunpack.c.l.b16 %v166
    %v509 = vunpack.c.h.b16 %v166
    %v510 = vunpack.c.l.b16 %v167
    %v511 = vunpack.c.h.b16 %v167
    %v512 = vunpack.c.l.b16 %v168
    %v513 = vunpack.c.h.b16 %v168
    %v514 = vunpack.c.l.b16 %v169
    %v515 = vunpack.c.h.b16 %v169
    %v516 = vunpack.c.l.b16 %v170
    %v517 = vunpack.c.h.b16 %v170
    %v518 = vunpack.c.l.b16 %v171
    %v519 = vunpack.c.h.b16 %v171
    %v520 = vunpack.c.l.b16 %v172
    %v521 = vunpack.c.h.b16 %v172
    %v522 = vunpack.c.l.b16 %v173
    %v523 = vunpack.c.h.b16 %v173
    %v524 = vunpack.c.l.b16 %v174
    %v525 = vunpack.c.h.b16 %v174
    %v526 = vunpack.c.l.b16 %v175
    %v527 = vunpack.c.h.b16 %v175
    %v528 = vunpack.c.l.b16 %v176
    %v529 = vunpack.c.h.b16 %v176
    %v530 = vunpack.c.l.b16 %v177
    %v531 = vunpack.c.h.b16 %v177
    %v532 = vunpack.c.l.b16 %v178
    %v533 = vunpack.c.h.b16 %v178
    %v534 = vunpack.c.l.b16 %v179
    %v535 = vunpack.c.h.b16 %v179
    %v536 = vunpack.c.l.b16 %v180
    %v537 = vunpack.c.h.b16 %v180
    %v538 = vunpack.c.l.b16 %v181
    %v539 = vunpack.c.h.b16 %v181
    %v540 = vunpack.c.l.b16 %v182
    %v541 = vunpack.c.h.b16 %v182
    %v542 = vunpack.c.l.b16 %v183
    %v543 = vunpack.c.h.b16 %v183
    %v544 = vunpack.c.l.b16 %v184
    %v545 = vunpack.c.h.b16 %v184
    %v546 = vunpack.c.l.b16 %v185
    %v547 = vunpack.c.h.b16 %v185
    %v548 = vunpack.c.l.b16 %v186
    %v549 = vunpack.c.h.b16 %v186
    %v550 = vunpack.c.l.b16 %v187
    %v551 = vunpack.c.h.b16 %v187
    %v552 = vunpack.c.l.b16 %v188
    %v553 = vunpack.c.h.b16 %v188
    %v554 = vunpack.c.l.b16 %v189
    %v555 = vunpack.c.h.b16 %v189
    %v556 = vunpack.c.l.b16 %v190
    %v557 = vunpack.c.h.b16 %v190
    %v558 = vunpack.c.l.b16 %v191
    %v559 = vunpack.c.h.b16 %v191
    %v560 = vunpack.c.l.b16 %v192
    %v561 = vunpack.c.h.b16 %v192
    %v562 = vunpack.c.l.b16 %v193
    %v563 = vunpack.c.h.b16 %v193
    %v564 = vunpack.c.l.b16 %v194
    %v565 = vunpack.c.h.b16 %v194
    %v566 = vunpack.c.l.b16 %v195
    %v567 = vunpack.c.h.b16 %v195
    %v568 = vunpack.c.l.b16 %v196
    %v569 = vunpack.c.h.b16 %v196
    %v570 = vunpack.c.l.b16 %v197
    %v571 = vunpack.c.h.b16 %v197
    %v572 = vpack.c.b16 %v448, %v444
    %v573 = vpack.c.b16 %v449, %v445
    %v574 = vpack.c.b16 %v450, %v446
    %v575 = vpack.c.b16 %v451, %v447
    %v576 = vpack.c.b16 %v456, %v452
    %v577 = vpack.c.b16 %v457, %v453
    %v578 = vpack.c.b16 %v458, %v454
    %v579 = vpack.c.b16 %v459, %v455
    %v580 = vpack.c.b16 %v464, %v460
    %v581 = vpack.c.b16 %v465, %v461
    %v582 = vpack.c.b16 %v466, %v462
    %v583 = vpack.c.b16 %v467, %v463
    %v584 = vpack.c.b16 %v472, %v468
    %v585 = vpack.c.b16 %v473, %v469
    %v586 = vpack.c.b16 %v474, %v470
    %v587 = vpack.c.b16 %v475, %v471
    %v588 = vpack.c.b16 %v480, %v476
    %v589 = vpack.c.b16 %v481, %v477
    %v590 = vpack.c.b16 %v482, %v478
    %v591 = vpack.c.b16 %v483, %v479
    %v592 = vpack.c.b16 %v488, %v484
    %v593 = vpack.c.b16 %v489, %v485
    %v594 = vpack.c.b16 %v490, %v486
    %v595 = vpack.c.b16 %v491, %v487
    %v596 = vpack.c.b16 %v496, %v492
    %v597 = vpack.c.b16 %v497, %v493
    %v598 = vpack.c.b16 %v498, %v494
    %v599 = vpack.c.b16 %v499, %v495
    %v600 = vpack.c.b16 %v504, %v500
    %v601 = vpack.c.b16 %v505, %v501
    %v602 = vpack.c.b16 %v506, %v502
    %v603 = vpack.c.b16 %v507, %v503
    %v604 = vpack.c.b16 %v512, %v508
    %v605 = vpack.c.b16 %v513, %v509
    %v606 = vpack.c.b16 %v514, %v510
    %v607 = vpack.c.b16 %v515, %v511
    %v608 = vpack.c.b16 %v520, %v516
    %v609 = vpack.c.b16 %v521, %v517
    %v610 = vpack.c.b16 %v522, %v518
    %v611 = vpack.c.b16 %v523, %v519
    %v612 = vpack.c.b16 %v528, %v524
    %v613 = vpack.c.b16 %v529, %v525
    %v614 = vpack.c.b16 %v530, %v526
    %v615 = vpack.c.b16 %v531, %v527
    %v616 = vpack.c.b16 %v536, %v532
    %v617 = vpack.c.b16 %v537, %v533
    %v618 = vpack.c.b16 %v538, %v534
    %v619 = vpack.c.b16 %v539, %v535
    %v620 = vpack.c.b16 %v544, %v540
    %v621 = vpack.c.b16 %v545, %v541
    %v622 = vpack.c.b16 %v546, %v542
    %v623 = vpack.c.b16 %v547, %v543
    %v624 = vpack.c.b16 %v552, %v548
    %v625 = vpack.c.b16 %v553, %v549
    %v626 = vpack.c.b16 %v554, %v550
    %v627 = vpack.c.b16 %v555, %v551
    %v628 = vpack.c.b16 %v560, %v556
    %v629 = vpack.c.b16 %v561, %v557
    %v630 = vpack.c.b16 %v562, %v558
    %v631 = vpack.c.b16 %v563, %v559
    %v632 = vpack.c.b16 %v568, %v564
    %v633 = vpack.c.b16 %v569, %v565
    %v634 = vpack.c.b16 %v570, %v566
    %v635 = vpack.c.b16 %v571, %v567
    %700 = vmatprep.subr.bf16.mxu0 %v573
    %701 = vmatpush1.bf16.msra.mxu0 %v572
    %702 = vmatprep.subr.bf16.mxu0 %v577
    %703 = vmatpush1.bf16.msra.mxu0 %v576
    %704 = vmatprep.subr.bf16.mxu0 %v581
    %705 = vmatpush1.bf16.msra.mxu0 %v580
    %706 = vmatprep.subr.bf16.mxu0 %v585
    %707 = vmatpush1.bf16.msra.mxu0 %v584
    %708 = vmatprep.subr.bf16.mxu0 %v589
    %709 = vmatpush1.bf16.msra.mxu0 %v588
    %710 = vmatprep.subr.bf16.mxu0 %v593
    %711 = vmatpush1.bf16.msra.mxu0 %v592
    %712 = vmatprep.subr.bf16.mxu0 %v597
    %713 = vmatpush1.bf16.msra.mxu0 %v596
    %714 = vmatprep.subr.bf16.mxu0 %v601
    %715 = vmatpush1.bf16.msra.mxu0 %v600
    %716 = vmatprep.subr.bf16.mxu0 %v605
    %717 = vmatpush1.bf16.msra.mxu0 %v604
    %718 = vmatprep.subr.bf16.mxu0 %v609
    %719 = vmatpush1.bf16.msra.mxu0 %v608
    %720 = vmatprep.subr.bf16.mxu0 %v613
    %721 = vmatpush1.bf16.msra.mxu0 %v612
    %722 = vmatprep.subr.bf16.mxu0 %v617
    %723 = vmatpush1.bf16.msra.mxu0 %v616
    %724 = vmatprep.subr.bf16.mxu0 %v621
    %725 = vmatpush1.bf16.msra.mxu0 %v620
    %726 = vmatprep.subr.bf16.mxu0 %v625
    %727 = vmatpush1.bf16.msra.mxu0 %v624
    %728 = vmatprep.subr.bf16.mxu0 %v629
    %729 = vmatpush1.bf16.msra.mxu0 %v628
    %730 = vmatprep.subr.bf16.mxu0 %v633
    %731 = vmatpush1.bf16.msra.mxu0 %v632
    %732 = vmatprep.mubr.bf16.mxu0 %v317
    %733 = vmatmul.mubr.bf16.gmra.mrb[0].mxu0 %v316
    %v734 = vpop.f32.mrb[0].mxu0
    %v735 = vadd.f32 %v203, %v734
    %v736 = vpop.f32.mrb[0].mxu0
    %v737 = vadd.f32 %v207, %v736
    %v738 = vpop.f32.mrb[0].mxu0
    %v739 = vadd.f32 %v203, %v738
    %v740 = vpop.f32.mrb[0].mxu0
    %v741 = vadd.f32 %v207, %v740
    %742 = vmatprep.mubr.bf16.mxu0 %v319
    %743 = vmatmul.mubr.bf16.gmra.mrb[0].mxu0 %v318
    %v744 = vpop.f32.mrb[0].mxu0
    %v745 = vadd.f32 %v203, %v744
    %v746 = vpop.f32.mrb[0].mxu0
    %v747 = vadd.f32 %v207, %v746
    %v748 = vpop.f32.mrb[0].mxu0
    %v749 = vadd.f32 %v203, %v748
    %v750 = vpop.f32.mrb[0].mxu0
    %v751 = vadd.f32 %v207, %v750
    %752 = vmatprep.mubr.bf16.mxu0 %v321
    %753 = vmatmul.mubr.bf16.gmra.mrb[0].mxu0 %v320
    %v754 = vpop.f32.mrb[0].mxu0
    %v755 = vadd.f32 %v203, %v754
    %v756 = vpop.f32.mrb[0].mxu0
    %v757 = vadd.f32 %v207, %v756
    %v758 = vpop.f32.mrb[0].mxu0
    %v759 = vadd.f32 %v203, %v758
    %v760 = vpop.f32.mrb[0].mxu0
    %v761 = vadd.f32 %v207, %v760
    %762 = vmatprep.mubr.bf16.mxu0 %v323
    %763 = vmatmul.mubr.bf16.gmra.mrb[0].mxu0 %v322
    %v764 = vpop.f32.mrb[0].mxu0
    %v765 = vadd.f32 %v203, %v764
    %v766 = vpop.f32.mrb[0].mxu0
    %v767 = vadd.f32 %v207, %v766
    %v768 = vpop.f32.mrb[0].mxu0
    %v769 = vadd.f32 %v203, %v768
    %v770 = vpop.f32.mrb[0].mxu0
    %v771 = vadd.f32 %v207, %v770
    %772 = vmatprep.mubr.bf16.mxu0 %v325
    %773 = vmatmul.mubr.bf16.gmra.mrb[0].mxu0 %v324
    %v774 = vpop.f32.mrb[0].mxu0
    %v775 = vadd.f32 %v203, %v774
    %v776 = vpop.f32.mrb[0].mxu0
    %v777 = vadd.f32 %v207, %v776
    %v778 = vpop.f32.mrb[0].mxu0
    %v779 = vadd.f32 %v203, %v778
    %v780 = vpop.f32.mrb[0].mxu0
    %v781 = vadd.f32 %v207, %v780
    %782 = vmatprep.mubr.bf16.mxu0 %v327
    %783 = vmatmul.mubr.bf16.gmra.mrb[0].mxu0 %v326
    %v784 = vpop.f32.mrb[0].mxu0
    %v785 = vadd.f32 %v203, %v784
    %v786 = vpop.f32.mrb[0].mxu0
    %v787 = vadd.f32 %v207, %v786
    %v788 = vpop.f32.mrb[0].mxu0
    %v789 = vadd.f32 %v203, %v788
    %v790 = vpop.f32.mrb[0].mxu0
    %v791 = vadd.f32 %v207, %v790
    %792 = vmatprep.mubr.bf16.mxu0 %v329
    %793 = vmatmul.mubr.bf16.gmra.mrb[0].mxu0 %v328
    %v794 = vpop.f32.mrb[0].mxu0
    %v795 = vadd.f32 %v203, %v794
    %v796 = vpop.f32.mrb[0].mxu0
    %v797 = vadd.f32 %v207, %v796
    %v798 = vpop.f32.mrb[0].mxu0
    %v799 = vadd.f32 %v203, %v798
    %v800 = vpop.f32.mrb[0].mxu0
    %v801 = vadd.f32 %v207, %v800
    %802 = vmatprep.mubr.bf16.mxu0 %v331
    %803 = vmatmul.mubr.bf16.gmra.mrb[0].mxu0 %v330
    %v804 = vpop.f32.mrb[0].mxu0
    %v805 = vadd.f32 %v203, %v804
    %v806 = vpop.f32.mrb[0].mxu0
    %v807 = vadd.f32 %v207, %v806
    %v808 = vpop.f32.mrb[0].mxu0
    %v809 = vadd.f32 %v203, %v808
    %v810 = vpop.f32.mrb[0].mxu0
    %v811 = vadd.f32 %v207, %v810
    %812 = vmatprep.mubr.bf16.mxu0 %v333
    %813 = vmatmul.mubr.bf16.gmra.mrb[0].mxu0 %v332
    %v814 = vpop.f32.mrb[0].mxu0
    %v815 = vadd.f32 %v203, %v814
    %v816 = vpop.f32.mrb[0].mxu0
    %v817 = vadd.f32 %v207, %v816
    %v818 = vpop.f32.mrb[0].mxu0
    %v819 = vadd.f32 %v203, %v818
    %v820 = vpop.f32.mrb[0].mxu0
    %v821 = vadd.f32 %v207, %v820
    %822 = vmatprep.mubr.bf16.mxu0 %v335
    %823 = vmatmul.mubr.bf16.gmra.mrb[0].mxu0 %v334
    %v824 = vpop.f32.mrb[0].mxu0
    %v825 = vadd.f32 %v203, %v824
    %v826 = vpop.f32.mrb[0].mxu0
    %v827 = vadd.f32 %v207, %v826
    %v828 = vpop.f32.mrb[0].mxu0
    %v829 = vadd.f32 %v203, %v828
    %v830 = vpop.f32.mrb[0].mxu0
    %v831 = vadd.f32 %v207, %v830
    %832 = vmatprep.mubr.bf16.mxu0 %v337
    %833 = vmatmul.mubr.bf16.gmra.mrb[0].mxu0 %v336
    %v834 = vpop.f32.mrb[0].mxu0
    %v835 = vadd.f32 %v203, %v834
    %v836 = vpop.f32.mrb[0].mxu0
    %v837 = vadd.f32 %v207, %v836
    %v838 = vpop.f32.mrb[0].mxu0
    %v839 = vadd.f32 %v203, %v838
    %v840 = vpop.f32.mrb[0].mxu0
    %v841 = vadd.f32 %v207, %v840
    %842 = vmatprep.mubr.bf16.mxu0 %v339
    %843 = vmatmul.mubr.bf16.gmra.mrb[0].mxu0 %v338
    %v844 = vpop.f32.mrb[0].mxu0
    %v845 = vadd.f32 %v203, %v844
    %v846 = vpop.f32.mrb[0].mxu0
    %v847 = vadd.f32 %v207, %v846
    %v848 = vpop.f32.mrb[0].mxu0
    %v849 = vadd.f32 %v203, %v848
    %v850 = vpop.f32.mrb[0].mxu0
    %v851 = vadd.f32 %v207, %v850
    %852 = vmatprep.mubr.bf16.mxu0 %v341
    %853 = vmatmul.mubr.bf16.gmra.mrb[0].mxu0 %v340
    %v854 = vpop.f32.mrb[0].mxu0
    %v855 = vadd.f32 %v203, %v854
    %v856 = vpop.f32.mrb[0].mxu0
    %v857 = vadd.f32 %v207, %v856
    %v858 = vpop.f32.mrb[0].mxu0
    %v859 = vadd.f32 %v203, %v858
    %v860 = vpop.f32.mrb[0].mxu0
    %v861 = vadd.f32 %v207, %v860
    %862 = vmatprep.mubr.bf16.mxu0 %v343
    %863 = vmatmul.mubr.bf16.gmra.mrb[0].mxu0 %v342
    %v864 = vpop.f32.mrb[0].mxu0
    %v865 = vadd.f32 %v203, %v864
    %v866 = vpop.f32.mrb[0].mxu0
    %v867 = vadd.f32 %v207, %v866
    %v868 = vpop.f32.mrb[0].mxu0
    %v869 = vadd.f32 %v203, %v868
    %v870 = vpop.f32.mrb[0].mxu0
    %v871 = vadd.f32 %v207, %v870
    %872 = vmatprep.mubr.bf16.mxu0 %v345
    %873 = vmatmul.mubr.bf16.gmra.mrb[0].mxu0 %v344
    %v874 = vpop.f32.mrb[0].mxu0
    %v875 = vadd.f32 %v203, %v874
    %v876 = vpop.f32.mrb[0].mxu0
    %v877 = vadd.f32 %v207, %v876
    %v878 = vpop.f32.mrb[0].mxu0
    %v879 = vadd.f32 %v203, %v878
    %v880 = vpop.f32.mrb[0].mxu0
    %v881 = vadd.f32 %v207, %v880
    %882 = vmatprep.mubr.bf16.mxu0 %v347
    %883 = vmatmul.mubr.bf16.gmra.mrb[0].mxu0 %v346
    %v884 = vpop.f32.mrb[0].mxu0
    %v885 = vadd.f32 %v203, %v884
    %v886 = vpop.f32.mrb[0].mxu0
    %v887 = vadd.f32 %v207, %v886
    %v888 = vpop.f32.mrb[0].mxu0
    %v889 = vadd.f32 %v203, %v888
    %v890 = vpop.f32.mrb[0].mxu0
    %v891 = vadd.f32 %v207, %v890
    %892 = vdwg.mxu0
    %893 = vmatprep.subr.bf16.mxu0 %v575
    %894 = vmatpush1.bf16.msra.mxu0 %v574
    %895 = vmatprep.subr.bf16.mxu0 %v579
    %896 = vmatpush1.bf16.msra.mxu0 %v578
    %897 = vmatprep.subr.bf16.mxu0 %v583
    %898 = vmatpush1.bf16.msra.mxu0 %v582
    %899 = vmatprep.subr.bf16.mxu0 %v587
    %900 = vmatpush1.bf16.msra.mxu0 %v586
    %901 = vmatprep.subr.bf16.mxu0 %v591
    %902 = vmatpush1.bf16.msra.mxu0 %v590
    %903 = vmatprep.subr.bf16.mxu0 %v595
    %904 = vmatpush1.bf16.msra.mxu0 %v594
    %905 = vmatprep.subr.bf16.mxu0 %v599
    %906 = vmatpush1.bf16.msra.mxu0 %v598
    %907 = vmatprep.subr.bf16.mxu0 %v603
    %908 = vmatpush1.bf16.msra.mxu0 %v602
    %909 = vmatprep.subr.bf16.mxu0 %v607
    %910 = vmatpush1.bf16.msra.mxu0 %v606
    %911 = vmatprep.subr.bf16.mxu0 %v611
    %912 = vmatpush1.bf16.msra.mxu0 %v610
    %913 = vmatprep.subr.bf16.mxu0 %v615
    %914 = vmatpush1.bf16.msra.mxu0 %v614
    %915 = vmatprep.subr.bf16.mxu0 %v619
    %916 = vmatpush1.bf16.msra.mxu0 %v618
    %917 = vmatprep.subr.bf16.mxu0 %v623
    %918 = vmatpush1.bf16.msra.mxu0 %v622
    %919 = vmatprep.subr.bf16.mxu0 %v627
    %920 = vmatpush1.bf16.msra.mxu0 %v626
    %921 = vmatprep.subr.bf16.mxu0 %v631
    %922 = vmatpush1.bf16.msra.mxu0 %v630
    %923 = vmatprep.subr.bf16.mxu0 %v635
    %924 = vmatpush1.bf16.msra.mxu0 %v634
    %925 = vmatprep.mubr.bf16.mxu0 %v317
    %926 = vmatmul.mubr.bf16.gmra.mrb[0].mxu0 %v316
    %v927 = vpop.f32.mrb[0].mxu0
    %v928 = vadd.f32 %v211, %v927
    %v929 = vpop.f32.mrb[0].mxu0
    %v930 = vadd.f32 %v215, %v929
    %v931 = vpop.f32.mrb[0].mxu0
    %v932 = vadd.f32 %v211, %v931
    %v933 = vpop.f32.mrb[0].mxu0
    %v934 = vadd.f32 %v215, %v933
    %935 = vmatprep.mubr.bf16.mxu0 %v319
    %936 = vmatmul.mubr.bf16.gmra.mrb[0].mxu0 %v318
    %v937 = vpop.f32.mrb[0].mxu0
    %v938 = vadd.f32 %v211, %v937
    %v939 = vpop.f32.mrb[0].mxu0
    %v940 = vadd.f32 %v215, %v939
    %v941 = vpop.f32.mrb[0].mxu0
    %v942 = vadd.f32 %v211, %v941
    %v943 = vpop.f32.mrb[0].mxu0
    %v944 = vadd.f32 %v215, %v943
    %945 = vmatprep.mubr.bf16.mxu0 %v321
    %946 = vmatmul.mubr.bf16.gmra.mrb[0].mxu0 %v320
    %v947 = vpop.f32.mrb[0].mxu0
    %v948 = vadd.f32 %v211, %v947
    %v949 = vpop.f32.mrb[0].mxu0
    %v950 = vadd.f32 %v215, %v949
    %v951 = vpop.f32.mrb[0].mxu0
    %v952 = vadd.f32 %v211, %v951
    %v953 = vpop.f32.mrb[0].mxu0
    %v954 = vadd.f32 %v215, %v953
    %955 = vmatprep.mubr.bf16.mxu0 %v323
    %956 = vmatmul.mubr.bf16.gmra.mrb[0].mxu0 %v322
    %v957 = vpop.f32.mrb[0].mxu0
    %v958 = vadd.f32 %v211, %v957
    %v959 = vpop.f32.mrb[0].mxu0
    %v960 = vadd.f32 %v215, %v959
    %v961 = vpop.f32.mrb[0].mxu0
    %v962 = vadd.f32 %v211, %v961
    %v963 = vpop.f32.mrb[0].mxu0
    %v964 = vadd.f32 %v215, %v963
    %965 = vmatprep.mubr.bf16.mxu0 %v325
    %966 = vmatmul.mubr.bf16.gmra.mrb[0].mxu0 %v324
    %v967 = vpop.f32.mrb[0].mxu0
    %v968 = vadd.f32 %v211, %v967
    %v969 = vpop.f32.mrb[0].mxu0
    %v970 = vadd.f32 %v215, %v969
    %v971 = vpop.f32.mrb[0].mxu0
    %v972 = vadd.f32 %v211, %v971
    %v973 = vpop.f32.mrb[0].mxu0
    %v974 = vadd.f32 %v215, %v973
    %975 = vmatprep.mubr.bf16.mxu0 %v327
    %976 = vmatmul.mubr.bf16.gmra.mrb[0].mxu0 %v326
    %v977 = vpop.f32.mrb[0].mxu0
    %v978 = vadd.f32 %v211, %v977
    %v979 = vpop.f32.mrb[0].mxu0
    %v980 = vadd.f32 %v215, %v979
    %v981 = vpop.f32.mrb[0].mxu0
    %v982 = vadd.f32 %v211, %v981
    %v983 = vpop.f32.mrb[0].mxu0
    %v984 = vadd.f32 %v215, %v983
    %985 = vmatprep.mubr.bf16.mxu0 %v329
    %986 = vmatmul.mubr.bf16.gmra.mrb[0].mxu0 %v328
    %v987 = vpop.f32.mrb[0].mxu0
    %v988 = vadd.f32 %v211, %v987
    %v989 = vpop.f32.mrb[0].mxu0
    %v990 = vadd.f32 %v215, %v989
    %v991 = vpop.f32.mrb[0].mxu0
    %v992 = vadd.f32 %v211, %v991
    %v993 = vpop.f32.mrb[0].mxu0
    %v994 = vadd.f32 %v215, %v993
    %995 = vmatprep.mubr.bf16.mxu0 %v331
    %996 = vmatmul.mubr.bf16.gmra.mrb[0].mxu0 %v330
    %v997 = vpop.f32.mrb[0].mxu0
    %v998 = vadd.f32 %v211, %v997
    %v999 = vpop.f32.mrb[0].mxu0
    %v1000 = vadd.f32 %v215, %v999
    %v1001 = vpop.f32.mrb[0].mxu0
    %v1002 = vadd.f32 %v211, %v1001
    %v1003 = vpop.f32.mrb[0].mxu0
    %v1004 = vadd.f32 %v215, %v1003
    %1005 = vmatprep.mubr.bf16.mxu0 %v333
    %1006 = vmatmul.mubr.bf16.gmra.mrb[0].mxu0 %v332
    %v1007 = vpop.f32.mrb[0].mxu0
    %v1008 = vadd.f32 %v211, %v1007
    %v1009 = vpop.f32.mrb[0].mxu0
    %v1010 = vadd.f32 %v215, %v1009
    %v1011 = vpop.f32.mrb[0].mxu0
    %v1012 = vadd.f32 %v211, %v1011
    %v1013 = vpop.f32.mrb[0].mxu0
    %v1014 = vadd.f32 %v215, %v1013
    %1015 = vmatprep.mubr.bf16.mxu0 %v335
    %1016 = vmatmul.mubr.bf16.gmra.mrb[0].mxu0 %v334
    %v1017 = vpop.f32.mrb[0].mxu0
    %v1018 = vadd.f32 %v211, %v1017
    %v1019 = vpop.f32.mrb[0].mxu0
    %v1020 = vadd.f32 %v215, %v1019
    %v1021 = vpop.f32.mrb[0].mxu0
    %v1022 = vadd.f32 %v211, %v1021
    %v1023 = vpop.f32.mrb[0].mxu0
    %v1024 = vadd.f32 %v215, %v1023
    %1025 = vmatprep.mubr.bf16.mxu0 %v337
    %1026 = vmatmul.mubr.bf16.gmra.mrb[0].mxu0 %v336
    %v1027 = vpop.f32.mrb[0].mxu0
    %v1028 = vadd.f32 %v211, %v1027
    %v1029 = vpop.f32.mrb[0].mxu0
    %v1030 = vadd.f32 %v215, %v1029
    %v1031 = vpop.f32.mrb[0].mxu0
    %v1032 = vadd.f32 %v211, %v1031
    %v1033 = vpop.f32.mrb[0].mxu0
    %v1034 = vadd.f32 %v215, %v1033
    %1035 = vmatprep.mubr.bf16.mxu0 %v339
    %1036 = vmatmul.mubr.bf16.gmra.mrb[0].mxu0 %v338
    %v1037 = vpop.f32.mrb[0].mxu0
    %v1038 = vadd.f32 %v211, %v1037
    %v1039 = vpop.f32.mrb[0].mxu0
    %v1040 = vadd.f32 %v215, %v1039
    %v1041 = vpop.f32.mrb[0].mxu0
    %v1042 = vadd.f32 %v211, %v1041
    %v1043 = vpop.f32.mrb[0].mxu0
    %v1044 = vadd.f32 %v215, %v1043
    %1045 = vmatprep.mubr.bf16.mxu0 %v341
    %1046 = vmatmul.mubr.bf16.gmra.mrb[0].mxu0 %v340
    %v1047 = vpop.f32.mrb[0].mxu0
    %v1048 = vadd.f32 %v211, %v1047
    %v1049 = vpop.f32.mrb[0].mxu0
    %v1050 = vadd.f32 %v215, %v1049
    %v1051 = vpop.f32.mrb[0].mxu0
    %v1052 = vadd.f32 %v211, %v1051
    %v1053 = vpop.f32.mrb[0].mxu0
    %v1054 = vadd.f32 %v215, %v1053
    %1055 = vmatprep.mubr.bf16.mxu0 %v343
    %1056 = vmatmul.mubr.bf16.gmra.mrb[0].mxu0 %v342
    %v1057 = vpop.f32.mrb[0].mxu0
    %v1058 = vadd.f32 %v211, %v1057
    %v1059 = vpop.f32.mrb[0].mxu0
    %v1060 = vadd.f32 %v215, %v1059
    %v1061 = vpop.f32.mrb[0].mxu0
    %v1062 = vadd.f32 %v211, %v1061
    %v1063 = vpop.f32.mrb[0].mxu0
    %v1064 = vadd.f32 %v215, %v1063
    %1065 = vmatprep.mubr.bf16.mxu0 %v345
    %1066 = vmatmul.mubr.bf16.gmra.mrb[0].mxu0 %v344
    %v1067 = vpop.f32.mrb[0].mxu0
    %v1068 = vadd.f32 %v211, %v1067
    %v1069 = vpop.f32.mrb[0].mxu0
    %v1070 = vadd.f32 %v215, %v1069
    %v1071 = vpop.f32.mrb[0].mxu0
    %v1072 = vadd.f32 %v211, %v1071
    %v1073 = vpop.f32.mrb[0].mxu0
    %v1074 = vadd.f32 %v215, %v1073
    %1075 = vmatprep.mubr.bf16.mxu0 %v347
    %1076 = vmatmul.mubr.bf16.gmra.mrb[0].mxu0 %v346
    %v1077 = vpop.f32.mrb[0].mxu0
    %v1078 = vadd.f32 %v211, %v1077
    %v1079 = vpop.f32.mrb[0].mxu0
    %v1080 = vadd.f32 %v215, %v1079
    %v1081 = vpop.f32.mrb[0].mxu0
    %v1082 = vadd.f32 %v211, %v1081
    %v1083 = vpop.f32.mrb[0].mxu0
    %v1084 = vadd.f32 %v215, %v1083
    %1085 = vdwg.mxu0
    %v1086 = vxor.u32 %v735, 2147483648
    %v1087 = vxor.u32 %v737, 2147483648
    %v1088 = vxor.u32 %v928, 2147483648
    %v1089 = vxor.u32 %v930, 2147483648
    %v1090 = vxor.u32 %v739, 2147483648
    %v1091 = vxor.u32 %v741, 2147483648
    %v1092 = vxor.u32 %v932, 2147483648
    %v1093 = vxor.u32 %v934, 2147483648
    %v1094 = vxor.u32 %v745, 2147483648
    %v1095 = vxor.u32 %v747, 2147483648
    %v1096 = vxor.u32 %v938, 2147483648
    %v1097 = vxor.u32 %v940, 2147483648
    %v1098 = vxor.u32 %v749, 2147483648
    %v1099 = vxor.u32 %v751, 2147483648
    %v1100 = vxor.u32 %v942, 2147483648
    %v1101 = vxor.u32 %v944, 2147483648
    %v1102 = vxor.u32 %v755, 2147483648
    %v1103 = vxor.u32 %v757, 2147483648
    %v1104 = vxor.u32 %v948, 2147483648
    %v1105 = vxor.u32 %v950, 2147483648
    %v1106 = vxor.u32 %v759, 2147483648
    %v1107 = vxor.u32 %v761, 2147483648
    %v1108 = vxor.u32 %v952, 2147483648
    %v1109 = vxor.u32 %v954, 2147483648
    %v1110 = vxor.u32 %v765, 2147483648
    %v1111 = vxor.u32 %v767, 2147483648
    %v1112 = vxor.u32 %v958, 2147483648
    %v1113 = vxor.u32 %v960, 2147483648
    %v1114 = vxor.u32 %v769, 2147483648
    %v1115 = vxor.u32 %v771, 2147483648
    %v1116 = vxor.u32 %v962, 2147483648
    %v1117 = vxor.u32 %v964, 2147483648
    %v1118 = vxor.u32 %v775, 2147483648
    %v1119 = vxor.u32 %v777, 2147483648
    %v1120 = vxor.u32 %v968, 2147483648
    %v1121 = vxor.u32 %v970, 2147483648
    %v1122 = vxor.u32 %v779, 2147483648
    %v1123 = vxor.u32 %v781, 2147483648
    %v1124 = vxor.u32 %v972, 2147483648
    %v1125 = vxor.u32 %v974, 2147483648
    %v1126 = vxor.u32 %v785, 2147483648
    %v1127 = vxor.u32 %v787, 2147483648
    %v1128 = vxor.u32 %v978, 2147483648
    %v1129 = vxor.u32 %v980, 2147483648
    %v1130 = vxor.u32 %v789, 2147483648
    %v1131 = vxor.u32 %v791, 2147483648
    %v1132 = vxor.u32 %v982, 2147483648
    %v1133 = vxor.u32 %v984, 2147483648
    %v1134 = vxor.u32 %v795, 2147483648
    %v1135 = vxor.u32 %v797, 2147483648
    %v1136 = vxor.u32 %v988, 2147483648
    %v1137 = vxor.u32 %v990, 2147483648
    %v1138 = vxor.u32 %v799, 2147483648
    %v1139 = vxor.u32 %v801, 2147483648
    %v1140 = vxor.u32 %v992, 2147483648
    %v1141 = vxor.u32 %v994, 2147483648
    %v1142 = vxor.u32 %v805, 2147483648
    %v1143 = vxor.u32 %v807, 2147483648
    %v1144 = vxor.u32 %v998, 2147483648
    %v1145 = vxor.u32 %v1000, 2147483648
    %v1146 = vxor.u32 %v809, 2147483648
    %v1147 = vxor.u32 %v811, 2147483648
    %v1148 = vxor.u32 %v1002, 2147483648
    %v1149 = vxor.u32 %v1004, 2147483648
    %v1150 = vxor.u32 %v815, 2147483648
    %v1151 = vxor.u32 %v817, 2147483648
    %v1152 = vxor.u32 %v1008, 2147483648
    %v1153 = vxor.u32 %v1010, 2147483648
    %v1154 = vxor.u32 %v819, 2147483648
    %v1155 = vxor.u32 %v821, 2147483648
    %v1156 = vxor.u32 %v1012, 2147483648
    %v1157 = vxor.u32 %v1014, 2147483648
    %v1158 = vxor.u32 %v825, 2147483648
    %v1159 = vxor.u32 %v827, 2147483648
    %v1160 = vxor.u32 %v1018, 2147483648
    %v1161 = vxor.u32 %v1020, 2147483648
    %v1162 = vxor.u32 %v829, 2147483648
    %v1163 = vxor.u32 %v831, 2147483648
    %v1164 = vxor.u32 %v1022, 2147483648
    %v1165 = vxor.u32 %v1024, 2147483648
    %v1166 = vxor.u32 %v835, 2147483648
    %v1167 = vxor.u32 %v837, 2147483648
    %v1168 = vxor.u32 %v1028, 2147483648
    %v1169 = vxor.u32 %v1030, 2147483648
    %v1170 = vxor.u32 %v839, 2147483648
    %v1171 = vxor.u32 %v841, 2147483648
    %v1172 = vxor.u32 %v1032, 2147483648
    %v1173 = vxor.u32 %v1034, 2147483648
    %v1174 = vxor.u32 %v845, 2147483648
    %v1175 = vxor.u32 %v847, 2147483648
    %v1176 = vxor.u32 %v1038, 2147483648
    %v1177 = vxor.u32 %v1040, 2147483648
    %v1178 = vxor.u32 %v849, 2147483648
    %v1179 = vxor.u32 %v851, 2147483648
    %v1180 = vxor.u32 %v1042, 2147483648
    %v1181 = vxor.u32 %v1044, 2147483648
    %v1182 = vxor.u32 %v855, 2147483648
    %v1183 = vxor.u32 %v857, 2147483648
    %v1184 = vxor.u32 %v1048, 2147483648
    %v1185 = vxor.u32 %v1050, 2147483648
    %v1186 = vxor.u32 %v859, 2147483648
    %v1187 = vxor.u32 %v861, 2147483648
    %v1188 = vxor.u32 %v1052, 2147483648
    %v1189 = vxor.u32 %v1054, 2147483648
    %v1190 = vxor.u32 %v865, 2147483648
    %v1191 = vxor.u32 %v867, 2147483648
    %v1192 = vxor.u32 %v1058, 2147483648
    %v1193 = vxor.u32 %v1060, 2147483648
    %v1194 = vxor.u32 %v869, 2147483648
    %v1195 = vxor.u32 %v871, 2147483648
    %v1196 = vxor.u32 %v1062, 2147483648
    %v1197 = vxor.u32 %v1064, 2147483648
    %v1198 = vxor.u32 %v875, 2147483648
    %v1199 = vxor.u32 %v877, 2147483648
    %v1200 = vxor.u32 %v1068, 2147483648
    %v1201 = vxor.u32 %v1070, 2147483648
    %v1202 = vxor.u32 %v879, 2147483648
    %v1203 = vxor.u32 %v881, 2147483648
    %v1204 = vxor.u32 %v1072, 2147483648
    %v1205 = vxor.u32 %v1074, 2147483648
    %v1206 = vxor.u32 %v885, 2147483648
    %v1207 = vxor.u32 %v887, 2147483648
    %v1208 = vxor.u32 %v1078, 2147483648
    %v1209 = vxor.u32 %v1080, 2147483648
    %v1210 = vxor.u32 %v889, 2147483648
    %v1211 = vxor.u32 %v891, 2147483648
    %v1212 = vxor.u32 %v1082, 2147483648
    %v1213 = vxor.u32 %v1084, 2147483648
    %v1214 = vmul.f32 %v1086, 1.442695
    %v1215 = vpow.pop %v1214
    %v1216 = vmul.f32 %v1087, 1.442695
    %v1217 = vpow.pop %v1216
    %v1218 = vmul.f32 %v1088, 1.442695
    %v1219 = vpow.pop %v1218
    %v1220 = vmul.f32 %v1089, 1.442695
    %v1221 = vpow.pop %v1220
    %v1222 = vmul.f32 %v1090, 1.442695
    %v1223 = vpow.pop %v1222
    %v1224 = vmul.f32 %v1091, 1.442695
    %v1225 = vpow.pop %v1224
    %v1226 = vmul.f32 %v1092, 1.442695
    %v1227 = vpow.pop %v1226
    %v1228 = vmul.f32 %v1093, 1.442695
    %v1229 = vpow.pop %v1228
    %v1230 = vmul.f32 %v1094, 1.442695
    %v1231 = vpow.pop %v1230
    %v1232 = vmul.f32 %v1095, 1.442695
    %v1233 = vpow.pop %v1232
    %v1234 = vmul.f32 %v1096, 1.442695
    %v1235 = vpow.pop %v1234
    %v1236 = vmul.f32 %v1097, 1.442695
    %v1237 = vpow.pop %v1236
    %v1238 = vmul.f32 %v1098, 1.442695
    %v1239 = vpow.pop %v1238
    %v1240 = vmul.f32 %v1099, 1.442695
    %v1241 = vpow.pop %v1240
    %v1242 = vmul.f32 %v1100, 1.442695
    %v1243 = vpow.pop %v1242
    %v1244 = vmul.f32 %v1101, 1.442695
    %v1245 = vpow.pop %v1244
    %v1246 = vmul.f32 %v1102, 1.442695
    %v1247 = vpow.pop %v1246
    %v1248 = vmul.f32 %v1103, 1.442695
    %v1249 = vpow.pop %v1248
    %v1250 = vmul.f32 %v1104, 1.442695
    %v1251 = vpow.pop %v1250
    %v1252 = vmul.f32 %v1105, 1.442695
    %v1253 = vpow.pop %v1252
    %v1254 = vmul.f32 %v1106, 1.442695
    %v1255 = vpow.pop %v1254
    %v1256 = vmul.f32 %v1107, 1.442695
    %v1257 = vpow.pop %v1256
    %v1258 = vmul.f32 %v1108, 1.442695
    %v1259 = vpow.pop %v1258
    %v1260 = vmul.f32 %v1109, 1.442695
    %v1261 = vpow.pop %v1260
    %v1262 = vmul.f32 %v1110, 1.442695
    %v1263 = vpow.pop %v1262
    %v1264 = vmul.f32 %v1111, 1.442695
    %v1265 = vpow.pop %v1264
    %v1266 = vmul.f32 %v1112, 1.442695
    %v1267 = vpow.pop %v1266
    %v1268 = vmul.f32 %v1113, 1.442695
    %v1269 = vpow.pop %v1268
    %v1270 = vmul.f32 %v1114, 1.442695
    %v1271 = vpow.pop %v1270
    %v1272 = vmul.f32 %v1115, 1.442695
    %v1273 = vpow.pop %v1272
    %v1274 = vmul.f32 %v1116, 1.442695
    %v1275 = vpow.pop %v1274
    %v1276 = vmul.f32 %v1117, 1.442695
    %v1277 = vpow.pop %v1276
    %v1278 = vmul.f32 %v1118, 1.442695
    %v1279 = vpow.pop %v1278
    %v1280 = vmul.f32 %v1119, 1.442695
    %v1281 = vpow.pop %v1280
    %v1282 = vmul.f32 %v1120, 1.442695
    %v1283 = vpow.pop %v1282
    %v1284 = vmul.f32 %v1121, 1.442695
    %v1285 = vpow.pop %v1284
    %v1286 = vmul.f32 %v1122, 1.442695
    %v1287 = vpow.pop %v1286
    %v1288 = vmul.f32 %v1123, 1.442695
    %v1289 = vpow.pop %v1288
    %v1290 = vmul.f32 %v1124, 1.442695
    %v1291 = vpow.pop %v1290
    %v1292 = vmul.f32 %v1125, 1.442695
    %v1293 = vpow.pop %v1292
    %v1294 = vmul.f32 %v1126, 1.442695
    %v1295 = vpow.pop %v1294
    %v1296 = vmul.f32 %v1127, 1.442695
    %v1297 = vpow.pop %v1296
    %v1298 = vmul.f32 %v1128, 1.442695
    %v1299 = vpow.pop %v1298
    %v1300 = vmul.f32 %v1129, 1.442695
    %v1301 = vpow.pop %v1300
    %v1302 = vmul.f32 %v1130, 1.442695
    %v1303 = vpow.pop %v1302
    %v1304 = vmul.f32 %v1131, 1.442695
    %v1305 = vpow.pop %v1304
    %v1306 = vmul.f32 %v1132, 1.442695
    %v1307 = vpow.pop %v1306
    %v1308 = vmul.f32 %v1133, 1.442695
    %v1309 = vpow.pop %v1308
    %v1310 = vmul.f32 %v1134, 1.442695
    %v1311 = vpow.pop %v1310
    %v1312 = vmul.f32 %v1135, 1.442695
    %v1313 = vpow.pop %v1312
    %v1314 = vmul.f32 %v1136, 1.442695
    %v1315 = vpow.pop %v1314
    %v1316 = vmul.f32 %v1137, 1.442695
    %v1317 = vpow.pop %v1316
    %v1318 = vmul.f32 %v1138, 1.442695
    %v1319 = vpow.pop %v1318
    %v1320 = vmul.f32 %v1139, 1.442695
    %v1321 = vpow.pop %v1320
    %v1322 = vmul.f32 %v1140, 1.442695
    %v1323 = vpow.pop %v1322
    %v1324 = vmul.f32 %v1141, 1.442695
    %v1325 = vpow.pop %v1324
    %v1326 = vmul.f32 %v1142, 1.442695
    %v1327 = vpow.pop %v1326
    %v1328 = vmul.f32 %v1143, 1.442695
    %v1329 = vpow.pop %v1328
    %v1330 = vmul.f32 %v1144, 1.442695
    %v1331 = vpow.pop %v1330
    %v1332 = vmul.f32 %v1145, 1.442695
    %v1333 = vpow.pop %v1332
    %v1334 = vmul.f32 %v1146, 1.442695
    %v1335 = vpow.pop %v1334
    %v1336 = vmul.f32 %v1147, 1.442695
    %v1337 = vpow.pop %v1336
    %v1338 = vmul.f32 %v1148, 1.442695
    %v1339 = vpow.pop %v1338
    %v1340 = vmul.f32 %v1149, 1.442695
    %v1341 = vpow.pop %v1340
    %v1342 = vmul.f32 %v1150, 1.442695
    %v1343 = vpow.pop %v1342
    %v1344 = vmul.f32 %v1151, 1.442695
    %v1345 = vpow.pop %v1344
    %v1346 = vmul.f32 %v1152, 1.442695
    %v1347 = vpow.pop %v1346
    %v1348 = vmul.f32 %v1153, 1.442695
    %v1349 = vpow.pop %v1348
    %v1350 = vmul.f32 %v1154, 1.442695
    %v1351 = vpow.pop %v1350
    %v1352 = vmul.f32 %v1155, 1.442695
    %v1353 = vpow.pop %v1352
    %v1354 = vmul.f32 %v1156, 1.442695
    %v1355 = vpow.pop %v1354
    %v1356 = vmul.f32 %v1157, 1.442695
    %v1357 = vpow.pop %v1356
    %v1358 = vmul.f32 %v1158, 1.442695
    %v1359 = vpow.pop %v1358
    %v1360 = vmul.f32 %v1159, 1.442695
    %v1361 = vpow.pop %v1360
    %v1362 = vmul.f32 %v1160, 1.442695
    %v1363 = vpow.pop %v1362
    %v1364 = vmul.f32 %v1161, 1.442695
    %v1365 = vpow.pop %v1364
    %v1366 = vmul.f32 %v1162, 1.442695
    %v1367 = vpow.pop %v1366
    %v1368 = vmul.f32 %v1163, 1.442695
    %v1369 = vpow.pop %v1368
    %v1370 = vmul.f32 %v1164, 1.442695
    %v1371 = vpow.pop %v1370
    %v1372 = vmul.f32 %v1165, 1.442695
    %v1373 = vpow.pop %v1372
    %v1374 = vmul.f32 %v1166, 1.442695
    %v1375 = vpow.pop %v1374
    %v1376 = vmul.f32 %v1167, 1.442695
    %v1377 = vpow.pop %v1376
    %v1378 = vmul.f32 %v1168, 1.442695
    %v1379 = vpow.pop %v1378
    %v1380 = vmul.f32 %v1169, 1.442695
    %v1381 = vpow.pop %v1380
    %v1382 = vmul.f32 %v1170, 1.442695
    %v1383 = vpow.pop %v1382
    %v1384 = vmul.f32 %v1171, 1.442695
    %v1385 = vpow.pop %v1384
    %v1386 = vmul.f32 %v1172, 1.442695
    %v1387 = vpow.pop %v1386
    %v1388 = vmul.f32 %v1173, 1.442695
    %v1389 = vpow.pop %v1388
    %v1390 = vmul.f32 %v1174, 1.442695
    %v1391 = vpow.pop %v1390
    %v1392 = vmul.f32 %v1175, 1.442695
    %v1393 = vpow.pop %v1392
    %v1394 = vmul.f32 %v1176, 1.442695
    %v1395 = vpow.pop %v1394
    %v1396 = vmul.f32 %v1177, 1.442695
    %v1397 = vpow.pop %v1396
    %v1398 = vmul.f32 %v1178, 1.442695
    %v1399 = vpow.pop %v1398
    %v1400 = vmul.f32 %v1179, 1.442695
    %v1401 = vpow.pop %v1400
    %v1402 = vmul.f32 %v1180, 1.442695
    %v1403 = vpow.pop %v1402
    %v1404 = vmul.f32 %v1181, 1.442695
    %v1405 = vpow.pop %v1404
    %v1406 = vmul.f32 %v1182, 1.442695
    %v1407 = vpow.pop %v1406
    %v1408 = vmul.f32 %v1183, 1.442695
    %v1409 = vpow.pop %v1408
    %v1410 = vmul.f32 %v1184, 1.442695
    %v1411 = vpow.pop %v1410
    %v1412 = vmul.f32 %v1185, 1.442695
    %v1413 = vpow.pop %v1412
    %v1414 = vmul.f32 %v1186, 1.442695
    %v1415 = vpow.pop %v1414
    %v1416 = vmul.f32 %v1187, 1.442695
    %v1417 = vpow.pop %v1416
    %v1418 = vmul.f32 %v1188, 1.442695
    %v1419 = vpow.pop %v1418
    %v1420 = vmul.f32 %v1189, 1.442695
    %v1421 = vpow.pop %v1420
    %v1422 = vmul.f32 %v1190, 1.442695
    %v1423 = vpow.pop %v1422
    %v1424 = vmul.f32 %v1191, 1.442695
    %v1425 = vpow.pop %v1424
    %v1426 = vmul.f32 %v1192, 1.442695
    %v1427 = vpow.pop %v1426
    %v1428 = vmul.f32 %v1193, 1.442695
    %v1429 = vpow.pop %v1428
    %v1430 = vmul.f32 %v1194, 1.442695
    %v1431 = vpow.pop %v1430
    %v1432 = vmul.f32 %v1195, 1.442695
    %v1433 = vpow.pop %v1432
    %v1434 = vmul.f32 %v1196, 1.442695
    %v1435 = vpow.pop %v1434
    %v1436 = vmul.f32 %v1197, 1.442695
    %v1437 = vpow.pop %v1436
    %v1438 = vmul.f32 %v1198, 1.442695
    %v1439 = vpow.pop %v1438
    %v1440 = vmul.f32 %v1199, 1.442695
    %v1441 = vpow.pop %v1440
    %v1442 = vmul.f32 %v1200, 1.442695
    %v1443 = vpow.pop %v1442
    %v1444 = vmul.f32 %v1201, 1.442695
    %v1445 = vpow.pop %v1444
    %v1446 = vmul.f32 %v1202, 1.442695
    %v1447 = vpow.pop %v1446
    %v1448 = vmul.f32 %v1203, 1.442695
    %v1449 = vpow.pop %v1448
    %v1450 = vmul.f32 %v1204, 1.442695
    %v1451 = vpow.pop %v1450
    %v1452 = vmul.f32 %v1205, 1.442695
    %v1453 = vpow.pop %v1452
    %v1454 = vmul.f32 %v1206, 1.442695
    %v1455 = vpow.pop %v1454
    %v1456 = vmul.f32 %v1207, 1.442695
    %v1457 = vpow.pop %v1456
    %v1458 = vmul.f32 %v1208, 1.442695
    %v1459 = vpow.pop %v1458
    %v1460 = vmul.f32 %v1209, 1.442695
    %v1461 = vpow.pop %v1460
    %v1462 = vmul.f32 %v1210, 1.442695
    %v1463 = vpow.pop %v1462
    %v1464 = vmul.f32 %v1211, 1.442695
    %v1465 = vpow.pop %v1464
    %v1466 = vmul.f32 %v1212, 1.442695
    %v1467 = vpow.pop %v1466
    %v1468 = vmul.f32 %v1213, 1.442695
    %v1469 = vpow.pop %v1468
    %v1470 = vadd.f32 %v1215, 1.0
    %v1471 = vadd.f32 %v1217, 1.0
    %v1472 = vadd.f32 %v1219, 1.0
    %v1473 = vadd.f32 %v1221, 1.0
    %v1474 = vadd.f32 %v1223, 1.0
    %v1475 = vadd.f32 %v1225, 1.0
    %v1476 = vadd.f32 %v1227, 1.0
    %v1477 = vadd.f32 %v1229, 1.0
    %v1478 = vadd.f32 %v1231, 1.0
    %v1479 = vadd.f32 %v1233, 1.0
    %v1480 = vadd.f32 %v1235, 1.0
    %v1481 = vadd.f32 %v1237, 1.0
    %v1482 = vadd.f32 %v1239, 1.0
    %v1483 = vadd.f32 %v1241, 1.0
    %v1484 = vadd.f32 %v1243, 1.0
    %v1485 = vadd.f32 %v1245, 1.0
    %v1486 = vadd.f32 %v1247, 1.0
    %v1487 = vadd.f32 %v1249, 1.0
    %v1488 = vadd.f32 %v1251, 1.0
    %v1489 = vadd.f32 %v1253, 1.0
    %v1490 = vadd.f32 %v1255, 1.0
    %v1491 = vadd.f32 %v1257, 1.0
    %v1492 = vadd.f32 %v1259, 1.0
    %v1493 = vadd.f32 %v1261, 1.0
    %v1494 = vadd.f32 %v1263, 1.0
    %v1495 = vadd.f32 %v1265, 1.0
    %v1496 = vadd.f32 %v1267, 1.0
    %v1497 = vadd.f32 %v1269, 1.0
    %v1498 = vadd.f32 %v1271, 1.0
    %v1499 = vadd.f32 %v1273, 1.0
    %v1500 = vadd.f32 %v1275, 1.0
    %v1501 = vadd.f32 %v1277, 1.0
    %v1502 = vadd.f32 %v1279, 1.0
    %v1503 = vadd.f32 %v1281, 1.0
    %v1504 = vadd.f32 %v1283, 1.0
    %v1505 = vadd.f32 %v1285, 1.0
    %v1506 = vadd.f32 %v1287, 1.0
    %v1507 = vadd.f32 %v1289, 1.0
    %v1508 = vadd.f32 %v1291, 1.0
    %v1509 = vadd.f32 %v1293, 1.0
    %v1510 = vadd.f32 %v1295, 1.0
    %v1511 = vadd.f32 %v1297, 1.0
    %v1512 = vadd.f32 %v1299, 1.0
    %v1513 = vadd.f32 %v1301, 1.0
    %v1514 = vadd.f32 %v1303, 1.0
    %v1515 = vadd.f32 %v1305, 1.0
    %v1516 = vadd.f32 %v1307, 1.0
    %v1517 = vadd.f32 %v1309, 1.0
    %v1518 = vadd.f32 %v1311, 1.0
    %v1519 = vadd.f32 %v1313, 1.0
    %v1520 = vadd.f32 %v1315, 1.0
    %v1521 = vadd.f32 %v1317, 1.0
    %v1522 = vadd.f32 %v1319, 1.0
    %v1523 = vadd.f32 %v1321, 1.0
    %v1524 = vadd.f32 %v1323, 1.0
    %v1525 = vadd.f32 %v1325, 1.0
    %v1526 = vadd.f32 %v1327, 1.0
    %v1527 = vadd.f32 %v1329, 1.0
    %v1528 = vadd.f32 %v1331, 1.0
    %v1529 = vadd.f32 %v1333, 1.0
    %v1530 = vadd.f32 %v1335, 1.0
    %v1531 = vadd.f32 %v1337, 1.0
    %v1532 = vadd.f32 %v1339, 1.0
    %v1533 = vadd.f32 %v1341, 1.0
    %v1534 = vadd.f32 %v1343, 1.0
    %v1535 = vadd.f32 %v1345, 1.0
    %v1536 = vadd.f32 %v1347, 1.0
    %v1537 = vadd.f32 %v1349, 1.0
    %v1538 = vadd.f32 %v1351, 1.0
    %v1539 = vadd.f32 %v1353, 1.0
    %v1540 = vadd.f32 %v1355, 1.0
    %v1541 = vadd.f32 %v1357, 1.0
    %v1542 = vadd.f32 %v1359, 1.0
    %v1543 = vadd.f32 %v1361, 1.0
    %v1544 = vadd.f32 %v1363, 1.0
    %v1545 = vadd.f32 %v1365, 1.0
    %v1546 = vadd.f32 %v1367, 1.0
    %v1547 = vadd.f32 %v1369, 1.0
    %v1548 = vadd.f32 %v1371, 1.0
    %v1549 = vadd.f32 %v1373, 1.0
    %v1550 = vadd.f32 %v1375, 1.0
    %v1551 = vadd.f32 %v1377, 1.0
    %v1552 = vadd.f32 %v1379, 1.0
    %v1553 = vadd.f32 %v1381, 1.0
    %v1554 = vadd.f32 %v1383, 1.0
    %v1555 = vadd.f32 %v1385, 1.0
    %v1556 = vadd.f32 %v1387, 1.0
    %v1557 = vadd.f32 %v1389, 1.0
    %v1558 = vadd.f32 %v1391, 1.0
    %v1559 = vadd.f32 %v1393, 1.0
    %v1560 = vadd.f32 %v1395, 1.0
    %v1561 = vadd.f32 %v1397, 1.0
    %v1562 = vadd.f32 %v1399, 1.0
    %v1563 = vadd.f32 %v1401, 1.0
    %v1564 = vadd.f32 %v1403, 1.0
    %v1565 = vadd.f32 %v1405, 1.0
    %v1566 = vadd.f32 %v1407, 1.0
    %v1567 = vadd.f32 %v1409, 1.0
    %v1568 = vadd.f32 %v1411, 1.0
    %v1569 = vadd.f32 %v1413, 1.0
    %v1570 = vadd.f32 %v1415, 1.0
    %v1571 = vadd.f32 %v1417, 1.0
    %v1572 = vadd.f32 %v1419, 1.0
    %v1573 = vadd.f32 %v1421, 1.0
    %v1574 = vadd.f32 %v1423, 1.0
    %v1575 = vadd.f32 %v1425, 1.0
    %v1576 = vadd.f32 %v1427, 1.0
    %v1577 = vadd.f32 %v1429, 1.0
    %v1578 = vadd.f32 %v1431, 1.0
    %v1579 = vadd.f32 %v1433, 1.0
    %v1580 = vadd.f32 %v1435, 1.0
    %v1581 = vadd.f32 %v1437, 1.0
    %v1582 = vadd.f32 %v1439, 1.0
    %v1583 = vadd.f32 %v1441, 1.0
    %v1584 = vadd.f32 %v1443, 1.0
    %v1585 = vadd.f32 %v1445, 1.0
    %v1586 = vadd.f32 %v1447, 1.0
    %v1587 = vadd.f32 %v1449, 1.0
    %v1588 = vadd.f32 %v1451, 1.0
    %v1589 = vadd.f32 %v1453, 1.0
    %v1590 = vadd.f32 %v1455, 1.0
    %v1591 = vadd.f32 %v1457, 1.0
    %v1592 = vadd.f32 %v1459, 1.0
    %v1593 = vadd.f32 %v1461, 1.0
    %v1594 = vadd.f32 %v1463, 1.0
    %v1595 = vadd.f32 %v1465, 1.0
    %v1596 = vadd.f32 %v1467, 1.0
    %v1597 = vadd.f32 %v1469, 1.0
    %v1598 = vrcp.pop %v1470
    %v1599 = vmul.f32 1.0, %v1598
    %v1600 = vrcp.pop %v1471
    %v1601 = vmul.f32 1.0, %v1600
    %v1602 = vrcp.pop %v1472
    %v1603 = vmul.f32 1.0, %v1602
    %v1604 = vrcp.pop %v1473
    %v1605 = vmul.f32 1.0, %v1604
    %v1606 = vrcp.pop %v1474
    %v1607 = vmul.f32 1.0, %v1606
    %v1608 = vrcp.pop %v1475
    %v1609 = vmul.f32 1.0, %v1608
    %v1610 = vrcp.pop %v1476
    %v1611 = vmul.f32 1.0, %v1610
    %v1612 = vrcp.pop %v1477
    %v1613 = vmul.f32 1.0, %v1612
    %v1614 = vrcp.pop %v1478
    %v1615 = vmul.f32 1.0, %v1614
    %v1616 = vrcp.pop %v1479
    %v1617 = vmul.f32 1.0, %v1616
    %v1618 = vrcp.pop %v1480
    %v1619 = vmul.f32 1.0, %v1618
    %v1620 = vrcp.pop %v1481
    %v1621 = vmul.f32 1.0, %v1620
    %v1622 = vrcp.pop %v1482
    %v1623 = vmul.f32 1.0, %v1622
    %v1624 = vrcp.pop %v1483
    %v1625 = vmul.f32 1.0, %v1624
    %v1626 = vrcp.pop %v1484
    %v1627 = vmul.f32 1.0, %v1626
    %v1628 = vrcp.pop %v1485
    %v1629 = vmul.f32 1.0, %v1628
    %v1630 = vrcp.pop %v1486
    %v1631 = vmul.f32 1.0, %v1630
    %v1632 = vrcp.pop %v1487
    %v1633 = vmul.f32 1.0, %v1632
    %v1634 = vrcp.pop %v1488
    %v1635 = vmul.f32 1.0, %v1634
    %v1636 = vrcp.pop %v1489
    %v1637 = vmul.f32 1.0, %v1636
    %v1638 = vrcp.pop %v1490
    %v1639 = vmul.f32 1.0, %v1638
    %v1640 = vrcp.pop %v1491
    %v1641 = vmul.f32 1.0, %v1640
    %v1642 = vrcp.pop %v1492
    %v1643 = vmul.f32 1.0, %v1642
    %v1644 = vrcp.pop %v1493
    %v1645 = vmul.f32 1.0, %v1644
    %v1646 = vrcp.pop %v1494
    %v1647 = vmul.f32 1.0, %v1646
    %v1648 = vrcp.pop %v1495
    %v1649 = vmul.f32 1.0, %v1648
    %v1650 = vrcp.pop %v1496
    %v1651 = vmul.f32 1.0, %v1650
    %v1652 = vrcp.pop %v1497
    %v1653 = vmul.f32 1.0, %v1652
    %v1654 = vrcp.pop %v1498
    %v1655 = vmul.f32 1.0, %v1654
    %v1656 = vrcp.pop %v1499
    %v1657 = vmul.f32 1.0, %v1656
    %v1658 = vrcp.pop %v1500
    %v1659 = vmul.f32 1.0, %v1658
    %v1660 = vrcp.pop %v1501
    %v1661 = vmul.f32 1.0, %v1660
    %v1662 = vrcp.pop %v1502
    %v1663 = vmul.f32 1.0, %v1662
    %v1664 = vrcp.pop %v1503
    %v1665 = vmul.f32 1.0, %v1664
    %v1666 = vrcp.pop %v1504
    %v1667 = vmul.f32 1.0, %v1666
    %v1668 = vrcp.pop %v1505
    %v1669 = vmul.f32 1.0, %v1668
    %v1670 = vrcp.pop %v1506
    %v1671 = vmul.f32 1.0, %v1670
    %v1672 = vrcp.pop %v1507
    %v1673 = vmul.f32 1.0, %v1672
    %v1674 = vrcp.pop %v1508
    %v1675 = vmul.f32 1.0, %v1674
    %v1676 = vrcp.pop %v1509
    %v1677 = vmul.f32 1.0, %v1676
    %v1678 = vrcp.pop %v1510
    %v1679 = vmul.f32 1.0, %v1678
    %v1680 = vrcp.pop %v1511
    %v1681 = vmul.f32 1.0, %v1680
    %v1682 = vrcp.pop %v1512
    %v1683 = vmul.f32 1.0, %v1682
    %v1684 = vrcp.pop %v1513
    %v1685 = vmul.f32 1.0, %v1684
    %v1686 = vrcp.pop %v1514
    %v1687 = vmul.f32 1.0, %v1686
    %v1688 = vrcp.pop %v1515
    %v1689 = vmul.f32 1.0, %v1688
    %v1690 = vrcp.pop %v1516
    %v1691 = vmul.f32 1.0, %v1690
    %v1692 = vrcp.pop %v1517
    %v1693 = vmul.f32 1.0, %v1692
    %v1694 = vrcp.pop %v1518
    %v1695 = vmul.f32 1.0, %v1694
    %v1696 = vrcp.pop %v1519
    %v1697 = vmul.f32 1.0, %v1696
    %v1698 = vrcp.pop %v1520
    %v1699 = vmul.f32 1.0, %v1698
    %v1700 = vrcp.pop %v1521
    %v1701 = vmul.f32 1.0, %v1700
    %v1702 = vrcp.pop %v1522
    %v1703 = vmul.f32 1.0, %v1702
    %v1704 = vrcp.pop %v1523
    %v1705 = vmul.f32 1.0, %v1704
    %v1706 = vrcp.pop %v1524
    %v1707 = vmul.f32 1.0, %v1706
    %v1708 = vrcp.pop %v1525
    %v1709 = vmul.f32 1.0, %v1708
    %v1710 = vrcp.pop %v1526
    %v1711 = vmul.f32 1.0, %v1710
    %v1712 = vrcp.pop %v1527
    %v1713 = vmul.f32 1.0, %v1712
    %v1714 = vrcp.pop %v1528
    %v1715 = vmul.f32 1.0, %v1714
    %v1716 = vrcp.pop %v1529
    %v1717 = vmul.f32 1.0, %v1716
    %v1718 = vrcp.pop %v1530
    %v1719 = vmul.f32 1.0, %v1718
    %v1720 = vrcp.pop %v1531
    %v1721 = vmul.f32 1.0, %v1720
    %v1722 = vrcp.pop %v1532
    %v1723 = vmul.f32 1.0, %v1722
    %v1724 = vrcp.pop %v1533
    %v1725 = vmul.f32 1.0, %v1724
    %v1726 = vrcp.pop %v1534
    %v1727 = vmul.f32 1.0, %v1726
    %v1728 = vrcp.pop %v1535
    %v1729 = vmul.f32 1.0, %v1728
    %v1730 = vrcp.pop %v1536
    %v1731 = vmul.f32 1.0, %v1730
    %v1732 = vrcp.pop %v1537
    %v1733 = vmul.f32 1.0, %v1732
    %v1734 = vrcp.pop %v1538
    %v1735 = vmul.f32 1.0, %v1734
    %v1736 = vrcp.pop %v1539
    %v1737 = vmul.f32 1.0, %v1736
    %v1738 = vrcp.pop %v1540
    %v1739 = vmul.f32 1.0, %v1738
    %v1740 = vrcp.pop %v1541
    %v1741 = vmul.f32 1.0, %v1740
    %v1742 = vrcp.pop %v1542
    %v1743 = vmul.f32 1.0, %v1742
    %v1744 = vrcp.pop %v1543
    %v1745 = vmul.f32 1.0, %v1744
    %v1746 = vrcp.pop %v1544
    %v1747 = vmul.f32 1.0, %v1746
    %v1748 = vrcp.pop %v1545
    %v1749 = vmul.f32 1.0, %v1748
    %v1750 = vrcp.pop %v1546
    %v1751 = vmul.f32 1.0, %v1750
    %v1752 = vrcp.pop %v1547
    %v1753 = vmul.f32 1.0, %v1752
    %v1754 = vrcp.pop %v1548
    %v1755 = vmul.f32 1.0, %v1754
    %v1756 = vrcp.pop %v1549
    %v1757 = vmul.f32 1.0, %v1756
    %v1758 = vrcp.pop %v1550
    %v1759 = vmul.f32 1.0, %v1758
    %v1760 = vrcp.pop %v1551
    %v1761 = vmul.f32 1.0, %v1760
    %v1762 = vrcp.pop %v1552
    %v1763 = vmul.f32 1.0, %v1762
    %v1764 = vrcp.pop %v1553
    %v1765 = vmul.f32 1.0, %v1764
    %v1766 = vrcp.pop %v1554
    %v1767 = vmul.f32 1.0, %v1766
    %v1768 = vrcp.pop %v1555
    %v1769 = vmul.f32 1.0, %v1768
    %v1770 = vrcp.pop %v1556
    %v1771 = vmul.f32 1.0, %v1770
    %v1772 = vrcp.pop %v1557
    %v1773 = vmul.f32 1.0, %v1772
    %v1774 = vrcp.pop %v1558
    %v1775 = vmul.f32 1.0, %v1774
    %v1776 = vrcp.pop %v1559
    %v1777 = vmul.f32 1.0, %v1776
    %v1778 = vrcp.pop %v1560
    %v1779 = vmul.f32 1.0, %v1778
    %v1780 = vrcp.pop %v1561
    %v1781 = vmul.f32 1.0, %v1780
    %v1782 = vrcp.pop %v1562
    %v1783 = vmul.f32 1.0, %v1782
    %v1784 = vrcp.pop %v1563
    %v1785 = vmul.f32 1.0, %v1784
    %v1786 = vrcp.pop %v1564
    %v1787 = vmul.f32 1.0, %v1786
    %v1788 = vrcp.pop %v1565
    %v1789 = vmul.f32 1.0, %v1788
    %v1790 = vrcp.pop %v1566
    %v1791 = vmul.f32 1.0, %v1790
    %v1792 = vrcp.pop %v1567
    %v1793 = vmul.f32 1.0, %v1792
    %v1794 = vrcp.pop %v1568
    %v1795 = vmul.f32 1.0, %v1794
    %v1796 = vrcp.pop %v1569
    %v1797 = vmul.f32 1.0, %v1796
    %v1798 = vrcp.pop %v1570
    %v1799 = vmul.f32 1.0, %v1798
    %v1800 = vrcp.pop %v1571
    %v1801 = vmul.f32 1.0, %v1800
    %v1802 = vrcp.pop %v1572
    %v1803 = vmul.f32 1.0, %v1802
    %v1804 = vrcp.pop %v1573
    %v1805 = vmul.f32 1.0, %v1804
    %v1806 = vrcp.pop %v1574
    %v1807 = vmul.f32 1.0, %v1806
    %v1808 = vrcp.pop %v1575
    %v1809 = vmul.f32 1.0, %v1808
    %v1810 = vrcp.pop %v1576
    %v1811 = vmul.f32 1.0, %v1810
    %v1812 = vrcp.pop %v1577
    %v1813 = vmul.f32 1.0, %v1812
    %v1814 = vrcp.pop %v1578
    %v1815 = vmul.f32 1.0, %v1814
    %v1816 = vrcp.pop %v1579
    %v1817 = vmul.f32 1.0, %v1816
    %v1818 = vrcp.pop %v1580
    %v1819 = vmul.f32 1.0, %v1818
    %v1820 = vrcp.pop %v1581
    %v1821 = vmul.f32 1.0, %v1820
    %v1822 = vrcp.pop %v1582
    %v1823 = vmul.f32 1.0, %v1822
    %v1824 = vrcp.pop %v1583
    %v1825 = vmul.f32 1.0, %v1824
    %v1826 = vrcp.pop %v1584
    %v1827 = vmul.f32 1.0, %v1826
    %v1828 = vrcp.pop %v1585
    %v1829 = vmul.f32 1.0, %v1828
    %v1830 = vrcp.pop %v1586
    %v1831 = vmul.f32 1.0, %v1830
    %v1832 = vrcp.pop %v1587
    %v1833 = vmul.f32 1.0, %v1832
    %v1834 = vrcp.pop %v1588
    %v1835 = vmul.f32 1.0, %v1834
    %v1836 = vrcp.pop %v1589
    %v1837 = vmul.f32 1.0, %v1836
    %v1838 = vrcp.pop %v1590
    %v1839 = vmul.f32 1.0, %v1838
    %v1840 = vrcp.pop %v1591
    %v1841 = vmul.f32 1.0, %v1840
    %v1842 = vrcp.pop %v1592
    %v1843 = vmul.f32 1.0, %v1842
    %v1844 = vrcp.pop %v1593
    %v1845 = vmul.f32 1.0, %v1844
    %v1846 = vrcp.pop %v1594
    %v1847 = vmul.f32 1.0, %v1846
    %v1848 = vrcp.pop %v1595
    %v1849 = vmul.f32 1.0, %v1848
    %v1850 = vrcp.pop %v1596
    %v1851 = vmul.f32 1.0, %v1850
    %v1852 = vrcp.pop %v1597
    %v1853 = vmul.f32 1.0, %v1852
    %v1854 = vmul.f32 %v735, %v1599
    %v1855 = vmul.f32 %v737, %v1601
    %v1856 = vmul.f32 %v928, %v1603
    %v1857 = vmul.f32 %v930, %v1605
    %v1858 = vmul.f32 %v739, %v1607
    %v1859 = vmul.f32 %v741, %v1609
    %v1860 = vmul.f32 %v932, %v1611
    %v1861 = vmul.f32 %v934, %v1613
    %v1862 = vmul.f32 %v745, %v1615
    %v1863 = vmul.f32 %v747, %v1617
    %v1864 = vmul.f32 %v938, %v1619
    %v1865 = vmul.f32 %v940, %v1621
    %v1866 = vmul.f32 %v749, %v1623
    %v1867 = vmul.f32 %v751, %v1625
    %v1868 = vmul.f32 %v942, %v1627
    %v1869 = vmul.f32 %v944, %v1629
    %v1870 = vmul.f32 %v755, %v1631
    %v1871 = vmul.f32 %v757, %v1633
    %v1872 = vmul.f32 %v948, %v1635
    %v1873 = vmul.f32 %v950, %v1637
    %v1874 = vmul.f32 %v759, %v1639
    %v1875 = vmul.f32 %v761, %v1641
    %v1876 = vmul.f32 %v952, %v1643
    %v1877 = vmul.f32 %v954, %v1645
    %v1878 = vmul.f32 %v765, %v1647
    %v1879 = vmul.f32 %v767, %v1649
    %v1880 = vmul.f32 %v958, %v1651
    %v1881 = vmul.f32 %v960, %v1653
    %v1882 = vmul.f32 %v769, %v1655
    %v1883 = vmul.f32 %v771, %v1657
    %v1884 = vmul.f32 %v962, %v1659
    %v1885 = vmul.f32 %v964, %v1661
    %v1886 = vmul.f32 %v775, %v1663
    %v1887 = vmul.f32 %v777, %v1665
    %v1888 = vmul.f32 %v968, %v1667
    %v1889 = vmul.f32 %v970, %v1669
    %v1890 = vmul.f32 %v779, %v1671
    %v1891 = vmul.f32 %v781, %v1673
    %v1892 = vmul.f32 %v972, %v1675
    %v1893 = vmul.f32 %v974, %v1677
    %v1894 = vmul.f32 %v785, %v1679
    %v1895 = vmul.f32 %v787, %v1681
    %v1896 = vmul.f32 %v978, %v1683
    %v1897 = vmul.f32 %v980, %v1685
    %v1898 = vmul.f32 %v789, %v1687
    %v1899 = vmul.f32 %v791, %v1689
    %v1900 = vmul.f32 %v982, %v1691
    %v1901 = vmul.f32 %v984, %v1693
    %v1902 = vmul.f32 %v795, %v1695
    %v1903 = vmul.f32 %v797, %v1697
    %v1904 = vmul.f32 %v988, %v1699
    %v1905 = vmul.f32 %v990, %v1701
    %v1906 = vmul.f32 %v799, %v1703
    %v1907 = vmul.f32 %v801, %v1705
    %v1908 = vmul.f32 %v992, %v1707
    %v1909 = vmul.f32 %v994, %v1709
    %v1910 = vmul.f32 %v805, %v1711
    %v1911 = vmul.f32 %v807, %v1713
    %v1912 = vmul.f32 %v998, %v1715
    %v1913 = vmul.f32 %v1000, %v1717
    %v1914 = vmul.f32 %v809, %v1719
    %v1915 = vmul.f32 %v811, %v1721
    %v1916 = vmul.f32 %v1002, %v1723
    %v1917 = vmul.f32 %v1004, %v1725
    %v1918 = vmul.f32 %v815, %v1727
    %v1919 = vmul.f32 %v817, %v1729
    %v1920 = vmul.f32 %v1008, %v1731
    %v1921 = vmul.f32 %v1010, %v1733
    %v1922 = vmul.f32 %v819, %v1735
    %v1923 = vmul.f32 %v821, %v1737
    %v1924 = vmul.f32 %v1012, %v1739
    %v1925 = vmul.f32 %v1014, %v1741
    %v1926 = vmul.f32 %v825, %v1743
    %v1927 = vmul.f32 %v827, %v1745
    %v1928 = vmul.f32 %v1018, %v1747
    %v1929 = vmul.f32 %v1020, %v1749
    %v1930 = vmul.f32 %v829, %v1751
    %v1931 = vmul.f32 %v831, %v1753
    %v1932 = vmul.f32 %v1022, %v1755
    %v1933 = vmul.f32 %v1024, %v1757
    %v1934 = vmul.f32 %v835, %v1759
    %v1935 = vmul.f32 %v837, %v1761
    %v1936 = vmul.f32 %v1028, %v1763
    %v1937 = vmul.f32 %v1030, %v1765
    %v1938 = vmul.f32 %v839, %v1767
    %v1939 = vmul.f32 %v841, %v1769
    %v1940 = vmul.f32 %v1032, %v1771
    %v1941 = vmul.f32 %v1034, %v1773
    %v1942 = vmul.f32 %v845, %v1775
    %v1943 = vmul.f32 %v847, %v1777
    %v1944 = vmul.f32 %v1038, %v1779
    %v1945 = vmul.f32 %v1040, %v1781
    %v1946 = vmul.f32 %v849, %v1783
    %v1947 = vmul.f32 %v851, %v1785
    %v1948 = vmul.f32 %v1042, %v1787
    %v1949 = vmul.f32 %v1044, %v1789
    %v1950 = vmul.f32 %v855, %v1791
    %v1951 = vmul.f32 %v857, %v1793
    %v1952 = vmul.f32 %v1048, %v1795
    %v1953 = vmul.f32 %v1050, %v1797
    %v1954 = vmul.f32 %v859, %v1799
    %v1955 = vmul.f32 %v861, %v1801
    %v1956 = vmul.f32 %v1052, %v1803
    %v1957 = vmul.f32 %v1054, %v1805
    %v1958 = vmul.f32 %v865, %v1807
    %v1959 = vmul.f32 %v867, %v1809
    %v1960 = vmul.f32 %v1058, %v1811
    %v1961 = vmul.f32 %v1060, %v1813
    %v1962 = vmul.f32 %v869, %v1815
    %v1963 = vmul.f32 %v871, %v1817
    %v1964 = vmul.f32 %v1062, %v1819
    %v1965 = vmul.f32 %v1064, %v1821
    %v1966 = vmul.f32 %v875, %v1823
    %v1967 = vmul.f32 %v877, %v1825
    %v1968 = vmul.f32 %v1068, %v1827
    %v1969 = vmul.f32 %v1070, %v1829
    %v1970 = vmul.f32 %v879, %v1831
    %v1971 = vmul.f32 %v881, %v1833
    %v1972 = vmul.f32 %v1072, %v1835
    %v1973 = vmul.f32 %v1074, %v1837
    %v1974 = vmul.f32 %v885, %v1839
    %v1975 = vmul.f32 %v887, %v1841
    %v1976 = vmul.f32 %v1078, %v1843
    %v1977 = vmul.f32 %v1080, %v1845
    %v1978 = vmul.f32 %v889, %v1847
    %v1979 = vmul.f32 %v891, %v1849
    %v1980 = vmul.f32 %v1082, %v1851
    %v1981 = vmul.f32 %v1084, %v1853
    %v1982 = vpack.c.bf16 %v1858, %v1854
    %v1983 = vpack.c.bf16 %v1859, %v1855
    %v1984 = vpack.c.bf16 %v1860, %v1856
    %v1985 = vpack.c.bf16 %v1861, %v1857
    %v1986 = vpack.c.bf16 %v1866, %v1862
    %v1987 = vpack.c.bf16 %v1867, %v1863
    %v1988 = vpack.c.bf16 %v1868, %v1864
    %v1989 = vpack.c.bf16 %v1869, %v1865
    %v1990 = vpack.c.bf16 %v1874, %v1870
    %v1991 = vpack.c.bf16 %v1875, %v1871
    %v1992 = vpack.c.bf16 %v1876, %v1872
    %v1993 = vpack.c.bf16 %v1877, %v1873
    %v1994 = vpack.c.bf16 %v1882, %v1878
    %v1995 = vpack.c.bf16 %v1883, %v1879
    %v1996 = vpack.c.bf16 %v1884, %v1880
    %v1997 = vpack.c.bf16 %v1885, %v1881
    %v1998 = vpack.c.bf16 %v1890, %v1886
    %v1999 = vpack.c.bf16 %v1891, %v1887
    %v2000 = vpack.c.bf16 %v1892, %v1888
    %v2001 = vpack.c.bf16 %v1893, %v1889
    %v2002 = vpack.c.bf16 %v1898, %v1894
    %v2003 = vpack.c.bf16 %v1899, %v1895
    %v2004 = vpack.c.bf16 %v1900, %v1896
    %v2005 = vpack.c.bf16 %v1901, %v1897
    %v2006 = vpack.c.bf16 %v1906, %v1902
    %v2007 = vpack.c.bf16 %v1907, %v1903
    %v2008 = vpack.c.bf16 %v1908, %v1904
    %v2009 = vpack.c.bf16 %v1909, %v1905
    %v2010 = vpack.c.bf16 %v1914, %v1910
    %v2011 = vpack.c.bf16 %v1915, %v1911
    %v2012 = vpack.c.bf16 %v1916, %v1912
    %v2013 = vpack.c.bf16 %v1917, %v1913
    %v2014 = vpack.c.bf16 %v1922, %v1918
    %v2015 = vpack.c.bf16 %v1923, %v1919
    %v2016 = vpack.c.bf16 %v1924, %v1920
    %v2017 = vpack.c.bf16 %v1925, %v1921
    %v2018 = vpack.c.bf16 %v1930, %v1926
    %v2019 = vpack.c.bf16 %v1931, %v1927
    %v2020 = vpack.c.bf16 %v1932, %v1928
    %v2021 = vpack.c.bf16 %v1933, %v1929
    %v2022 = vpack.c.bf16 %v1938, %v1934
    %v2023 = vpack.c.bf16 %v1939, %v1935
    %v2024 = vpack.c.bf16 %v1940, %v1936
    %v2025 = vpack.c.bf16 %v1941, %v1937
    %v2026 = vpack.c.bf16 %v1946, %v1942
    %v2027 = vpack.c.bf16 %v1947, %v1943
    %v2028 = vpack.c.bf16 %v1948, %v1944
    %v2029 = vpack.c.bf16 %v1949, %v1945
    %v2030 = vpack.c.bf16 %v1954, %v1950
    %v2031 = vpack.c.bf16 %v1955, %v1951
    %v2032 = vpack.c.bf16 %v1956, %v1952
    %v2033 = vpack.c.bf16 %v1957, %v1953
    %v2034 = vpack.c.bf16 %v1962, %v1958
    %v2035 = vpack.c.bf16 %v1963, %v1959
    %v2036 = vpack.c.bf16 %v1964, %v1960
    %v2037 = vpack.c.bf16 %v1965, %v1961
    %v2038 = vpack.c.bf16 %v1970, %v1966
    %v2039 = vpack.c.bf16 %v1971, %v1967
    %v2040 = vpack.c.bf16 %v1972, %v1968
    %v2041 = vpack.c.bf16 %v1973, %v1969
    %v2042 = vpack.c.bf16 %v1978, %v1974
    %v2043 = vpack.c.bf16 %v1979, %v1975
    %v2044 = vpack.c.bf16 %v1980, %v1976
    %v2045 = vpack.c.bf16 %v1981, %v1977
    %v2046 = vld [vmem:[#allocation7] sm:$0xff]
    %v2047 = vld [vmem:[#allocation7 + $0x8] sm:$0xff]
    %v2048 = vld [vmem:[#allocation7 + $0x10] sm:$0xff]
    %v2049 = vld [vmem:[#allocation7 + $0x18] sm:$0xff]
    %v2050 = vld [vmem:[#allocation7 + $0x20] sm:$0xff]
    %v2051 = vld [vmem:[#allocation7 + $0x28] sm:$0xff]
    %v2052 = vld [vmem:[#allocation7 + $0x30] sm:$0xff]
    %v2053 = vld [vmem:[#allocation7 + $0x38] sm:$0xff]
    %v2054 = vld [vmem:[#allocation7 + $0x40] sm:$0xff]
    %v2055 = vld [vmem:[#allocation7 + $0x48] sm:$0xff]
    %v2056 = vld [vmem:[#allocation7 + $0x50] sm:$0xff]
    %v2057 = vld [vmem:[#allocation7 + $0x58] sm:$0xff]
    %v2058 = vld [vmem:[#allocation7 + $0x60] sm:$0xff]
    %v2059 = vld [vmem:[#allocation7 + $0x68] sm:$0xff]
    %v2060 = vld [vmem:[#allocation7 + $0x70] sm:$0xff]
    %v2061 = vld [vmem:[#allocation7 + $0x78] sm:$0xff]
    %v2062 = vld [vmem:[#allocation7 + $0x80] sm:$0xff]
    %v2063 = vld [vmem:[#allocation7 + $0x88] sm:$0xff]
    %v2064 = vld [vmem:[#allocation7 + $0x90] sm:$0xff]
    %v2065 = vld [vmem:[#allocation7 + $0x98] sm:$0xff]
    %v2066 = vld [vmem:[#allocation7 + $0xa0] sm:$0xff]
    %v2067 = vld [vmem:[#allocation7 + $0xa8] sm:$0xff]
    %v2068 = vld [vmem:[#allocation7 + $0xb0] sm:$0xff]
    %v2069 = vld [vmem:[#allocation7 + $0xb8] sm:$0xff]
    %v2070 = vld [vmem:[#allocation7 + $0xc0] sm:$0xff]
    %v2071 = vld [vmem:[#allocation7 + $0xc8] sm:$0xff]
    %v2072 = vld [vmem:[#allocation7 + $0xd0] sm:$0xff]
    %v2073 = vld [vmem:[#allocation7 + $0xd8] sm:$0xff]
    %v2074 = vld [vmem:[#allocation7 + $0xe0] sm:$0xff]
    %v2075 = vld [vmem:[#allocation7 + $0xe8] sm:$0xff]
    %v2076 = vld [vmem:[#allocation7 + $0xf0] sm:$0xff]
    %v2077 = vld [vmem:[#allocation7 + $0xf8] sm:$0xff]
    %v2078 = vld [vmem:[#allocation7 + $0x100] sm:$0xff]
    %v2079 = vld [vmem:[#allocation7 + $0x108] sm:$0xff]
    %v2080 = vld [vmem:[#allocation7 + $0x110] sm:$0xff]
    %v2081 = vld [vmem:[#allocation7 + $0x118] sm:$0xff]
    %v2082 = vld [vmem:[#allocation7 + $0x120] sm:$0xff]
    %v2083 = vld [vmem:[#allocation7 + $0x128] sm:$0xff]
    %v2084 = vld [vmem:[#allocation7 + $0x130] sm:$0xff]
    %v2085 = vld [vmem:[#allocation7 + $0x138] sm:$0xff]
    %v2086 = vld [vmem:[#allocation7 + $0x140] sm:$0xff]
    %v2087 = vld [vmem:[#allocation7 + $0x148] sm:$0xff]
    %v2088 = vld [vmem:[#allocation7 + $0x150] sm:$0xff]
    %v2089 = vld [vmem:[#allocation7 + $0x158] sm:$0xff]
    %v2090 = vld [vmem:[#allocation7 + $0x160] sm:$0xff]
    %v2091 = vld [vmem:[#allocation7 + $0x168] sm:$0xff]
    %v2092 = vld [vmem:[#allocation7 + $0x170] sm:$0xff]
    %v2093 = vld [vmem:[#allocation7 + $0x178] sm:$0xff]
    %v2094 = vld [vmem:[#allocation7 + $0x180] sm:$0xff]
    %v2095 = vld [vmem:[#allocation7 + $0x188] sm:$0xff]
    %v2096 = vld [vmem:[#allocation7 + $0x190] sm:$0xff]
    %v2097 = vld [vmem:[#allocation7 + $0x198] sm:$0xff]
    %v2098 = vld [vmem:[#allocation7 + $0x1a0] sm:$0xff]
    %v2099 = vld [vmem:[#allocation7 + $0x1a8] sm:$0xff]
    %v2100 = vld [vmem:[#allocation7 + $0x1b0] sm:$0xff]
    %v2101 = vld [vmem:[#allocation7 + $0x1b8] sm:$0xff]
    %v2102 = vld [vmem:[#allocation7 + $0x1c0] sm:$0xff]
    %v2103 = vld [vmem:[#allocation7 + $0x1c8] sm:$0xff]
    %v2104 = vld [vmem:[#allocation7 + $0x1d0] sm:$0xff]
    %v2105 = vld [vmem:[#allocation7 + $0x1d8] sm:$0xff]
    %v2106 = vld [vmem:[#allocation7 + $0x1e0] sm:$0xff]
    %v2107 = vld [vmem:[#allocation7 + $0x1e8] sm:$0xff]
    %v2108 = vld [vmem:[#allocation7 + $0x1f0] sm:$0xff]
    %v2109 = vld [vmem:[#allocation7 + $0x1f8] sm:$0xff]
    %v2110 = vld [vmem:[#allocation7 + $0x200] sm:$0xff]
    %v2111 = vld [vmem:[#allocation7 + $0x208] sm:$0xff]
    %v2112 = vld [vmem:[#allocation7 + $0x210] sm:$0xff]
    %v2113 = vld [vmem:[#allocation7 + $0x218] sm:$0xff]
    %v2114 = vld [vmem:[#allocation7 + $0x220] sm:$0xff]
    %v2115 = vld [vmem:[#allocation7 + $0x228] sm:$0xff]
    %v2116 = vld [vmem:[#allocation7 + $0x230] sm:$0xff]
    %v2117 = vld [vmem:[#allocation7 + $0x238] sm:$0xff]
    %v2118 = vld [vmem:[#allocation7 + $0x240] sm:$0xff]
    %v2119 = vld [vmem:[#allocation7 + $0x248] sm:$0xff]
    %v2120 = vld [vmem:[#allocation7 + $0x250] sm:$0xff]
    %v2121 = vld [vmem:[#allocation7 + $0x258] sm:$0xff]
    %v2122 = vld [vmem:[#allocation7 + $0x260] sm:$0xff]
    %v2123 = vld [vmem:[#allocation7 + $0x268] sm:$0xff]
    %v2124 = vld [vmem:[#allocation7 + $0x270] sm:$0xff]
    %v2125 = vld [vmem:[#allocation7 + $0x278] sm:$0xff]
    %v2126 = vld [vmem:[#allocation7 + $0x280] sm:$0xff]
    %v2127 = vld [vmem:[#allocation7 + $0x288] sm:$0xff]
    %v2128 = vld [vmem:[#allocation7 + $0x290] sm:$0xff]
    %v2129 = vld [vmem:[#allocation7 + $0x298] sm:$0xff]
    %v2130 = vld [vmem:[#allocation7 + $0x2a0] sm:$0xff]
    %v2131 = vld [vmem:[#allocation7 + $0x2a8] sm:$0xff]
    %v2132 = vld [vmem:[#allocation7 + $0x2b0] sm:$0xff]
    %v2133 = vld [vmem:[#allocation7 + $0x2b8] sm:$0xff]
    %v2134 = vld [vmem:[#allocation7 + $0x2c0] sm:$0xff]
    %v2135 = vld [vmem:[#allocation7 + $0x2c8] sm:$0xff]
    %v2136 = vld [vmem:[#allocation7 + $0x2d0] sm:$0xff]
    %v2137 = vld [vmem:[#allocation7 + $0x2d8] sm:$0xff]
    %v2138 = vld [vmem:[#allocation7 + $0x2e0] sm:$0xff]
    %v2139 = vld [vmem:[#allocation7 + $0x2e8] sm:$0xff]
    %v2140 = vld [vmem:[#allocation7 + $0x2f0] sm:$0xff]
    %v2141 = vld [vmem:[#allocation7 + $0x2f8] sm:$0xff]
    %v2142 = vld [vmem:[#allocation7 + $0x300] sm:$0xff]
    %v2143 = vld [vmem:[#allocation7 + $0x308] sm:$0xff]
    %v2144 = vld [vmem:[#allocation7 + $0x310] sm:$0xff]
    %v2145 = vld [vmem:[#allocation7 + $0x318] sm:$0xff]
    %v2146 = vld [vmem:[#allocation7 + $0x320] sm:$0xff]
    %v2147 = vld [vmem:[#allocation7 + $0x328] sm:$0xff]
    %v2148 = vld [vmem:[#allocation7 + $0x330] sm:$0xff]
    %v2149 = vld [vmem:[#allocation7 + $0x338] sm:$0xff]
    %v2150 = vld [vmem:[#allocation7 + $0x340] sm:$0xff]
    %v2151 = vld [vmem:[#allocation7 + $0x348] sm:$0xff]
    %v2152 = vld [vmem:[#allocation7 + $0x350] sm:$0xff]
    %v2153 = vld [vmem:[#allocation7 + $0x358] sm:$0xff]
    %v2154 = vld [vmem:[#allocation7 + $0x360] sm:$0xff]
    %v2155 = vld [vmem:[#allocation7 + $0x368] sm:$0xff]
    %v2156 = vld [vmem:[#allocation7 + $0x370] sm:$0xff]
    %v2157 = vld [vmem:[#allocation7 + $0x378] sm:$0xff]
    %v2158 = vld [vmem:[#allocation7 + $0x380] sm:$0xff]
    %v2159 = vld [vmem:[#allocation7 + $0x388] sm:$0xff]
    %v2160 = vld [vmem:[#allocation7 + $0x390] sm:$0xff]
    %v2161 = vld [vmem:[#allocation7 + $0x398] sm:$0xff]
    %v2162 = vld [vmem:[#allocation7 + $0x3a0] sm:$0xff]
    %v2163 = vld [vmem:[#allocation7 + $0x3a8] sm:$0xff]
    %v2164 = vld [vmem:[#allocation7 + $0x3b0] sm:$0xff]
    %v2165 = vld [vmem:[#allocation7 + $0x3b8] sm:$0xff]
    %v2166 = vld [vmem:[#allocation7 + $0x3c0] sm:$0xff]
    %v2167 = vld [vmem:[#allocation7 + $0x3c8] sm:$0xff]
    %v2168 = vld [vmem:[#allocation7 + $0x3d0] sm:$0xff]
    %v2169 = vld [vmem:[#allocation7 + $0x3d8] sm:$0xff]
    %v2170 = vld [vmem:[#allocation7 + $0x3e0] sm:$0xff]
    %v2171 = vld [vmem:[#allocation7 + $0x3e8] sm:$0xff]
    %v2172 = vld [vmem:[#allocation7 + $0x3f0] sm:$0xff]
    %v2173 = vld [vmem:[#allocation7 + $0x3f8] sm:$0xff]
    %v2174 = vld [vmem:[%s4] sm:$0xf]
    %v2176 = vlaneseq
    %v2177 = vshrl.u32 %v2176, 7
    %v2178 = vsub.s32 0, %v2177
    %v2179 = vrot.slane %v2174, %v2178
    %v2180 = vlaneseq
    %v2181 = vshrl.u32 %v2180, 7
    %v2182 = vsub.s32 1, %v2181
    %v2183 = vrot.slane %v2174, %v2182
    %v2184 = vlaneseq
    %v2185 = vshrl.u32 %v2184, 7
    %v2186 = vsub.s32 2, %v2185
    %v2187 = vrot.slane %v2174, %v2186
    %v2188 = vlaneseq
    %v2189 = vshrl.u32 %v2188, 7
    %v2190 = vsub.s32 3, %v2189
    %v2191 = vrot.slane %v2174, %v2190
    %v2324 = vunpack.c.l.b16 %v2046
    %v2325 = vunpack.c.h.b16 %v2046
    %v2326 = vunpack.c.l.b16 %v2047
    %v2327 = vunpack.c.h.b16 %v2047
    %v2328 = vunpack.c.l.b16 %v2048
    %v2329 = vunpack.c.h.b16 %v2048
    %v2330 = vunpack.c.l.b16 %v2049
    %v2331 = vunpack.c.h.b16 %v2049
    %v2332 = vunpack.c.l.b16 %v2050
    %v2333 = vunpack.c.h.b16 %v2050
    %v2334 = vunpack.c.l.b16 %v2051
    %v2335 = vunpack.c.h.b16 %v2051
    %v2336 = vunpack.c.l.b16 %v2052
    %v2337 = vunpack.c.h.b16 %v2052
    %v2338 = vunpack.c.l.b16 %v2053
    %v2339 = vunpack.c.h.b16 %v2053
    %v2340 = vunpack.c.l.b16 %v2054
    %v2341 = vunpack.c.h.b16 %v2054
    %v2342 = vunpack.c.l.b16 %v2055
    %v2343 = vunpack.c.h.b16 %v2055
    %v2344 = vunpack.c.l.b16 %v2056
    %v2345 = vunpack.c.h.b16 %v2056
    %v2346 = vunpack.c.l.b16 %v2057
    %v2347 = vunpack.c.h.b16 %v2057
    %v2348 = vunpack.c.l.b16 %v2058
    %v2349 = vunpack.c.h.b16 %v2058
    %v2350 = vunpack.c.l.b16 %v2059
    %v2351 = vunpack.c.h.b16 %v2059
    %v2352 = vunpack.c.l.b16 %v2060
    %v2353 = vunpack.c.h.b16 %v2060
    %v2354 = vunpack.c.l.b16 %v2061
    %v2355 = vunpack.c.h.b16 %v2061
    %v2356 = vunpack.c.l.b16 %v2062
    %v2357 = vunpack.c.h.b16 %v2062
    %v2358 = vunpack.c.l.b16 %v2063
    %v2359 = vunpack.c.h.b16 %v2063
    %v2360 = vunpack.c.l.b16 %v2064
    %v2361 = vunpack.c.h.b16 %v2064
    %v2362 = vunpack.c.l.b16 %v2065
    %v2363 = vunpack.c.h.b16 %v2065
    %v2364 = vunpack.c.l.b16 %v2066
    %v2365 = vunpack.c.h.b16 %v2066
    %v2366 = vunpack.c.l.b16 %v2067
    %v2367 = vunpack.c.h.b16 %v2067
    %v2368 = vunpack.c.l.b16 %v2068
    %v2369 = vunpack.c.h.b16 %v2068
    %v2370 = vunpack.c.l.b16 %v2069
    %v2371 = vunpack.c.h.b16 %v2069
    %v2372 = vunpack.c.l.b16 %v2070
    %v2373 = vunpack.c.h.b16 %v2070
    %v2374 = vunpack.c.l.b16 %v2071
    %v2375 = vunpack.c.h.b16 %v2071
    %v2376 = vunpack.c.l.b16 %v2072
    %v2377 = vunpack.c.h.b16 %v2072
    %v2378 = vunpack.c.l.b16 %v2073
    %v2379 = vunpack.c.h.b16 %v2073
    %v2380 = vunpack.c.l.b16 %v2074
    %v2381 = vunpack.c.h.b16 %v2074
    %v2382 = vunpack.c.l.b16 %v2075
    %v2383 = vunpack.c.h.b16 %v2075
    %v2384 = vunpack.c.l.b16 %v2076
    %v2385 = vunpack.c.h.b16 %v2076
    %v2386 = vunpack.c.l.b16 %v2077
    %v2387 = vunpack.c.h.b16 %v2077
    %v2388 = vunpack.c.l.b16 %v2078
    %v2389 = vunpack.c.h.b16 %v2078
    %v2390 = vunpack.c.l.b16 %v2079
    %v2391 = vunpack.c.h.b16 %v2079
    %v2392 = vunpack.c.l.b16 %v2080
    %v2393 = vunpack.c.h.b16 %v2080
    %v2394 = vunpack.c.l.b16 %v2081
    %v2395 = vunpack.c.h.b16 %v2081
    %v2396 = vunpack.c.l.b16 %v2082
    %v2397 = vunpack.c.h.b16 %v2082
    %v2398 = vunpack.c.l.b16 %v2083
    %v2399 = vunpack.c.h.b16 %v2083
    %v2400 = vunpack.c.l.b16 %v2084
    %v2401 = vunpack.c.h.b16 %v2084
    %v2402 = vunpack.c.l.b16 %v2085
    %v2403 = vunpack.c.h.b16 %v2085
    %v2404 = vunpack.c.l.b16 %v2086
    %v2405 = vunpack.c.h.b16 %v2086
    %v2406 = vunpack.c.l.b16 %v2087
    %v2407 = vunpack.c.h.b16 %v2087
    %v2408 = vunpack.c.l.b16 %v2088
    %v2409 = vunpack.c.h.b16 %v2088
    %v2410 = vunpack.c.l.b16 %v2089
    %v2411 = vunpack.c.h.b16 %v2089
    %v2412 = vunpack.c.l.b16 %v2090
    %v2413 = vunpack.c.h.b16 %v2090
    %v2414 = vunpack.c.l.b16 %v2091
    %v2415 = vunpack.c.h.b16 %v2091
    %v2416 = vunpack.c.l.b16 %v2092
    %v2417 = vunpack.c.h.b16 %v2092
    %v2418 = vunpack.c.l.b16 %v2093
    %v2419 = vunpack.c.h.b16 %v2093
    %v2420 = vunpack.c.l.b16 %v2094
    %v2421 = vunpack.c.h.b16 %v2094
    %v2422 = vunpack.c.l.b16 %v2095
    %v2423 = vunpack.c.h.b16 %v2095
    %v2424 = vunpack.c.l.b16 %v2096
    %v2425 = vunpack.c.h.b16 %v2096
    %v2426 = vunpack.c.l.b16 %v2097
    %v2427 = vunpack.c.h.b16 %v2097
    %v2428 = vunpack.c.l.b16 %v2098
    %v2429 = vunpack.c.h.b16 %v2098
    %v2430 = vunpack.c.l.b16 %v2099
    %v2431 = vunpack.c.h.b16 %v2099
    %v2432 = vunpack.c.l.b16 %v2100
    %v2433 = vunpack.c.h.b16 %v2100
    %v2434 = vunpack.c.l.b16 %v2101
    %v2435 = vunpack.c.h.b16 %v2101
    %v2436 = vunpack.c.l.b16 %v2102
    %v2437 = vunpack.c.h.b16 %v2102
    %v2438 = vunpack.c.l.b16 %v2103
    %v2439 = vunpack.c.h.b16 %v2103
    %v2440 = vunpack.c.l.b16 %v2104
    %v2441 = vunpack.c.h.b16 %v2104
    %v2442 = vunpack.c.l.b16 %v2105
    %v2443 = vunpack.c.h.b16 %v2105
    %v2444 = vunpack.c.l.b16 %v2106
    %v2445 = vunpack.c.h.b16 %v2106
    %v2446 = vunpack.c.l.b16 %v2107
    %v2447 = vunpack.c.h.b16 %v2107
    %v2448 = vunpack.c.l.b16 %v2108
    %v2449 = vunpack.c.h.b16 %v2108
    %v2450 = vunpack.c.l.b16 %v2109
    %v2451 = vunpack.c.h.b16 %v2109
    %v2452 = vunpack.c.l.b16 %v2110
    %v2453 = vunpack.c.h.b16 %v2110
    %v2454 = vunpack.c.l.b16 %v2111
    %v2455 = vunpack.c.h.b16 %v2111
    %v2456 = vunpack.c.l.b16 %v2112
    %v2457 = vunpack.c.h.b16 %v2112
    %v2458 = vunpack.c.l.b16 %v2113
    %v2459 = vunpack.c.h.b16 %v2113
    %v2460 = vunpack.c.l.b16 %v2114
    %v2461 = vunpack.c.h.b16 %v2114
    %v2462 = vunpack.c.l.b16 %v2115
    %v2463 = vunpack.c.h.b16 %v2115
    %v2464 = vunpack.c.l.b16 %v2116
    %v2465 = vunpack.c.h.b16 %v2116
    %v2466 = vunpack.c.l.b16 %v2117
    %v2467 = vunpack.c.h.b16 %v2117
    %v2468 = vunpack.c.l.b16 %v2118
    %v2469 = vunpack.c.h.b16 %v2118
    %v2470 = vunpack.c.l.b16 %v2119
    %v2471 = vunpack.c.h.b16 %v2119
    %v2472 = vunpack.c.l.b16 %v2120
    %v2473 = vunpack.c.h.b16 %v2120
    %v2474 = vunpack.c.l.b16 %v2121
    %v2475 = vunpack.c.h.b16 %v2121
    %v2476 = vunpack.c.l.b16 %v2122
    %v2477 = vunpack.c.h.b16 %v2122
    %v2478 = vunpack.c.l.b16 %v2123
    %v2479 = vunpack.c.h.b16 %v2123
    %v2480 = vunpack.c.l.b16 %v2124
    %v2481 = vunpack.c.h.b16 %v2124
    %v2482 = vunpack.c.l.b16 %v2125
    %v2483 = vunpack.c.h.b16 %v2125
    %v2484 = vunpack.c.l.b16 %v2126
    %v2485 = vunpack.c.h.b16 %v2126
    %v2486 = vunpack.c.l.b16 %v2127
    %v2487 = vunpack.c.h.b16 %v2127
    %v2488 = vunpack.c.l.b16 %v2128
    %v2489 = vunpack.c.h.b16 %v2128
    %v2490 = vunpack.c.l.b16 %v2129
    %v2491 = vunpack.c.h.b16 %v2129
    %v2492 = vunpack.c.l.b16 %v2130
    %v2493 = vunpack.c.h.b16 %v2130
    %v2494 = vunpack.c.l.b16 %v2131
    %v2495 = vunpack.c.h.b16 %v2131
    %v2496 = vunpack.c.l.b16 %v2132
    %v2497 = vunpack.c.h.b16 %v2132
    %v2498 = vunpack.c.l.b16 %v2133
    %v2499 = vunpack.c.h.b16 %v2133
    %v2500 = vunpack.c.l.b16 %v2134
    %v2501 = vunpack.c.h.b16 %v2134
    %v2502 = vunpack.c.l.b16 %v2135
    %v2503 = vunpack.c.h.b16 %v2135
    %v2504 = vunpack.c.l.b16 %v2136
    %v2505 = vunpack.c.h.b16 %v2136
    %v2506 = vunpack.c.l.b16 %v2137
    %v2507 = vunpack.c.h.b16 %v2137
    %v2508 = vunpack.c.l.b16 %v2138
    %v2509 = vunpack.c.h.b16 %v2138
    %v2510 = vunpack.c.l.b16 %v2139
    %v2511 = vunpack.c.h.b16 %v2139
    %v2512 = vunpack.c.l.b16 %v2140
    %v2513 = vunpack.c.h.b16 %v2140
    %v2514 = vunpack.c.l.b16 %v2141
    %v2515 = vunpack.c.h.b16 %v2141
    %v2516 = vunpack.c.l.b16 %v2142
    %v2517 = vunpack.c.h.b16 %v2142
    %v2518 = vunpack.c.l.b16 %v2143
    %v2519 = vunpack.c.h.b16 %v2143
    %v2520 = vunpack.c.l.b16 %v2144
    %v2521 = vunpack.c.h.b16 %v2144
    %v2522 = vunpack.c.l.b16 %v2145
    %v2523 = vunpack.c.h.b16 %v2145
    %v2524 = vunpack.c.l.b16 %v2146
    %v2525 = vunpack.c.h.b16 %v2146
    %v2526 = vunpack.c.l.b16 %v2147
    %v2527 = vunpack.c.h.b16 %v2147
    %v2528 = vunpack.c.l.b16 %v2148
    %v2529 = vunpack.c.h.b16 %v2148
    %v2530 = vunpack.c.l.b16 %v2149
    %v2531 = vunpack.c.h.b16 %v2149
    %v2532 = vunpack.c.l.b16 %v2150
    %v2533 = vunpack.c.h.b16 %v2150
    %v2534 = vunpack.c.l.b16 %v2151
    %v2535 = vunpack.c.h.b16 %v2151
    %v2536 = vunpack.c.l.b16 %v2152
    %v2537 = vunpack.c.h.b16 %v2152
    %v2538 = vunpack.c.l.b16 %v2153
    %v2539 = vunpack.c.h.b16 %v2153
    %v2540 = vunpack.c.l.b16 %v2154
    %v2541 = vunpack.c.h.b16 %v2154
    %v2542 = vunpack.c.l.b16 %v2155
    %v2543 = vunpack.c.h.b16 %v2155
    %v2544 = vunpack.c.l.b16 %v2156
    %v2545 = vunpack.c.h.b16 %v2156
    %v2546 = vunpack.c.l.b16 %v2157
    %v2547 = vunpack.c.h.b16 %v2157
    %v2548 = vunpack.c.l.b16 %v2158
    %v2549 = vunpack.c.h.b16 %v2158
    %v2550 = vunpack.c.l.b16 %v2159
    %v2551 = vunpack.c.h.b16 %v2159
    %v2552 = vunpack.c.l.b16 %v2160
    %v2553 = vunpack.c.h.b16 %v2160
    %v2554 = vunpack.c.l.b16 %v2161
    %v2555 = vunpack.c.h.b16 %v2161
    %v2556 = vunpack.c.l.b16 %v2162
    %v2557 = vunpack.c.h.b16 %v2162
    %v2558 = vunpack.c.l.b16 %v2163
    %v2559 = vunpack.c.h.b16 %v2163
    %v2560 = vunpack.c.l.b16 %v2164
    %v2561 = vunpack.c.h.b16 %v2164
    %v2562 = vunpack.c.l.b16 %v2165
    %v2563 = vunpack.c.h.b16 %v2165
    %v2564 = vunpack.c.l.b16 %v2166
    %v2565 = vunpack.c.h.b16 %v2166
    %v2566 = vunpack.c.l.b16 %v2167
    %v2567 = vunpack.c.h.b16 %v2167
    %v2568 = vunpack.c.l.b16 %v2168
    %v2569 = vunpack.c.h.b16 %v2168
    %v2570 = vunpack.c.l.b16 %v2169
    %v2571 = vunpack.c.h.b16 %v2169
    %v2572 = vunpack.c.l.b16 %v2170
    %v2573 = vunpack.c.h.b16 %v2170
    %v2574 = vunpack.c.l.b16 %v2171
    %v2575 = vunpack.c.h.b16 %v2171
    %v2576 = vunpack.c.l.b16 %v2172
    %v2577 = vunpack.c.h.b16 %v2172
    %v2578 = vunpack.c.l.b16 %v2173
    %v2579 = vunpack.c.h.b16 %v2173
    %v2580 = vpack.c.b16 %v2328, %v2324
    %v2581 = vpack.c.b16 %v2329, %v2325
    %v2582 = vpack.c.b16 %v2330, %v2326
    %v2583 = vpack.c.b16 %v2331, %v2327
    %v2584 = vpack.c.b16 %v2336, %v2332
    %v2585 = vpack.c.b16 %v2337, %v2333
    %v2586 = vpack.c.b16 %v2338, %v2334
    %v2587 = vpack.c.b16 %v2339, %v2335
    %v2588 = vpack.c.b16 %v2344, %v2340
    %v2589 = vpack.c.b16 %v2345, %v2341
    %v2590 = vpack.c.b16 %v2346, %v2342
    %v2591 = vpack.c.b16 %v2347, %v2343
    %v2592 = vpack.c.b16 %v2352, %v2348
    %v2593 = vpack.c.b16 %v2353, %v2349
    %v2594 = vpack.c.b16 %v2354, %v2350
    %v2595 = vpack.c.b16 %v2355, %v2351
    %v2596 = vpack.c.b16 %v2360, %v2356
    %v2597 = vpack.c.b16 %v2361, %v2357
    %v2598 = vpack.c.b16 %v2362, %v2358
    %v2599 = vpack.c.b16 %v2363, %v2359
    %v2600 = vpack.c.b16 %v2368, %v2364
    %v2601 = vpack.c.b16 %v2369, %v2365
    %v2602 = vpack.c.b16 %v2370, %v2366
    %v2603 = vpack.c.b16 %v2371, %v2367
    %v2604 = vpack.c.b16 %v2376, %v2372
    %v2605 = vpack.c.b16 %v2377, %v2373
    %v2606 = vpack.c.b16 %v2378, %v2374
    %v2607 = vpack.c.b16 %v2379, %v2375
    %v2608 = vpack.c.b16 %v2384, %v2380
    %v2609 = vpack.c.b16 %v2385, %v2381
    %v2610 = vpack.c.b16 %v2386, %v2382
    %v2611 = vpack.c.b16 %v2387, %v2383
    %v2612 = vpack.c.b16 %v2392, %v2388
    %v2613 = vpack.c.b16 %v2393, %v2389
    %v2614 = vpack.c.b16 %v2394, %v2390
    %v2615 = vpack.c.b16 %v2395, %v2391
    %v2616 = vpack.c.b16 %v2400, %v2396
    %v2617 = vpack.c.b16 %v2401, %v2397
    %v2618 = vpack.c.b16 %v2402, %v2398
    %v2619 = vpack.c.b16 %v2403, %v2399
    %v2620 = vpack.c.b16 %v2408, %v2404
    %v2621 = vpack.c.b16 %v2409, %v2405
    %v2622 = vpack.c.b16 %v2410, %v2406
    %v2623 = vpack.c.b16 %v2411, %v2407
    %v2624 = vpack.c.b16 %v2416, %v2412
    %v2625 = vpack.c.b16 %v2417, %v2413
    %v2626 = vpack.c.b16 %v2418, %v2414
    %v2627 = vpack.c.b16 %v2419, %v2415
    %v2628 = vpack.c.b16 %v2424, %v2420
    %v2629 = vpack.c.b16 %v2425, %v2421
    %v2630 = vpack.c.b16 %v2426, %v2422
    %v2631 = vpack.c.b16 %v2427, %v2423
    %v2632 = vpack.c.b16 %v2432, %v2428
    %v2633 = vpack.c.b16 %v2433, %v2429
    %v2634 = vpack.c.b16 %v2434, %v2430
    %v2635 = vpack.c.b16 %v2435, %v2431
    %v2636 = vpack.c.b16 %v2440, %v2436
    %v2637 = vpack.c.b16 %v2441, %v2437
    %v2638 = vpack.c.b16 %v2442, %v2438
    %v2639 = vpack.c.b16 %v2443, %v2439
    %v2640 = vpack.c.b16 %v2448, %v2444
    %v2641 = vpack.c.b16 %v2449, %v2445
    %v2642 = vpack.c.b16 %v2450, %v2446
    %v2643 = vpack.c.b16 %v2451, %v2447
    %v2644 = vpack.c.b16 %v2456, %v2452
    %v2645 = vpack.c.b16 %v2457, %v2453
    %v2646 = vpack.c.b16 %v2458, %v2454
    %v2647 = vpack.c.b16 %v2459, %v2455
    %v2648 = vpack.c.b16 %v2464, %v2460
    %v2649 = vpack.c.b16 %v2465, %v2461
    %v2650 = vpack.c.b16 %v2466, %v2462
    %v2651 = vpack.c.b16 %v2467, %v2463
    %v2652 = vpack.c.b16 %v2472, %v2468
    %v2653 = vpack.c.b16 %v2473, %v2469
    %v2654 = vpack.c.b16 %v2474, %v2470
    %v2655 = vpack.c.b16 %v2475, %v2471
    %v2656 = vpack.c.b16 %v2480, %v2476
    %v2657 = vpack.c.b16 %v2481, %v2477
    %v2658 = vpack.c.b16 %v2482, %v2478
    %v2659 = vpack.c.b16 %v2483, %v2479
    %v2660 = vpack.c.b16 %v2488, %v2484
    %v2661 = vpack.c.b16 %v2489, %v2485
    %v2662 = vpack.c.b16 %v2490, %v2486
    %v2663 = vpack.c.b16 %v2491, %v2487
    %v2664 = vpack.c.b16 %v2496, %v2492
    %v2665 = vpack.c.b16 %v2497, %v2493
    %v2666 = vpack.c.b16 %v2498, %v2494
    %v2667 = vpack.c.b16 %v2499, %v2495
    %v2668 = vpack.c.b16 %v2504, %v2500
    %v2669 = vpack.c.b16 %v2505, %v2501
    %v2670 = vpack.c.b16 %v2506, %v2502
    %v2671 = vpack.c.b16 %v2507, %v2503
    %v2672 = vpack.c.b16 %v2512, %v2508
    %v2673 = vpack.c.b16 %v2513, %v2509
    %v2674 = vpack.c.b16 %v2514, %v2510
    %v2675 = vpack.c.b16 %v2515, %v2511
    %v2676 = vpack.c.b16 %v2520, %v2516
    %v2677 = vpack.c.b16 %v2521, %v2517
    %v2678 = vpack.c.b16 %v2522, %v2518
    %v2679 = vpack.c.b16 %v2523, %v2519
    %v2680 = vpack.c.b16 %v2528, %v2524
    %v2681 = vpack.c.b16 %v2529, %v2525
    %v2682 = vpack.c.b16 %v2530, %v2526
    %v2683 = vpack.c.b16 %v2531, %v2527
    %v2684 = vpack.c.b16 %v2536, %v2532
    %v2685 = vpack.c.b16 %v2537, %v2533
    %v2686 = vpack.c.b16 %v2538, %v2534
    %v2687 = vpack.c.b16 %v2539, %v2535
    %v2688 = vpack.c.b16 %v2544, %v2540
    %v2689 = vpack.c.b16 %v2545, %v2541
    %v2690 = vpack.c.b16 %v2546, %v2542
    %v2691 = vpack.c.b16 %v2547, %v2543
    %v2692 = vpack.c.b16 %v2552, %v2548
    %v2693 = vpack.c.b16 %v2553, %v2549
    %v2694 = vpack.c.b16 %v2554, %v2550
    %v2695 = vpack.c.b16 %v2555, %v2551
    %v2696 = vpack.c.b16 %v2560, %v2556
    %v2697 = vpack.c.b16 %v2561, %v2557
    %v2698 = vpack.c.b16 %v2562, %v2558
    %v2699 = vpack.c.b16 %v2563, %v2559
    %v2700 = vpack.c.b16 %v2568, %v2564
    %v2701 = vpack.c.b16 %v2569, %v2565
    %v2702 = vpack.c.b16 %v2570, %v2566
    %v2703 = vpack.c.b16 %v2571, %v2567
    %v2704 = vpack.c.b16 %v2576, %v2572
    %v2705 = vpack.c.b16 %v2577, %v2573
    %v2706 = vpack.c.b16 %v2578, %v2574
    %v2707 = vpack.c.b16 %v2579, %v2575
    %2836 = vmatprep.subr.bf16.mxu0 %v2581
    %2837 = vmatpush1.bf16.msra.mxu0 %v2580
    %2838 = vmatprep.subr.bf16.mxu0 %v2585
    %2839 = vmatpush1.bf16.msra.mxu0 %v2584
    %2840 = vmatprep.subr.bf16.mxu0 %v2589
    %2841 = vmatpush1.bf16.msra.mxu0 %v2588
    %2842 = vmatprep.subr.bf16.mxu0 %v2593
    %2843 = vmatpush1.bf16.msra.mxu0 %v2592
    %2844 = vmatprep.subr.bf16.mxu0 %v2597
    %2845 = vmatpush1.bf16.msra.mxu0 %v2596
    %2846 = vmatprep.subr.bf16.mxu0 %v2601
    %2847 = vmatpush1.bf16.msra.mxu0 %v2600
    %2848 = vmatprep.subr.bf16.mxu0 %v2605
    %2849 = vmatpush1.bf16.msra.mxu0 %v2604
    %2850 = vmatprep.subr.bf16.mxu0 %v2609
    %2851 = vmatpush1.bf16.msra.mxu0 %v2608
    %2852 = vmatprep.subr.bf16.mxu0 %v2613
    %2853 = vmatpush1.bf16.msra.mxu0 %v2612
    %2854 = vmatprep.subr.bf16.mxu0 %v2617
    %2855 = vmatpush1.bf16.msra.mxu0 %v2616
    %2856 = vmatprep.subr.bf16.mxu0 %v2621
    %2857 = vmatpush1.bf16.msra.mxu0 %v2620
    %2858 = vmatprep.subr.bf16.mxu0 %v2625
    %2859 = vmatpush1.bf16.msra.mxu0 %v2624
    %2860 = vmatprep.subr.bf16.mxu0 %v2629
    %2861 = vmatpush1.bf16.msra.mxu0 %v2628
    %2862 = vmatprep.subr.bf16.mxu0 %v2633
    %2863 = vmatpush1.bf16.msra.mxu0 %v2632
    %2864 = vmatprep.subr.bf16.mxu0 %v2637
    %2865 = vmatpush1.bf16.msra.mxu0 %v2636
    %2866 = vmatprep.subr.bf16.mxu0 %v2641
    %2867 = vmatpush1.bf16.msra.mxu0 %v2640
    %2868 = vmatprep.mubr.bf16.mxu0 %v1983
    %2869 = vmatmul.mubr.bf16.gmra.mrb[0].mxu0 %v1982
    %v2870 = vpop.f32.mrb[0].mxu0
    %v2871 = vadd.f32 %v2179, %v2870
    %v2872 = vpop.f32.mrb[0].mxu0
    %v2873 = vadd.f32 %v2183, %v2872
    %v2874 = vpop.f32.mrb[0].mxu0
    %v2875 = vadd.f32 %v2179, %v2874
    %v2876 = vpop.f32.mrb[0].mxu0
    %v2877 = vadd.f32 %v2183, %v2876
    %2878 = vmatprep.mubr.bf16.mxu0 %v1987
    %2879 = vmatmul.mubr.bf16.gmra.mrb[0].mxu0 %v1986
    %v2880 = vpop.f32.mrb[0].mxu0
    %v2881 = vadd.f32 %v2179, %v2880
    %v2882 = vpop.f32.mrb[0].mxu0
    %v2883 = vadd.f32 %v2183, %v2882
    %v2884 = vpop.f32.mrb[0].mxu0
    %v2885 = vadd.f32 %v2179, %v2884
    %v2886 = vpop.f32.mrb[0].mxu0
    %v2887 = vadd.f32 %v2183, %v2886
    %2888 = vmatprep.mubr.bf16.mxu0 %v1991
    %2889 = vmatmul.mubr.bf16.gmra.mrb[0].mxu0 %v1990
    %v2890 = vpop.f32.mrb[0].mxu0
    %v2891 = vadd.f32 %v2179, %v2890
    %v2892 = vpop.f32.mrb[0].mxu0
    %v2893 = vadd.f32 %v2183, %v2892
    %v2894 = vpop.f32.mrb[0].mxu0
    %v2895 = vadd.f32 %v2179, %v2894
    %v2896 = vpop.f32.mrb[0].mxu0
    %v2897 = vadd.f32 %v2183, %v2896
    %2898 = vmatprep.mubr.bf16.mxu0 %v1995
    %2899 = vmatmul.mubr.bf16.gmra.mrb[0].mxu0 %v1994
    %v2900 = vpop.f32.mrb[0].mxu0
    %v2901 = vadd.f32 %v2179, %v2900
    %v2902 = vpop.f32.mrb[0].mxu0
    %v2903 = vadd.f32 %v2183, %v2902
    %v2904 = vpop.f32.mrb[0].mxu0
    %v2905 = vadd.f32 %v2179, %v2904
    %v2906 = vpop.f32.mrb[0].mxu0
    %v2907 = vadd.f32 %v2183, %v2906
    %2908 = vmatprep.mubr.bf16.mxu0 %v1999
    %2909 = vmatmul.mubr.bf16.gmra.mrb[0].mxu0 %v1998
    %v2910 = vpop.f32.mrb[0].mxu0
    %v2911 = vadd.f32 %v2179, %v2910
    %v2912 = vpop.f32.mrb[0].mxu0
    %v2913 = vadd.f32 %v2183, %v2912
    %v2914 = vpop.f32.mrb[0].mxu0
    %v2915 = vadd.f32 %v2179, %v2914
    %v2916 = vpop.f32.mrb[0].mxu0
    %v2917 = vadd.f32 %v2183, %v2916
    %2918 = vmatprep.mubr.bf16.mxu0 %v2003
    %2919 = vmatmul.mubr.bf16.gmra.mrb[0].mxu0 %v2002
    %v2920 = vpop.f32.mrb[0].mxu0
    %v2921 = vadd.f32 %v2179, %v2920
    %v2922 = vpop.f32.mrb[0].mxu0
    %v2923 = vadd.f32 %v2183, %v2922
    %v2924 = vpop.f32.mrb[0].mxu0
    %v2925 = vadd.f32 %v2179, %v2924
    %v2926 = vpop.f32.mrb[0].mxu0
    %v2927 = vadd.f32 %v2183, %v2926
    %2928 = vmatprep.mubr.bf16.mxu0 %v2007
    %2929 = vmatmul.mubr.bf16.gmra.mrb[0].mxu0 %v2006
    %v2930 = vpop.f32.mrb[0].mxu0
    %v2931 = vadd.f32 %v2179, %v2930
    %v2932 = vpop.f32.mrb[0].mxu0
    %v2933 = vadd.f32 %v2183, %v2932
    %v2934 = vpop.f32.mrb[0].mxu0
    %v2935 = vadd.f32 %v2179, %v2934
    %v2936 = vpop.f32.mrb[0].mxu0
    %v2937 = vadd.f32 %v2183, %v2936
    %2938 = vmatprep.mubr.bf16.mxu0 %v2011
    %2939 = vmatmul.mubr.bf16.gmra.mrb[0].mxu0 %v2010
    %v2940 = vpop.f32.mrb[0].mxu0
    %v2941 = vadd.f32 %v2179, %v2940
    %v2942 = vpop.f32.mrb[0].mxu0
    %v2943 = vadd.f32 %v2183, %v2942
    %v2944 = vpop.f32.mrb[0].mxu0
    %v2945 = vadd.f32 %v2179, %v2944
    %v2946 = vpop.f32.mrb[0].mxu0
    %v2947 = vadd.f32 %v2183, %v2946
    %2948 = vmatprep.mubr.bf16.mxu0 %v2015
    %2949 = vmatmul.mubr.bf16.gmra.mrb[0].mxu0 %v2014
    %v2950 = vpop.f32.mrb[0].mxu0
    %v2951 = vadd.f32 %v2179, %v2950
    %v2952 = vpop.f32.mrb[0].mxu0
    %v2953 = vadd.f32 %v2183, %v2952
    %v2954 = vpop.f32.mrb[0].mxu0
    %v2955 = vadd.f32 %v2179, %v2954
    %v2956 = vpop.f32.mrb[0].mxu0
    %v2957 = vadd.f32 %v2183, %v2956
    %2958 = vmatprep.mubr.bf16.mxu0 %v2019
    %2959 = vmatmul.mubr.bf16.gmra.mrb[0].mxu0 %v2018
    %v2960 = vpop.f32.mrb[0].mxu0
    %v2961 = vadd.f32 %v2179, %v2960
    %v2962 = vpop.f32.mrb[0].mxu0
    %v2963 = vadd.f32 %v2183, %v2962
    %v2964 = vpop.f32.mrb[0].mxu0
    %v2965 = vadd.f32 %v2179, %v2964
    %v2966 = vpop.f32.mrb[0].mxu0
    %v2967 = vadd.f32 %v2183, %v2966
    %2968 = vmatprep.mubr.bf16.mxu0 %v2023
    %2969 = vmatmul.mubr.bf16.gmra.mrb[0].mxu0 %v2022
    %v2970 = vpop.f32.mrb[0].mxu0
    %v2971 = vadd.f32 %v2179, %v2970
    %v2972 = vpop.f32.mrb[0].mxu0
    %v2973 = vadd.f32 %v2183, %v2972
    %v2974 = vpop.f32.mrb[0].mxu0
    %v2975 = vadd.f32 %v2179, %v2974
    %v2976 = vpop.f32.mrb[0].mxu0
    %v2977 = vadd.f32 %v2183, %v2976
    %2978 = vmatprep.mubr.bf16.mxu0 %v2027
    %2979 = vmatmul.mubr.bf16.gmra.mrb[0].mxu0 %v2026
    %v2980 = vpop.f32.mrb[0].mxu0
    %v2981 = vadd.f32 %v2179, %v2980
    %v2982 = vpop.f32.mrb[0].mxu0
    %v2983 = vadd.f32 %v2183, %v2982
    %v2984 = vpop.f32.mrb[0].mxu0
    %v2985 = vadd.f32 %v2179, %v2984
    %v2986 = vpop.f32.mrb[0].mxu0
    %v2987 = vadd.f32 %v2183, %v2986
    %2988 = vmatprep.mubr.bf16.mxu0 %v2031
    %2989 = vmatmul.mubr.bf16.gmra.mrb[0].mxu0 %v2030
    %v2990 = vpop.f32.mrb[0].mxu0
    %v2991 = vadd.f32 %v2179, %v2990
    %v2992 = vpop.f32.mrb[0].mxu0
    %v2993 = vadd.f32 %v2183, %v2992
    %v2994 = vpop.f32.mrb[0].mxu0
    %v2995 = vadd.f32 %v2179, %v2994
    %v2996 = vpop.f32.mrb[0].mxu0
    %v2997 = vadd.f32 %v2183, %v2996
    %2998 = vmatprep.mubr.bf16.mxu0 %v2035
    %2999 = vmatmul.mubr.bf16.gmra.mrb[0].mxu0 %v2034
    %v3000 = vpop.f32.mrb[0].mxu0
    %v3001 = vadd.f32 %v2179, %v3000
    %v3002 = vpop.f32.mrb[0].mxu0
    %v3003 = vadd.f32 %v2183, %v3002
    %v3004 = vpop.f32.mrb[0].mxu0
    %v3005 = vadd.f32 %v2179, %v3004
    %v3006 = vpop.f32.mrb[0].mxu0
    %v3007 = vadd.f32 %v2183, %v3006
    %3008 = vmatprep.mubr.bf16.mxu0 %v2039
    %3009 = vmatmul.mubr.bf16.gmra.mrb[0].mxu0 %v2038
    %v3010 = vpop.f32.mrb[0].mxu0
    %v3011 = vadd.f32 %v2179, %v3010
    %v3012 = vpop.f32.mrb[0].mxu0
    %v3013 = vadd.f32 %v2183, %v3012
    %v3014 = vpop.f32.mrb[0].mxu0
    %v3015 = vadd.f32 %v2179, %v3014
    %v3016 = vpop.f32.mrb[0].mxu0
    %v3017 = vadd.f32 %v2183, %v3016
    %3018 = vmatprep.mubr.bf16.mxu0 %v2043
    %3019 = vmatmul.mubr.bf16.gmra.mrb[0].mxu0 %v2042
    %v3020 = vpop.f32.mrb[0].mxu0
    %v3021 = vadd.f32 %v2179, %v3020
    %v3022 = vpop.f32.mrb[0].mxu0
    %v3023 = vadd.f32 %v2183, %v3022
    %v3024 = vpop.f32.mrb[0].mxu0
    %v3025 = vadd.f32 %v2179, %v3024
    %v3026 = vpop.f32.mrb[0].mxu0
    %v3027 = vadd.f32 %v2183, %v3026
    %3028 = vdwg.mxu0
    %3029 = vmatprep.subr.bf16.mxu0 %v2645
    %3030 = vmatpush1.bf16.msra.mxu0 %v2644
    %3031 = vmatprep.subr.bf16.mxu0 %v2649
    %3032 = vmatpush1.bf16.msra.mxu0 %v2648
    %3033 = vmatprep.subr.bf16.mxu0 %v2653
    %3034 = vmatpush1.bf16.msra.mxu0 %v2652
    %3035 = vmatprep.subr.bf16.mxu0 %v2657
    %3036 = vmatpush1.bf16.msra.mxu0 %v2656
    %3037 = vmatprep.subr.bf16.mxu0 %v2661
    %3038 = vmatpush1.bf16.msra.mxu0 %v2660
    %3039 = vmatprep.subr.bf16.mxu0 %v2665
    %3040 = vmatpush1.bf16.msra.mxu0 %v2664
    %3041 = vmatprep.subr.bf16.mxu0 %v2669
    %3042 = vmatpush1.bf16.msra.mxu0 %v2668
    %3043 = vmatprep.subr.bf16.mxu0 %v2673
    %3044 = vmatpush1.bf16.msra.mxu0 %v2672
    %3045 = vmatprep.subr.bf16.mxu0 %v2677
    %3046 = vmatpush1.bf16.msra.mxu0 %v2676
    %3047 = vmatprep.subr.bf16.mxu0 %v2681
    %3048 = vmatpush1.bf16.msra.mxu0 %v2680
    %3049 = vmatprep.subr.bf16.mxu0 %v2685
    %3050 = vmatpush1.bf16.msra.mxu0 %v2684
    %3051 = vmatprep.subr.bf16.mxu0 %v2689
    %3052 = vmatpush1.bf16.msra.mxu0 %v2688
    %3053 = vmatprep.subr.bf16.mxu0 %v2693
    %3054 = vmatpush1.bf16.msra.mxu0 %v2692
    %3055 = vmatprep.subr.bf16.mxu0 %v2697
    %3056 = vmatpush1.bf16.msra.mxu0 %v2696
    %3057 = vmatprep.subr.bf16.mxu0 %v2701
    %3058 = vmatpush1.bf16.msra.mxu0 %v2700
    %3059 = vmatprep.subr.bf16.mxu0 %v2705
    %3060 = vmatpush1.bf16.msra.mxu0 %v2704
    %3061 = vmatprep.mubr.bf16.mxu0 %v1985
    %3062 = vmatmul.mubr.bf16.gmra.mrb[0].mxu0 %v1984
    %v3063 = vpop.f32.mrb[0].mxu0
    %v3064 = vadd.f32 %v2871, %v3063
    %v3065 = vpop.f32.mrb[0].mxu0
    %v3066 = vadd.f32 %v2873, %v3065
    %v3067 = vpop.f32.mrb[0].mxu0
    %v3068 = vadd.f32 %v2875, %v3067
    %v3069 = vpop.f32.mrb[0].mxu0
    %v3070 = vadd.f32 %v2877, %v3069
    %3071 = vmatprep.mubr.bf16.mxu0 %v1989
    %3072 = vmatmul.mubr.bf16.gmra.mrb[0].mxu0 %v1988
    %v3073 = vpop.f32.mrb[0].mxu0
    %v3074 = vadd.f32 %v2881, %v3073
    %v3075 = vpop.f32.mrb[0].mxu0
    %v3076 = vadd.f32 %v2883, %v3075
    %v3077 = vpop.f32.mrb[0].mxu0
    %v3078 = vadd.f32 %v2885, %v3077
    %v3079 = vpop.f32.mrb[0].mxu0
    %v3080 = vadd.f32 %v2887, %v3079
    %3081 = vmatprep.mubr.bf16.mxu0 %v1993
    %3082 = vmatmul.mubr.bf16.gmra.mrb[0].mxu0 %v1992
    %v3083 = vpop.f32.mrb[0].mxu0
    %v3084 = vadd.f32 %v2891, %v3083
    %v3085 = vpop.f32.mrb[0].mxu0
    %v3086 = vadd.f32 %v2893, %v3085
    %v3087 = vpop.f32.mrb[0].mxu0
    %v3088 = vadd.f32 %v2895, %v3087
    %v3089 = vpop.f32.mrb[0].mxu0
    %v3090 = vadd.f32 %v2897, %v3089
    %3091 = vmatprep.mubr.bf16.mxu0 %v1997
    %3092 = vmatmul.mubr.bf16.gmra.mrb[0].mxu0 %v1996
    %v3093 = vpop.f32.mrb[0].mxu0
    %v3094 = vadd.f32 %v2901, %v3093
    %v3095 = vpop.f32.mrb[0].mxu0
    %v3096 = vadd.f32 %v2903, %v3095
    %v3097 = vpop.f32.mrb[0].mxu0
    %v3098 = vadd.f32 %v2905, %v3097
    %v3099 = vpop.f32.mrb[0].mxu0
    %v3100 = vadd.f32 %v2907, %v3099
    %3101 = vmatprep.mubr.bf16.mxu0 %v2001
    %3102 = vmatmul.mubr.bf16.gmra.mrb[0].mxu0 %v2000
    %v3103 = vpop.f32.mrb[0].mxu0
    %v3104 = vadd.f32 %v2911, %v3103
    %v3105 = vpop.f32.mrb[0].mxu0
    %v3106 = vadd.f32 %v2913, %v3105
    %v3107 = vpop.f32.mrb[0].mxu0
    %v3108 = vadd.f32 %v2915, %v3107
    %v3109 = vpop.f32.mrb[0].mxu0
    %v3110 = vadd.f32 %v2917, %v3109
    %3111 = vmatprep.mubr.bf16.mxu0 %v2005
    %3112 = vmatmul.mubr.bf16.gmra.mrb[0].mxu0 %v2004
    %v3113 = vpop.f32.mrb[0].mxu0
    %v3114 = vadd.f32 %v2921, %v3113
    %v3115 = vpop.f32.mrb[0].mxu0
    %v3116 = vadd.f32 %v2923, %v3115
    %v3117 = vpop.f32.mrb[0].mxu0
    %v3118 = vadd.f32 %v2925, %v3117
    %v3119 = vpop.f32.mrb[0].mxu0
    %v3120 = vadd.f32 %v2927, %v3119
    %3121 = vmatprep.mubr.bf16.mxu0 %v2009
    %3122 = vmatmul.mubr.bf16.gmra.mrb[0].mxu0 %v2008
    %v3123 = vpop.f32.mrb[0].mxu0
    %v3124 = vadd.f32 %v2931, %v3123
    %v3125 = vpop.f32.mrb[0].mxu0
    %v3126 = vadd.f32 %v2933, %v3125
    %v3127 = vpop.f32.mrb[0].mxu0
    %v3128 = vadd.f32 %v2935, %v3127
    %v3129 = vpop.f32.mrb[0].mxu0
    %v3130 = vadd.f32 %v2937, %v3129
    %3131 = vmatprep.mubr.bf16.mxu0 %v2013
    %3132 = vmatmul.mubr.bf16.gmra.mrb[0].mxu0 %v2012
    %v3133 = vpop.f32.mrb[0].mxu0
    %v3134 = vadd.f32 %v2941, %v3133
    %v3135 = vpop.f32.mrb[0].mxu0
    %v3136 = vadd.f32 %v2943, %v3135
    %v3137 = vpop.f32.mrb[0].mxu0
    %v3138 = vadd.f32 %v2945, %v3137
    %v3139 = vpop.f32.mrb[0].mxu0
    %v3140 = vadd.f32 %v2947, %v3139
    %3141 = vmatprep.mubr.bf16.mxu0 %v2017
    %3142 = vmatmul.mubr.bf16.gmra.mrb[0].mxu0 %v2016
    %v3143 = vpop.f32.mrb[0].mxu0
    %v3144 = vadd.f32 %v2951, %v3143
    %v3145 = vpop.f32.mrb[0].mxu0
    %v3146 = vadd.f32 %v2953, %v3145
    %v3147 = vpop.f32.mrb[0].mxu0
    %v3148 = vadd.f32 %v2955, %v3147
    %v3149 = vpop.f32.mrb[0].mxu0
    %v3150 = vadd.f32 %v2957, %v3149
    %3151 = vmatprep.mubr.bf16.mxu0 %v2021
    %3152 = vmatmul.mubr.bf16.gmra.mrb[0].mxu0 %v2020
    %v3153 = vpop.f32.mrb[0].mxu0
    %v3154 = vadd.f32 %v2961, %v3153
    %v3155 = vpop.f32.mrb[0].mxu0
    %v3156 = vadd.f32 %v2963, %v3155
    %v3157 = vpop.f32.mrb[0].mxu0
    %v3158 = vadd.f32 %v2965, %v3157
    %v3159 = vpop.f32.mrb[0].mxu0
    %v3160 = vadd.f32 %v2967, %v3159
    %3161 = vmatprep.mubr.bf16.mxu0 %v2025
    %3162 = vmatmul.mubr.bf16.gmra.mrb[0].mxu0 %v2024
    %v3163 = vpop.f32.mrb[0].mxu0
    %v3164 = vadd.f32 %v2971, %v3163
    %v3165 = vpop.f32.mrb[0].mxu0
    %v3166 = vadd.f32 %v2973, %v3165
    %v3167 = vpop.f32.mrb[0].mxu0
    %v3168 = vadd.f32 %v2975, %v3167
    %v3169 = vpop.f32.mrb[0].mxu0
    %v3170 = vadd.f32 %v2977, %v3169
    %3171 = vmatprep.mubr.bf16.mxu0 %v2029
    %3172 = vmatmul.mubr.bf16.gmra.mrb[0].mxu0 %v2028
    %v3173 = vpop.f32.mrb[0].mxu0
    %v3174 = vadd.f32 %v2981, %v3173
    %v3175 = vpop.f32.mrb[0].mxu0
    %v3176 = vadd.f32 %v2983, %v3175
    %v3177 = vpop.f32.mrb[0].mxu0
    %v3178 = vadd.f32 %v2985, %v3177
    %v3179 = vpop.f32.mrb[0].mxu0
    %v3180 = vadd.f32 %v2987, %v3179
    %3181 = vmatprep.mubr.bf16.mxu0 %v2033
    %3182 = vmatmul.mubr.bf16.gmra.mrb[0].mxu0 %v2032
    %v3183 = vpop.f32.mrb[0].mxu0
    %v3184 = vadd.f32 %v2991, %v3183
    %v3185 = vpop.f32.mrb[0].mxu0
    %v3186 = vadd.f32 %v2993, %v3185
    %v3187 = vpop.f32.mrb[0].mxu0
    %v3188 = vadd.f32 %v2995, %v3187
    %v3189 = vpop.f32.mrb[0].mxu0
    %v3190 = vadd.f32 %v2997, %v3189
    %3191 = vmatprep.mubr.bf16.mxu0 %v2037
    %3192 = vmatmul.mubr.bf16.gmra.mrb[0].mxu0 %v2036
    %v3193 = vpop.f32.mrb[0].mxu0
    %v3194 = vadd.f32 %v3001, %v3193
    %v3195 = vpop.f32.mrb[0].mxu0
    %v3196 = vadd.f32 %v3003, %v3195
    %v3197 = vpop.f32.mrb[0].mxu0
    %v3198 = vadd.f32 %v3005, %v3197
    %v3199 = vpop.f32.mrb[0].mxu0
    %v3200 = vadd.f32 %v3007, %v3199
    %3201 = vmatprep.mubr.bf16.mxu0 %v2041
    %3202 = vmatmul.mubr.bf16.gmra.mrb[0].mxu0 %v2040
    %v3203 = vpop.f32.mrb[0].mxu0
    %v3204 = vadd.f32 %v3011, %v3203
    %v3205 = vpop.f32.mrb[0].mxu0
    %v3206 = vadd.f32 %v3013, %v3205
    %v3207 = vpop.f32.mrb[0].mxu0
    %v3208 = vadd.f32 %v3015, %v3207
    %v3209 = vpop.f32.mrb[0].mxu0
    %v3210 = vadd.f32 %v3017, %v3209
    %3211 = vmatprep.mubr.bf16.mxu0 %v2045
    %3212 = vmatmul.mubr.bf16.gmra.mrb[0].mxu0 %v2044
    %v3213 = vpop.f32.mrb[0].mxu0
    %v3214 = vadd.f32 %v3021, %v3213
    %v3215 = vpop.f32.mrb[0].mxu0
    %v3216 = vadd.f32 %v3023, %v3215
    %v3217 = vpop.f32.mrb[0].mxu0
    %v3218 = vadd.f32 %v3025, %v3217
    %v3219 = vpop.f32.mrb[0].mxu0
    %v3220 = vadd.f32 %v3027, %v3219
    %3221 = vdwg.mxu0
    %3222 = vmatprep.subr.bf16.mxu0 %v2583
    %3223 = vmatpush1.bf16.msra.mxu0 %v2582
    %3224 = vmatprep.subr.bf16.mxu0 %v2587
    %3225 = vmatpush1.bf16.msra.mxu0 %v2586
    %3226 = vmatprep.subr.bf16.mxu0 %v2591
    %3227 = vmatpush1.bf16.msra.mxu0 %v2590
    %3228 = vmatprep.subr.bf16.mxu0 %v2595
    %3229 = vmatpush1.bf16.msra.mxu0 %v2594
    %3230 = vmatprep.subr.bf16.mxu0 %v2599
    %3231 = vmatpush1.bf16.msra.mxu0 %v2598
    %3232 = vmatprep.subr.bf16.mxu0 %v2603
    %3233 = vmatpush1.bf16.msra.mxu0 %v2602
    %3234 = vmatprep.subr.bf16.mxu0 %v2607
    %3235 = vmatpush1.bf16.msra.mxu0 %v2606
    %3236 = vmatprep.subr.bf16.mxu0 %v2611
    %3237 = vmatpush1.bf16.msra.mxu0 %v2610
    %3238 = vmatprep.subr.bf16.mxu0 %v2615
    %3239 = vmatpush1.bf16.msra.mxu0 %v2614
    %3240 = vmatprep.subr.bf16.mxu0 %v2619
    %3241 = vmatpush1.bf16.msra.mxu0 %v2618
    %3242 = vmatprep.subr.bf16.mxu0 %v2623
    %3243 = vmatpush1.bf16.msra.mxu0 %v2622
    %3244 = vmatprep.subr.bf16.mxu0 %v2627
    %3245 = vmatpush1.bf16.msra.mxu0 %v2626
    %3246 = vmatprep.subr.bf16.mxu0 %v2631
    %3247 = vmatpush1.bf16.msra.mxu0 %v2630
    %3248 = vmatprep.subr.bf16.mxu0 %v2635
    %3249 = vmatpush1.bf16.msra.mxu0 %v2634
    %3250 = vmatprep.subr.bf16.mxu0 %v2639
    %3251 = vmatpush1.bf16.msra.mxu0 %v2638
    %3252 = vmatprep.subr.bf16.mxu0 %v2643
    %3253 = vmatpush1.bf16.msra.mxu0 %v2642
    %3254 = vmatprep.mubr.bf16.mxu0 %v1983
    %3255 = vmatmul.mubr.bf16.gmra.mrb[0].mxu0 %v1982
    %v3256 = vpop.f32.mrb[0].mxu0
    %v3257 = vadd.f32 %v2187, %v3256
    %v3258 = vpop.f32.mrb[0].mxu0
    %v3259 = vadd.f32 %v2191, %v3258
    %v3260 = vpop.f32.mrb[0].mxu0
    %v3261 = vadd.f32 %v2187, %v3260
    %v3262 = vpop.f32.mrb[0].mxu0
    %v3263 = vadd.f32 %v2191, %v3262
    %3264 = vmatprep.mubr.bf16.mxu0 %v1987
    %3265 = vmatmul.mubr.bf16.gmra.mrb[0].mxu0 %v1986
    %v3266 = vpop.f32.mrb[0].mxu0
    %v3267 = vadd.f32 %v2187, %v3266
    %v3268 = vpop.f32.mrb[0].mxu0
    %v3269 = vadd.f32 %v2191, %v3268
    %v3270 = vpop.f32.mrb[0].mxu0
    %v3271 = vadd.f32 %v2187, %v3270
    %v3272 = vpop.f32.mrb[0].mxu0
    %v3273 = vadd.f32 %v2191, %v3272
    %3274 = vmatprep.mubr.bf16.mxu0 %v1991
    %3275 = vmatmul.mubr.bf16.gmra.mrb[0].mxu0 %v1990
    %v3276 = vpop.f32.mrb[0].mxu0
    %v3277 = vadd.f32 %v2187, %v3276
    %v3278 = vpop.f32.mrb[0].mxu0
    %v3279 = vadd.f32 %v2191, %v3278
    %v3280 = vpop.f32.mrb[0].mxu0
    %v3281 = vadd.f32 %v2187, %v3280
    %v3282 = vpop.f32.mrb[0].mxu0
    %v3283 = vadd.f32 %v2191, %v3282
    %3284 = vmatprep.mubr.bf16.mxu0 %v1995
    %3285 = vmatmul.mubr.bf16.gmra.mrb[0].mxu0 %v1994
    %v3286 = vpop.f32.mrb[0].mxu0
    %v3287 = vadd.f32 %v2187, %v3286
    %v3288 = vpop.f32.mrb[0].mxu0
    %v3289 = vadd.f32 %v2191, %v3288
    %v3290 = vpop.f32.mrb[0].mxu0
    %v3291 = vadd.f32 %v2187, %v3290
    %v3292 = vpop.f32.mrb[0].mxu0
    %v3293 = vadd.f32 %v2191, %v3292
    %3294 = vmatprep.mubr.bf16.mxu0 %v1999
    %3295 = vmatmul.mubr.bf16.gmra.mrb[0].mxu0 %v1998
    %v3296 = vpop.f32.mrb[0].mxu0
    %v3297 = vadd.f32 %v2187, %v3296
    %v3298 = vpop.f32.mrb[0].mxu0
    %v3299 = vadd.f32 %v2191, %v3298
    %v3300 = vpop.f32.mrb[0].mxu0
    %v3301 = vadd.f32 %v2187, %v3300
    %v3302 = vpop.f32.mrb[0].mxu0
    %v3303 = vadd.f32 %v2191, %v3302
    %3304 = vmatprep.mubr.bf16.mxu0 %v2003
    %3305 = vmatmul.mubr.bf16.gmra.mrb[0].mxu0 %v2002
    %v3306 = vpop.f32.mrb[0].mxu0
    %v3307 = vadd.f32 %v2187, %v3306
    %v3308 = vpop.f32.mrb[0].mxu0
    %v3309 = vadd.f32 %v2191, %v3308
    %v3310 = vpop.f32.mrb[0].mxu0
    %v3311 = vadd.f32 %v2187, %v3310
    %v3312 = vpop.f32.mrb[0].mxu0
    %v3313 = vadd.f32 %v2191, %v3312
    %3314 = vmatprep.mubr.bf16.mxu0 %v2007
    %3315 = vmatmul.mubr.bf16.gmra.mrb[0].mxu0 %v2006
    %v3316 = vpop.f32.mrb[0].mxu0
    %v3317 = vadd.f32 %v2187, %v3316
    %v3318 = vpop.f32.mrb[0].mxu0
    %v3319 = vadd.f32 %v2191, %v3318
    %v3320 = vpop.f32.mrb[0].mxu0
    %v3321 = vadd.f32 %v2187, %v3320
    %v3322 = vpop.f32.mrb[0].mxu0
    %v3323 = vadd.f32 %v2191, %v3322
    %3324 = vmatprep.mubr.bf16.mxu0 %v2011
    %3325 = vmatmul.mubr.bf16.gmra.mrb[0].mxu0 %v2010
    %v3326 = vpop.f32.mrb[0].mxu0
    %v3327 = vadd.f32 %v2187, %v3326
    %v3328 = vpop.f32.mrb[0].mxu0
    %v3329 = vadd.f32 %v2191, %v3328
    %v3330 = vpop.f32.mrb[0].mxu0
    %v3331 = vadd.f32 %v2187, %v3330
    %v3332 = vpop.f32.mrb[0].mxu0
    %v3333 = vadd.f32 %v2191, %v3332
    %3334 = vmatprep.mubr.bf16.mxu0 %v2015
    %3335 = vmatmul.mubr.bf16.gmra.mrb[0].mxu0 %v2014
    %v3336 = vpop.f32.mrb[0].mxu0
    %v3337 = vadd.f32 %v2187, %v3336
    %v3338 = vpop.f32.mrb[0].mxu0
    %v3339 = vadd.f32 %v2191, %v3338
    %v3340 = vpop.f32.mrb[0].mxu0
    %v3341 = vadd.f32 %v2187, %v3340
    %v3342 = vpop.f32.mrb[0].mxu0
    %v3343 = vadd.f32 %v2191, %v3342
    %3344 = vmatprep.mubr.bf16.mxu0 %v2019
    %3345 = vmatmul.mubr.bf16.gmra.mrb[0].mxu0 %v2018
    %v3346 = vpop.f32.mrb[0].mxu0
    %v3347 = vadd.f32 %v2187, %v3346
    %v3348 = vpop.f32.mrb[0].mxu0
    %v3349 = vadd.f32 %v2191, %v3348
    %v3350 = vpop.f32.mrb[0].mxu0
    %v3351 = vadd.f32 %v2187, %v3350
    %v3352 = vpop.f32.mrb[0].mxu0
    %v3353 = vadd.f32 %v2191, %v3352
    %3354 = vmatprep.mubr.bf16.mxu0 %v2023
    %3355 = vmatmul.mubr.bf16.gmra.mrb[0].mxu0 %v2022
    %v3356 = vpop.f32.mrb[0].mxu0
    %v3357 = vadd.f32 %v2187, %v3356
    %v3358 = vpop.f32.mrb[0].mxu0
    %v3359 = vadd.f32 %v2191, %v3358
    %v3360 = vpop.f32.mrb[0].mxu0
    %v3361 = vadd.f32 %v2187, %v3360
    %v3362 = vpop.f32.mrb[0].mxu0
    %v3363 = vadd.f32 %v2191, %v3362
    %3364 = vmatprep.mubr.bf16.mxu0 %v2027
    %3365 = vmatmul.mubr.bf16.gmra.mrb[0].mxu0 %v2026
    %v3366 = vpop.f32.mrb[0].mxu0
    %v3367 = vadd.f32 %v2187, %v3366
    %v3368 = vpop.f32.mrb[0].mxu0
    %v3369 = vadd.f32 %v2191, %v3368
    %v3370 = vpop.f32.mrb[0].mxu0
    %v3371 = vadd.f32 %v2187, %v3370
    %v3372 = vpop.f32.mrb[0].mxu0
    %v3373 = vadd.f32 %v2191, %v3372
    %3374 = vmatprep.mubr.bf16.mxu0 %v2031
    %3375 = vmatmul.mubr.bf16.gmra.mrb[0].mxu0 %v2030
    %v3376 = vpop.f32.mrb[0].mxu0
    %v3377 = vadd.f32 %v2187, %v3376
    %v3378 = vpop.f32.mrb[0].mxu0
    %v3379 = vadd.f32 %v2191, %v3378
    %v3380 = vpop.f32.mrb[0].mxu0
    %v3381 = vadd.f32 %v2187, %v3380
    %v3382 = vpop.f32.mrb[0].mxu0
    %v3383 = vadd.f32 %v2191, %v3382
    %3384 = vmatprep.mubr.bf16.mxu0 %v2035
    %3385 = vmatmul.mubr.bf16.gmra.mrb[0].mxu0 %v2034
    %v3386 = vpop.f32.mrb[0].mxu0
    %v3387 = vadd.f32 %v2187, %v3386
    %v3388 = vpop.f32.mrb[0].mxu0
    %v3389 = vadd.f32 %v2191, %v3388
    %v3390 = vpop.f32.mrb[0].mxu0
    %v3391 = vadd.f32 %v2187, %v3390
    %v3392 = vpop.f32.mrb[0].mxu0
    %v3393 = vadd.f32 %v2191, %v3392
    %3394 = vmatprep.mubr.bf16.mxu0 %v2039
    %3395 = vmatmul.mubr.bf16.gmra.mrb[0].mxu0 %v2038
    %v3396 = vpop.f32.mrb[0].mxu0
    %v3397 = vadd.f32 %v2187, %v3396
    %v3398 = vpop.f32.mrb[0].mxu0
    %v3399 = vadd.f32 %v2191, %v3398
    %v3400 = vpop.f32.mrb[0].mxu0
    %v3401 = vadd.f32 %v2187, %v3400
    %v3402 = vpop.f32.mrb[0].mxu0
    %v3403 = vadd.f32 %v2191, %v3402
    %3404 = vmatprep.mubr.bf16.mxu0 %v2043
    %3405 = vmatmul.mubr.bf16.gmra.mrb[0].mxu0 %v2042
    %v3406 = vpop.f32.mrb[0].mxu0
    %v3407 = vadd.f32 %v2187, %v3406
    %v3408 = vpop.f32.mrb[0].mxu0
    %v3409 = vadd.f32 %v2191, %v3408
    %v3410 = vpop.f32.mrb[0].mxu0
    %v3411 = vadd.f32 %v2187, %v3410
    %v3412 = vpop.f32.mrb[0].mxu0
    %v3413 = vadd.f32 %v2191, %v3412
    %3414 = vdwg.mxu0
    %3415 = vmatprep.subr.bf16.mxu0 %v2647
    %3416 = vmatpush1.bf16.msra.mxu0 %v2646
    %3417 = vmatprep.subr.bf16.mxu0 %v2651
    %3418 = vmatpush1.bf16.msra.mxu0 %v2650
    %3419 = vmatprep.subr.bf16.mxu0 %v2655
    %3420 = vmatpush1.bf16.msra.mxu0 %v2654
    %3421 = vmatprep.subr.bf16.mxu0 %v2659
    %3422 = vmatpush1.bf16.msra.mxu0 %v2658
    %3423 = vmatprep.subr.bf16.mxu0 %v2663
    %3424 = vmatpush1.bf16.msra.mxu0 %v2662
    %3425 = vmatprep.subr.bf16.mxu0 %v2667
    %3426 = vmatpush1.bf16.msra.mxu0 %v2666
    %3427 = vmatprep.subr.bf16.mxu0 %v2671
    %3428 = vmatpush1.bf16.msra.mxu0 %v2670
    %3429 = vmatprep.subr.bf16.mxu0 %v2675
    %3430 = vmatpush1.bf16.msra.mxu0 %v2674
    %3431 = vmatprep.subr.bf16.mxu0 %v2679
    %3432 = vmatpush1.bf16.msra.mxu0 %v2678
    %3433 = vmatprep.subr.bf16.mxu0 %v2683
    %3434 = vmatpush1.bf16.msra.mxu0 %v2682
    %3435 = vmatprep.subr.bf16.mxu0 %v2687
    %3436 = vmatpush1.bf16.msra.mxu0 %v2686
    %3437 = vmatprep.subr.bf16.mxu0 %v2691
    %3438 = vmatpush1.bf16.msra.mxu0 %v2690
    %3439 = vmatprep.subr.bf16.mxu0 %v2695
    %3440 = vmatpush1.bf16.msra.mxu0 %v2694
    %3441 = vmatprep.subr.bf16.mxu0 %v2699
    %3442 = vmatpush1.bf16.msra.mxu0 %v2698
    %3443 = vmatprep.subr.bf16.mxu0 %v2703
    %3444 = vmatpush1.bf16.msra.mxu0 %v2702
    %3445 = vmatprep.subr.bf16.mxu0 %v2707
    %3446 = vmatpush1.bf16.msra.mxu0 %v2706
    %3447 = vmatprep.mubr.bf16.mxu0 %v1985
    %3448 = vmatmul.mubr.bf16.gmra.mrb[0].mxu0 %v1984
    %v3449 = vpop.f32.mrb[0].mxu0
    %v3450 = vadd.f32 %v3257, %v3449
    %v3451 = vpop.f32.mrb[0].mxu0
    %v3452 = vadd.f32 %v3259, %v3451
    %v3453 = vpop.f32.mrb[0].mxu0
    %v3454 = vadd.f32 %v3261, %v3453
    %v3455 = vpop.f32.mrb[0].mxu0
    %v3456 = vadd.f32 %v3263, %v3455
    %3457 = vmatprep.mubr.bf16.mxu0 %v1989
    %3458 = vmatmul.mubr.bf16.gmra.mrb[0].mxu0 %v1988
    %v3459 = vpop.f32.mrb[0].mxu0
    %v3460 = vadd.f32 %v3267, %v3459
    %v3461 = vpop.f32.mrb[0].mxu0
    %v3462 = vadd.f32 %v3269, %v3461
    %v3463 = vpop.f32.mrb[0].mxu0
    %v3464 = vadd.f32 %v3271, %v3463
    %v3465 = vpop.f32.mrb[0].mxu0
    %v3466 = vadd.f32 %v3273, %v3465
    %3467 = vmatprep.mubr.bf16.mxu0 %v1993
    %3468 = vmatmul.mubr.bf16.gmra.mrb[0].mxu0 %v1992
    %v3469 = vpop.f32.mrb[0].mxu0
    %v3470 = vadd.f32 %v3277, %v3469
    %v3471 = vpop.f32.mrb[0].mxu0
    %v3472 = vadd.f32 %v3279, %v3471
    %v3473 = vpop.f32.mrb[0].mxu0
    %v3474 = vadd.f32 %v3281, %v3473
    %v3475 = vpop.f32.mrb[0].mxu0
    %v3476 = vadd.f32 %v3283, %v3475
    %3477 = vmatprep.mubr.bf16.mxu0 %v1997
    %3478 = vmatmul.mubr.bf16.gmra.mrb[0].mxu0 %v1996
    %v3479 = vpop.f32.mrb[0].mxu0
    %v3480 = vadd.f32 %v3287, %v3479
    %v3481 = vpop.f32.mrb[0].mxu0
    %v3482 = vadd.f32 %v3289, %v3481
    %v3483 = vpop.f32.mrb[0].mxu0
    %v3484 = vadd.f32 %v3291, %v3483
    %v3485 = vpop.f32.mrb[0].mxu0
    %v3486 = vadd.f32 %v3293, %v3485
    %3487 = vmatprep.mubr.bf16.mxu0 %v2001
    %3488 = vmatmul.mubr.bf16.gmra.mrb[0].mxu0 %v2000
    %v3489 = vpop.f32.mrb[0].mxu0
    %v3490 = vadd.f32 %v3297, %v3489
    %v3491 = vpop.f32.mrb[0].mxu0
    %v3492 = vadd.f32 %v3299, %v3491
    %v3493 = vpop.f32.mrb[0].mxu0
    %v3494 = vadd.f32 %v3301, %v3493
    %v3495 = vpop.f32.mrb[0].mxu0
    %v3496 = vadd.f32 %v3303, %v3495
    %3497 = vmatprep.mubr.bf16.mxu0 %v2005
    %3498 = vmatmul.mubr.bf16.gmra.mrb[0].mxu0 %v2004
    %v3499 = vpop.f32.mrb[0].mxu0
    %v3500 = vadd.f32 %v3307, %v3499
    %v3501 = vpop.f32.mrb[0].mxu0
    %v3502 = vadd.f32 %v3309, %v3501
    %v3503 = vpop.f32.mrb[0].mxu0
    %v3504 = vadd.f32 %v3311, %v3503
    %v3505 = vpop.f32.mrb[0].mxu0
    %v3506 = vadd.f32 %v3313, %v3505
    %3507 = vmatprep.mubr.bf16.mxu0 %v2009
    %3508 = vmatmul.mubr.bf16.gmra.mrb[0].mxu0 %v2008
    %v3509 = vpop.f32.mrb[0].mxu0
    %v3510 = vadd.f32 %v3317, %v3509
    %v3511 = vpop.f32.mrb[0].mxu0
    %v3512 = vadd.f32 %v3319, %v3511
    %v3513 = vpop.f32.mrb[0].mxu0
    %v3514 = vadd.f32 %v3321, %v3513
    %v3515 = vpop.f32.mrb[0].mxu0
    %v3516 = vadd.f32 %v3323, %v3515
    %3517 = vmatprep.mubr.bf16.mxu0 %v2013
    %3518 = vmatmul.mubr.bf16.gmra.mrb[0].mxu0 %v2012
    %v3519 = vpop.f32.mrb[0].mxu0
    %v3520 = vadd.f32 %v3327, %v3519
    %v3521 = vpop.f32.mrb[0].mxu0
    %v3522 = vadd.f32 %v3329, %v3521
    %v3523 = vpop.f32.mrb[0].mxu0
    %v3524 = vadd.f32 %v3331, %v3523
    %v3525 = vpop.f32.mrb[0].mxu0
    %v3526 = vadd.f32 %v3333, %v3525
    %3527 = vmatprep.mubr.bf16.mxu0 %v2017
    %3528 = vmatmul.mubr.bf16.gmra.mrb[0].mxu0 %v2016
    %v3529 = vpop.f32.mrb[0].mxu0
    %v3530 = vadd.f32 %v3337, %v3529
    %v3531 = vpop.f32.mrb[0].mxu0
    %v3532 = vadd.f32 %v3339, %v3531
    %v3533 = vpop.f32.mrb[0].mxu0
    %v3534 = vadd.f32 %v3341, %v3533
    %v3535 = vpop.f32.mrb[0].mxu0
    %v3536 = vadd.f32 %v3343, %v3535
    %3537 = vmatprep.mubr.bf16.mxu0 %v2021
    %3538 = vmatmul.mubr.bf16.gmra.mrb[0].mxu0 %v2020
    %v3539 = vpop.f32.mrb[0].mxu0
    %v3540 = vadd.f32 %v3347, %v3539
    %v3541 = vpop.f32.mrb[0].mxu0
    %v3542 = vadd.f32 %v3349, %v3541
    %v3543 = vpop.f32.mrb[0].mxu0
    %v3544 = vadd.f32 %v3351, %v3543
    %v3545 = vpop.f32.mrb[0].mxu0
    %v3546 = vadd.f32 %v3353, %v3545
    %3547 = vmatprep.mubr.bf16.mxu0 %v2025
    %3548 = vmatmul.mubr.bf16.gmra.mrb[0].mxu0 %v2024
    %v3549 = vpop.f32.mrb[0].mxu0
    %v3550 = vadd.f32 %v3357, %v3549
    %v3551 = vpop.f32.mrb[0].mxu0
    %v3552 = vadd.f32 %v3359, %v3551
    %v3553 = vpop.f32.mrb[0].mxu0
    %v3554 = vadd.f32 %v3361, %v3553
    %v3555 = vpop.f32.mrb[0].mxu0
    %v3556 = vadd.f32 %v3363, %v3555
    %3557 = vmatprep.mubr.bf16.mxu0 %v2029
    %3558 = vmatmul.mubr.bf16.gmra.mrb[0].mxu0 %v2028
    %v3559 = vpop.f32.mrb[0].mxu0
    %v3560 = vadd.f32 %v3367, %v3559
    %v3561 = vpop.f32.mrb[0].mxu0
    %v3562 = vadd.f32 %v3369, %v3561
    %v3563 = vpop.f32.mrb[0].mxu0
    %v3564 = vadd.f32 %v3371, %v3563
    %v3565 = vpop.f32.mrb[0].mxu0
    %v3566 = vadd.f32 %v3373, %v3565
    %3567 = vmatprep.mubr.bf16.mxu0 %v2033
    %3568 = vmatmul.mubr.bf16.gmra.mrb[0].mxu0 %v2032
    %v3569 = vpop.f32.mrb[0].mxu0
    %v3570 = vadd.f32 %v3377, %v3569
    %v3571 = vpop.f32.mrb[0].mxu0
    %v3572 = vadd.f32 %v3379, %v3571
    %v3573 = vpop.f32.mrb[0].mxu0
    %v3574 = vadd.f32 %v3381, %v3573
    %v3575 = vpop.f32.mrb[0].mxu0
    %v3576 = vadd.f32 %v3383, %v3575
    %3577 = vmatprep.mubr.bf16.mxu0 %v2037
    %3578 = vmatmul.mubr.bf16.gmra.mrb[0].mxu0 %v2036
    %v3579 = vpop.f32.mrb[0].mxu0
    %v3580 = vadd.f32 %v3387, %v3579
    %v3581 = vpop.f32.mrb[0].mxu0
    %v3582 = vadd.f32 %v3389, %v3581
    %v3583 = vpop.f32.mrb[0].mxu0
    %v3584 = vadd.f32 %v3391, %v3583
    %v3585 = vpop.f32.mrb[0].mxu0
    %v3586 = vadd.f32 %v3393, %v3585
    %3587 = vmatprep.mubr.bf16.mxu0 %v2041
    %3588 = vmatmul.mubr.bf16.gmra.mrb[0].mxu0 %v2040
    %v3589 = vpop.f32.mrb[0].mxu0
    %v3590 = vadd.f32 %v3397, %v3589
    %v3591 = vpop.f32.mrb[0].mxu0
    %v3592 = vadd.f32 %v3399, %v3591
    %v3593 = vpop.f32.mrb[0].mxu0
    %v3594 = vadd.f32 %v3401, %v3593
    %v3595 = vpop.f32.mrb[0].mxu0
    %v3596 = vadd.f32 %v3403, %v3595
    %3597 = vmatprep.mubr.bf16.mxu0 %v2045
    %3598 = vmatmul.mubr.bf16.gmra.mrb[0].mxu0 %v2044
    %v3599 = vpop.f32.mrb[0].mxu0
    %v3600 = vadd.f32 %v3407, %v3599
    %v3601 = vpop.f32.mrb[0].mxu0
    %v3602 = vadd.f32 %v3409, %v3601
    %v3603 = vpop.f32.mrb[0].mxu0
    %v3604 = vadd.f32 %v3411, %v3603
    %v3605 = vpop.f32.mrb[0].mxu0
    %v3606 = vadd.f32 %v3413, %v3605
    %3607 = vdwg.mxu0
    %v3608 = vxor.u32 %v3064, 2147483648
    %v3609 = vxor.u32 %v3066, 2147483648
    %v3610 = vxor.u32 %v3450, 2147483648
    %v3611 = vxor.u32 %v3452, 2147483648
    %v3612 = vxor.u32 %v3068, 2147483648
    %v3613 = vxor.u32 %v3070, 2147483648
    %v3614 = vxor.u32 %v3454, 2147483648
    %v3615 = vxor.u32 %v3456, 2147483648
    %v3616 = vxor.u32 %v3074, 2147483648
    %v3617 = vxor.u32 %v3076, 2147483648
    %v3618 = vxor.u32 %v3460, 2147483648
    %v3619 = vxor.u32 %v3462, 2147483648
    %v3620 = vxor.u32 %v3078, 2147483648
    %v3621 = vxor.u32 %v3080, 2147483648
    %v3622 = vxor.u32 %v3464, 2147483648
    %v3623 = vxor.u32 %v3466, 2147483648
    %v3624 = vxor.u32 %v3084, 2147483648
    %v3625 = vxor.u32 %v3086, 2147483648
    %v3626 = vxor.u32 %v3470, 2147483648
    %v3627 = vxor.u32 %v3472, 2147483648
    %v3628 = vxor.u32 %v3088, 2147483648
    %v3629 = vxor.u32 %v3090, 2147483648
    %v3630 = vxor.u32 %v3474, 2147483648
    %v3631 = vxor.u32 %v3476, 2147483648
    %v3632 = vxor.u32 %v3094, 2147483648
    %v3633 = vxor.u32 %v3096, 2147483648
    %v3634 = vxor.u32 %v3480, 2147483648
    %v3635 = vxor.u32 %v3482, 2147483648
    %v3636 = vxor.u32 %v3098, 2147483648
    %v3637 = vxor.u32 %v3100, 2147483648
    %v3638 = vxor.u32 %v3484, 2147483648
    %v3639 = vxor.u32 %v3486, 2147483648
    %v3640 = vxor.u32 %v3104, 2147483648
    %v3641 = vxor.u32 %v3106, 2147483648
    %v3642 = vxor.u32 %v3490, 2147483648
    %v3643 = vxor.u32 %v3492, 2147483648
    %v3644 = vxor.u32 %v3108, 2147483648
    %v3645 = vxor.u32 %v3110, 2147483648
    %v3646 = vxor.u32 %v3494, 2147483648
    %v3647 = vxor.u32 %v3496, 2147483648
    %v3648 = vxor.u32 %v3114, 2147483648
    %v3649 = vxor.u32 %v3116, 2147483648
    %v3650 = vxor.u32 %v3500, 2147483648
    %v3651 = vxor.u32 %v3502, 2147483648
    %v3652 = vxor.u32 %v3118, 2147483648
    %v3653 = vxor.u32 %v3120, 2147483648
    %v3654 = vxor.u32 %v3504, 2147483648
    %v3655 = vxor.u32 %v3506, 2147483648
    %v3656 = vxor.u32 %v3124, 2147483648
    %v3657 = vxor.u32 %v3126, 2147483648
    %v3658 = vxor.u32 %v3510, 2147483648
    %v3659 = vxor.u32 %v3512, 2147483648
    %v3660 = vxor.u32 %v3128, 2147483648
    %v3661 = vxor.u32 %v3130, 2147483648
    %v3662 = vxor.u32 %v3514, 2147483648
    %v3663 = vxor.u32 %v3516, 2147483648
    %v3664 = vxor.u32 %v3134, 2147483648
    %v3665 = vxor.u32 %v3136, 2147483648
    %v3666 = vxor.u32 %v3520, 2147483648
    %v3667 = vxor.u32 %v3522, 2147483648
    %v3668 = vxor.u32 %v3138, 2147483648
    %v3669 = vxor.u32 %v3140, 2147483648
    %v3670 = vxor.u32 %v3524, 2147483648
    %v3671 = vxor.u32 %v3526, 2147483648
    %v3672 = vxor.u32 %v3144, 2147483648
    %v3673 = vxor.u32 %v3146, 2147483648
    %v3674 = vxor.u32 %v3530, 2147483648
    %v3675 = vxor.u32 %v3532, 2147483648
    %v3676 = vxor.u32 %v3148, 2147483648
    %v3677 = vxor.u32 %v3150, 2147483648
    %v3678 = vxor.u32 %v3534, 2147483648
    %v3679 = vxor.u32 %v3536, 2147483648
    %v3680 = vxor.u32 %v3154, 2147483648
    %v3681 = vxor.u32 %v3156, 2147483648
    %v3682 = vxor.u32 %v3540, 2147483648
    %v3683 = vxor.u32 %v3542, 2147483648
    %v3684 = vxor.u32 %v3158, 2147483648
    %v3685 = vxor.u32 %v3160, 2147483648
    %v3686 = vxor.u32 %v3544, 2147483648
    %v3687 = vxor.u32 %v3546, 2147483648
    %v3688 = vxor.u32 %v3164, 2147483648
    %v3689 = vxor.u32 %v3166, 2147483648
    %v3690 = vxor.u32 %v3550, 2147483648
    %v3691 = vxor.u32 %v3552, 2147483648
    %v3692 = vxor.u32 %v3168, 2147483648
    %v3693 = vxor.u32 %v3170, 2147483648
    %v3694 = vxor.u32 %v3554, 2147483648
    %v3695 = vxor.u32 %v3556, 2147483648
    %v3696 = vxor.u32 %v3174, 2147483648
    %v3697 = vxor.u32 %v3176, 2147483648
    %v3698 = vxor.u32 %v3560, 2147483648
    %v3699 = vxor.u32 %v3562, 2147483648
    %v3700 = vxor.u32 %v3178, 2147483648
    %v3701 = vxor.u32 %v3180, 2147483648
    %v3702 = vxor.u32 %v3564, 2147483648
    %v3703 = vxor.u32 %v3566, 2147483648
    %v3704 = vxor.u32 %v3184, 2147483648
    %v3705 = vxor.u32 %v3186, 2147483648
    %v3706 = vxor.u32 %v3570, 2147483648
    %v3707 = vxor.u32 %v3572, 2147483648
    %v3708 = vxor.u32 %v3188, 2147483648
    %v3709 = vxor.u32 %v3190, 2147483648
    %v3710 = vxor.u32 %v3574, 2147483648
    %v3711 = vxor.u32 %v3576, 2147483648
    %v3712 = vxor.u32 %v3194, 2147483648
    %v3713 = vxor.u32 %v3196, 2147483648
    %v3714 = vxor.u32 %v3580, 2147483648
    %v3715 = vxor.u32 %v3582, 2147483648
    %v3716 = vxor.u32 %v3198, 2147483648
    %v3717 = vxor.u32 %v3200, 2147483648
    %v3718 = vxor.u32 %v3584, 2147483648
    %v3719 = vxor.u32 %v3586, 2147483648
    %v3720 = vxor.u32 %v3204, 2147483648
    %v3721 = vxor.u32 %v3206, 2147483648
    %v3722 = vxor.u32 %v3590, 2147483648
    %v3723 = vxor.u32 %v3592, 2147483648
    %v3724 = vxor.u32 %v3208, 2147483648
    %v3725 = vxor.u32 %v3210, 2147483648
    %v3726 = vxor.u32 %v3594, 2147483648
    %v3727 = vxor.u32 %v3596, 2147483648
    %v3728 = vxor.u32 %v3214, 2147483648
    %v3729 = vxor.u32 %v3216, 2147483648
    %v3730 = vxor.u32 %v3600, 2147483648
    %v3731 = vxor.u32 %v3602, 2147483648
    %v3732 = vxor.u32 %v3218, 2147483648
    %v3733 = vxor.u32 %v3220, 2147483648
    %v3734 = vxor.u32 %v3604, 2147483648
    %v3735 = vxor.u32 %v3606, 2147483648
    %v3736 = vmul.f32 %v3608, 1.442695
    %v3737 = vpow.pop %v3736
    %v3738 = vmul.f32 %v3609, 1.442695
    %v3739 = vpow.pop %v3738
    %v3740 = vmul.f32 %v3610, 1.442695
    %v3741 = vpow.pop %v3740
    %v3742 = vmul.f32 %v3611, 1.442695
    %v3743 = vpow.pop %v3742
    %v3744 = vmul.f32 %v3612, 1.442695
    %v3745 = vpow.pop %v3744
    %v3746 = vmul.f32 %v3613, 1.442695
    %v3747 = vpow.pop %v3746
    %v3748 = vmul.f32 %v3614, 1.442695
    %v3749 = vpow.pop %v3748
    %v3750 = vmul.f32 %v3615, 1.442695
    %v3751 = vpow.pop %v3750
    %v3752 = vmul.f32 %v3616, 1.442695
    %v3753 = vpow.pop %v3752
    %v3754 = vmul.f32 %v3617, 1.442695
    %v3755 = vpow.pop %v3754
    %v3756 = vmul.f32 %v3618, 1.442695
    %v3757 = vpow.pop %v3756
    %v3758 = vmul.f32 %v3619, 1.442695
    %v3759 = vpow.pop %v3758
    %v3760 = vmul.f32 %v3620, 1.442695
    %v3761 = vpow.pop %v3760
    %v3762 = vmul.f32 %v3621, 1.442695
    %v3763 = vpow.pop %v3762
    %v3764 = vmul.f32 %v3622, 1.442695
    %v3765 = vpow.pop %v3764
    %v3766 = vmul.f32 %v3623, 1.442695
    %v3767 = vpow.pop %v3766
    %v3768 = vmul.f32 %v3624, 1.442695
    %v3769 = vpow.pop %v3768
    %v3770 = vmul.f32 %v3625, 1.442695
    %v3771 = vpow.pop %v3770
    %v3772 = vmul.f32 %v3626, 1.442695
    %v3773 = vpow.pop %v3772
    %v3774 = vmul.f32 %v3627, 1.442695
    %v3775 = vpow.pop %v3774
    %v3776 = vmul.f32 %v3628, 1.442695
    %v3777 = vpow.pop %v3776
    %v3778 = vmul.f32 %v3629, 1.442695
    %v3779 = vpow.pop %v3778
    %v3780 = vmul.f32 %v3630, 1.442695
    %v3781 = vpow.pop %v3780
    %v3782 = vmul.f32 %v3631, 1.442695
    %v3783 = vpow.pop %v3782
    %v3784 = vmul.f32 %v3632, 1.442695
    %v3785 = vpow.pop %v3784
    %v3786 = vmul.f32 %v3633, 1.442695
    %v3787 = vpow.pop %v3786
    %v3788 = vmul.f32 %v3634, 1.442695
    %v3789 = vpow.pop %v3788
    %v3790 = vmul.f32 %v3635, 1.442695
    %v3791 = vpow.pop %v3790
    %v3792 = vmul.f32 %v3636, 1.442695
    %v3793 = vpow.pop %v3792
    %v3794 = vmul.f32 %v3637, 1.442695
    %v3795 = vpow.pop %v3794
    %v3796 = vmul.f32 %v3638, 1.442695
    %v3797 = vpow.pop %v3796
    %v3798 = vmul.f32 %v3639, 1.442695
    %v3799 = vpow.pop %v3798
    %v3800 = vmul.f32 %v3640, 1.442695
    %v3801 = vpow.pop %v3800
    %v3802 = vmul.f32 %v3641, 1.442695
    %v3803 = vpow.pop %v3802
    %v3804 = vmul.f32 %v3642, 1.442695
    %v3805 = vpow.pop %v3804
    %v3806 = vmul.f32 %v3643, 1.442695
    %v3807 = vpow.pop %v3806
    %v3808 = vmul.f32 %v3644, 1.442695
    %v3809 = vpow.pop %v3808
    %v3810 = vmul.f32 %v3645, 1.442695
    %v3811 = vpow.pop %v3810
    %v3812 = vmul.f32 %v3646, 1.442695
    %v3813 = vpow.pop %v3812
    %v3814 = vmul.f32 %v3647, 1.442695
    %v3815 = vpow.pop %v3814
    %v3816 = vmul.f32 %v3648, 1.442695
    %v3817 = vpow.pop %v3816
    %v3818 = vmul.f32 %v3649, 1.442695
    %v3819 = vpow.pop %v3818
    %v3820 = vmul.f32 %v3650, 1.442695
    %v3821 = vpow.pop %v3820
    %v3822 = vmul.f32 %v3651, 1.442695
    %v3823 = vpow.pop %v3822
    %v3824 = vmul.f32 %v3652, 1.442695
    %v3825 = vpow.pop %v3824
    %v3826 = vmul.f32 %v3653, 1.442695
    %v3827 = vpow.pop %v3826
    %v3828 = vmul.f32 %v3654, 1.442695
    %v3829 = vpow.pop %v3828
    %v3830 = vmul.f32 %v3655, 1.442695
    %v3831 = vpow.pop %v3830
    %v3832 = vmul.f32 %v3656, 1.442695
    %v3833 = vpow.pop %v3832
    %v3834 = vmul.f32 %v3657, 1.442695
    %v3835 = vpow.pop %v3834
    %v3836 = vmul.f32 %v3658, 1.442695
    %v3837 = vpow.pop %v3836
    %v3838 = vmul.f32 %v3659, 1.442695
    %v3839 = vpow.pop %v3838
    %v3840 = vmul.f32 %v3660, 1.442695
    %v3841 = vpow.pop %v3840
    %v3842 = vmul.f32 %v3661, 1.442695
    %v3843 = vpow.pop %v3842
    %v3844 = vmul.f32 %v3662, 1.442695
    %v3845 = vpow.pop %v3844
    %v3846 = vmul.f32 %v3663, 1.442695
    %v3847 = vpow.pop %v3846
    %v3848 = vmul.f32 %v3664, 1.442695
    %v3849 = vpow.pop %v3848
    %v3850 = vmul.f32 %v3665, 1.442695
    %v3851 = vpow.pop %v3850
    %v3852 = vmul.f32 %v3666, 1.442695
    %v3853 = vpow.pop %v3852
    %v3854 = vmul.f32 %v3667, 1.442695
    %v3855 = vpow.pop %v3854
    %v3856 = vmul.f32 %v3668, 1.442695
    %v3857 = vpow.pop %v3856
    %v3858 = vmul.f32 %v3669, 1.442695
    %v3859 = vpow.pop %v3858
    %v3860 = vmul.f32 %v3670, 1.442695
    %v3861 = vpow.pop %v3860
    %v3862 = vmul.f32 %v3671, 1.442695
    %v3863 = vpow.pop %v3862
    %v3864 = vmul.f32 %v3672, 1.442695
    %v3865 = vpow.pop %v3864
    %v3866 = vmul.f32 %v3673, 1.442695
    %v3867 = vpow.pop %v3866
    %v3868 = vmul.f32 %v3674, 1.442695
    %v3869 = vpow.pop %v3868
    %v3870 = vmul.f32 %v3675, 1.442695
    %v3871 = vpow.pop %v3870
    %v3872 = vmul.f32 %v3676, 1.442695
    %v3873 = vpow.pop %v3872
    %v3874 = vmul.f32 %v3677, 1.442695
    %v3875 = vpow.pop %v3874
    %v3876 = vmul.f32 %v3678, 1.442695
    %v3877 = vpow.pop %v3876
    %v3878 = vmul.f32 %v3679, 1.442695
    %v3879 = vpow.pop %v3878
    %v3880 = vmul.f32 %v3680, 1.442695
    %v3881 = vpow.pop %v3880
    %v3882 = vmul.f32 %v3681, 1.442695
    %v3883 = vpow.pop %v3882
    %v3884 = vmul.f32 %v3682, 1.442695
    %v3885 = vpow.pop %v3884
    %v3886 = vmul.f32 %v3683, 1.442695
    %v3887 = vpow.pop %v3886
    %v3888 = vmul.f32 %v3684, 1.442695
    %v3889 = vpow.pop %v3888
    %v3890 = vmul.f32 %v3685, 1.442695
    %v3891 = vpow.pop %v3890
    %v3892 = vmul.f32 %v3686, 1.442695
    %v3893 = vpow.pop %v3892
    %v3894 = vmul.f32 %v3687, 1.442695
    %v3895 = vpow.pop %v3894
    %v3896 = vmul.f32 %v3688, 1.442695
    %v3897 = vpow.pop %v3896
    %v3898 = vmul.f32 %v3689, 1.442695
    %v3899 = vpow.pop %v3898
    %v3900 = vmul.f32 %v3690, 1.442695
    %v3901 = vpow.pop %v3900
    %v3902 = vmul.f32 %v3691, 1.442695
    %v3903 = vpow.pop %v3902
    %v3904 = vmul.f32 %v3692, 1.442695
    %v3905 = vpow.pop %v3904
    %v3906 = vmul.f32 %v3693, 1.442695
    %v3907 = vpow.pop %v3906
    %v3908 = vmul.f32 %v3694, 1.442695
    %v3909 = vpow.pop %v3908
    %v3910 = vmul.f32 %v3695, 1.442695
    %v3911 = vpow.pop %v3910
    %v3912 = vmul.f32 %v3696, 1.442695
    %v3913 = vpow.pop %v3912
    %v3914 = vmul.f32 %v3697, 1.442695
    %v3915 = vpow.pop %v3914
    %v3916 = vmul.f32 %v3698, 1.442695
    %v3917 = vpow.pop %v3916
    %v3918 = vmul.f32 %v3699, 1.442695
    %v3919 = vpow.pop %v3918
    %v3920 = vmul.f32 %v3700, 1.442695
    %v3921 = vpow.pop %v3920
    %v3922 = vmul.f32 %v3701, 1.442695
    %v3923 = vpow.pop %v3922
    %v3924 = vmul.f32 %v3702, 1.442695
    %v3925 = vpow.pop %v3924
    %v3926 = vmul.f32 %v3703, 1.442695
    %v3927 = vpow.pop %v3926
    %v3928 = vmul.f32 %v3704, 1.442695
    %v3929 = vpow.pop %v3928
    %v3930 = vmul.f32 %v3705, 1.442695
    %v3931 = vpow.pop %v3930
    %v3932 = vmul.f32 %v3706, 1.442695
    %v3933 = vpow.pop %v3932
    %v3934 = vmul.f32 %v3707, 1.442695
    %v3935 = vpow.pop %v3934
    %v3936 = vmul.f32 %v3708, 1.442695
    %v3937 = vpow.pop %v3936
    %v3938 = vmul.f32 %v3709, 1.442695
    %v3939 = vpow.pop %v3938
    %v3940 = vmul.f32 %v3710, 1.442695
    %v3941 = vpow.pop %v3940
    %v3942 = vmul.f32 %v3711, 1.442695
    %v3943 = vpow.pop %v3942
    %v3944 = vmul.f32 %v3712, 1.442695
    %v3945 = vpow.pop %v3944
    %v3946 = vmul.f32 %v3713, 1.442695
    %v3947 = vpow.pop %v3946
    %v3948 = vmul.f32 %v3714, 1.442695
    %v3949 = vpow.pop %v3948
    %v3950 = vmul.f32 %v3715, 1.442695
    %v3951 = vpow.pop %v3950
    %v3952 = vmul.f32 %v3716, 1.442695
    %v3953 = vpow.pop %v3952
    %v3954 = vmul.f32 %v3717, 1.442695
    %v3955 = vpow.pop %v3954
    %v3956 = vmul.f32 %v3718, 1.442695
    %v3957 = vpow.pop %v3956
    %v3958 = vmul.f32 %v3719, 1.442695
    %v3959 = vpow.pop %v3958
    %v3960 = vmul.f32 %v3720, 1.442695
    %v3961 = vpow.pop %v3960
    %v3962 = vmul.f32 %v3721, 1.442695
    %v3963 = vpow.pop %v3962
    %v3964 = vmul.f32 %v3722, 1.442695
    %v3965 = vpow.pop %v3964
    %v3966 = vmul.f32 %v3723, 1.442695
    %v3967 = vpow.pop %v3966
    %v3968 = vmul.f32 %v3724, 1.442695
    %v3969 = vpow.pop %v3968
    %v3970 = vmul.f32 %v3725, 1.442695
    %v3971 = vpow.pop %v3970
    %v3972 = vmul.f32 %v3726, 1.442695
    %v3973 = vpow.pop %v3972
    %v3974 = vmul.f32 %v3727, 1.442695
    %v3975 = vpow.pop %v3974
    %v3976 = vmul.f32 %v3728, 1.442695
    %v3977 = vpow.pop %v3976
    %v3978 = vmul.f32 %v3729, 1.442695
    %v3979 = vpow.pop %v3978
    %v3980 = vmul.f32 %v3730, 1.442695
    %v3981 = vpow.pop %v3980
    %v3982 = vmul.f32 %v3731, 1.442695
    %v3983 = vpow.pop %v3982
    %v3984 = vmul.f32 %v3732, 1.442695
    %v3985 = vpow.pop %v3984
    %v3986 = vmul.f32 %v3733, 1.442695
    %v3987 = vpow.pop %v3986
    %v3988 = vmul.f32 %v3734, 1.442695
    %v3989 = vpow.pop %v3988
    %v3990 = vmul.f32 %v3735, 1.442695
    %v3991 = vpow.pop %v3990
    %v3992 = vadd.f32 %v3737, 1.0
    %v3993 = vadd.f32 %v3739, 1.0
    %v3994 = vadd.f32 %v3741, 1.0
    %v3995 = vadd.f32 %v3743, 1.0
    %v3996 = vadd.f32 %v3745, 1.0
    %v3997 = vadd.f32 %v3747, 1.0
    %v3998 = vadd.f32 %v3749, 1.0
    %v3999 = vadd.f32 %v3751, 1.0
    %v4000 = vadd.f32 %v3753, 1.0
    %v4001 = vadd.f32 %v3755, 1.0
    %v4002 = vadd.f32 %v3757, 1.0
    %v4003 = vadd.f32 %v3759, 1.0
    %v4004 = vadd.f32 %v3761, 1.0
    %v4005 = vadd.f32 %v3763, 1.0
    %v4006 = vadd.f32 %v3765, 1.0
    %v4007 = vadd.f32 %v3767, 1.0
    %v4008 = vadd.f32 %v3769, 1.0
    %v4009 = vadd.f32 %v3771, 1.0
    %v4010 = vadd.f32 %v3773, 1.0
    %v4011 = vadd.f32 %v3775, 1.0
    %v4012 = vadd.f32 %v3777, 1.0
    %v4013 = vadd.f32 %v3779, 1.0
    %v4014 = vadd.f32 %v3781, 1.0
    %v4015 = vadd.f32 %v3783, 1.0
    %v4016 = vadd.f32 %v3785, 1.0
    %v4017 = vadd.f32 %v3787, 1.0
    %v4018 = vadd.f32 %v3789, 1.0
    %v4019 = vadd.f32 %v3791, 1.0
    %v4020 = vadd.f32 %v3793, 1.0
    %v4021 = vadd.f32 %v3795, 1.0
    %v4022 = vadd.f32 %v3797, 1.0
    %v4023 = vadd.f32 %v3799, 1.0
    %v4024 = vadd.f32 %v3801, 1.0
    %v4025 = vadd.f32 %v3803, 1.0
    %v4026 = vadd.f32 %v3805, 1.0
    %v4027 = vadd.f32 %v3807, 1.0
    %v4028 = vadd.f32 %v3809, 1.0
    %v4029 = vadd.f32 %v3811, 1.0
    %v4030 = vadd.f32 %v3813, 1.0
    %v4031 = vadd.f32 %v3815, 1.0
    %v4032 = vadd.f32 %v3817, 1.0
    %v4033 = vadd.f32 %v3819, 1.0
    %v4034 = vadd.f32 %v3821, 1.0
    %v4035 = vadd.f32 %v3823, 1.0
    %v4036 = vadd.f32 %v3825, 1.0
    %v4037 = vadd.f32 %v3827, 1.0
    %v4038 = vadd.f32 %v3829, 1.0
    %v4039 = vadd.f32 %v3831, 1.0
    %v4040 = vadd.f32 %v3833, 1.0
    %v4041 = vadd.f32 %v3835, 1.0
    %v4042 = vadd.f32 %v3837, 1.0
    %v4043 = vadd.f32 %v3839, 1.0
    %v4044 = vadd.f32 %v3841, 1.0
    %v4045 = vadd.f32 %v3843, 1.0
    %v4046 = vadd.f32 %v3845, 1.0
    %v4047 = vadd.f32 %v3847, 1.0
    %v4048 = vadd.f32 %v3849, 1.0
    %v4049 = vadd.f32 %v3851, 1.0
    %v4050 = vadd.f32 %v3853, 1.0
    %v4051 = vadd.f32 %v3855, 1.0
    %v4052 = vadd.f32 %v3857, 1.0
    %v4053 = vadd.f32 %v3859, 1.0
    %v4054 = vadd.f32 %v3861, 1.0
    %v4055 = vadd.f32 %v3863, 1.0
    %v4056 = vadd.f32 %v3865, 1.0
    %v4057 = vadd.f32 %v3867, 1.0
    %v4058 = vadd.f32 %v3869, 1.0
    %v4059 = vadd.f32 %v3871, 1.0
    %v4060 = vadd.f32 %v3873, 1.0
    %v4061 = vadd.f32 %v3875, 1.0
    %v4062 = vadd.f32 %v3877, 1.0
    %v4063 = vadd.f32 %v3879, 1.0
    %v4064 = vadd.f32 %v3881, 1.0
    %v4065 = vadd.f32 %v3883, 1.0
    %v4066 = vadd.f32 %v3885, 1.0
    %v4067 = vadd.f32 %v3887, 1.0
    %v4068 = vadd.f32 %v3889, 1.0
    %v4069 = vadd.f32 %v3891, 1.0
    %v4070 = vadd.f32 %v3893, 1.0
    %v4071 = vadd.f32 %v3895, 1.0
    %v4072 = vadd.f32 %v3897, 1.0
    %v4073 = vadd.f32 %v3899, 1.0
    %v4074 = vadd.f32 %v3901, 1.0
    %v4075 = vadd.f32 %v3903, 1.0
    %v4076 = vadd.f32 %v3905, 1.0
    %v4077 = vadd.f32 %v3907, 1.0
    %v4078 = vadd.f32 %v3909, 1.0
    %v4079 = vadd.f32 %v3911, 1.0
    %v4080 = vadd.f32 %v3913, 1.0
    %v4081 = vadd.f32 %v3915, 1.0
    %v4082 = vadd.f32 %v3917, 1.0
    %v4083 = vadd.f32 %v3919, 1.0
    %v4084 = vadd.f32 %v3921, 1.0
    %v4085 = vadd.f32 %v3923, 1.0
    %v4086 = vadd.f32 %v3925, 1.0
    %v4087 = vadd.f32 %v3927, 1.0
    %v4088 = vadd.f32 %v3929, 1.0
    %v4089 = vadd.f32 %v3931, 1.0
    %v4090 = vadd.f32 %v3933, 1.0
    %v4091 = vadd.f32 %v3935, 1.0
    %v4092 = vadd.f32 %v3937, 1.0
    %v4093 = vadd.f32 %v3939, 1.0
    %v4094 = vadd.f32 %v3941, 1.0
    %v4095 = vadd.f32 %v3943, 1.0
    %v4096 = vadd.f32 %v3945, 1.0
    %v4097 = vadd.f32 %v3947, 1.0
    %v4098 = vadd.f32 %v3949, 1.0
    %v4099 = vadd.f32 %v3951, 1.0
    %v4100 = vadd.f32 %v3953, 1.0
    %v4101 = vadd.f32 %v3955, 1.0
    %v4102 = vadd.f32 %v3957, 1.0
    %v4103 = vadd.f32 %v3959, 1.0
    %v4104 = vadd.f32 %v3961, 1.0
    %v4105 = vadd.f32 %v3963, 1.0
    %v4106 = vadd.f32 %v3965, 1.0
    %v4107 = vadd.f32 %v3967, 1.0
    %v4108 = vadd.f32 %v3969, 1.0
    %v4109 = vadd.f32 %v3971, 1.0
    %v4110 = vadd.f32 %v3973, 1.0
    %v4111 = vadd.f32 %v3975, 1.0
    %v4112 = vadd.f32 %v3977, 1.0
    %v4113 = vadd.f32 %v3979, 1.0
    %v4114 = vadd.f32 %v3981, 1.0
    %v4115 = vadd.f32 %v3983, 1.0
    %v4116 = vadd.f32 %v3985, 1.0
    %v4117 = vadd.f32 %v3987, 1.0
    %v4118 = vadd.f32 %v3989, 1.0
    %v4119 = vadd.f32 %v3991, 1.0
    %v4120 = vrcp.pop %v3992
    %v4121 = vmul.f32 1.0, %v4120
    %v4122 = vrcp.pop %v3993
    %v4123 = vmul.f32 1.0, %v4122
    %v4124 = vrcp.pop %v3994
    %v4125 = vmul.f32 1.0, %v4124
    %v4126 = vrcp.pop %v3995
    %v4127 = vmul.f32 1.0, %v4126
    %v4128 = vrcp.pop %v3996
    %v4129 = vmul.f32 1.0, %v4128
    %v4130 = vrcp.pop %v3997
    %v4131 = vmul.f32 1.0, %v4130
    %v4132 = vrcp.pop %v3998
    %v4133 = vmul.f32 1.0, %v4132
    %v4134 = vrcp.pop %v3999
    %v4135 = vmul.f32 1.0, %v4134
    %v4136 = vrcp.pop %v4000
    %v4137 = vmul.f32 1.0, %v4136
    %v4138 = vrcp.pop %v4001
    %v4139 = vmul.f32 1.0, %v4138
    %v4140 = vrcp.pop %v4002
    %v4141 = vmul.f32 1.0, %v4140
    %v4142 = vrcp.pop %v4003
    %v4143 = vmul.f32 1.0, %v4142
    %v4144 = vrcp.pop %v4004
    %v4145 = vmul.f32 1.0, %v4144
    %v4146 = vrcp.pop %v4005
    %v4147 = vmul.f32 1.0, %v4146
    %v4148 = vrcp.pop %v4006
    %v4149 = vmul.f32 1.0, %v4148
    %v4150 = vrcp.pop %v4007
    %v4151 = vmul.f32 1.0, %v4150
    %v4152 = vrcp.pop %v4008
    %v4153 = vmul.f32 1.0, %v4152
    %v4154 = vrcp.pop %v4009
    %v4155 = vmul.f32 1.0, %v4154
    %v4156 = vrcp.pop %v4010
    %v4157 = vmul.f32 1.0, %v4156
    %v4158 = vrcp.pop %v4011
    %v4159 = vmul.f32 1.0, %v4158
    %v4160 = vrcp.pop %v4012
    %v4161 = vmul.f32 1.0, %v4160
    %v4162 = vrcp.pop %v4013
    %v4163 = vmul.f32 1.0, %v4162
    %v4164 = vrcp.pop %v4014
    %v4165 = vmul.f32 1.0, %v4164
    %v4166 = vrcp.pop %v4015
    %v4167 = vmul.f32 1.0, %v4166
    %v4168 = vrcp.pop %v4016
    %v4169 = vmul.f32 1.0, %v4168
    %v4170 = vrcp.pop %v4017
    %v4171 = vmul.f32 1.0, %v4170
    %v4172 = vrcp.pop %v4018
    %v4173 = vmul.f32 1.0, %v4172
    %v4174 = vrcp.pop %v4019
    %v4175 = vmul.f32 1.0, %v4174
    %v4176 = vrcp.pop %v4020
    %v4177 = vmul.f32 1.0, %v4176
    %v4178 = vrcp.pop %v4021
    %v4179 = vmul.f32 1.0, %v4178
    %v4180 = vrcp.pop %v4022
    %v4181 = vmul.f32 1.0, %v4180
    %v4182 = vrcp.pop %v4023
    %v4183 = vmul.f32 1.0, %v4182
    %v4184 = vrcp.pop %v4024
    %v4185 = vmul.f32 1.0, %v4184
    %v4186 = vrcp.pop %v4025
    %v4187 = vmul.f32 1.0, %v4186
    %v4188 = vrcp.pop %v4026
    %v4189 = vmul.f32 1.0, %v4188
    %v4190 = vrcp.pop %v4027
    %v4191 = vmul.f32 1.0, %v4190
    %v4192 = vrcp.pop %v4028
    %v4193 = vmul.f32 1.0, %v4192
    %v4194 = vrcp.pop %v4029
    %v4195 = vmul.f32 1.0, %v4194
    %v4196 = vrcp.pop %v4030
    %v4197 = vmul.f32 1.0, %v4196
    %v4198 = vrcp.pop %v4031
    %v4199 = vmul.f32 1.0, %v4198
    %v4200 = vrcp.pop %v4032
    %v4201 = vmul.f32 1.0, %v4200
    %v4202 = vrcp.pop %v4033
    %v4203 = vmul.f32 1.0, %v4202
    %v4204 = vrcp.pop %v4034
    %v4205 = vmul.f32 1.0, %v4204
    %v4206 = vrcp.pop %v4035
    %v4207 = vmul.f32 1.0, %v4206
    %v4208 = vrcp.pop %v4036
    %v4209 = vmul.f32 1.0, %v4208
    %v4210 = vrcp.pop %v4037
    %v4211 = vmul.f32 1.0, %v4210
    %v4212 = vrcp.pop %v4038
    %v4213 = vmul.f32 1.0, %v4212
    %v4214 = vrcp.pop %v4039
    %v4215 = vmul.f32 1.0, %v4214
    %v4216 = vrcp.pop %v4040
    %v4217 = vmul.f32 1.0, %v4216
    %v4218 = vrcp.pop %v4041
    %v4219 = vmul.f32 1.0, %v4218
    %v4220 = vrcp.pop %v4042
    %v4221 = vmul.f32 1.0, %v4220
    %v4222 = vrcp.pop %v4043
    %v4223 = vmul.f32 1.0, %v4222
    %v4224 = vrcp.pop %v4044
    %v4225 = vmul.f32 1.0, %v4224
    %v4226 = vrcp.pop %v4045
    %v4227 = vmul.f32 1.0, %v4226
    %v4228 = vrcp.pop %v4046
    %v4229 = vmul.f32 1.0, %v4228
    %v4230 = vrcp.pop %v4047
    %v4231 = vmul.f32 1.0, %v4230
    %v4232 = vrcp.pop %v4048
    %v4233 = vmul.f32 1.0, %v4232
    %v4234 = vrcp.pop %v4049
    %v4235 = vmul.f32 1.0, %v4234
    %v4236 = vrcp.pop %v4050
    %v4237 = vmul.f32 1.0, %v4236
    %v4238 = vrcp.pop %v4051
    %v4239 = vmul.f32 1.0, %v4238
    %v4240 = vrcp.pop %v4052
    %v4241 = vmul.f32 1.0, %v4240
    %v4242 = vrcp.pop %v4053
    %v4243 = vmul.f32 1.0, %v4242
    %v4244 = vrcp.pop %v4054
    %v4245 = vmul.f32 1.0, %v4244
    %v4246 = vrcp.pop %v4055
    %v4247 = vmul.f32 1.0, %v4246
    %v4248 = vrcp.pop %v4056
    %v4249 = vmul.f32 1.0, %v4248
    %v4250 = vrcp.pop %v4057
    %v4251 = vmul.f32 1.0, %v4250
    %v4252 = vrcp.pop %v4058
    %v4253 = vmul.f32 1.0, %v4252
    %v4254 = vrcp.pop %v4059
    %v4255 = vmul.f32 1.0, %v4254
    %v4256 = vrcp.pop %v4060
    %v4257 = vmul.f32 1.0, %v4256
    %v4258 = vrcp.pop %v4061
    %v4259 = vmul.f32 1.0, %v4258
    %v4260 = vrcp.pop %v4062
    %v4261 = vmul.f32 1.0, %v4260
    %v4262 = vrcp.pop %v4063
    %v4263 = vmul.f32 1.0, %v4262
    %v4264 = vrcp.pop %v4064
    %v4265 = vmul.f32 1.0, %v4264
    %v4266 = vrcp.pop %v4065
    %v4267 = vmul.f32 1.0, %v4266
    %v4268 = vrcp.pop %v4066
    %v4269 = vmul.f32 1.0, %v4268
    %v4270 = vrcp.pop %v4067
    %v4271 = vmul.f32 1.0, %v4270
    %v4272 = vrcp.pop %v4068
    %v4273 = vmul.f32 1.0, %v4272
    %v4274 = vrcp.pop %v4069
    %v4275 = vmul.f32 1.0, %v4274
    %v4276 = vrcp.pop %v4070
    %v4277 = vmul.f32 1.0, %v4276
    %v4278 = vrcp.pop %v4071
    %v4279 = vmul.f32 1.0, %v4278
    %v4280 = vrcp.pop %v4072
    %v4281 = vmul.f32 1.0, %v4280
    %v4282 = vrcp.pop %v4073
    %v4283 = vmul.f32 1.0, %v4282
    %v4284 = vrcp.pop %v4074
    %v4285 = vmul.f32 1.0, %v4284
    %v4286 = vrcp.pop %v4075
    %v4287 = vmul.f32 1.0, %v4286
    %v4288 = vrcp.pop %v4076
    %v4289 = vmul.f32 1.0, %v4288
    %v4290 = vrcp.pop %v4077
    %v4291 = vmul.f32 1.0, %v4290
    %v4292 = vrcp.pop %v4078
    %v4293 = vmul.f32 1.0, %v4292
    %v4294 = vrcp.pop %v4079
    %v4295 = vmul.f32 1.0, %v4294
    %v4296 = vrcp.pop %v4080
    %v4297 = vmul.f32 1.0, %v4296
    %v4298 = vrcp.pop %v4081
    %v4299 = vmul.f32 1.0, %v4298
    %v4300 = vrcp.pop %v4082
    %v4301 = vmul.f32 1.0, %v4300
    %v4302 = vrcp.pop %v4083
    %v4303 = vmul.f32 1.0, %v4302
    %v4304 = vrcp.pop %v4084
    %v4305 = vmul.f32 1.0, %v4304
    %v4306 = vrcp.pop %v4085
    %v4307 = vmul.f32 1.0, %v4306
    %v4308 = vrcp.pop %v4086
    %v4309 = vmul.f32 1.0, %v4308
    %v4310 = vrcp.pop %v4087
    %v4311 = vmul.f32 1.0, %v4310
    %v4312 = vrcp.pop %v4088
    %v4313 = vmul.f32 1.0, %v4312
    %v4314 = vrcp.pop %v4089
    %v4315 = vmul.f32 1.0, %v4314
    %v4316 = vrcp.pop %v4090
    %v4317 = vmul.f32 1.0, %v4316
    %v4318 = vrcp.pop %v4091
    %v4319 = vmul.f32 1.0, %v4318
    %v4320 = vrcp.pop %v4092
    %v4321 = vmul.f32 1.0, %v4320
    %v4322 = vrcp.pop %v4093
    %v4323 = vmul.f32 1.0, %v4322
    %v4324 = vrcp.pop %v4094
    %v4325 = vmul.f32 1.0, %v4324
    %v4326 = vrcp.pop %v4095
    %v4327 = vmul.f32 1.0, %v4326
    %v4328 = vrcp.pop %v4096
    %v4329 = vmul.f32 1.0, %v4328
    %v4330 = vrcp.pop %v4097
    %v4331 = vmul.f32 1.0, %v4330
    %v4332 = vrcp.pop %v4098
    %v4333 = vmul.f32 1.0, %v4332
    %v4334 = vrcp.pop %v4099
    %v4335 = vmul.f32 1.0, %v4334
    %v4336 = vrcp.pop %v4100
    %v4337 = vmul.f32 1.0, %v4336
    %v4338 = vrcp.pop %v4101
    %v4339 = vmul.f32 1.0, %v4338
    %v4340 = vrcp.pop %v4102
    %v4341 = vmul.f32 1.0, %v4340
    %v4342 = vrcp.pop %v4103
    %v4343 = vmul.f32 1.0, %v4342
    %v4344 = vrcp.pop %v4104
    %v4345 = vmul.f32 1.0, %v4344
    %v4346 = vrcp.pop %v4105
    %v4347 = vmul.f32 1.0, %v4346
    %v4348 = vrcp.pop %v4106
    %v4349 = vmul.f32 1.0, %v4348
    %v4350 = vrcp.pop %v4107
    %v4351 = vmul.f32 1.0, %v4350
    %v4352 = vrcp.pop %v4108
    %v4353 = vmul.f32 1.0, %v4352
    %v4354 = vrcp.pop %v4109
    %v4355 = vmul.f32 1.0, %v4354
    %v4356 = vrcp.pop %v4110
    %v4357 = vmul.f32 1.0, %v4356
    %v4358 = vrcp.pop %v4111
    %v4359 = vmul.f32 1.0, %v4358
    %v4360 = vrcp.pop %v4112
    %v4361 = vmul.f32 1.0, %v4360
    %v4362 = vrcp.pop %v4113
    %v4363 = vmul.f32 1.0, %v4362
    %v4364 = vrcp.pop %v4114
    %v4365 = vmul.f32 1.0, %v4364
    %v4366 = vrcp.pop %v4115
    %v4367 = vmul.f32 1.0, %v4366
    %v4368 = vrcp.pop %v4116
    %v4369 = vmul.f32 1.0, %v4368
    %v4370 = vrcp.pop %v4117
    %v4371 = vmul.f32 1.0, %v4370
    %v4372 = vrcp.pop %v4118
    %v4373 = vmul.f32 1.0, %v4372
    %v4374 = vrcp.pop %v4119
    %v4375 = vmul.f32 1.0, %v4374
    %v4376 = vmul.f32 %v3064, %v4121
    %v4377 = vmul.f32 %v3066, %v4123
    %v4378 = vmul.f32 %v3450, %v4125
    %v4379 = vmul.f32 %v3452, %v4127
    %v4380 = vmul.f32 %v3068, %v4129
    %v4381 = vmul.f32 %v3070, %v4131
    %v4382 = vmul.f32 %v3454, %v4133
    %v4383 = vmul.f32 %v3456, %v4135
    %v4384 = vmul.f32 %v3074, %v4137
    %v4385 = vmul.f32 %v3076, %v4139
    %v4386 = vmul.f32 %v3460, %v4141
    %v4387 = vmul.f32 %v3462, %v4143
    %v4388 = vmul.f32 %v3078, %v4145
    %v4389 = vmul.f32 %v3080, %v4147
    %v4390 = vmul.f32 %v3464, %v4149
    %v4391 = vmul.f32 %v3466, %v4151
    %v4392 = vmul.f32 %v3084, %v4153
    %v4393 = vmul.f32 %v3086, %v4155
    %v4394 = vmul.f32 %v3470, %v4157
    %v4395 = vmul.f32 %v3472, %v4159
    %v4396 = vmul.f32 %v3088, %v4161
    %v4397 = vmul.f32 %v3090, %v4163
    %v4398 = vmul.f32 %v3474, %v4165
    %v4399 = vmul.f32 %v3476, %v4167
    %v4400 = vmul.f32 %v3094, %v4169
    %v4401 = vmul.f32 %v3096, %v4171
    %v4402 = vmul.f32 %v3480, %v4173
    %v4403 = vmul.f32 %v3482, %v4175
    %v4404 = vmul.f32 %v3098, %v4177
    %v4405 = vmul.f32 %v3100, %v4179
    %v4406 = vmul.f32 %v3484, %v4181
    %v4407 = vmul.f32 %v3486, %v4183
    %v4408 = vmul.f32 %v3104, %v4185
    %v4409 = vmul.f32 %v3106, %v4187
    %v4410 = vmul.f32 %v3490, %v4189
    %v4411 = vmul.f32 %v3492, %v4191
    %v4412 = vmul.f32 %v3108, %v4193
    %v4413 = vmul.f32 %v3110, %v4195
    %v4414 = vmul.f32 %v3494, %v4197
    %v4415 = vmul.f32 %v3496, %v4199
    %v4416 = vmul.f32 %v3114, %v4201
    %v4417 = vmul.f32 %v3116, %v4203
    %v4418 = vmul.f32 %v3500, %v4205
    %v4419 = vmul.f32 %v3502, %v4207
    %v4420 = vmul.f32 %v3118, %v4209
    %v4421 = vmul.f32 %v3120, %v4211
    %v4422 = vmul.f32 %v3504, %v4213
    %v4423 = vmul.f32 %v3506, %v4215
    %v4424 = vmul.f32 %v3124, %v4217
    %v4425 = vmul.f32 %v3126, %v4219
    %v4426 = vmul.f32 %v3510, %v4221
    %v4427 = vmul.f32 %v3512, %v4223
    %v4428 = vmul.f32 %v3128, %v4225
    %v4429 = vmul.f32 %v3130, %v4227
    %v4430 = vmul.f32 %v3514, %v4229
    %v4431 = vmul.f32 %v3516, %v4231
    %v4432 = vmul.f32 %v3134, %v4233
    %v4433 = vmul.f32 %v3136, %v4235
    %v4434 = vmul.f32 %v3520, %v4237
    %v4435 = vmul.f32 %v3522, %v4239
    %v4436 = vmul.f32 %v3138, %v4241
    %v4437 = vmul.f32 %v3140, %v4243
    %v4438 = vmul.f32 %v3524, %v4245
    %v4439 = vmul.f32 %v3526, %v4247
    %v4440 = vmul.f32 %v3144, %v4249
    %v4441 = vmul.f32 %v3146, %v4251
    %v4442 = vmul.f32 %v3530, %v4253
    %v4443 = vmul.f32 %v3532, %v4255
    %v4444 = vmul.f32 %v3148, %v4257
    %v4445 = vmul.f32 %v3150, %v4259
    %v4446 = vmul.f32 %v3534, %v4261
    %v4447 = vmul.f32 %v3536, %v4263
    %v4448 = vmul.f32 %v3154, %v4265
    %v4449 = vmul.f32 %v3156, %v4267
    %v4450 = vmul.f32 %v3540, %v4269
    %v4451 = vmul.f32 %v3542, %v4271
    %v4452 = vmul.f32 %v3158, %v4273
    %v4453 = vmul.f32 %v3160, %v4275
    %v4454 = vmul.f32 %v3544, %v4277
    %v4455 = vmul.f32 %v3546, %v4279
    %v4456 = vmul.f32 %v3164, %v4281
    %v4457 = vmul.f32 %v3166, %v4283
    %v4458 = vmul.f32 %v3550, %v4285
    %v4459 = vmul.f32 %v3552, %v4287
    %v4460 = vmul.f32 %v3168, %v4289
    %v4461 = vmul.f32 %v3170, %v4291
    %v4462 = vmul.f32 %v3554, %v4293
    %v4463 = vmul.f32 %v3556, %v4295
    %v4464 = vmul.f32 %v3174, %v4297
    %v4465 = vmul.f32 %v3176, %v4299
    %v4466 = vmul.f32 %v3560, %v4301
    %v4467 = vmul.f32 %v3562, %v4303
    %v4468 = vmul.f32 %v3178, %v4305
    %v4469 = vmul.f32 %v3180, %v4307
    %v4470 = vmul.f32 %v3564, %v4309
    %v4471 = vmul.f32 %v3566, %v4311
    %v4472 = vmul.f32 %v3184, %v4313
    %v4473 = vmul.f32 %v3186, %v4315
    %v4474 = vmul.f32 %v3570, %v4317
    %v4475 = vmul.f32 %v3572, %v4319
    %v4476 = vmul.f32 %v3188, %v4321
    %v4477 = vmul.f32 %v3190, %v4323
    %v4478 = vmul.f32 %v3574, %v4325
    %v4479 = vmul.f32 %v3576, %v4327
    %v4480 = vmul.f32 %v3194, %v4329
    %v4481 = vmul.f32 %v3196, %v4331
    %v4482 = vmul.f32 %v3580, %v4333
    %v4483 = vmul.f32 %v3582, %v4335
    %v4484 = vmul.f32 %v3198, %v4337
    %v4485 = vmul.f32 %v3200, %v4339
    %v4486 = vmul.f32 %v3584, %v4341
    %v4487 = vmul.f32 %v3586, %v4343
    %v4488 = vmul.f32 %v3204, %v4345
    %v4489 = vmul.f32 %v3206, %v4347
    %v4490 = vmul.f32 %v3590, %v4349
    %v4491 = vmul.f32 %v3592, %v4351
    %v4492 = vmul.f32 %v3208, %v4353
    %v4493 = vmul.f32 %v3210, %v4355
    %v4494 = vmul.f32 %v3594, %v4357
    %v4495 = vmul.f32 %v3596, %v4359
    %v4496 = vmul.f32 %v3214, %v4361
    %v4497 = vmul.f32 %v3216, %v4363
    %v4498 = vmul.f32 %v3600, %v4365
    %v4499 = vmul.f32 %v3602, %v4367
    %v4500 = vmul.f32 %v3218, %v4369
    %v4501 = vmul.f32 %v3220, %v4371
    %v4502 = vmul.f32 %v3604, %v4373
    %v4503 = vmul.f32 %v3606, %v4375
    %v4504 = vpack.c.bf16 %v4380, %v4376
    %v4505 = vpack.c.bf16 %v4381, %v4377
    %v4506 = vpack.c.bf16 %v4382, %v4378
    %v4507 = vpack.c.bf16 %v4383, %v4379
    %v4508 = vpack.c.bf16 %v4388, %v4384
    %v4509 = vpack.c.bf16 %v4389, %v4385
    %v4510 = vpack.c.bf16 %v4390, %v4386
    %v4511 = vpack.c.bf16 %v4391, %v4387
    %v4512 = vpack.c.bf16 %v4396, %v4392
    %v4513 = vpack.c.bf16 %v4397, %v4393
    %v4514 = vpack.c.bf16 %v4398, %v4394
    %v4515 = vpack.c.bf16 %v4399, %v4395
    %v4516 = vpack.c.bf16 %v4404, %v4400
    %v4517 = vpack.c.bf16 %v4405, %v4401
    %v4518 = vpack.c.bf16 %v4406, %v4402
    %v4519 = vpack.c.bf16 %v4407, %v4403
    %v4520 = vpack.c.bf16 %v4412, %v4408
    %v4521 = vpack.c.bf16 %v4413, %v4409
    %v4522 = vpack.c.bf16 %v4414, %v4410
    %v4523 = vpack.c.bf16 %v4415, %v4411
    %v4524 = vpack.c.bf16 %v4420, %v4416
    %v4525 = vpack.c.bf16 %v4421, %v4417
    %v4526 = vpack.c.bf16 %v4422, %v4418
    %v4527 = vpack.c.bf16 %v4423, %v4419
    %v4528 = vpack.c.bf16 %v4428, %v4424
    %v4529 = vpack.c.bf16 %v4429, %v4425
    %v4530 = vpack.c.bf16 %v4430, %v4426
    %v4531 = vpack.c.bf16 %v4431, %v4427
    %v4532 = vpack.c.bf16 %v4436, %v4432
    %v4533 = vpack.c.bf16 %v4437, %v4433
    %v4534 = vpack.c.bf16 %v4438, %v4434
    %v4535 = vpack.c.bf16 %v4439, %v4435
    %v4536 = vpack.c.bf16 %v4444, %v4440
    %v4537 = vpack.c.bf16 %v4445, %v4441
    %v4538 = vpack.c.bf16 %v4446, %v4442
    %v4539 = vpack.c.bf16 %v4447, %v4443
    %v4540 = vpack.c.bf16 %v4452, %v4448
    %v4541 = vpack.c.bf16 %v4453, %v4449
    %v4542 = vpack.c.bf16 %v4454, %v4450
    %v4543 = vpack.c.bf16 %v4455, %v4451
    %v4544 = vpack.c.bf16 %v4460, %v4456
    %v4545 = vpack.c.bf16 %v4461, %v4457
    %v4546 = vpack.c.bf16 %v4462, %v4458
    %v4547 = vpack.c.bf16 %v4463, %v4459
    %v4548 = vpack.c.bf16 %v4468, %v4464
    %v4549 = vpack.c.bf16 %v4469, %v4465
    %v4550 = vpack.c.bf16 %v4470, %v4466
    %v4551 = vpack.c.bf16 %v4471, %v4467
    %v4552 = vpack.c.bf16 %v4476, %v4472
    %v4553 = vpack.c.bf16 %v4477, %v4473
    %v4554 = vpack.c.bf16 %v4478, %v4474
    %v4555 = vpack.c.bf16 %v4479, %v4475
    %v4556 = vpack.c.bf16 %v4484, %v4480
    %v4557 = vpack.c.bf16 %v4485, %v4481
    %v4558 = vpack.c.bf16 %v4486, %v4482
    %v4559 = vpack.c.bf16 %v4487, %v4483
    %v4560 = vpack.c.bf16 %v4492, %v4488
    %v4561 = vpack.c.bf16 %v4493, %v4489
    %v4562 = vpack.c.bf16 %v4494, %v4490
    %v4563 = vpack.c.bf16 %v4495, %v4491
    %v4564 = vpack.c.bf16 %v4500, %v4496
    %v4565 = vpack.c.bf16 %v4501, %v4497
    %v4566 = vpack.c.bf16 %v4502, %v4498
    %v4567 = vpack.c.bf16 %v4503, %v4499
    %v4568 = vld [vmem:[#allocation8] sm:$0xff]
    %v4569 = vld [vmem:[#allocation8 + $0x8] sm:$0xff]
    %v4570 = vld [vmem:[#allocation8 + $0x10] sm:$0xff]
    %v4571 = vld [vmem:[#allocation8 + $0x18] sm:$0xff]
    %v4572 = vld [vmem:[#allocation8 + $0x20] sm:$0xff]
    %v4573 = vld [vmem:[#allocation8 + $0x28] sm:$0xff]
    %v4574 = vld [vmem:[#allocation8 + $0x30] sm:$0xff]
    %v4575 = vld [vmem:[#allocation8 + $0x38] sm:$0xff]
    %v4576 = vld [vmem:[#allocation8 + $0x40] sm:$0xff]
    %v4577 = vld [vmem:[#allocation8 + $0x48] sm:$0xff]
    %v4578 = vld [vmem:[#allocation8 + $0x50] sm:$0xff]
    %v4579 = vld [vmem:[#allocation8 + $0x58] sm:$0xff]
    %v4580 = vld [vmem:[#allocation8 + $0x60] sm:$0xff]
    %v4581 = vld [vmem:[#allocation8 + $0x68] sm:$0xff]
    %v4582 = vld [vmem:[#allocation8 + $0x70] sm:$0xff]
    %v4583 = vld [vmem:[#allocation8 + $0x78] sm:$0xff]
    %v4584 = vld [vmem:[#allocation8 + $0x80] sm:$0xff]
    %v4585 = vld [vmem:[#allocation8 + $0x88] sm:$0xff]
    %v4586 = vld [vmem:[#allocation8 + $0x90] sm:$0xff]
    %v4587 = vld [vmem:[#allocation8 + $0x98] sm:$0xff]
    %v4588 = vld [vmem:[#allocation8 + $0xa0] sm:$0xff]
    %v4589 = vld [vmem:[#allocation8 + $0xa8] sm:$0xff]
    %v4590 = vld [vmem:[#allocation8 + $0xb0] sm:$0xff]
    %v4591 = vld [vmem:[#allocation8 + $0xb8] sm:$0xff]
    %v4592 = vld [vmem:[#allocation8 + $0xc0] sm:$0xff]
    %v4593 = vld [vmem:[#allocation8 + $0xc8] sm:$0xff]
    %v4594 = vld [vmem:[#allocation8 + $0xd0] sm:$0xff]
    %v4595 = vld [vmem:[#allocation8 + $0xd8] sm:$0xff]
    %v4596 = vld [vmem:[#allocation8 + $0xe0] sm:$0xff]
    %v4597 = vld [vmem:[#allocation8 + $0xe8] sm:$0xff]
    %v4598 = vld [vmem:[#allocation8 + $0xf0] sm:$0xff]
    %v4599 = vld [vmem:[#allocation8 + $0xf8] sm:$0xff]
    %v4600 = vld [vmem:[#allocation8 + $0x100] sm:$0xff]
    %v4601 = vld [vmem:[#allocation8 + $0x108] sm:$0xff]
    %v4602 = vld [vmem:[#allocation8 + $0x110] sm:$0xff]
    %v4603 = vld [vmem:[#allocation8 + $0x118] sm:$0xff]
    %v4604 = vld [vmem:[#allocation8 + $0x120] sm:$0xff]
    %v4605 = vld [vmem:[#allocation8 + $0x128] sm:$0xff]
    %v4606 = vld [vmem:[#allocation8 + $0x130] sm:$0xff]
    %v4607 = vld [vmem:[#allocation8 + $0x138] sm:$0xff]
    %v4608 = vld [vmem:[#allocation8 + $0x140] sm:$0xff]
    %v4609 = vld [vmem:[#allocation8 + $0x148] sm:$0xff]
    %v4610 = vld [vmem:[#allocation8 + $0x150] sm:$0xff]
    %v4611 = vld [vmem:[#allocation8 + $0x158] sm:$0xff]
    %v4612 = vld [vmem:[#allocation8 + $0x160] sm:$0xff]
    %v4613 = vld [vmem:[#allocation8 + $0x168] sm:$0xff]
    %v4614 = vld [vmem:[#allocation8 + $0x170] sm:$0xff]
    %v4615 = vld [vmem:[#allocation8 + $0x178] sm:$0xff]
    %v4616 = vld [vmem:[#allocation8 + $0x180] sm:$0xff]
    %v4617 = vld [vmem:[#allocation8 + $0x188] sm:$0xff]
    %v4618 = vld [vmem:[#allocation8 + $0x190] sm:$0xff]
    %v4619 = vld [vmem:[#allocation8 + $0x198] sm:$0xff]
    %v4620 = vld [vmem:[#allocation8 + $0x1a0] sm:$0xff]
    %v4621 = vld [vmem:[#allocation8 + $0x1a8] sm:$0xff]
    %v4622 = vld [vmem:[#allocation8 + $0x1b0] sm:$0xff]
    %v4623 = vld [vmem:[#allocation8 + $0x1b8] sm:$0xff]
    %v4624 = vld [vmem:[#allocation8 + $0x1c0] sm:$0xff]
    %v4625 = vld [vmem:[#allocation8 + $0x1c8] sm:$0xff]
    %v4626 = vld [vmem:[#allocation8 + $0x1d0] sm:$0xff]
    %v4627 = vld [vmem:[#allocation8 + $0x1d8] sm:$0xff]
    %v4628 = vld [vmem:[#allocation8 + $0x1e0] sm:$0xff]
    %v4629 = vld [vmem:[#allocation8 + $0x1e8] sm:$0xff]
    %v4630 = vld [vmem:[#allocation8 + $0x1f0] sm:$0xff]
    %v4631 = vld [vmem:[#allocation8 + $0x1f8] sm:$0xff]
    %v4632 = vld [vmem:[#allocation8 + $0x200] sm:$0xff]
    %v4633 = vld [vmem:[#allocation8 + $0x208] sm:$0xff]
    %v4634 = vld [vmem:[#allocation8 + $0x210] sm:$0xff]
    %v4635 = vld [vmem:[#allocation8 + $0x218] sm:$0xff]
    %v4636 = vld [vmem:[#allocation8 + $0x220] sm:$0xff]
    %v4637 = vld [vmem:[#allocation8 + $0x228] sm:$0xff]
    %v4638 = vld [vmem:[#allocation8 + $0x230] sm:$0xff]
    %v4639 = vld [vmem:[#allocation8 + $0x238] sm:$0xff]
    %v4640 = vld [vmem:[#allocation8 + $0x240] sm:$0xff]
    %v4641 = vld [vmem:[#allocation8 + $0x248] sm:$0xff]
    %v4642 = vld [vmem:[#allocation8 + $0x250] sm:$0xff]
    %v4643 = vld [vmem:[#allocation8 + $0x258] sm:$0xff]
    %v4644 = vld [vmem:[#allocation8 + $0x260] sm:$0xff]
    %v4645 = vld [vmem:[#allocation8 + $0x268] sm:$0xff]
    %v4646 = vld [vmem:[#allocation8 + $0x270] sm:$0xff]
    %v4647 = vld [vmem:[#allocation8 + $0x278] sm:$0xff]
    %v4648 = vld [vmem:[#allocation8 + $0x280] sm:$0xff]
    %v4649 = vld [vmem:[#allocation8 + $0x288] sm:$0xff]
    %v4650 = vld [vmem:[#allocation8 + $0x290] sm:$0xff]
    %v4651 = vld [vmem:[#allocation8 + $0x298] sm:$0xff]
    %v4652 = vld [vmem:[#allocation8 + $0x2a0] sm:$0xff]
    %v4653 = vld [vmem:[#allocation8 + $0x2a8] sm:$0xff]
    %v4654 = vld [vmem:[#allocation8 + $0x2b0] sm:$0xff]
    %v4655 = vld [vmem:[#allocation8 + $0x2b8] sm:$0xff]
    %v4656 = vld [vmem:[#allocation8 + $0x2c0] sm:$0xff]
    %v4657 = vld [vmem:[#allocation8 + $0x2c8] sm:$0xff]
    %v4658 = vld [vmem:[#allocation8 + $0x2d0] sm:$0xff]
    %v4659 = vld [vmem:[#allocation8 + $0x2d8] sm:$0xff]
    %v4660 = vld [vmem:[#allocation8 + $0x2e0] sm:$0xff]
    %v4661 = vld [vmem:[#allocation8 + $0x2e8] sm:$0xff]
    %v4662 = vld [vmem:[#allocation8 + $0x2f0] sm:$0xff]
    %v4663 = vld [vmem:[#allocation8 + $0x2f8] sm:$0xff]
    %v4664 = vld [vmem:[#allocation8 + $0x300] sm:$0xff]
    %v4665 = vld [vmem:[#allocation8 + $0x308] sm:$0xff]
    %v4666 = vld [vmem:[#allocation8 + $0x310] sm:$0xff]
    %v4667 = vld [vmem:[#allocation8 + $0x318] sm:$0xff]
    %v4668 = vld [vmem:[#allocation8 + $0x320] sm:$0xff]
    %v4669 = vld [vmem:[#allocation8 + $0x328] sm:$0xff]
    %v4670 = vld [vmem:[#allocation8 + $0x330] sm:$0xff]
    %v4671 = vld [vmem:[#allocation8 + $0x338] sm:$0xff]
    %v4672 = vld [vmem:[#allocation8 + $0x340] sm:$0xff]
    %v4673 = vld [vmem:[#allocation8 + $0x348] sm:$0xff]
    %v4674 = vld [vmem:[#allocation8 + $0x350] sm:$0xff]
    %v4675 = vld [vmem:[#allocation8 + $0x358] sm:$0xff]
    %v4676 = vld [vmem:[#allocation8 + $0x360] sm:$0xff]
    %v4677 = vld [vmem:[#allocation8 + $0x368] sm:$0xff]
    %v4678 = vld [vmem:[#allocation8 + $0x370] sm:$0xff]
    %v4679 = vld [vmem:[#allocation8 + $0x378] sm:$0xff]
    %v4680 = vld [vmem:[#allocation8 + $0x380] sm:$0xff]
    %v4681 = vld [vmem:[#allocation8 + $0x388] sm:$0xff]
    %v4682 = vld [vmem:[#allocation8 + $0x390] sm:$0xff]
    %v4683 = vld [vmem:[#allocation8 + $0x398] sm:$0xff]
    %v4684 = vld [vmem:[#allocation8 + $0x3a0] sm:$0xff]
    %v4685 = vld [vmem:[#allocation8 + $0x3a8] sm:$0xff]
    %v4686 = vld [vmem:[#allocation8 + $0x3b0] sm:$0xff]
    %v4687 = vld [vmem:[#allocation8 + $0x3b8] sm:$0xff]
    %v4688 = vld [vmem:[#allocation8 + $0x3c0] sm:$0xff]
    %v4689 = vld [vmem:[#allocation8 + $0x3c8] sm:$0xff]
    %v4690 = vld [vmem:[#allocation8 + $0x3d0] sm:$0xff]
    %v4691 = vld [vmem:[#allocation8 + $0x3d8] sm:$0xff]
    %v4692 = vld [vmem:[#allocation8 + $0x3e0] sm:$0xff]
    %v4693 = vld [vmem:[#allocation8 + $0x3e8] sm:$0xff]
    %v4694 = vld [vmem:[#allocation8 + $0x3f0] sm:$0xff]
    %v4695 = vld [vmem:[#allocation8 + $0x3f8] sm:$0xff]
    %v4696 = vld [vmem:[%s6] sm:$0xf]
    %v4698 = vlaneseq
    %v4699 = vshrl.u32 %v4698, 7
    %v4700 = vsub.s32 0, %v4699
    %v4701 = vrot.slane %v4696, %v4700
    %v4702 = vlaneseq
    %v4703 = vshrl.u32 %v4702, 7
    %v4704 = vsub.s32 1, %v4703
    %v4705 = vrot.slane %v4696, %v4704
    %v4706 = vlaneseq
    %v4707 = vshrl.u32 %v4706, 7
    %v4708 = vsub.s32 2, %v4707
    %v4709 = vrot.slane %v4696, %v4708
    %v4710 = vlaneseq
    %v4711 = vshrl.u32 %v4710, 7
    %v4712 = vsub.s32 3, %v4711
    %v4713 = vrot.slane %v4696, %v4712
    %v4846 = vunpack.c.l.b16 %v4568
    %v4847 = vunpack.c.h.b16 %v4568
    %v4848 = vunpack.c.l.b16 %v4569
    %v4849 = vunpack.c.h.b16 %v4569
    %v4850 = vunpack.c.l.b16 %v4570
    %v4851 = vunpack.c.h.b16 %v4570
    %v4852 = vunpack.c.l.b16 %v4571
    %v4853 = vunpack.c.h.b16 %v4571
    %v4854 = vunpack.c.l.b16 %v4572
    %v4855 = vunpack.c.h.b16 %v4572
    %v4856 = vunpack.c.l.b16 %v4573
    %v4857 = vunpack.c.h.b16 %v4573
    %v4858 = vunpack.c.l.b16 %v4574
    %v4859 = vunpack.c.h.b16 %v4574
    %v4860 = vunpack.c.l.b16 %v4575
    %v4861 = vunpack.c.h.b16 %v4575
    %v4862 = vunpack.c.l.b16 %v4576
    %v4863 = vunpack.c.h.b16 %v4576
    %v4864 = vunpack.c.l.b16 %v4577
    %v4865 = vunpack.c.h.b16 %v4577
    %v4866 = vunpack.c.l.b16 %v4578
    %v4867 = vunpack.c.h.b16 %v4578
    %v4868 = vunpack.c.l.b16 %v4579
    %v4869 = vunpack.c.h.b16 %v4579
    %v4870 = vunpack.c.l.b16 %v4580
    %v4871 = vunpack.c.h.b16 %v4580
    %v4872 = vunpack.c.l.b16 %v4581
    %v4873 = vunpack.c.h.b16 %v4581
    %v4874 = vunpack.c.l.b16 %v4582
    %v4875 = vunpack.c.h.b16 %v4582
    %v4876 = vunpack.c.l.b16 %v4583
    %v4877 = vunpack.c.h.b16 %v4583
    %v4878 = vunpack.c.l.b16 %v4584
    %v4879 = vunpack.c.h.b16 %v4584
    %v4880 = vunpack.c.l.b16 %v4585
    %v4881 = vunpack.c.h.b16 %v4585
    %v4882 = vunpack.c.l.b16 %v4586
    %v4883 = vunpack.c.h.b16 %v4586
    %v4884 = vunpack.c.l.b16 %v4587
    %v4885 = vunpack.c.h.b16 %v4587
    %v4886 = vunpack.c.l.b16 %v4588
    %v4887 = vunpack.c.h.b16 %v4588
    %v4888 = vunpack.c.l.b16 %v4589
    %v4889 = vunpack.c.h.b16 %v4589
    %v4890 = vunpack.c.l.b16 %v4590
    %v4891 = vunpack.c.h.b16 %v4590
    %v4892 = vunpack.c.l.b16 %v4591
    %v4893 = vunpack.c.h.b16 %v4591
    %v4894 = vunpack.c.l.b16 %v4592
    %v4895 = vunpack.c.h.b16 %v4592
    %v4896 = vunpack.c.l.b16 %v4593
    %v4897 = vunpack.c.h.b16 %v4593
    %v4898 = vunpack.c.l.b16 %v4594
    %v4899 = vunpack.c.h.b16 %v4594
    %v4900 = vunpack.c.l.b16 %v4595
    %v4901 = vunpack.c.h.b16 %v4595
    %v4902 = vunpack.c.l.b16 %v4596
    %v4903 = vunpack.c.h.b16 %v4596
    %v4904 = vunpack.c.l.b16 %v4597
    %v4905 = vunpack.c.h.b16 %v4597
    %v4906 = vunpack.c.l.b16 %v4598
    %v4907 = vunpack.c.h.b16 %v4598
    %v4908 = vunpack.c.l.b16 %v4599
    %v4909 = vunpack.c.h.b16 %v4599
    %v4910 = vunpack.c.l.b16 %v4600
    %v4911 = vunpack.c.h.b16 %v4600
    %v4912 = vunpack.c.l.b16 %v4601
    %v4913 = vunpack.c.h.b16 %v4601
    %v4914 = vunpack.c.l.b16 %v4602
    %v4915 = vunpack.c.h.b16 %v4602
    %v4916 = vunpack.c.l.b16 %v4603
    %v4917 = vunpack.c.h.b16 %v4603
    %v4918 = vunpack.c.l.b16 %v4604
    %v4919 = vunpack.c.h.b16 %v4604
    %v4920 = vunpack.c.l.b16 %v4605
    %v4921 = vunpack.c.h.b16 %v4605
    %v4922 = vunpack.c.l.b16 %v4606
    %v4923 = vunpack.c.h.b16 %v4606
    %v4924 = vunpack.c.l.b16 %v4607
    %v4925 = vunpack.c.h.b16 %v4607
    %v4926 = vunpack.c.l.b16 %v4608
    %v4927 = vunpack.c.h.b16 %v4608
    %v4928 = vunpack.c.l.b16 %v4609
    %v4929 = vunpack.c.h.b16 %v4609
    %v4930 = vunpack.c.l.b16 %v4610
    %v4931 = vunpack.c.h.b16 %v4610
    %v4932 = vunpack.c.l.b16 %v4611
    %v4933 = vunpack.c.h.b16 %v4611
    %v4934 = vunpack.c.l.b16 %v4612
    %v4935 = vunpack.c.h.b16 %v4612
    %v4936 = vunpack.c.l.b16 %v4613
    %v4937 = vunpack.c.h.b16 %v4613
    %v4938 = vunpack.c.l.b16 %v4614
    %v4939 = vunpack.c.h.b16 %v4614
    %v4940 = vunpack.c.l.b16 %v4615
    %v4941 = vunpack.c.h.b16 %v4615
    %v4942 = vunpack.c.l.b16 %v4616
    %v4943 = vunpack.c.h.b16 %v4616
    %v4944 = vunpack.c.l.b16 %v4617
    %v4945 = vunpack.c.h.b16 %v4617
    %v4946 = vunpack.c.l.b16 %v4618
    %v4947 = vunpack.c.h.b16 %v4618
    %v4948 = vunpack.c.l.b16 %v4619
    %v4949 = vunpack.c.h.b16 %v4619
    %v4950 = vunpack.c.l.b16 %v4620
    %v4951 = vunpack.c.h.b16 %v4620
    %v4952 = vunpack.c.l.b16 %v4621
    %v4953 = vunpack.c.h.b16 %v4621
    %v4954 = vunpack.c.l.b16 %v4622
    %v4955 = vunpack.c.h.b16 %v4622
    %v4956 = vunpack.c.l.b16 %v4623
    %v4957 = vunpack.c.h.b16 %v4623
    %v4958 = vunpack.c.l.b16 %v4624
    %v4959 = vunpack.c.h.b16 %v4624
    %v4960 = vunpack.c.l.b16 %v4625
    %v4961 = vunpack.c.h.b16 %v4625
    %v4962 = vunpack.c.l.b16 %v4626
    %v4963 = vunpack.c.h.b16 %v4626
    %v4964 = vunpack.c.l.b16 %v4627
    %v4965 = vunpack.c.h.b16 %v4627
    %v4966 = vunpack.c.l.b16 %v4628
    %v4967 = vunpack.c.h.b16 %v4628
    %v4968 = vunpack.c.l.b16 %v4629
    %v4969 = vunpack.c.h.b16 %v4629
    %v4970 = vunpack.c.l.b16 %v4630
    %v4971 = vunpack.c.h.b16 %v4630
    %v4972 = vunpack.c.l.b16 %v4631
    %v4973 = vunpack.c.h.b16 %v4631
    %v4974 = vunpack.c.l.b16 %v4632
    %v4975 = vunpack.c.h.b16 %v4632
    %v4976 = vunpack.c.l.b16 %v4633
    %v4977 = vunpack.c.h.b16 %v4633
    %v4978 = vunpack.c.l.b16 %v4634
    %v4979 = vunpack.c.h.b16 %v4634
    %v4980 = vunpack.c.l.b16 %v4635
    %v4981 = vunpack.c.h.b16 %v4635
    %v4982 = vunpack.c.l.b16 %v4636
    %v4983 = vunpack.c.h.b16 %v4636
    %v4984 = vunpack.c.l.b16 %v4637
    %v4985 = vunpack.c.h.b16 %v4637
    %v4986 = vunpack.c.l.b16 %v4638
    %v4987 = vunpack.c.h.b16 %v4638
    %v4988 = vunpack.c.l.b16 %v4639
    %v4989 = vunpack.c.h.b16 %v4639
    %v4990 = vunpack.c.l.b16 %v4640
    %v4991 = vunpack.c.h.b16 %v4640
    %v4992 = vunpack.c.l.b16 %v4641
    %v4993 = vunpack.c.h.b16 %v4641
    %v4994 = vunpack.c.l.b16 %v4642
    %v4995 = vunpack.c.h.b16 %v4642
    %v4996 = vunpack.c.l.b16 %v4643
    %v4997 = vunpack.c.h.b16 %v4643
    %v4998 = vunpack.c.l.b16 %v4644
    %v4999 = vunpack.c.h.b16 %v4644
    %v5000 = vunpack.c.l.b16 %v4645
    %v5001 = vunpack.c.h.b16 %v4645
    %v5002 = vunpack.c.l.b16 %v4646
    %v5003 = vunpack.c.h.b16 %v4646
    %v5004 = vunpack.c.l.b16 %v4647
    %v5005 = vunpack.c.h.b16 %v4647
    %v5006 = vunpack.c.l.b16 %v4648
    %v5007 = vunpack.c.h.b16 %v4648
    %v5008 = vunpack.c.l.b16 %v4649
    %v5009 = vunpack.c.h.b16 %v4649
    %v5010 = vunpack.c.l.b16 %v4650
    %v5011 = vunpack.c.h.b16 %v4650
    %v5012 = vunpack.c.l.b16 %v4651
    %v5013 = vunpack.c.h.b16 %v4651
    %v5014 = vunpack.c.l.b16 %v4652
    %v5015 = vunpack.c.h.b16 %v4652
    %v5016 = vunpack.c.l.b16 %v4653
    %v5017 = vunpack.c.h.b16 %v4653
    %v5018 = vunpack.c.l.b16 %v4654
    %v5019 = vunpack.c.h.b16 %v4654
    %v5020 = vunpack.c.l.b16 %v4655
    %v5021 = vunpack.c.h.b16 %v4655
    %v5022 = vunpack.c.l.b16 %v4656
    %v5023 = vunpack.c.h.b16 %v4656
    %v5024 = vunpack.c.l.b16 %v4657
    %v5025 = vunpack.c.h.b16 %v4657
    %v5026 = vunpack.c.l.b16 %v4658
    %v5027 = vunpack.c.h.b16 %v4658
    %v5028 = vunpack.c.l.b16 %v4659
    %v5029 = vunpack.c.h.b16 %v4659
    %v5030 = vunpack.c.l.b16 %v4660
    %v5031 = vunpack.c.h.b16 %v4660
    %v5032 = vunpack.c.l.b16 %v4661
    %v5033 = vunpack.c.h.b16 %v4661
    %v5034 = vunpack.c.l.b16 %v4662
    %v5035 = vunpack.c.h.b16 %v4662
    %v5036 = vunpack.c.l.b16 %v4663
    %v5037 = vunpack.c.h.b16 %v4663
    %v5038 = vunpack.c.l.b16 %v4664
    %v5039 = vunpack.c.h.b16 %v4664
    %v5040 = vunpack.c.l.b16 %v4665
    %v5041 = vunpack.c.h.b16 %v4665
    %v5042 = vunpack.c.l.b16 %v4666
    %v5043 = vunpack.c.h.b16 %v4666
    %v5044 = vunpack.c.l.b16 %v4667
    %v5045 = vunpack.c.h.b16 %v4667
    %v5046 = vunpack.c.l.b16 %v4668
    %v5047 = vunpack.c.h.b16 %v4668
    %v5048 = vunpack.c.l.b16 %v4669
    %v5049 = vunpack.c.h.b16 %v4669
    %v5050 = vunpack.c.l.b16 %v4670
    %v5051 = vunpack.c.h.b16 %v4670
    %v5052 = vunpack.c.l.b16 %v4671
    %v5053 = vunpack.c.h.b16 %v4671
    %v5054 = vunpack.c.l.b16 %v4672
    %v5055 = vunpack.c.h.b16 %v4672
    %v5056 = vunpack.c.l.b16 %v4673
    %v5057 = vunpack.c.h.b16 %v4673
    %v5058 = vunpack.c.l.b16 %v4674
    %v5059 = vunpack.c.h.b16 %v4674
    %v5060 = vunpack.c.l.b16 %v4675
    %v5061 = vunpack.c.h.b16 %v4675
    %v5062 = vunpack.c.l.b16 %v4676
    %v5063 = vunpack.c.h.b16 %v4676
    %v5064 = vunpack.c.l.b16 %v4677
    %v5065 = vunpack.c.h.b16 %v4677
    %v5066 = vunpack.c.l.b16 %v4678
    %v5067 = vunpack.c.h.b16 %v4678
    %v5068 = vunpack.c.l.b16 %v4679
    %v5069 = vunpack.c.h.b16 %v4679
    %v5070 = vunpack.c.l.b16 %v4680
    %v5071 = vunpack.c.h.b16 %v4680
    %v5072 = vunpack.c.l.b16 %v4681
    %v5073 = vunpack.c.h.b16 %v4681
    %v5074 = vunpack.c.l.b16 %v4682
    %v5075 = vunpack.c.h.b16 %v4682
    %v5076 = vunpack.c.l.b16 %v4683
    %v5077 = vunpack.c.h.b16 %v4683
    %v5078 = vunpack.c.l.b16 %v4684
    %v5079 = vunpack.c.h.b16 %v4684
    %v5080 = vunpack.c.l.b16 %v4685
    %v5081 = vunpack.c.h.b16 %v4685
    %v5082 = vunpack.c.l.b16 %v4686
    %v5083 = vunpack.c.h.b16 %v4686
    %v5084 = vunpack.c.l.b16 %v4687
    %v5085 = vunpack.c.h.b16 %v4687
    %v5086 = vunpack.c.l.b16 %v4688
    %v5087 = vunpack.c.h.b16 %v4688
    %v5088 = vunpack.c.l.b16 %v4689
    %v5089 = vunpack.c.h.b16 %v4689
    %v5090 = vunpack.c.l.b16 %v4690
    %v5091 = vunpack.c.h.b16 %v4690
    %v5092 = vunpack.c.l.b16 %v4691
    %v5093 = vunpack.c.h.b16 %v4691
    %v5094 = vunpack.c.l.b16 %v4692
    %v5095 = vunpack.c.h.b16 %v4692
    %v5096 = vunpack.c.l.b16 %v4693
    %v5097 = vunpack.c.h.b16 %v4693
    %v5098 = vunpack.c.l.b16 %v4694
    %v5099 = vunpack.c.h.b16 %v4694
    %v5100 = vunpack.c.l.b16 %v4695
    %v5101 = vunpack.c.h.b16 %v4695
    %v5102 = vpack.c.b16 %v4850, %v4846
    %v5103 = vpack.c.b16 %v4851, %v4847
    %v5104 = vpack.c.b16 %v4852, %v4848
    %v5105 = vpack.c.b16 %v4853, %v4849
    %v5106 = vpack.c.b16 %v4858, %v4854
    %v5107 = vpack.c.b16 %v4859, %v4855
    %v5108 = vpack.c.b16 %v4860, %v4856
    %v5109 = vpack.c.b16 %v4861, %v4857
    %v5110 = vpack.c.b16 %v4866, %v4862
    %v5111 = vpack.c.b16 %v4867, %v4863
    %v5112 = vpack.c.b16 %v4868, %v4864
    %v5113 = vpack.c.b16 %v4869, %v4865
    %v5114 = vpack.c.b16 %v4874, %v4870
    %v5115 = vpack.c.b16 %v4875, %v4871
    %v5116 = vpack.c.b16 %v4876, %v4872
    %v5117 = vpack.c.b16 %v4877, %v4873
    %v5118 = vpack.c.b16 %v4882, %v4878
    %v5119 = vpack.c.b16 %v4883, %v4879
    %v5120 = vpack.c.b16 %v4884, %v4880
    %v5121 = vpack.c.b16 %v4885, %v4881
    %v5122 = vpack.c.b16 %v4890, %v4886
    %v5123 = vpack.c.b16 %v4891, %v4887
    %v5124 = vpack.c.b16 %v4892, %v4888
    %v5125 = vpack.c.b16 %v4893, %v4889
    %v5126 = vpack.c.b16 %v4898, %v4894
    %v5127 = vpack.c.b16 %v4899, %v4895
    %v5128 = vpack.c.b16 %v4900, %v4896
    %v5129 = vpack.c.b16 %v4901, %v4897
    %v5130 = vpack.c.b16 %v4906, %v4902
    %v5131 = vpack.c.b16 %v4907, %v4903
    %v5132 = vpack.c.b16 %v4908, %v4904
    %v5133 = vpack.c.b16 %v4909, %v4905
    %v5134 = vpack.c.b16 %v4914, %v4910
    %v5135 = vpack.c.b16 %v4915, %v4911
    %v5136 = vpack.c.b16 %v4916, %v4912
    %v5137 = vpack.c.b16 %v4917, %v4913
    %v5138 = vpack.c.b16 %v4922, %v4918
    %v5139 = vpack.c.b16 %v4923, %v4919
    %v5140 = vpack.c.b16 %v4924, %v4920
    %v5141 = vpack.c.b16 %v4925, %v4921
    %v5142 = vpack.c.b16 %v4930, %v4926
    %v5143 = vpack.c.b16 %v4931, %v4927
    %v5144 = vpack.c.b16 %v4932, %v4928
    %v5145 = vpack.c.b16 %v4933, %v4929
    %v5146 = vpack.c.b16 %v4938, %v4934
    %v5147 = vpack.c.b16 %v4939, %v4935
    %v5148 = vpack.c.b16 %v4940, %v4936
    %v5149 = vpack.c.b16 %v4941, %v4937
    %v5150 = vpack.c.b16 %v4946, %v4942
    %v5151 = vpack.c.b16 %v4947, %v4943
    %v5152 = vpack.c.b16 %v4948, %v4944
    %v5153 = vpack.c.b16 %v4949, %v4945
    %v5154 = vpack.c.b16 %v4954, %v4950
    %v5155 = vpack.c.b16 %v4955, %v4951
    %v5156 = vpack.c.b16 %v4956, %v4952
    %v5157 = vpack.c.b16 %v4957, %v4953
    %v5158 = vpack.c.b16 %v4962, %v4958
    %v5159 = vpack.c.b16 %v4963, %v4959
    %v5160 = vpack.c.b16 %v4964, %v4960
    %v5161 = vpack.c.b16 %v4965, %v4961
    %v5162 = vpack.c.b16 %v4970, %v4966
    %v5163 = vpack.c.b16 %v4971, %v4967
    %v5164 = vpack.c.b16 %v4972, %v4968
    %v5165 = vpack.c.b16 %v4973, %v4969
    %v5166 = vpack.c.b16 %v4978, %v4974
    %v5167 = vpack.c.b16 %v4979, %v4975
    %v5168 = vpack.c.b16 %v4980, %v4976
    %v5169 = vpack.c.b16 %v4981, %v4977
    %v5170 = vpack.c.b16 %v4986, %v4982
    %v5171 = vpack.c.b16 %v4987, %v4983
    %v5172 = vpack.c.b16 %v4988, %v4984
    %v5173 = vpack.c.b16 %v4989, %v4985
    %v5174 = vpack.c.b16 %v4994, %v4990
    %v5175 = vpack.c.b16 %v4995, %v4991
    %v5176 = vpack.c.b16 %v4996, %v4992
    %v5177 = vpack.c.b16 %v4997, %v4993
    %v5178 = vpack.c.b16 %v5002, %v4998
    %v5179 = vpack.c.b16 %v5003, %v4999
    %v5180 = vpack.c.b16 %v5004, %v5000
    %v5181 = vpack.c.b16 %v5005, %v5001
    %v5182 = vpack.c.b16 %v5010, %v5006
    %v5183 = vpack.c.b16 %v5011, %v5007
    %v5184 = vpack.c.b16 %v5012, %v5008
    %v5185 = vpack.c.b16 %v5013, %v5009
    %v5186 = vpack.c.b16 %v5018, %v5014
    %v5187 = vpack.c.b16 %v5019, %v5015
    %v5188 = vpack.c.b16 %v5020, %v5016
    %v5189 = vpack.c.b16 %v5021, %v5017
    %v5190 = vpack.c.b16 %v5026, %v5022
    %v5191 = vpack.c.b16 %v5027, %v5023
    %v5192 = vpack.c.b16 %v5028, %v5024
    %v5193 = vpack.c.b16 %v5029, %v5025
    %v5194 = vpack.c.b16 %v5034, %v5030
    %v5195 = vpack.c.b16 %v5035, %v5031
    %v5196 = vpack.c.b16 %v5036, %v5032
    %v5197 = vpack.c.b16 %v5037, %v5033
    %v5198 = vpack.c.b16 %v5042, %v5038
    %v5199 = vpack.c.b16 %v5043, %v5039
    %v5200 = vpack.c.b16 %v5044, %v5040
    %v5201 = vpack.c.b16 %v5045, %v5041
    %v5202 = vpack.c.b16 %v5050, %v5046
    %v5203 = vpack.c.b16 %v5051, %v5047
    %v5204 = vpack.c.b16 %v5052, %v5048
    %v5205 = vpack.c.b16 %v5053, %v5049
    %v5206 = vpack.c.b16 %v5058, %v5054
    %v5207 = vpack.c.b16 %v5059, %v5055
    %v5208 = vpack.c.b16 %v5060, %v5056
    %v5209 = vpack.c.b16 %v5061, %v5057
    %v5210 = vpack.c.b16 %v5066, %v5062
    %v5211 = vpack.c.b16 %v5067, %v5063
    %v5212 = vpack.c.b16 %v5068, %v5064
    %v5213 = vpack.c.b16 %v5069, %v5065
    %v5214 = vpack.c.b16 %v5074, %v5070
    %v5215 = vpack.c.b16 %v5075, %v5071
    %v5216 = vpack.c.b16 %v5076, %v5072
    %v5217 = vpack.c.b16 %v5077, %v5073
    %v5218 = vpack.c.b16 %v5082, %v5078
    %v5219 = vpack.c.b16 %v5083, %v5079
    %v5220 = vpack.c.b16 %v5084, %v5080
    %v5221 = vpack.c.b16 %v5085, %v5081
    %v5222 = vpack.c.b16 %v5090, %v5086
    %v5223 = vpack.c.b16 %v5091, %v5087
    %v5224 = vpack.c.b16 %v5092, %v5088
    %v5225 = vpack.c.b16 %v5093, %v5089
    %v5226 = vpack.c.b16 %v5098, %v5094
    %v5227 = vpack.c.b16 %v5099, %v5095
    %v5228 = vpack.c.b16 %v5100, %v5096
    %v5229 = vpack.c.b16 %v5101, %v5097
    %5358 = vmatprep.subr.bf16.mxu0 %v5103
    %5359 = vmatpush1.bf16.msra.mxu0 %v5102
    %5360 = vmatprep.subr.bf16.mxu0 %v5107
    %5361 = vmatpush1.bf16.msra.mxu0 %v5106
    %5362 = vmatprep.subr.bf16.mxu0 %v5111
    %5363 = vmatpush1.bf16.msra.mxu0 %v5110
    %5364 = vmatprep.subr.bf16.mxu0 %v5115
    %5365 = vmatpush1.bf16.msra.mxu0 %v5114
    %5366 = vmatprep.subr.bf16.mxu0 %v5119
    %5367 = vmatpush1.bf16.msra.mxu0 %v5118
    %5368 = vmatprep.subr.bf16.mxu0 %v5123
    %5369 = vmatpush1.bf16.msra.mxu0 %v5122
    %5370 = vmatprep.subr.bf16.mxu0 %v5127
    %5371 = vmatpush1.bf16.msra.mxu0 %v5126
    %5372 = vmatprep.subr.bf16.mxu0 %v5131
    %5373 = vmatpush1.bf16.msra.mxu0 %v5130
    %5374 = vmatprep.subr.bf16.mxu0 %v5135
    %5375 = vmatpush1.bf16.msra.mxu0 %v5134
    %5376 = vmatprep.subr.bf16.mxu0 %v5139
    %5377 = vmatpush1.bf16.msra.mxu0 %v5138
    %5378 = vmatprep.subr.bf16.mxu0 %v5143
    %5379 = vmatpush1.bf16.msra.mxu0 %v5142
    %5380 = vmatprep.subr.bf16.mxu0 %v5147
    %5381 = vmatpush1.bf16.msra.mxu0 %v5146
    %5382 = vmatprep.subr.bf16.mxu0 %v5151
    %5383 = vmatpush1.bf16.msra.mxu0 %v5150
    %5384 = vmatprep.subr.bf16.mxu0 %v5155
    %5385 = vmatpush1.bf16.msra.mxu0 %v5154
    %5386 = vmatprep.subr.bf16.mxu0 %v5159
    %5387 = vmatpush1.bf16.msra.mxu0 %v5158
    %5388 = vmatprep.subr.bf16.mxu0 %v5163
    %5389 = vmatpush1.bf16.msra.mxu0 %v5162
    %5390 = vmatprep.mubr.bf16.mxu0 %v4505
    %5391 = vmatmul.mubr.bf16.gmra.mrb[0].mxu0 %v4504
    %v5392 = vpop.f32.mrb[0].mxu0
    %v5393 = vadd.f32 %v4701, %v5392
    %v5394 = vpop.f32.mrb[0].mxu0
    %v5395 = vadd.f32 %v4705, %v5394
    %v5396 = vpop.f32.mrb[0].mxu0
    %v5397 = vadd.f32 %v4701, %v5396
    %v5398 = vpop.f32.mrb[0].mxu0
    %v5399 = vadd.f32 %v4705, %v5398
    %5400 = vmatprep.mubr.bf16.mxu0 %v4509
    %5401 = vmatmul.mubr.bf16.gmra.mrb[0].mxu0 %v4508
    %v5402 = vpop.f32.mrb[0].mxu0
    %v5403 = vadd.f32 %v4701, %v5402
    %v5404 = vpop.f32.mrb[0].mxu0
    %v5405 = vadd.f32 %v4705, %v5404
    %v5406 = vpop.f32.mrb[0].mxu0
    %v5407 = vadd.f32 %v4701, %v5406
    %v5408 = vpop.f32.mrb[0].mxu0
    %v5409 = vadd.f32 %v4705, %v5408
    %5410 = vmatprep.mubr.bf16.mxu0 %v4513
    %5411 = vmatmul.mubr.bf16.gmra.mrb[0].mxu0 %v4512
    %v5412 = vpop.f32.mrb[0].mxu0
    %v5413 = vadd.f32 %v4701, %v5412
    %v5414 = vpop.f32.mrb[0].mxu0
    %v5415 = vadd.f32 %v4705, %v5414
    %v5416 = vpop.f32.mrb[0].mxu0
    %v5417 = vadd.f32 %v4701, %v5416
    %v5418 = vpop.f32.mrb[0].mxu0
    %v5419 = vadd.f32 %v4705, %v5418
    %5420 = vmatprep.mubr.bf16.mxu0 %v4517
    %5421 = vmatmul.mubr.bf16.gmra.mrb[0].mxu0 %v4516
    %v5422 = vpop.f32.mrb[0].mxu0
    %v5423 = vadd.f32 %v4701, %v5422
    %v5424 = vpop.f32.mrb[0].mxu0
    %v5425 = vadd.f32 %v4705, %v5424
    %v5426 = vpop.f32.mrb[0].mxu0
    %v5427 = vadd.f32 %v4701, %v5426
    %v5428 = vpop.f32.mrb[0].mxu0
    %v5429 = vadd.f32 %v4705, %v5428
    %5430 = vmatprep.mubr.bf16.mxu0 %v4521
    %5431 = vmatmul.mubr.bf16.gmra.mrb[0].mxu0 %v4520
    %v5432 = vpop.f32.mrb[0].mxu0
    %v5433 = vadd.f32 %v4701, %v5432
    %v5434 = vpop.f32.mrb[0].mxu0
    %v5435 = vadd.f32 %v4705, %v5434
    %v5436 = vpop.f32.mrb[0].mxu0
    %v5437 = vadd.f32 %v4701, %v5436
    %v5438 = vpop.f32.mrb[0].mxu0
    %v5439 = vadd.f32 %v4705, %v5438
    %5440 = vmatprep.mubr.bf16.mxu0 %v4525
    %5441 = vmatmul.mubr.bf16.gmra.mrb[0].mxu0 %v4524
    %v5442 = vpop.f32.mrb[0].mxu0
    %v5443 = vadd.f32 %v4701, %v5442
    %v5444 = vpop.f32.mrb[0].mxu0
    %v5445 = vadd.f32 %v4705, %v5444
    %v5446 = vpop.f32.mrb[0].mxu0
    %v5447 = vadd.f32 %v4701, %v5446
    %v5448 = vpop.f32.mrb[0].mxu0
    %v5449 = vadd.f32 %v4705, %v5448
    %5450 = vmatprep.mubr.bf16.mxu0 %v4529
    %5451 = vmatmul.mubr.bf16.gmra.mrb[0].mxu0 %v4528
    %v5452 = vpop.f32.mrb[0].mxu0
    %v5453 = vadd.f32 %v4701, %v5452
    %v5454 = vpop.f32.mrb[0].mxu0
    %v5455 = vadd.f32 %v4705, %v5454
    %v5456 = vpop.f32.mrb[0].mxu0
    %v5457 = vadd.f32 %v4701, %v5456
    %v5458 = vpop.f32.mrb[0].mxu0
    %v5459 = vadd.f32 %v4705, %v5458
    %5460 = vmatprep.mubr.bf16.mxu0 %v4533
    %5461 = vmatmul.mubr.bf16.gmra.mrb[0].mxu0 %v4532
    %v5462 = vpop.f32.mrb[0].mxu0
    %v5463 = vadd.f32 %v4701, %v5462
    %v5464 = vpop.f32.mrb[0].mxu0
    %v5465 = vadd.f32 %v4705, %v5464
    %v5466 = vpop.f32.mrb[0].mxu0
    %v5467 = vadd.f32 %v4701, %v5466
    %v5468 = vpop.f32.mrb[0].mxu0
    %v5469 = vadd.f32 %v4705, %v5468
    %5470 = vmatprep.mubr.bf16.mxu0 %v4537
    %5471 = vmatmul.mubr.bf16.gmra.mrb[0].mxu0 %v4536
    %v5472 = vpop.f32.mrb[0].mxu0
    %v5473 = vadd.f32 %v4701, %v5472
    %v5474 = vpop.f32.mrb[0].mxu0
    %v5475 = vadd.f32 %v4705, %v5474
    %v5476 = vpop.f32.mrb[0].mxu0
    %v5477 = vadd.f32 %v4701, %v5476
    %v5478 = vpop.f32.mrb[0].mxu0
    %v5479 = vadd.f32 %v4705, %v5478
    %5480 = vmatprep.mubr.bf16.mxu0 %v4541
    %5481 = vmatmul.mubr.bf16.gmra.mrb[0].mxu0 %v4540
    %v5482 = vpop.f32.mrb[0].mxu0
    %v5483 = vadd.f32 %v4701, %v5482
    %v5484 = vpop.f32.mrb[0].mxu0
    %v5485 = vadd.f32 %v4705, %v5484
    %v5486 = vpop.f32.mrb[0].mxu0
    %v5487 = vadd.f32 %v4701, %v5486
    %v5488 = vpop.f32.mrb[0].mxu0
    %v5489 = vadd.f32 %v4705, %v5488
    %5490 = vmatprep.mubr.bf16.mxu0 %v4545
    %5491 = vmatmul.mubr.bf16.gmra.mrb[0].mxu0 %v4544
    %v5492 = vpop.f32.mrb[0].mxu0
    %v5493 = vadd.f32 %v4701, %v5492
    %v5494 = vpop.f32.mrb[0].mxu0
    %v5495 = vadd.f32 %v4705, %v5494
    %v5496 = vpop.f32.mrb[0].mxu0
    %v5497 = vadd.f32 %v4701, %v5496
    %v5498 = vpop.f32.mrb[0].mxu0
    %v5499 = vadd.f32 %v4705, %v5498
    %5500 = vmatprep.mubr.bf16.mxu0 %v4549
    %5501 = vmatmul.mubr.bf16.gmra.mrb[0].mxu0 %v4548
    %v5502 = vpop.f32.mrb[0].mxu0
    %v5503 = vadd.f32 %v4701, %v5502
    %v5504 = vpop.f32.mrb[0].mxu0
    %v5505 = vadd.f32 %v4705, %v5504
    %v5506 = vpop.f32.mrb[0].mxu0
    %v5507 = vadd.f32 %v4701, %v5506
    %v5508 = vpop.f32.mrb[0].mxu0
    %v5509 = vadd.f32 %v4705, %v5508
    %5510 = vmatprep.mubr.bf16.mxu0 %v4553
    %5511 = vmatmul.mubr.bf16.gmra.mrb[0].mxu0 %v4552
    %v5512 = vpop.f32.mrb[0].mxu0
    %v5513 = vadd.f32 %v4701, %v5512
    %v5514 = vpop.f32.mrb[0].mxu0
    %v5515 = vadd.f32 %v4705, %v5514
    %v5516 = vpop.f32.mrb[0].mxu0
    %v5517 = vadd.f32 %v4701, %v5516
    %v5518 = vpop.f32.mrb[0].mxu0
    %v5519 = vadd.f32 %v4705, %v5518
    %5520 = vmatprep.mubr.bf16.mxu0 %v4557
    %5521 = vmatmul.mubr.bf16.gmra.mrb[0].mxu0 %v4556
    %v5522 = vpop.f32.mrb[0].mxu0
    %v5523 = vadd.f32 %v4701, %v5522
    %v5524 = vpop.f32.mrb[0].mxu0
    %v5525 = vadd.f32 %v4705, %v5524
    %v5526 = vpop.f32.mrb[0].mxu0
    %v5527 = vadd.f32 %v4701, %v5526
    %v5528 = vpop.f32.mrb[0].mxu0
    %v5529 = vadd.f32 %v4705, %v5528
    %5530 = vmatprep.mubr.bf16.mxu0 %v4561
    %5531 = vmatmul.mubr.bf16.gmra.mrb[0].mxu0 %v4560
    %v5532 = vpop.f32.mrb[0].mxu0
    %v5533 = vadd.f32 %v4701, %v5532
    %v5534 = vpop.f32.mrb[0].mxu0
    %v5535 = vadd.f32 %v4705, %v5534
    %v5536 = vpop.f32.mrb[0].mxu0
    %v5537 = vadd.f32 %v4701, %v5536
    %v5538 = vpop.f32.mrb[0].mxu0
    %v5539 = vadd.f32 %v4705, %v5538
    %5540 = vmatprep.mubr.bf16.mxu0 %v4565
    %5541 = vmatmul.mubr.bf16.gmra.mrb[0].mxu0 %v4564
    %v5542 = vpop.f32.mrb[0].mxu0
    %v5543 = vadd.f32 %v4701, %v5542
    %v5544 = vpop.f32.mrb[0].mxu0
    %v5545 = vadd.f32 %v4705, %v5544
    %v5546 = vpop.f32.mrb[0].mxu0
    %v5547 = vadd.f32 %v4701, %v5546
    %v5548 = vpop.f32.mrb[0].mxu0
    %v5549 = vadd.f32 %v4705, %v5548
    %5550 = vdwg.mxu0
    %5551 = vmatprep.subr.bf16.mxu0 %v5167
    %5552 = vmatpush1.bf16.msra.mxu0 %v5166
    %5553 = vmatprep.subr.bf16.mxu0 %v5171
    %5554 = vmatpush1.bf16.msra.mxu0 %v5170
    %5555 = vmatprep.subr.bf16.mxu0 %v5175
    %5556 = vmatpush1.bf16.msra.mxu0 %v5174
    %5557 = vmatprep.subr.bf16.mxu0 %v5179
    %5558 = vmatpush1.bf16.msra.mxu0 %v5178
    %5559 = vmatprep.subr.bf16.mxu0 %v5183
    %5560 = vmatpush1.bf16.msra.mxu0 %v5182
    %5561 = vmatprep.subr.bf16.mxu0 %v5187
    %5562 = vmatpush1.bf16.msra.mxu0 %v5186
    %5563 = vmatprep.subr.bf16.mxu0 %v5191
    %5564 = vmatpush1.bf16.msra.mxu0 %v5190
    %5565 = vmatprep.subr.bf16.mxu0 %v5195
    %5566 = vmatpush1.bf16.msra.mxu0 %v5194
    %5567 = vmatprep.subr.bf16.mxu0 %v5199
    %5568 = vmatpush1.bf16.msra.mxu0 %v5198
    %5569 = vmatprep.subr.bf16.mxu0 %v5203
    %5570 = vmatpush1.bf16.msra.mxu0 %v5202
    %5571 = vmatprep.subr.bf16.mxu0 %v5207
    %5572 = vmatpush1.bf16.msra.mxu0 %v5206
    %5573 = vmatprep.subr.bf16.mxu0 %v5211
    %5574 = vmatpush1.bf16.msra.mxu0 %v5210
    %5575 = vmatprep.subr.bf16.mxu0 %v5215
    %5576 = vmatpush1.bf16.msra.mxu0 %v5214
    %5577 = vmatprep.subr.bf16.mxu0 %v5219
    %5578 = vmatpush1.bf16.msra.mxu0 %v5218
    %5579 = vmatprep.subr.bf16.mxu0 %v5223
    %5580 = vmatpush1.bf16.msra.mxu0 %v5222
    %5581 = vmatprep.subr.bf16.mxu0 %v5227
    %5582 = vmatpush1.bf16.msra.mxu0 %v5226
    %5583 = vmatprep.mubr.bf16.mxu0 %v4507
    %5584 = vmatmul.mubr.bf16.gmra.mrb[0].mxu0 %v4506
    %v5585 = vpop.f32.mrb[0].mxu0
    %v5586 = vadd.f32 %v5393, %v5585
    %v5587 = vpop.f32.mrb[0].mxu0
    %v5588 = vadd.f32 %v5395, %v5587
    %v5589 = vpop.f32.mrb[0].mxu0
    %v5590 = vadd.f32 %v5397, %v5589
    %v5591 = vpop.f32.mrb[0].mxu0
    %v5592 = vadd.f32 %v5399, %v5591
    %5593 = vmatprep.mubr.bf16.mxu0 %v4511
    %5594 = vmatmul.mubr.bf16.gmra.mrb[0].mxu0 %v4510
    %v5595 = vpop.f32.mrb[0].mxu0
    %v5596 = vadd.f32 %v5403, %v5595
    %v5597 = vpop.f32.mrb[0].mxu0
    %v5598 = vadd.f32 %v5405, %v5597
    %v5599 = vpop.f32.mrb[0].mxu0
    %v5600 = vadd.f32 %v5407, %v5599
    %v5601 = vpop.f32.mrb[0].mxu0
    %v5602 = vadd.f32 %v5409, %v5601
    %5603 = vmatprep.mubr.bf16.mxu0 %v4515
    %5604 = vmatmul.mubr.bf16.gmra.mrb[0].mxu0 %v4514
    %v5605 = vpop.f32.mrb[0].mxu0
    %v5606 = vadd.f32 %v5413, %v5605
    %v5607 = vpop.f32.mrb[0].mxu0
    %v5608 = vadd.f32 %v5415, %v5607
    %v5609 = vpop.f32.mrb[0].mxu0
    %v5610 = vadd.f32 %v5417, %v5609
    %v5611 = vpop.f32.mrb[0].mxu0
    %v5612 = vadd.f32 %v5419, %v5611
    %5613 = vmatprep.mubr.bf16.mxu0 %v4519
    %5614 = vmatmul.mubr.bf16.gmra.mrb[0].mxu0 %v4518
    %v5615 = vpop.f32.mrb[0].mxu0
    %v5616 = vadd.f32 %v5423, %v5615
    %v5617 = vpop.f32.mrb[0].mxu0
    %v5618 = vadd.f32 %v5425, %v5617
    %v5619 = vpop.f32.mrb[0].mxu0
    %v5620 = vadd.f32 %v5427, %v5619
    %v5621 = vpop.f32.mrb[0].mxu0
    %v5622 = vadd.f32 %v5429, %v5621
    %5623 = vmatprep.mubr.bf16.mxu0 %v4523
    %5624 = vmatmul.mubr.bf16.gmra.mrb[0].mxu0 %v4522
    %v5625 = vpop.f32.mrb[0].mxu0
    %v5626 = vadd.f32 %v5433, %v5625
    %v5627 = vpop.f32.mrb[0].mxu0
    %v5628 = vadd.f32 %v5435, %v5627
    %v5629 = vpop.f32.mrb[0].mxu0
    %v5630 = vadd.f32 %v5437, %v5629
    %v5631 = vpop.f32.mrb[0].mxu0
    %v5632 = vadd.f32 %v5439, %v5631
    %5633 = vmatprep.mubr.bf16.mxu0 %v4527
    %5634 = vmatmul.mubr.bf16.gmra.mrb[0].mxu0 %v4526
    %v5635 = vpop.f32.mrb[0].mxu0
    %v5636 = vadd.f32 %v5443, %v5635
    %v5637 = vpop.f32.mrb[0].mxu0
    %v5638 = vadd.f32 %v5445, %v5637
    %v5639 = vpop.f32.mrb[0].mxu0
    %v5640 = vadd.f32 %v5447, %v5639
    %v5641 = vpop.f32.mrb[0].mxu0
    %v5642 = vadd.f32 %v5449, %v5641
    %5643 = vmatprep.mubr.bf16.mxu0 %v4531
    %5644 = vmatmul.mubr.bf16.gmra.mrb[0].mxu0 %v4530
    %v5645 = vpop.f32.mrb[0].mxu0
    %v5646 = vadd.f32 %v5453, %v5645
    %v5647 = vpop.f32.mrb[0].mxu0
    %v5648 = vadd.f32 %v5455, %v5647
    %v5649 = vpop.f32.mrb[0].mxu0
    %v5650 = vadd.f32 %v5457, %v5649
    %v5651 = vpop.f32.mrb[0].mxu0
    %v5652 = vadd.f32 %v5459, %v5651
    %5653 = vmatprep.mubr.bf16.mxu0 %v4535
    %5654 = vmatmul.mubr.bf16.gmra.mrb[0].mxu0 %v4534
    %v5655 = vpop.f32.mrb[0].mxu0
    %v5656 = vadd.f32 %v5463, %v5655
    %v5657 = vpop.f32.mrb[0].mxu0
    %v5658 = vadd.f32 %v5465, %v5657
    %v5659 = vpop.f32.mrb[0].mxu0
    %v5660 = vadd.f32 %v5467, %v5659
    %v5661 = vpop.f32.mrb[0].mxu0
    %v5662 = vadd.f32 %v5469, %v5661
    %5663 = vmatprep.mubr.bf16.mxu0 %v4539
    %5664 = vmatmul.mubr.bf16.gmra.mrb[0].mxu0 %v4538
    %v5665 = vpop.f32.mrb[0].mxu0
    %v5666 = vadd.f32 %v5473, %v5665
    %v5667 = vpop.f32.mrb[0].mxu0
    %v5668 = vadd.f32 %v5475, %v5667
    %v5669 = vpop.f32.mrb[0].mxu0
    %v5670 = vadd.f32 %v5477, %v5669
    %v5671 = vpop.f32.mrb[0].mxu0
    %v5672 = vadd.f32 %v5479, %v5671
    %5673 = vmatprep.mubr.bf16.mxu0 %v4543
    %5674 = vmatmul.mubr.bf16.gmra.mrb[0].mxu0 %v4542
    %v5675 = vpop.f32.mrb[0].mxu0
    %v5676 = vadd.f32 %v5483, %v5675
    %v5677 = vpop.f32.mrb[0].mxu0
    %v5678 = vadd.f32 %v5485, %v5677
    %v5679 = vpop.f32.mrb[0].mxu0
    %v5680 = vadd.f32 %v5487, %v5679
    %v5681 = vpop.f32.mrb[0].mxu0
    %v5682 = vadd.f32 %v5489, %v5681
    %5683 = vmatprep.mubr.bf16.mxu0 %v4547
    %5684 = vmatmul.mubr.bf16.gmra.mrb[0].mxu0 %v4546
    %v5685 = vpop.f32.mrb[0].mxu0
    %v5686 = vadd.f32 %v5493, %v5685
    %v5687 = vpop.f32.mrb[0].mxu0
    %v5688 = vadd.f32 %v5495, %v5687
    %v5689 = vpop.f32.mrb[0].mxu0
    %v5690 = vadd.f32 %v5497, %v5689
    %v5691 = vpop.f32.mrb[0].mxu0
    %v5692 = vadd.f32 %v5499, %v5691
    %5693 = vmatprep.mubr.bf16.mxu0 %v4551
    %5694 = vmatmul.mubr.bf16.gmra.mrb[0].mxu0 %v4550
    %v5695 = vpop.f32.mrb[0].mxu0
    %v5696 = vadd.f32 %v5503, %v5695
    %v5697 = vpop.f32.mrb[0].mxu0
    %v5698 = vadd.f32 %v5505, %v5697
    %v5699 = vpop.f32.mrb[0].mxu0
    %v5700 = vadd.f32 %v5507, %v5699
    %v5701 = vpop.f32.mrb[0].mxu0
    %v5702 = vadd.f32 %v5509, %v5701
    %5703 = vmatprep.mubr.bf16.mxu0 %v4555
    %5704 = vmatmul.mubr.bf16.gmra.mrb[0].mxu0 %v4554
    %v5705 = vpop.f32.mrb[0].mxu0
    %v5706 = vadd.f32 %v5513, %v5705
    %v5707 = vpop.f32.mrb[0].mxu0
    %v5708 = vadd.f32 %v5515, %v5707
    %v5709 = vpop.f32.mrb[0].mxu0
    %v5710 = vadd.f32 %v5517, %v5709
    %v5711 = vpop.f32.mrb[0].mxu0
    %v5712 = vadd.f32 %v5519, %v5711
    %5713 = vmatprep.mubr.bf16.mxu0 %v4559
    %5714 = vmatmul.mubr.bf16.gmra.mrb[0].mxu0 %v4558
    %v5715 = vpop.f32.mrb[0].mxu0
    %v5716 = vadd.f32 %v5523, %v5715
    %v5717 = vpop.f32.mrb[0].mxu0
    %v5718 = vadd.f32 %v5525, %v5717
    %v5719 = vpop.f32.mrb[0].mxu0
    %v5720 = vadd.f32 %v5527, %v5719
    %v5721 = vpop.f32.mrb[0].mxu0
    %v5722 = vadd.f32 %v5529, %v5721
    %5723 = vmatprep.mubr.bf16.mxu0 %v4563
    %5724 = vmatmul.mubr.bf16.gmra.mrb[0].mxu0 %v4562
    %v5725 = vpop.f32.mrb[0].mxu0
    %v5726 = vadd.f32 %v5533, %v5725
    %v5727 = vpop.f32.mrb[0].mxu0
    %v5728 = vadd.f32 %v5535, %v5727
    %v5729 = vpop.f32.mrb[0].mxu0
    %v5730 = vadd.f32 %v5537, %v5729
    %v5731 = vpop.f32.mrb[0].mxu0
    %v5732 = vadd.f32 %v5539, %v5731
    %5733 = vmatprep.mubr.bf16.mxu0 %v4567
    %5734 = vmatmul.mubr.bf16.gmra.mrb[0].mxu0 %v4566
    %v5735 = vpop.f32.mrb[0].mxu0
    %v5736 = vadd.f32 %v5543, %v5735
    %v5737 = vpop.f32.mrb[0].mxu0
    %v5738 = vadd.f32 %v5545, %v5737
    %v5739 = vpop.f32.mrb[0].mxu0
    %v5740 = vadd.f32 %v5547, %v5739
    %v5741 = vpop.f32.mrb[0].mxu0
    %v5742 = vadd.f32 %v5549, %v5741
    %5743 = vdwg.mxu0
    %5744 = vmatprep.subr.bf16.mxu0 %v5105
    %5745 = vmatpush1.bf16.msra.mxu0 %v5104
    %5746 = vmatprep.subr.bf16.mxu0 %v5109
    %5747 = vmatpush1.bf16.msra.mxu0 %v5108
    %5748 = vmatprep.subr.bf16.mxu0 %v5113
    %5749 = vmatpush1.bf16.msra.mxu0 %v5112
    %5750 = vmatprep.subr.bf16.mxu0 %v5117
    %5751 = vmatpush1.bf16.msra.mxu0 %v5116
    %5752 = vmatprep.subr.bf16.mxu0 %v5121
    %5753 = vmatpush1.bf16.msra.mxu0 %v5120
    %5754 = vmatprep.subr.bf16.mxu0 %v5125
    %5755 = vmatpush1.bf16.msra.mxu0 %v5124
    %5756 = vmatprep.subr.bf16.mxu0 %v5129
    %5757 = vmatpush1.bf16.msra.mxu0 %v5128
    %5758 = vmatprep.subr.bf16.mxu0 %v5133
    %5759 = vmatpush1.bf16.msra.mxu0 %v5132
    %5760 = vmatprep.subr.bf16.mxu0 %v5137
    %5761 = vmatpush1.bf16.msra.mxu0 %v5136
    %5762 = vmatprep.subr.bf16.mxu0 %v5141
    %5763 = vmatpush1.bf16.msra.mxu0 %v5140
    %5764 = vmatprep.subr.bf16.mxu0 %v5145
    %5765 = vmatpush1.bf16.msra.mxu0 %v5144
    %5766 = vmatprep.subr.bf16.mxu0 %v5149
    %5767 = vmatpush1.bf16.msra.mxu0 %v5148
    %5768 = vmatprep.subr.bf16.mxu0 %v5153
    %5769 = vmatpush1.bf16.msra.mxu0 %v5152
    %5770 = vmatprep.subr.bf16.mxu0 %v5157
    %5771 = vmatpush1.bf16.msra.mxu0 %v5156
    %5772 = vmatprep.subr.bf16.mxu0 %v5161
    %5773 = vmatpush1.bf16.msra.mxu0 %v5160
    %5774 = vmatprep.subr.bf16.mxu0 %v5165
    %5775 = vmatpush1.bf16.msra.mxu0 %v5164
    %5776 = vmatprep.mubr.bf16.mxu0 %v4505
    %5777 = vmatmul.mubr.bf16.gmra.mrb[0].mxu0 %v4504
    %v5778 = vpop.f32.mrb[0].mxu0
    %v5779 = vadd.f32 %v4709, %v5778
    %v5780 = vpop.f32.mrb[0].mxu0
    %v5781 = vadd.f32 %v4713, %v5780
    %v5782 = vpop.f32.mrb[0].mxu0
    %v5783 = vadd.f32 %v4709, %v5782
    %v5784 = vpop.f32.mrb[0].mxu0
    %v5785 = vadd.f32 %v4713, %v5784
    %5786 = vmatprep.mubr.bf16.mxu0 %v4509
    %5787 = vmatmul.mubr.bf16.gmra.mrb[0].mxu0 %v4508
    %v5788 = vpop.f32.mrb[0].mxu0
    %v5789 = vadd.f32 %v4709, %v5788
    %v5790 = vpop.f32.mrb[0].mxu0
    %v5791 = vadd.f32 %v4713, %v5790
    %v5792 = vpop.f32.mrb[0].mxu0
    %v5793 = vadd.f32 %v4709, %v5792
    %v5794 = vpop.f32.mrb[0].mxu0
    %v5795 = vadd.f32 %v4713, %v5794
    %5796 = vmatprep.mubr.bf16.mxu0 %v4513
    %5797 = vmatmul.mubr.bf16.gmra.mrb[0].mxu0 %v4512
    %v5798 = vpop.f32.mrb[0].mxu0
    %v5799 = vadd.f32 %v4709, %v5798
    %v5800 = vpop.f32.mrb[0].mxu0
    %v5801 = vadd.f32 %v4713, %v5800
    %v5802 = vpop.f32.mrb[0].mxu0
    %v5803 = vadd.f32 %v4709, %v5802
    %v5804 = vpop.f32.mrb[0].mxu0
    %v5805 = vadd.f32 %v4713, %v5804
    %5806 = vmatprep.mubr.bf16.mxu0 %v4517
    %5807 = vmatmul.mubr.bf16.gmra.mrb[0].mxu0 %v4516
    %v5808 = vpop.f32.mrb[0].mxu0
    %v5809 = vadd.f32 %v4709, %v5808
    %v5810 = vpop.f32.mrb[0].mxu0
    %v5811 = vadd.f32 %v4713, %v5810
    %v5812 = vpop.f32.mrb[0].mxu0
    %v5813 = vadd.f32 %v4709, %v5812
    %v5814 = vpop.f32.mrb[0].mxu0
    %v5815 = vadd.f32 %v4713, %v5814
    %5816 = vmatprep.mubr.bf16.mxu0 %v4521
    %5817 = vmatmul.mubr.bf16.gmra.mrb[0].mxu0 %v4520
    %v5818 = vpop.f32.mrb[0].mxu0
    %v5819 = vadd.f32 %v4709, %v5818
    %v5820 = vpop.f32.mrb[0].mxu0
    %v5821 = vadd.f32 %v4713, %v5820
    %v5822 = vpop.f32.mrb[0].mxu0
    %v5823 = vadd.f32 %v4709, %v5822
    %v5824 = vpop.f32.mrb[0].mxu0
    %v5825 = vadd.f32 %v4713, %v5824
    %5826 = vmatprep.mubr.bf16.mxu0 %v4525
    %5827 = vmatmul.mubr.bf16.gmra.mrb[0].mxu0 %v4524
    %v5828 = vpop.f32.mrb[0].mxu0
    %v5829 = vadd.f32 %v4709, %v5828
    %v5830 = vpop.f32.mrb[0].mxu0
    %v5831 = vadd.f32 %v4713, %v5830
    %v5832 = vpop.f32.mrb[0].mxu0
    %v5833 = vadd.f32 %v4709, %v5832
    %v5834 = vpop.f32.mrb[0].mxu0
    %v5835 = vadd.f32 %v4713, %v5834
    %5836 = vmatprep.mubr.bf16.mxu0 %v4529
    %5837 = vmatmul.mubr.bf16.gmra.mrb[0].mxu0 %v4528
    %v5838 = vpop.f32.mrb[0].mxu0
    %v5839 = vadd.f32 %v4709, %v5838
    %v5840 = vpop.f32.mrb[0].mxu0
    %v5841 = vadd.f32 %v4713, %v5840
    %v5842 = vpop.f32.mrb[0].mxu0
    %v5843 = vadd.f32 %v4709, %v5842
    %v5844 = vpop.f32.mrb[0].mxu0
    %v5845 = vadd.f32 %v4713, %v5844
    %5846 = vmatprep.mubr.bf16.mxu0 %v4533
    %5847 = vmatmul.mubr.bf16.gmra.mrb[0].mxu0 %v4532
    %v5848 = vpop.f32.mrb[0].mxu0
    %v5849 = vadd.f32 %v4709, %v5848
    %v5850 = vpop.f32.mrb[0].mxu0
    %v5851 = vadd.f32 %v4713, %v5850
    %v5852 = vpop.f32.mrb[0].mxu0
    %v5853 = vadd.f32 %v4709, %v5852
    %v5854 = vpop.f32.mrb[0].mxu0
    %v5855 = vadd.f32 %v4713, %v5854
    %5856 = vmatprep.mubr.bf16.mxu0 %v4537
    %5857 = vmatmul.mubr.bf16.gmra.mrb[0].mxu0 %v4536
    %v5858 = vpop.f32.mrb[0].mxu0
    %v5859 = vadd.f32 %v4709, %v5858
    %v5860 = vpop.f32.mrb[0].mxu0
    %v5861 = vadd.f32 %v4713, %v5860
    %v5862 = vpop.f32.mrb[0].mxu0
    %v5863 = vadd.f32 %v4709, %v5862
    %v5864 = vpop.f32.mrb[0].mxu0
    %v5865 = vadd.f32 %v4713, %v5864
    %5866 = vmatprep.mubr.bf16.mxu0 %v4541
    %5867 = vmatmul.mubr.bf16.gmra.mrb[0].mxu0 %v4540
    %v5868 = vpop.f32.mrb[0].mxu0
    %v5869 = vadd.f32 %v4709, %v5868
    %v5870 = vpop.f32.mrb[0].mxu0
    %v5871 = vadd.f32 %v4713, %v5870
    %v5872 = vpop.f32.mrb[0].mxu0
    %v5873 = vadd.f32 %v4709, %v5872
    %v5874 = vpop.f32.mrb[0].mxu0
    %v5875 = vadd.f32 %v4713, %v5874
    %5876 = vmatprep.mubr.bf16.mxu0 %v4545
    %5877 = vmatmul.mubr.bf16.gmra.mrb[0].mxu0 %v4544
    %v5878 = vpop.f32.mrb[0].mxu0
    %v5879 = vadd.f32 %v4709, %v5878
    %v5880 = vpop.f32.mrb[0].mxu0
    %v5881 = vadd.f32 %v4713, %v5880
    %v5882 = vpop.f32.mrb[0].mxu0
    %v5883 = vadd.f32 %v4709, %v5882
    %v5884 = vpop.f32.mrb[0].mxu0
    %v5885 = vadd.f32 %v4713, %v5884
    %5886 = vmatprep.mubr.bf16.mxu0 %v4549
    %5887 = vmatmul.mubr.bf16.gmra.mrb[0].mxu0 %v4548
    %v5888 = vpop.f32.mrb[0].mxu0
    %v5889 = vadd.f32 %v4709, %v5888
    %v5890 = vpop.f32.mrb[0].mxu0
    %v5891 = vadd.f32 %v4713, %v5890
    %v5892 = vpop.f32.mrb[0].mxu0
    %v5893 = vadd.f32 %v4709, %v5892
    %v5894 = vpop.f32.mrb[0].mxu0
    %v5895 = vadd.f32 %v4713, %v5894
    %5896 = vmatprep.mubr.bf16.mxu0 %v4553
    %5897 = vmatmul.mubr.bf16.gmra.mrb[0].mxu0 %v4552
    %v5898 = vpop.f32.mrb[0].mxu0
    %v5899 = vadd.f32 %v4709, %v5898
    %v5900 = vpop.f32.mrb[0].mxu0
    %v5901 = vadd.f32 %v4713, %v5900
    %v5902 = vpop.f32.mrb[0].mxu0
    %v5903 = vadd.f32 %v4709, %v5902
    %v5904 = vpop.f32.mrb[0].mxu0
    %v5905 = vadd.f32 %v4713, %v5904
    %5906 = vmatprep.mubr.bf16.mxu0 %v4557
    %5907 = vmatmul.mubr.bf16.gmra.mrb[0].mxu0 %v4556
    %v5908 = vpop.f32.mrb[0].mxu0
    %v5909 = vadd.f32 %v4709, %v5908
    %v5910 = vpop.f32.mrb[0].mxu0
    %v5911 = vadd.f32 %v4713, %v5910
    %v5912 = vpop.f32.mrb[0].mxu0
    %v5913 = vadd.f32 %v4709, %v5912
    %v5914 = vpop.f32.mrb[0].mxu0
    %v5915 = vadd.f32 %v4713, %v5914
    %5916 = vmatprep.mubr.bf16.mxu0 %v4561
    %5917 = vmatmul.mubr.bf16.gmra.mrb[0].mxu0 %v4560
    %v5918 = vpop.f32.mrb[0].mxu0
    %v5919 = vadd.f32 %v4709, %v5918
    %v5920 = vpop.f32.mrb[0].mxu0
    %v5921 = vadd.f32 %v4713, %v5920
    %v5922 = vpop.f32.mrb[0].mxu0
    %v5923 = vadd.f32 %v4709, %v5922
    %v5924 = vpop.f32.mrb[0].mxu0
    %v5925 = vadd.f32 %v4713, %v5924
    %5926 = vmatprep.mubr.bf16.mxu0 %v4565
    %5927 = vmatmul.mubr.bf16.gmra.mrb[0].mxu0 %v4564
    %v5928 = vpop.f32.mrb[0].mxu0
    %v5929 = vadd.f32 %v4709, %v5928
    %v5930 = vpop.f32.mrb[0].mxu0
    %v5931 = vadd.f32 %v4713, %v5930
    %v5932 = vpop.f32.mrb[0].mxu0
    %v5933 = vadd.f32 %v4709, %v5932
    %v5934 = vpop.f32.mrb[0].mxu0
    %v5935 = vadd.f32 %v4713, %v5934
    %5936 = vdwg.mxu0
    %5937 = vmatprep.subr.bf16.mxu0 %v5169
    %5938 = vmatpush1.bf16.msra.mxu0 %v5168
    %5939 = vmatprep.subr.bf16.mxu0 %v5173
    %5940 = vmatpush1.bf16.msra.mxu0 %v5172
    %5941 = vmatprep.subr.bf16.mxu0 %v5177
    %5942 = vmatpush1.bf16.msra.mxu0 %v5176
    %5943 = vmatprep.subr.bf16.mxu0 %v5181
    %5944 = vmatpush1.bf16.msra.mxu0 %v5180
    %5945 = vmatprep.subr.bf16.mxu0 %v5185
    %5946 = vmatpush1.bf16.msra.mxu0 %v5184
    %5947 = vmatprep.subr.bf16.mxu0 %v5189
    %5948 = vmatpush1.bf16.msra.mxu0 %v5188
    %5949 = vmatprep.subr.bf16.mxu0 %v5193
    %5950 = vmatpush1.bf16.msra.mxu0 %v5192
    %5951 = vmatprep.subr.bf16.mxu0 %v5197
    %5952 = vmatpush1.bf16.msra.mxu0 %v5196
    %5953 = vmatprep.subr.bf16.mxu0 %v5201
    %5954 = vmatpush1.bf16.msra.mxu0 %v5200
    %5955 = vmatprep.subr.bf16.mxu0 %v5205
    %5956 = vmatpush1.bf16.msra.mxu0 %v5204
    %5957 = vmatprep.subr.bf16.mxu0 %v5209
    %5958 = vmatpush1.bf16.msra.mxu0 %v5208
    %5959 = vmatprep.subr.bf16.mxu0 %v5213
    %5960 = vmatpush1.bf16.msra.mxu0 %v5212
    %5961 = vmatprep.subr.bf16.mxu0 %v5217
    %5962 = vmatpush1.bf16.msra.mxu0 %v5216
    %5963 = vmatprep.subr.bf16.mxu0 %v5221
    %5964 = vmatpush1.bf16.msra.mxu0 %v5220
    %5965 = vmatprep.subr.bf16.mxu0 %v5225
    %5966 = vmatpush1.bf16.msra.mxu0 %v5224
    %5967 = vmatprep.subr.bf16.mxu0 %v5229
    %5968 = vmatpush1.bf16.msra.mxu0 %v5228
    %5969 = vmatprep.mubr.bf16.mxu0 %v4507
    %5970 = vmatmul.mubr.bf16.gmra.mrb[0].mxu0 %v4506
    %v5971 = vpop.f32.mrb[0].mxu0
    %v5972 = vadd.f32 %v5779, %v5971
    %v5973 = vpop.f32.mrb[0].mxu0
    %v5974 = vadd.f32 %v5781, %v5973
    %v5975 = vpop.f32.mrb[0].mxu0
    %v5976 = vadd.f32 %v5783, %v5975
    %v5977 = vpop.f32.mrb[0].mxu0
    %v5978 = vadd.f32 %v5785, %v5977
    %5979 = vmatprep.mubr.bf16.mxu0 %v4511
    %5980 = vmatmul.mubr.bf16.gmra.mrb[0].mxu0 %v4510
    %v5981 = vpop.f32.mrb[0].mxu0
    %v5982 = vadd.f32 %v5789, %v5981
    %v5983 = vpop.f32.mrb[0].mxu0
    %v5984 = vadd.f32 %v5791, %v5983
    %v5985 = vpop.f32.mrb[0].mxu0
    %v5986 = vadd.f32 %v5793, %v5985
    %v5987 = vpop.f32.mrb[0].mxu0
    %v5988 = vadd.f32 %v5795, %v5987
    %5989 = vmatprep.mubr.bf16.mxu0 %v4515
    %5990 = vmatmul.mubr.bf16.gmra.mrb[0].mxu0 %v4514
    %v5991 = vpop.f32.mrb[0].mxu0
    %v5992 = vadd.f32 %v5799, %v5991
    %v5993 = vpop.f32.mrb[0].mxu0
    %v5994 = vadd.f32 %v5801, %v5993
    %v5995 = vpop.f32.mrb[0].mxu0
    %v5996 = vadd.f32 %v5803, %v5995
    %v5997 = vpop.f32.mrb[0].mxu0
    %v5998 = vadd.f32 %v5805, %v5997
    %5999 = vmatprep.mubr.bf16.mxu0 %v4519
    %6000 = vmatmul.mubr.bf16.gmra.mrb[0].mxu0 %v4518
    %v6001 = vpop.f32.mrb[0].mxu0
    %v6002 = vadd.f32 %v5809, %v6001
    %v6003 = vpop.f32.mrb[0].mxu0
    %v6004 = vadd.f32 %v5811, %v6003
    %v6005 = vpop.f32.mrb[0].mxu0
    %v6006 = vadd.f32 %v5813, %v6005
    %v6007 = vpop.f32.mrb[0].mxu0
    %v6008 = vadd.f32 %v5815, %v6007
    %6009 = vmatprep.mubr.bf16.mxu0 %v4523
    %6010 = vmatmul.mubr.bf16.gmra.mrb[0].mxu0 %v4522
    %v6011 = vpop.f32.mrb[0].mxu0
    %v6012 = vadd.f32 %v5819, %v6011
    %v6013 = vpop.f32.mrb[0].mxu0
    %v6014 = vadd.f32 %v5821, %v6013
    %v6015 = vpop.f32.mrb[0].mxu0
    %v6016 = vadd.f32 %v5823, %v6015
    %v6017 = vpop.f32.mrb[0].mxu0
    %v6018 = vadd.f32 %v5825, %v6017
    %6019 = vmatprep.mubr.bf16.mxu0 %v4527
    %6020 = vmatmul.mubr.bf16.gmra.mrb[0].mxu0 %v4526
    %v6021 = vpop.f32.mrb[0].mxu0
    %v6022 = vadd.f32 %v5829, %v6021
    %v6023 = vpop.f32.mrb[0].mxu0
    %v6024 = vadd.f32 %v5831, %v6023
    %v6025 = vpop.f32.mrb[0].mxu0
    %v6026 = vadd.f32 %v5833, %v6025
    %v6027 = vpop.f32.mrb[0].mxu0
    %v6028 = vadd.f32 %v5835, %v6027
    %6029 = vmatprep.mubr.bf16.mxu0 %v4531
    %6030 = vmatmul.mubr.bf16.gmra.mrb[0].mxu0 %v4530
    %v6031 = vpop.f32.mrb[0].mxu0
    %v6032 = vadd.f32 %v5839, %v6031
    %v6033 = vpop.f32.mrb[0].mxu0
    %v6034 = vadd.f32 %v5841, %v6033
    %v6035 = vpop.f32.mrb[0].mxu0
    %v6036 = vadd.f32 %v5843, %v6035
    %v6037 = vpop.f32.mrb[0].mxu0
    %v6038 = vadd.f32 %v5845, %v6037
    %6039 = vmatprep.mubr.bf16.mxu0 %v4535
    %6040 = vmatmul.mubr.bf16.gmra.mrb[0].mxu0 %v4534
    %v6041 = vpop.f32.mrb[0].mxu0
    %v6042 = vadd.f32 %v5849, %v6041
    %v6043 = vpop.f32.mrb[0].mxu0
    %v6044 = vadd.f32 %v5851, %v6043
    %v6045 = vpop.f32.mrb[0].mxu0
    %v6046 = vadd.f32 %v5853, %v6045
    %v6047 = vpop.f32.mrb[0].mxu0
    %v6048 = vadd.f32 %v5855, %v6047
    %6049 = vmatprep.mubr.bf16.mxu0 %v4539
    %6050 = vmatmul.mubr.bf16.gmra.mrb[0].mxu0 %v4538
    %v6051 = vpop.f32.mrb[0].mxu0
    %v6052 = vadd.f32 %v5859, %v6051
    %v6053 = vpop.f32.mrb[0].mxu0
    %v6054 = vadd.f32 %v5861, %v6053
    %v6055 = vpop.f32.mrb[0].mxu0
    %v6056 = vadd.f32 %v5863, %v6055
    %v6057 = vpop.f32.mrb[0].mxu0
    %v6058 = vadd.f32 %v5865, %v6057
    %6059 = vmatprep.mubr.bf16.mxu0 %v4543
    %6060 = vmatmul.mubr.bf16.gmra.mrb[0].mxu0 %v4542
    %v6061 = vpop.f32.mrb[0].mxu0
    %v6062 = vadd.f32 %v5869, %v6061
    %v6063 = vpop.f32.mrb[0].mxu0
    %v6064 = vadd.f32 %v5871, %v6063
    %v6065 = vpop.f32.mrb[0].mxu0
    %v6066 = vadd.f32 %v5873, %v6065
    %v6067 = vpop.f32.mrb[0].mxu0
    %v6068 = vadd.f32 %v5875, %v6067
    %6069 = vmatprep.mubr.bf16.mxu0 %v4547
    %6070 = vmatmul.mubr.bf16.gmra.mrb[0].mxu0 %v4546
    %v6071 = vpop.f32.mrb[0].mxu0
    %v6072 = vadd.f32 %v5879, %v6071
    %v6073 = vpop.f32.mrb[0].mxu0
    %v6074 = vadd.f32 %v5881, %v6073
    %v6075 = vpop.f32.mrb[0].mxu0
    %v6076 = vadd.f32 %v5883, %v6075
    %v6077 = vpop.f32.mrb[0].mxu0
    %v6078 = vadd.f32 %v5885, %v6077
    %6079 = vmatprep.mubr.bf16.mxu0 %v4551
    %6080 = vmatmul.mubr.bf16.gmra.mrb[0].mxu0 %v4550
    %v6081 = vpop.f32.mrb[0].mxu0
    %v6082 = vadd.f32 %v5889, %v6081
    %v6083 = vpop.f32.mrb[0].mxu0
    %v6084 = vadd.f32 %v5891, %v6083
    %v6085 = vpop.f32.mrb[0].mxu0
    %v6086 = vadd.f32 %v5893, %v6085
    %v6087 = vpop.f32.mrb[0].mxu0
    %v6088 = vadd.f32 %v5895, %v6087
    %6089 = vmatprep.mubr.bf16.mxu0 %v4555
    %6090 = vmatmul.mubr.bf16.gmra.mrb[0].mxu0 %v4554
    %v6091 = vpop.f32.mrb[0].mxu0
    %v6092 = vadd.f32 %v5899, %v6091
    %v6093 = vpop.f32.mrb[0].mxu0
    %v6094 = vadd.f32 %v5901, %v6093
    %v6095 = vpop.f32.mrb[0].mxu0
    %v6096 = vadd.f32 %v5903, %v6095
    %v6097 = vpop.f32.mrb[0].mxu0
    %v6098 = vadd.f32 %v5905, %v6097
    %6099 = vmatprep.mubr.bf16.mxu0 %v4559
    %6100 = vmatmul.mubr.bf16.gmra.mrb[0].mxu0 %v4558
    %v6101 = vpop.f32.mrb[0].mxu0
    %v6102 = vadd.f32 %v5909, %v6101
    %v6103 = vpop.f32.mrb[0].mxu0
    %v6104 = vadd.f32 %v5911, %v6103
    %v6105 = vpop.f32.mrb[0].mxu0
    %v6106 = vadd.f32 %v5913, %v6105
    %v6107 = vpop.f32.mrb[0].mxu0
    %v6108 = vadd.f32 %v5915, %v6107
    %6109 = vmatprep.mubr.bf16.mxu0 %v4563
    %6110 = vmatmul.mubr.bf16.gmra.mrb[0].mxu0 %v4562
    %v6111 = vpop.f32.mrb[0].mxu0
    %v6112 = vadd.f32 %v5919, %v6111
    %v6113 = vpop.f32.mrb[0].mxu0
    %v6114 = vadd.f32 %v5921, %v6113
    %v6115 = vpop.f32.mrb[0].mxu0
    %v6116 = vadd.f32 %v5923, %v6115
    %v6117 = vpop.f32.mrb[0].mxu0
    %v6118 = vadd.f32 %v5925, %v6117
    %6119 = vmatprep.mubr.bf16.mxu0 %v4567
    %6120 = vmatmul.mubr.bf16.gmra.mrb[0].mxu0 %v4566
    %v6121 = vpop.f32.mrb[0].mxu0
    %v6122 = vadd.f32 %v5929, %v6121
    %v6123 = vpop.f32.mrb[0].mxu0
    %v6124 = vadd.f32 %v5931, %v6123
    %v6125 = vpop.f32.mrb[0].mxu0
    %v6126 = vadd.f32 %v5933, %v6125
    %v6127 = vpop.f32.mrb[0].mxu0
    %v6128 = vadd.f32 %v5935, %v6127
    %6129 = vdwg.mxu0
    %v6130 = vxor.u32 %v5586, 2147483648
    %v6131 = vxor.u32 %v5588, 2147483648
    %v6132 = vxor.u32 %v5972, 2147483648
    %v6133 = vxor.u32 %v5974, 2147483648
    %v6134 = vxor.u32 %v5590, 2147483648
    %v6135 = vxor.u32 %v5592, 2147483648
    %v6136 = vxor.u32 %v5976, 2147483648
    %v6137 = vxor.u32 %v5978, 2147483648
    %v6138 = vxor.u32 %v5596, 2147483648
    %v6139 = vxor.u32 %v5598, 2147483648
    %v6140 = vxor.u32 %v5982, 2147483648
    %v6141 = vxor.u32 %v5984, 2147483648
    %v6142 = vxor.u32 %v5600, 2147483648
    %v6143 = vxor.u32 %v5602, 2147483648
    %v6144 = vxor.u32 %v5986, 2147483648
    %v6145 = vxor.u32 %v5988, 2147483648
    %v6146 = vxor.u32 %v5606, 2147483648
    %v6147 = vxor.u32 %v5608, 2147483648
    %v6148 = vxor.u32 %v5992, 2147483648
    %v6149 = vxor.u32 %v5994, 2147483648
    %v6150 = vxor.u32 %v5610, 2147483648
    %v6151 = vxor.u32 %v5612, 2147483648
    %v6152 = vxor.u32 %v5996, 2147483648
    %v6153 = vxor.u32 %v5998, 2147483648
    %v6154 = vxor.u32 %v5616, 2147483648
    %v6155 = vxor.u32 %v5618, 2147483648
    %v6156 = vxor.u32 %v6002, 2147483648
    %v6157 = vxor.u32 %v6004, 2147483648
    %v6158 = vxor.u32 %v5620, 2147483648
    %v6159 = vxor.u32 %v5622, 2147483648
    %v6160 = vxor.u32 %v6006, 2147483648
    %v6161 = vxor.u32 %v6008, 2147483648
    %v6162 = vxor.u32 %v5626, 2147483648
    %v6163 = vxor.u32 %v5628, 2147483648
    %v6164 = vxor.u32 %v6012, 2147483648
    %v6165 = vxor.u32 %v6014, 2147483648
    %v6166 = vxor.u32 %v5630, 2147483648
    %v6167 = vxor.u32 %v5632, 2147483648
    %v6168 = vxor.u32 %v6016, 2147483648
    %v6169 = vxor.u32 %v6018, 2147483648
    %v6170 = vxor.u32 %v5636, 2147483648
    %v6171 = vxor.u32 %v5638, 2147483648
    %v6172 = vxor.u32 %v6022, 2147483648
    %v6173 = vxor.u32 %v6024, 2147483648
    %v6174 = vxor.u32 %v5640, 2147483648
    %v6175 = vxor.u32 %v5642, 2147483648
    %v6176 = vxor.u32 %v6026, 2147483648
    %v6177 = vxor.u32 %v6028, 2147483648
    %v6178 = vxor.u32 %v5646, 2147483648
    %v6179 = vxor.u32 %v5648, 2147483648
    %v6180 = vxor.u32 %v6032, 2147483648
    %v6181 = vxor.u32 %v6034, 2147483648
    %v6182 = vxor.u32 %v5650, 2147483648
    %v6183 = vxor.u32 %v5652, 2147483648
    %v6184 = vxor.u32 %v6036, 2147483648
    %v6185 = vxor.u32 %v6038, 2147483648
    %v6186 = vxor.u32 %v5656, 2147483648
    %v6187 = vxor.u32 %v5658, 2147483648
    %v6188 = vxor.u32 %v6042, 2147483648
    %v6189 = vxor.u32 %v6044, 2147483648
    %v6190 = vxor.u32 %v5660, 2147483648
    %v6191 = vxor.u32 %v5662, 2147483648
    %v6192 = vxor.u32 %v6046, 2147483648
    %v6193 = vxor.u32 %v6048, 2147483648
    %v6194 = vxor.u32 %v5666, 2147483648
    %v6195 = vxor.u32 %v5668, 2147483648
    %v6196 = vxor.u32 %v6052, 2147483648
    %v6197 = vxor.u32 %v6054, 2147483648
    %v6198 = vxor.u32 %v5670, 2147483648
    %v6199 = vxor.u32 %v5672, 2147483648
    %v6200 = vxor.u32 %v6056, 2147483648
    %v6201 = vxor.u32 %v6058, 2147483648
    %v6202 = vxor.u32 %v5676, 2147483648
    %v6203 = vxor.u32 %v5678, 2147483648
    %v6204 = vxor.u32 %v6062, 2147483648
    %v6205 = vxor.u32 %v6064, 2147483648
    %v6206 = vxor.u32 %v5680, 2147483648
    %v6207 = vxor.u32 %v5682, 2147483648
    %v6208 = vxor.u32 %v6066, 2147483648
    %v6209 = vxor.u32 %v6068, 2147483648
    %v6210 = vxor.u32 %v5686, 2147483648
    %v6211 = vxor.u32 %v5688, 2147483648
    %v6212 = vxor.u32 %v6072, 2147483648
    %v6213 = vxor.u32 %v6074, 2147483648
    %v6214 = vxor.u32 %v5690, 2147483648
    %v6215 = vxor.u32 %v5692, 2147483648
    %v6216 = vxor.u32 %v6076, 2147483648
    %v6217 = vxor.u32 %v6078, 2147483648
    %v6218 = vxor.u32 %v5696, 2147483648
    %v6219 = vxor.u32 %v5698, 2147483648
    %v6220 = vxor.u32 %v6082, 2147483648
    %v6221 = vxor.u32 %v6084, 2147483648
    %v6222 = vxor.u32 %v5700, 2147483648
    %v6223 = vxor.u32 %v5702, 2147483648
    %v6224 = vxor.u32 %v6086, 2147483648
    %v6225 = vxor.u32 %v6088, 2147483648
    %v6226 = vxor.u32 %v5706, 2147483648
    %v6227 = vxor.u32 %v5708, 2147483648
    %v6228 = vxor.u32 %v6092, 2147483648
    %v6229 = vxor.u32 %v6094, 2147483648
    %v6230 = vxor.u32 %v5710, 2147483648
    %v6231 = vxor.u32 %v5712, 2147483648
    %v6232 = vxor.u32 %v6096, 2147483648
    %v6233 = vxor.u32 %v6098, 2147483648
    %v6234 = vxor.u32 %v5716, 2147483648
    %v6235 = vxor.u32 %v5718, 2147483648
    %v6236 = vxor.u32 %v6102, 2147483648
    %v6237 = vxor.u32 %v6104, 2147483648
    %v6238 = vxor.u32 %v5720, 2147483648
    %v6239 = vxor.u32 %v5722, 2147483648
    %v6240 = vxor.u32 %v6106, 2147483648
    %v6241 = vxor.u32 %v6108, 2147483648
    %v6242 = vxor.u32 %v5726, 2147483648
    %v6243 = vxor.u32 %v5728, 2147483648
    %v6244 = vxor.u32 %v6112, 2147483648
    %v6245 = vxor.u32 %v6114, 2147483648
    %v6246 = vxor.u32 %v5730, 2147483648
    %v6247 = vxor.u32 %v5732, 2147483648
    %v6248 = vxor.u32 %v6116, 2147483648
    %v6249 = vxor.u32 %v6118, 2147483648
    %v6250 = vxor.u32 %v5736, 2147483648
    %v6251 = vxor.u32 %v5738, 2147483648
    %v6252 = vxor.u32 %v6122, 2147483648
    %v6253 = vxor.u32 %v6124, 2147483648
    %v6254 = vxor.u32 %v5740, 2147483648
    %v6255 = vxor.u32 %v5742, 2147483648
    %v6256 = vxor.u32 %v6126, 2147483648
    %v6257 = vxor.u32 %v6128, 2147483648
    %v6258 = vmul.f32 %v6130, 1.442695
    %v6259 = vpow.pop %v6258
    %v6260 = vmul.f32 %v6131, 1.442695
    %v6261 = vpow.pop %v6260
    %v6262 = vmul.f32 %v6132, 1.442695
    %v6263 = vpow.pop %v6262
    %v6264 = vmul.f32 %v6133, 1.442695
    %v6265 = vpow.pop %v6264
    %v6266 = vmul.f32 %v6134, 1.442695
    %v6267 = vpow.pop %v6266
    %v6268 = vmul.f32 %v6135, 1.442695
    %v6269 = vpow.pop %v6268
    %v6270 = vmul.f32 %v6136, 1.442695
    %v6271 = vpow.pop %v6270
    %v6272 = vmul.f32 %v6137, 1.442695
    %v6273 = vpow.pop %v6272
    %v6274 = vmul.f32 %v6138, 1.442695
    %v6275 = vpow.pop %v6274
    %v6276 = vmul.f32 %v6139, 1.442695
    %v6277 = vpow.pop %v6276
    %v6278 = vmul.f32 %v6140, 1.442695
    %v6279 = vpow.pop %v6278
    %v6280 = vmul.f32 %v6141, 1.442695
    %v6281 = vpow.pop %v6280
    %v6282 = vmul.f32 %v6142, 1.442695
    %v6283 = vpow.pop %v6282
    %v6284 = vmul.f32 %v6143, 1.442695
    %v6285 = vpow.pop %v6284
    %v6286 = vmul.f32 %v6144, 1.442695
    %v6287 = vpow.pop %v6286
    %v6288 = vmul.f32 %v6145, 1.442695
    %v6289 = vpow.pop %v6288
    %v6290 = vmul.f32 %v6146, 1.442695
    %v6291 = vpow.pop %v6290
    %v6292 = vmul.f32 %v6147, 1.442695
    %v6293 = vpow.pop %v6292
    %v6294 = vmul.f32 %v6148, 1.442695
    %v6295 = vpow.pop %v6294
    %v6296 = vmul.f32 %v6149, 1.442695
    %v6297 = vpow.pop %v6296
    %v6298 = vmul.f32 %v6150, 1.442695
    %v6299 = vpow.pop %v6298
    %v6300 = vmul.f32 %v6151, 1.442695
    %v6301 = vpow.pop %v6300
    %v6302 = vmul.f32 %v6152, 1.442695
    %v6303 = vpow.pop %v6302
    %v6304 = vmul.f32 %v6153, 1.442695
    %v6305 = vpow.pop %v6304
    %v6306 = vmul.f32 %v6154, 1.442695
    %v6307 = vpow.pop %v6306
    %v6308 = vmul.f32 %v6155, 1.442695
    %v6309 = vpow.pop %v6308
    %v6310 = vmul.f32 %v6156, 1.442695
    %v6311 = vpow.pop %v6310
    %v6312 = vmul.f32 %v6157, 1.442695
    %v6313 = vpow.pop %v6312
    %v6314 = vmul.f32 %v6158, 1.442695
    %v6315 = vpow.pop %v6314
    %v6316 = vmul.f32 %v6159, 1.442695
    %v6317 = vpow.pop %v6316
    %v6318 = vmul.f32 %v6160, 1.442695
    %v6319 = vpow.pop %v6318
    %v6320 = vmul.f32 %v6161, 1.442695
    %v6321 = vpow.pop %v6320
    %v6322 = vmul.f32 %v6162, 1.442695
    %v6323 = vpow.pop %v6322
    %v6324 = vmul.f32 %v6163, 1.442695
    %v6325 = vpow.pop %v6324
    %v6326 = vmul.f32 %v6164, 1.442695
    %v6327 = vpow.pop %v6326
    %v6328 = vmul.f32 %v6165, 1.442695
    %v6329 = vpow.pop %v6328
    %v6330 = vmul.f32 %v6166, 1.442695
    %v6331 = vpow.pop %v6330
    %v6332 = vmul.f32 %v6167, 1.442695
    %v6333 = vpow.pop %v6332
    %v6334 = vmul.f32 %v6168, 1.442695
    %v6335 = vpow.pop %v6334
    %v6336 = vmul.f32 %v6169, 1.442695
    %v6337 = vpow.pop %v6336
    %v6338 = vmul.f32 %v6170, 1.442695
    %v6339 = vpow.pop %v6338
    %v6340 = vmul.f32 %v6171, 1.442695
    %v6341 = vpow.pop %v6340
    %v6342 = vmul.f32 %v6172, 1.442695
    %v6343 = vpow.pop %v6342
    %v6344 = vmul.f32 %v6173, 1.442695
    %v6345 = vpow.pop %v6344
    %v6346 = vmul.f32 %v6174, 1.442695
    %v6347 = vpow.pop %v6346
    %v6348 = vmul.f32 %v6175, 1.442695
    %v6349 = vpow.pop %v6348
    %v6350 = vmul.f32 %v6176, 1.442695
    %v6351 = vpow.pop %v6350
    %v6352 = vmul.f32 %v6177, 1.442695
    %v6353 = vpow.pop %v6352
    %v6354 = vmul.f32 %v6178, 1.442695
    %v6355 = vpow.pop %v6354
    %v6356 = vmul.f32 %v6179, 1.442695
    %v6357 = vpow.pop %v6356
    %v6358 = vmul.f32 %v6180, 1.442695
    %v6359 = vpow.pop %v6358
    %v6360 = vmul.f32 %v6181, 1.442695
    %v6361 = vpow.pop %v6360
    %v6362 = vmul.f32 %v6182, 1.442695
    %v6363 = vpow.pop %v6362
    %v6364 = vmul.f32 %v6183, 1.442695
    %v6365 = vpow.pop %v6364
    %v6366 = vmul.f32 %v6184, 1.442695
    %v6367 = vpow.pop %v6366
    %v6368 = vmul.f32 %v6185, 1.442695
    %v6369 = vpow.pop %v6368
    %v6370 = vmul.f32 %v6186, 1.442695
    %v6371 = vpow.pop %v6370
    %v6372 = vmul.f32 %v6187, 1.442695
    %v6373 = vpow.pop %v6372
    %v6374 = vmul.f32 %v6188, 1.442695
    %v6375 = vpow.pop %v6374
    %v6376 = vmul.f32 %v6189, 1.442695
    %v6377 = vpow.pop %v6376
    %v6378 = vmul.f32 %v6190, 1.442695
    %v6379 = vpow.pop %v6378
    %v6380 = vmul.f32 %v6191, 1.442695
    %v6381 = vpow.pop %v6380
    %v6382 = vmul.f32 %v6192, 1.442695
    %v6383 = vpow.pop %v6382
    %v6384 = vmul.f32 %v6193, 1.442695
    %v6385 = vpow.pop %v6384
    %v6386 = vmul.f32 %v6194, 1.442695
    %v6387 = vpow.pop %v6386
    %v6388 = vmul.f32 %v6195, 1.442695
    %v6389 = vpow.pop %v6388
    %v6390 = vmul.f32 %v6196, 1.442695
    %v6391 = vpow.pop %v6390
    %v6392 = vmul.f32 %v6197, 1.442695
    %v6393 = vpow.pop %v6392
    %v6394 = vmul.f32 %v6198, 1.442695
    %v6395 = vpow.pop %v6394
    %v6396 = vmul.f32 %v6199, 1.442695
    %v6397 = vpow.pop %v6396
    %v6398 = vmul.f32 %v6200, 1.442695
    %v6399 = vpow.pop %v6398
    %v6400 = vmul.f32 %v6201, 1.442695
    %v6401 = vpow.pop %v6400
    %v6402 = vmul.f32 %v6202, 1.442695
    %v6403 = vpow.pop %v6402
    %v6404 = vmul.f32 %v6203, 1.442695
    %v6405 = vpow.pop %v6404
    %v6406 = vmul.f32 %v6204, 1.442695
    %v6407 = vpow.pop %v6406
    %v6408 = vmul.f32 %v6205, 1.442695
    %v6409 = vpow.pop %v6408
    %v6410 = vmul.f32 %v6206, 1.442695
    %v6411 = vpow.pop %v6410
    %v6412 = vmul.f32 %v6207, 1.442695
    %v6413 = vpow.pop %v6412
    %v6414 = vmul.f32 %v6208, 1.442695
    %v6415 = vpow.pop %v6414
    %v6416 = vmul.f32 %v6209, 1.442695
    %v6417 = vpow.pop %v6416
    %v6418 = vmul.f32 %v6210, 1.442695
    %v6419 = vpow.pop %v6418
    %v6420 = vmul.f32 %v6211, 1.442695
    %v6421 = vpow.pop %v6420
    %v6422 = vmul.f32 %v6212, 1.442695
    %v6423 = vpow.pop %v6422
    %v6424 = vmul.f32 %v6213, 1.442695
    %v6425 = vpow.pop %v6424
    %v6426 = vmul.f32 %v6214, 1.442695
    %v6427 = vpow.pop %v6426
    %v6428 = vmul.f32 %v6215, 1.442695
    %v6429 = vpow.pop %v6428
    %v6430 = vmul.f32 %v6216, 1.442695
    %v6431 = vpow.pop %v6430
    %v6432 = vmul.f32 %v6217, 1.442695
    %v6433 = vpow.pop %v6432
    %v6434 = vmul.f32 %v6218, 1.442695
    %v6435 = vpow.pop %v6434
    %v6436 = vmul.f32 %v6219, 1.442695
    %v6437 = vpow.pop %v6436
    %v6438 = vmul.f32 %v6220, 1.442695
    %v6439 = vpow.pop %v6438
    %v6440 = vmul.f32 %v6221, 1.442695
    %v6441 = vpow.pop %v6440
    %v6442 = vmul.f32 %v6222, 1.442695
    %v6443 = vpow.pop %v6442
    %v6444 = vmul.f32 %v6223, 1.442695
    %v6445 = vpow.pop %v6444
    %v6446 = vmul.f32 %v6224, 1.442695
    %v6447 = vpow.pop %v6446
    %v6448 = vmul.f32 %v6225, 1.442695
    %v6449 = vpow.pop %v6448
    %v6450 = vmul.f32 %v6226, 1.442695
    %v6451 = vpow.pop %v6450
    %v6452 = vmul.f32 %v6227, 1.442695
    %v6453 = vpow.pop %v6452
    %v6454 = vmul.f32 %v6228, 1.442695
    %v6455 = vpow.pop %v6454
    %v6456 = vmul.f32 %v6229, 1.442695
    %v6457 = vpow.pop %v6456
    %v6458 = vmul.f32 %v6230, 1.442695
    %v6459 = vpow.pop %v6458
    %v6460 = vmul.f32 %v6231, 1.442695
    %v6461 = vpow.pop %v6460
    %v6462 = vmul.f32 %v6232, 1.442695
    %v6463 = vpow.pop %v6462
    %v6464 = vmul.f32 %v6233, 1.442695
    %v6465 = vpow.pop %v6464
    %v6466 = vmul.f32 %v6234, 1.442695
    %v6467 = vpow.pop %v6466
    %v6468 = vmul.f32 %v6235, 1.442695
    %v6469 = vpow.pop %v6468
    %v6470 = vmul.f32 %v6236, 1.442695
    %v6471 = vpow.pop %v6470
    %v6472 = vmul.f32 %v6237, 1.442695
    %v6473 = vpow.pop %v6472
    %v6474 = vmul.f32 %v6238, 1.442695
    %v6475 = vpow.pop %v6474
    %v6476 = vmul.f32 %v6239, 1.442695
    %v6477 = vpow.pop %v6476
    %v6478 = vmul.f32 %v6240, 1.442695
    %v6479 = vpow.pop %v6478
    %v6480 = vmul.f32 %v6241, 1.442695
    %v6481 = vpow.pop %v6480
    %v6482 = vmul.f32 %v6242, 1.442695
    %v6483 = vpow.pop %v6482
    %v6484 = vmul.f32 %v6243, 1.442695
    %v6485 = vpow.pop %v6484
    %v6486 = vmul.f32 %v6244, 1.442695
    %v6487 = vpow.pop %v6486
    %v6488 = vmul.f32 %v6245, 1.442695
    %v6489 = vpow.pop %v6488
    %v6490 = vmul.f32 %v6246, 1.442695
    %v6491 = vpow.pop %v6490
    %v6492 = vmul.f32 %v6247, 1.442695
    %v6493 = vpow.pop %v6492
    %v6494 = vmul.f32 %v6248, 1.442695
    %v6495 = vpow.pop %v6494
    %v6496 = vmul.f32 %v6249, 1.442695
    %v6497 = vpow.pop %v6496
    %v6498 = vmul.f32 %v6250, 1.442695
    %v6499 = vpow.pop %v6498
    %v6500 = vmul.f32 %v6251, 1.442695
    %v6501 = vpow.pop %v6500
    %v6502 = vmul.f32 %v6252, 1.442695
    %v6503 = vpow.pop %v6502
    %v6504 = vmul.f32 %v6253, 1.442695
    %v6505 = vpow.pop %v6504
    %v6506 = vmul.f32 %v6254, 1.442695
    %v6507 = vpow.pop %v6506
    %v6508 = vmul.f32 %v6255, 1.442695
    %v6509 = vpow.pop %v6508
    %v6510 = vmul.f32 %v6256, 1.442695
    %v6511 = vpow.pop %v6510
    %v6512 = vmul.f32 %v6257, 1.442695
    %v6513 = vpow.pop %v6512
    %v6514 = vadd.f32 %v6259, 1.0
    %v6515 = vadd.f32 %v6261, 1.0
    %v6516 = vadd.f32 %v6263, 1.0
    %v6517 = vadd.f32 %v6265, 1.0
    %v6518 = vadd.f32 %v6267, 1.0
    %v6519 = vadd.f32 %v6269, 1.0
    %v6520 = vadd.f32 %v6271, 1.0
    %v6521 = vadd.f32 %v6273, 1.0
    %v6522 = vadd.f32 %v6275, 1.0
    %v6523 = vadd.f32 %v6277, 1.0
    %v6524 = vadd.f32 %v6279, 1.0
    %v6525 = vadd.f32 %v6281, 1.0
    %v6526 = vadd.f32 %v6283, 1.0
    %v6527 = vadd.f32 %v6285, 1.0
    %v6528 = vadd.f32 %v6287, 1.0
    %v6529 = vadd.f32 %v6289, 1.0
    %v6530 = vadd.f32 %v6291, 1.0
    %v6531 = vadd.f32 %v6293, 1.0
    %v6532 = vadd.f32 %v6295, 1.0
    %v6533 = vadd.f32 %v6297, 1.0
    %v6534 = vadd.f32 %v6299, 1.0
    %v6535 = vadd.f32 %v6301, 1.0
    %v6536 = vadd.f32 %v6303, 1.0
    %v6537 = vadd.f32 %v6305, 1.0
    %v6538 = vadd.f32 %v6307, 1.0
    %v6539 = vadd.f32 %v6309, 1.0
    %v6540 = vadd.f32 %v6311, 1.0
    %v6541 = vadd.f32 %v6313, 1.0
    %v6542 = vadd.f32 %v6315, 1.0
    %v6543 = vadd.f32 %v6317, 1.0
    %v6544 = vadd.f32 %v6319, 1.0
    %v6545 = vadd.f32 %v6321, 1.0
    %v6546 = vadd.f32 %v6323, 1.0
    %v6547 = vadd.f32 %v6325, 1.0
    %v6548 = vadd.f32 %v6327, 1.0
    %v6549 = vadd.f32 %v6329, 1.0
    %v6550 = vadd.f32 %v6331, 1.0
    %v6551 = vadd.f32 %v6333, 1.0
    %v6552 = vadd.f32 %v6335, 1.0
    %v6553 = vadd.f32 %v6337, 1.0
    %v6554 = vadd.f32 %v6339, 1.0
    %v6555 = vadd.f32 %v6341, 1.0
    %v6556 = vadd.f32 %v6343, 1.0
    %v6557 = vadd.f32 %v6345, 1.0
    %v6558 = vadd.f32 %v6347, 1.0
    %v6559 = vadd.f32 %v6349, 1.0
    %v6560 = vadd.f32 %v6351, 1.0
    %v6561 = vadd.f32 %v6353, 1.0
    %v6562 = vadd.f32 %v6355, 1.0
    %v6563 = vadd.f32 %v6357, 1.0
    %v6564 = vadd.f32 %v6359, 1.0
    %v6565 = vadd.f32 %v6361, 1.0
    %v6566 = vadd.f32 %v6363, 1.0
    %v6567 = vadd.f32 %v6365, 1.0
    %v6568 = vadd.f32 %v6367, 1.0
    %v6569 = vadd.f32 %v6369, 1.0
    %v6570 = vadd.f32 %v6371, 1.0
    %v6571 = vadd.f32 %v6373, 1.0
    %v6572 = vadd.f32 %v6375, 1.0
    %v6573 = vadd.f32 %v6377, 1.0
    %v6574 = vadd.f32 %v6379, 1.0
    %v6575 = vadd.f32 %v6381, 1.0
    %v6576 = vadd.f32 %v6383, 1.0
    %v6577 = vadd.f32 %v6385, 1.0
    %v6578 = vadd.f32 %v6387, 1.0
    %v6579 = vadd.f32 %v6389, 1.0
    %v6580 = vadd.f32 %v6391, 1.0
    %v6581 = vadd.f32 %v6393, 1.0
    %v6582 = vadd.f32 %v6395, 1.0
    %v6583 = vadd.f32 %v6397, 1.0
    %v6584 = vadd.f32 %v6399, 1.0
    %v6585 = vadd.f32 %v6401, 1.0
    %v6586 = vadd.f32 %v6403, 1.0
    %v6587 = vadd.f32 %v6405, 1.0
    %v6588 = vadd.f32 %v6407, 1.0
    %v6589 = vadd.f32 %v6409, 1.0
    %v6590 = vadd.f32 %v6411, 1.0
    %v6591 = vadd.f32 %v6413, 1.0
    %v6592 = vadd.f32 %v6415, 1.0
    %v6593 = vadd.f32 %v6417, 1.0
    %v6594 = vadd.f32 %v6419, 1.0
    %v6595 = vadd.f32 %v6421, 1.0
    %v6596 = vadd.f32 %v6423, 1.0
    %v6597 = vadd.f32 %v6425, 1.0
    %v6598 = vadd.f32 %v6427, 1.0
    %v6599 = vadd.f32 %v6429, 1.0
    %v6600 = vadd.f32 %v6431, 1.0
    %v6601 = vadd.f32 %v6433, 1.0
    %v6602 = vadd.f32 %v6435, 1.0
    %v6603 = vadd.f32 %v6437, 1.0
    %v6604 = vadd.f32 %v6439, 1.0
    %v6605 = vadd.f32 %v6441, 1.0
    %v6606 = vadd.f32 %v6443, 1.0
    %v6607 = vadd.f32 %v6445, 1.0
    %v6608 = vadd.f32 %v6447, 1.0
    %v6609 = vadd.f32 %v6449, 1.0
    %v6610 = vadd.f32 %v6451, 1.0
    %v6611 = vadd.f32 %v6453, 1.0
    %v6612 = vadd.f32 %v6455, 1.0
    %v6613 = vadd.f32 %v6457, 1.0
    %v6614 = vadd.f32 %v6459, 1.0
    %v6615 = vadd.f32 %v6461, 1.0
    %v6616 = vadd.f32 %v6463, 1.0
    %v6617 = vadd.f32 %v6465, 1.0
    %v6618 = vadd.f32 %v6467, 1.0
    %v6619 = vadd.f32 %v6469, 1.0
    %v6620 = vadd.f32 %v6471, 1.0
    %v6621 = vadd.f32 %v6473, 1.0
    %v6622 = vadd.f32 %v6475, 1.0
    %v6623 = vadd.f32 %v6477, 1.0
    %v6624 = vadd.f32 %v6479, 1.0
    %v6625 = vadd.f32 %v6481, 1.0
    %v6626 = vadd.f32 %v6483, 1.0
    %v6627 = vadd.f32 %v6485, 1.0
    %v6628 = vadd.f32 %v6487, 1.0
    %v6629 = vadd.f32 %v6489, 1.0
    %v6630 = vadd.f32 %v6491, 1.0
    %v6631 = vadd.f32 %v6493, 1.0
    %v6632 = vadd.f32 %v6495, 1.0
    %v6633 = vadd.f32 %v6497, 1.0
    %v6634 = vadd.f32 %v6499, 1.0
    %v6635 = vadd.f32 %v6501, 1.0
    %v6636 = vadd.f32 %v6503, 1.0
    %v6637 = vadd.f32 %v6505, 1.0
    %v6638 = vadd.f32 %v6507, 1.0
    %v6639 = vadd.f32 %v6509, 1.0
    %v6640 = vadd.f32 %v6511, 1.0
    %v6641 = vadd.f32 %v6513, 1.0
    %v6642 = vrcp.pop %v6514
    %v6643 = vmul.f32 1.0, %v6642
    %v6644 = vrcp.pop %v6515
    %v6645 = vmul.f32 1.0, %v6644
    %v6646 = vrcp.pop %v6516
    %v6647 = vmul.f32 1.0, %v6646
    %v6648 = vrcp.pop %v6517
    %v6649 = vmul.f32 1.0, %v6648
    %v6650 = vrcp.pop %v6518
    %v6651 = vmul.f32 1.0, %v6650
    %v6652 = vrcp.pop %v6519
    %v6653 = vmul.f32 1.0, %v6652
    %v6654 = vrcp.pop %v6520
    %v6655 = vmul.f32 1.0, %v6654
    %v6656 = vrcp.pop %v6521
    %v6657 = vmul.f32 1.0, %v6656
    %v6658 = vrcp.pop %v6522
    %v6659 = vmul.f32 1.0, %v6658
    %v6660 = vrcp.pop %v6523
    %v6661 = vmul.f32 1.0, %v6660
    %v6662 = vrcp.pop %v6524
    %v6663 = vmul.f32 1.0, %v6662
    %v6664 = vrcp.pop %v6525
    %v6665 = vmul.f32 1.0, %v6664
    %v6666 = vrcp.pop %v6526
    %v6667 = vmul.f32 1.0, %v6666
    %v6668 = vrcp.pop %v6527
    %v6669 = vmul.f32 1.0, %v6668
    %v6670 = vrcp.pop %v6528
    %v6671 = vmul.f32 1.0, %v6670
    %v6672 = vrcp.pop %v6529
    %v6673 = vmul.f32 1.0, %v6672
    %v6674 = vrcp.pop %v6530
    %v6675 = vmul.f32 1.0, %v6674
    %v6676 = vrcp.pop %v6531
    %v6677 = vmul.f32 1.0, %v6676
    %v6678 = vrcp.pop %v6532
    %v6679 = vmul.f32 1.0, %v6678
    %v6680 = vrcp.pop %v6533
    %v6681 = vmul.f32 1.0, %v6680
    %v6682 = vrcp.pop %v6534
    %v6683 = vmul.f32 1.0, %v6682
    %v6684 = vrcp.pop %v6535
    %v6685 = vmul.f32 1.0, %v6684
    %v6686 = vrcp.pop %v6536
    %v6687 = vmul.f32 1.0, %v6686
    %v6688 = vrcp.pop %v6537
    %v6689 = vmul.f32 1.0, %v6688
    %v6690 = vrcp.pop %v6538
    %v6691 = vmul.f32 1.0, %v6690
    %v6692 = vrcp.pop %v6539
    %v6693 = vmul.f32 1.0, %v6692
    %v6694 = vrcp.pop %v6540
    %v6695 = vmul.f32 1.0, %v6694
    %v6696 = vrcp.pop %v6541
    %v6697 = vmul.f32 1.0, %v6696
    %v6698 = vrcp.pop %v6542
    %v6699 = vmul.f32 1.0, %v6698
    %v6700 = vrcp.pop %v6543
    %v6701 = vmul.f32 1.0, %v6700
    %v6702 = vrcp.pop %v6544
    %v6703 = vmul.f32 1.0, %v6702
    %v6704 = vrcp.pop %v6545
    %v6705 = vmul.f32 1.0, %v6704
    %v6706 = vrcp.pop %v6546
    %v6707 = vmul.f32 1.0, %v6706
    %v6708 = vrcp.pop %v6547
    %v6709 = vmul.f32 1.0, %v6708
    %v6710 = vrcp.pop %v6548
    %v6711 = vmul.f32 1.0, %v6710
    %v6712 = vrcp.pop %v6549
    %v6713 = vmul.f32 1.0, %v6712
    %v6714 = vrcp.pop %v6550
    %v6715 = vmul.f32 1.0, %v6714
    %v6716 = vrcp.pop %v6551
    %v6717 = vmul.f32 1.0, %v6716
    %v6718 = vrcp.pop %v6552
    %v6719 = vmul.f32 1.0, %v6718
    %v6720 = vrcp.pop %v6553
    %v6721 = vmul.f32 1.0, %v6720
    %v6722 = vrcp.pop %v6554
    %v6723 = vmul.f32 1.0, %v6722
    %v6724 = vrcp.pop %v6555
    %v6725 = vmul.f32 1.0, %v6724
    %v6726 = vrcp.pop %v6556
    %v6727 = vmul.f32 1.0, %v6726
    %v6728 = vrcp.pop %v6557
    %v6729 = vmul.f32 1.0, %v6728
    %v6730 = vrcp.pop %v6558
    %v6731 = vmul.f32 1.0, %v6730
    %v6732 = vrcp.pop %v6559
    %v6733 = vmul.f32 1.0, %v6732
    %v6734 = vrcp.pop %v6560
    %v6735 = vmul.f32 1.0, %v6734
    %v6736 = vrcp.pop %v6561
    %v6737 = vmul.f32 1.0, %v6736
    %v6738 = vrcp.pop %v6562
    %v6739 = vmul.f32 1.0, %v6738
    %v6740 = vrcp.pop %v6563
    %v6741 = vmul.f32 1.0, %v6740
    %v6742 = vrcp.pop %v6564
    %v6743 = vmul.f32 1.0, %v6742
    %v6744 = vrcp.pop %v6565
    %v6745 = vmul.f32 1.0, %v6744
    %v6746 = vrcp.pop %v6566
    %v6747 = vmul.f32 1.0, %v6746
    %v6748 = vrcp.pop %v6567
    %v6749 = vmul.f32 1.0, %v6748
    %v6750 = vrcp.pop %v6568
    %v6751 = vmul.f32 1.0, %v6750
    %v6752 = vrcp.pop %v6569
    %v6753 = vmul.f32 1.0, %v6752
    %v6754 = vrcp.pop %v6570
    %v6755 = vmul.f32 1.0, %v6754
    %v6756 = vrcp.pop %v6571
    %v6757 = vmul.f32 1.0, %v6756
    %v6758 = vrcp.pop %v6572
    %v6759 = vmul.f32 1.0, %v6758
    %v6760 = vrcp.pop %v6573
    %v6761 = vmul.f32 1.0, %v6760
    %v6762 = vrcp.pop %v6574
    %v6763 = vmul.f32 1.0, %v6762
    %v6764 = vrcp.pop %v6575
    %v6765 = vmul.f32 1.0, %v6764
    %v6766 = vrcp.pop %v6576
    %v6767 = vmul.f32 1.0, %v6766
    %v6768 = vrcp.pop %v6577
    %v6769 = vmul.f32 1.0, %v6768
    %v6770 = vrcp.pop %v6578
    %v6771 = vmul.f32 1.0, %v6770
    %v6772 = vrcp.pop %v6579
    %v6773 = vmul.f32 1.0, %v6772
    %v6774 = vrcp.pop %v6580
    %v6775 = vmul.f32 1.0, %v6774
    %v6776 = vrcp.pop %v6581
    %v6777 = vmul.f32 1.0, %v6776
    %v6778 = vrcp.pop %v6582
    %v6779 = vmul.f32 1.0, %v6778
    %v6780 = vrcp.pop %v6583
    %v6781 = vmul.f32 1.0, %v6780
    %v6782 = vrcp.pop %v6584
    %v6783 = vmul.f32 1.0, %v6782
    %v6784 = vrcp.pop %v6585
    %v6785 = vmul.f32 1.0, %v6784
    %v6786 = vrcp.pop %v6586
    %v6787 = vmul.f32 1.0, %v6786
    %v6788 = vrcp.pop %v6587
    %v6789 = vmul.f32 1.0, %v6788
    %v6790 = vrcp.pop %v6588
    %v6791 = vmul.f32 1.0, %v6790
    %v6792 = vrcp.pop %v6589
    %v6793 = vmul.f32 1.0, %v6792
    %v6794 = vrcp.pop %v6590
    %v6795 = vmul.f32 1.0, %v6794
    %v6796 = vrcp.pop %v6591
    %v6797 = vmul.f32 1.0, %v6796
    %v6798 = vrcp.pop %v6592
    %v6799 = vmul.f32 1.0, %v6798
    %v6800 = vrcp.pop %v6593
    %v6801 = vmul.f32 1.0, %v6800
    %v6802 = vrcp.pop %v6594
    %v6803 = vmul.f32 1.0, %v6802
    %v6804 = vrcp.pop %v6595
    %v6805 = vmul.f32 1.0, %v6804
    %v6806 = vrcp.pop %v6596
    %v6807 = vmul.f32 1.0, %v6806
    %v6808 = vrcp.pop %v6597
    %v6809 = vmul.f32 1.0, %v6808
    %v6810 = vrcp.pop %v6598
    %v6811 = vmul.f32 1.0, %v6810
    %v6812 = vrcp.pop %v6599
    %v6813 = vmul.f32 1.0, %v6812
    %v6814 = vrcp.pop %v6600
    %v6815 = vmul.f32 1.0, %v6814
    %v6816 = vrcp.pop %v6601
    %v6817 = vmul.f32 1.0, %v6816
    %v6818 = vrcp.pop %v6602
    %v6819 = vmul.f32 1.0, %v6818
    %v6820 = vrcp.pop %v6603
    %v6821 = vmul.f32 1.0, %v6820
    %v6822 = vrcp.pop %v6604
    %v6823 = vmul.f32 1.0, %v6822
    %v6824 = vrcp.pop %v6605
    %v6825 = vmul.f32 1.0, %v6824
    %v6826 = vrcp.pop %v6606
    %v6827 = vmul.f32 1.0, %v6826
    %v6828 = vrcp.pop %v6607
    %v6829 = vmul.f32 1.0, %v6828
    %v6830 = vrcp.pop %v6608
    %v6831 = vmul.f32 1.0, %v6830
    %v6832 = vrcp.pop %v6609
    %v6833 = vmul.f32 1.0, %v6832
    %v6834 = vrcp.pop %v6610
    %v6835 = vmul.f32 1.0, %v6834
    %v6836 = vrcp.pop %v6611
    %v6837 = vmul.f32 1.0, %v6836
    %v6838 = vrcp.pop %v6612
    %v6839 = vmul.f32 1.0, %v6838
    %v6840 = vrcp.pop %v6613
    %v6841 = vmul.f32 1.0, %v6840
    %v6842 = vrcp.pop %v6614
    %v6843 = vmul.f32 1.0, %v6842
    %v6844 = vrcp.pop %v6615
    %v6845 = vmul.f32 1.0, %v6844
    %v6846 = vrcp.pop %v6616
    %v6847 = vmul.f32 1.0, %v6846
    %v6848 = vrcp.pop %v6617
    %v6849 = vmul.f32 1.0, %v6848
    %v6850 = vrcp.pop %v6618
    %v6851 = vmul.f32 1.0, %v6850
    %v6852 = vrcp.pop %v6619
    %v6853 = vmul.f32 1.0, %v6852
    %v6854 = vrcp.pop %v6620
    %v6855 = vmul.f32 1.0, %v6854
    %v6856 = vrcp.pop %v6621
    %v6857 = vmul.f32 1.0, %v6856
    %v6858 = vrcp.pop %v6622
    %v6859 = vmul.f32 1.0, %v6858
    %v6860 = vrcp.pop %v6623
    %v6861 = vmul.f32 1.0, %v6860
    %v6862 = vrcp.pop %v6624
    %v6863 = vmul.f32 1.0, %v6862
    %v6864 = vrcp.pop %v6625
    %v6865 = vmul.f32 1.0, %v6864
    %v6866 = vrcp.pop %v6626
    %v6867 = vmul.f32 1.0, %v6866
    %v6868 = vrcp.pop %v6627
    %v6869 = vmul.f32 1.0, %v6868
    %v6870 = vrcp.pop %v6628
    %v6871 = vmul.f32 1.0, %v6870
    %v6872 = vrcp.pop %v6629
    %v6873 = vmul.f32 1.0, %v6872
    %v6874 = vrcp.pop %v6630
    %v6875 = vmul.f32 1.0, %v6874
    %v6876 = vrcp.pop %v6631
    %v6877 = vmul.f32 1.0, %v6876
    %v6878 = vrcp.pop %v6632
    %v6879 = vmul.f32 1.0, %v6878
    %v6880 = vrcp.pop %v6633
    %v6881 = vmul.f32 1.0, %v6880
    %v6882 = vrcp.pop %v6634
    %v6883 = vmul.f32 1.0, %v6882
    %v6884 = vrcp.pop %v6635
    %v6885 = vmul.f32 1.0, %v6884
    %v6886 = vrcp.pop %v6636
    %v6887 = vmul.f32 1.0, %v6886
    %v6888 = vrcp.pop %v6637
    %v6889 = vmul.f32 1.0, %v6888
    %v6890 = vrcp.pop %v6638
    %v6891 = vmul.f32 1.0, %v6890
    %v6892 = vrcp.pop %v6639
    %v6893 = vmul.f32 1.0, %v6892
    %v6894 = vrcp.pop %v6640
    %v6895 = vmul.f32 1.0, %v6894
    %v6896 = vrcp.pop %v6641
    %v6897 = vmul.f32 1.0, %v6896
    %v6898 = vmul.f32 %v5586, %v6643
    %v6899 = vmul.f32 %v5588, %v6645
    %v6900 = vmul.f32 %v5972, %v6647
    %v6901 = vmul.f32 %v5974, %v6649
    %v6902 = vmul.f32 %v5590, %v6651
    %v6903 = vmul.f32 %v5592, %v6653
    %v6904 = vmul.f32 %v5976, %v6655
    %v6905 = vmul.f32 %v5978, %v6657
    %v6906 = vmul.f32 %v5596, %v6659
    %v6907 = vmul.f32 %v5598, %v6661
    %v6908 = vmul.f32 %v5982, %v6663
    %v6909 = vmul.f32 %v5984, %v6665
    %v6910 = vmul.f32 %v5600, %v6667
    %v6911 = vmul.f32 %v5602, %v6669
    %v6912 = vmul.f32 %v5986, %v6671
    %v6913 = vmul.f32 %v5988, %v6673
    %v6914 = vmul.f32 %v5606, %v6675
    %v6915 = vmul.f32 %v5608, %v6677
    %v6916 = vmul.f32 %v5992, %v6679
    %v6917 = vmul.f32 %v5994, %v6681
    %v6918 = vmul.f32 %v5610, %v6683
    %v6919 = vmul.f32 %v5612, %v6685
    %v6920 = vmul.f32 %v5996, %v6687
    %v6921 = vmul.f32 %v5998, %v6689
    %v6922 = vmul.f32 %v5616, %v6691
    %v6923 = vmul.f32 %v5618, %v6693
    %v6924 = vmul.f32 %v6002, %v6695
    %v6925 = vmul.f32 %v6004, %v6697
    %v6926 = vmul.f32 %v5620, %v6699
    %v6927 = vmul.f32 %v5622, %v6701
    %v6928 = vmul.f32 %v6006, %v6703
    %v6929 = vmul.f32 %v6008, %v6705
    %v6930 = vmul.f32 %v5626, %v6707
    %v6931 = vmul.f32 %v5628, %v6709
    %v6932 = vmul.f32 %v6012, %v6711
    %v6933 = vmul.f32 %v6014, %v6713
    %v6934 = vmul.f32 %v5630, %v6715
    %v6935 = vmul.f32 %v5632, %v6717
    %v6936 = vmul.f32 %v6016, %v6719
    %v6937 = vmul.f32 %v6018, %v6721
    %v6938 = vmul.f32 %v5636, %v6723
    %v6939 = vmul.f32 %v5638, %v6725
    %v6940 = vmul.f32 %v6022, %v6727
    %v6941 = vmul.f32 %v6024, %v6729
    %v6942 = vmul.f32 %v5640, %v6731
    %v6943 = vmul.f32 %v5642, %v6733
    %v6944 = vmul.f32 %v6026, %v6735
    %v6945 = vmul.f32 %v6028, %v6737
    %v6946 = vmul.f32 %v5646, %v6739
    %v6947 = vmul.f32 %v5648, %v6741
    %v6948 = vmul.f32 %v6032, %v6743
    %v6949 = vmul.f32 %v6034, %v6745
    %v6950 = vmul.f32 %v5650, %v6747
    %v6951 = vmul.f32 %v5652, %v6749
    %v6952 = vmul.f32 %v6036, %v6751
    %v6953 = vmul.f32 %v6038, %v6753
    %v6954 = vmul.f32 %v5656, %v6755
    %v6955 = vmul.f32 %v5658, %v6757
    %v6956 = vmul.f32 %v6042, %v6759
    %v6957 = vmul.f32 %v6044, %v6761
    %v6958 = vmul.f32 %v5660, %v6763
    %v6959 = vmul.f32 %v5662, %v6765
    %v6960 = vmul.f32 %v6046, %v6767
    %v6961 = vmul.f32 %v6048, %v6769
    %v6962 = vmul.f32 %v5666, %v6771
    %v6963 = vmul.f32 %v5668, %v6773
    %v6964 = vmul.f32 %v6052, %v6775
    %v6965 = vmul.f32 %v6054, %v6777
    %v6966 = vmul.f32 %v5670, %v6779
    %v6967 = vmul.f32 %v5672, %v6781
    %v6968 = vmul.f32 %v6056, %v6783
    %v6969 = vmul.f32 %v6058, %v6785
    %v6970 = vmul.f32 %v5676, %v6787
    %v6971 = vmul.f32 %v5678, %v6789
    %v6972 = vmul.f32 %v6062, %v6791
    %v6973 = vmul.f32 %v6064, %v6793
    %v6974 = vmul.f32 %v5680, %v6795
    %v6975 = vmul.f32 %v5682, %v6797
    %v6976 = vmul.f32 %v6066, %v6799
    %v6977 = vmul.f32 %v6068, %v6801
    %v6978 = vmul.f32 %v5686, %v6803
    %v6979 = vmul.f32 %v5688, %v6805
    %v6980 = vmul.f32 %v6072, %v6807
    %v6981 = vmul.f32 %v6074, %v6809
    %v6982 = vmul.f32 %v5690, %v6811
    %v6983 = vmul.f32 %v5692, %v6813
    %v6984 = vmul.f32 %v6076, %v6815
    %v6985 = vmul.f32 %v6078, %v6817
    %v6986 = vmul.f32 %v5696, %v6819
    %v6987 = vmul.f32 %v5698, %v6821
    %v6988 = vmul.f32 %v6082, %v6823
    %v6989 = vmul.f32 %v6084, %v6825
    %v6990 = vmul.f32 %v5700, %v6827
    %v6991 = vmul.f32 %v5702, %v6829
    %v6992 = vmul.f32 %v6086, %v6831
    %v6993 = vmul.f32 %v6088, %v6833
    %v6994 = vmul.f32 %v5706, %v6835
    %v6995 = vmul.f32 %v5708, %v6837
    %v6996 = vmul.f32 %v6092, %v6839
    %v6997 = vmul.f32 %v6094, %v6841
    %v6998 = vmul.f32 %v5710, %v6843
    %v6999 = vmul.f32 %v5712, %v6845
    %v7000 = vmul.f32 %v6096, %v6847
    %v7001 = vmul.f32 %v6098, %v6849
    %v7002 = vmul.f32 %v5716, %v6851
    %v7003 = vmul.f32 %v5718, %v6853
    %v7004 = vmul.f32 %v6102, %v6855
    %v7005 = vmul.f32 %v6104, %v6857
    %v7006 = vmul.f32 %v5720, %v6859
    %v7007 = vmul.f32 %v5722, %v6861
    %v7008 = vmul.f32 %v6106, %v6863
    %v7009 = vmul.f32 %v6108, %v6865
    %v7010 = vmul.f32 %v5726, %v6867
    %v7011 = vmul.f32 %v5728, %v6869
    %v7012 = vmul.f32 %v6112, %v6871
    %v7013 = vmul.f32 %v6114, %v6873
    %v7014 = vmul.f32 %v5730, %v6875
    %v7015 = vmul.f32 %v5732, %v6877
    %v7016 = vmul.f32 %v6116, %v6879
    %v7017 = vmul.f32 %v6118, %v6881
    %v7018 = vmul.f32 %v5736, %v6883
    %v7019 = vmul.f32 %v5738, %v6885
    %v7020 = vmul.f32 %v6122, %v6887
    %v7021 = vmul.f32 %v6124, %v6889
    %v7022 = vmul.f32 %v5740, %v6891
    %v7023 = vmul.f32 %v5742, %v6893
    %v7024 = vmul.f32 %v6126, %v6895
    %v7025 = vmul.f32 %v6128, %v6897
    %v7026 = vpack.c.bf16 %v6902, %v6898
    %v7027 = vpack.c.bf16 %v6903, %v6899
    %v7028 = vpack.c.bf16 %v6904, %v6900
    %v7029 = vpack.c.bf16 %v6905, %v6901
    %v7030 = vpack.c.bf16 %v6910, %v6906
    %v7031 = vpack.c.bf16 %v6911, %v6907
    %v7032 = vpack.c.bf16 %v6912, %v6908
    %v7033 = vpack.c.bf16 %v6913, %v6909
    %v7034 = vpack.c.bf16 %v6918, %v6914
    %v7035 = vpack.c.bf16 %v6919, %v6915
    %v7036 = vpack.c.bf16 %v6920, %v6916
    %v7037 = vpack.c.bf16 %v6921, %v6917
    %v7038 = vpack.c.bf16 %v6926, %v6922
    %v7039 = vpack.c.bf16 %v6927, %v6923
    %v7040 = vpack.c.bf16 %v6928, %v6924
    %v7041 = vpack.c.bf16 %v6929, %v6925
    %v7042 = vpack.c.bf16 %v6934, %v6930
    %v7043 = vpack.c.bf16 %v6935, %v6931
    %v7044 = vpack.c.bf16 %v6936, %v6932
    %v7045 = vpack.c.bf16 %v6937, %v6933
    %v7046 = vpack.c.bf16 %v6942, %v6938
    %v7047 = vpack.c.bf16 %v6943, %v6939
    %v7048 = vpack.c.bf16 %v6944, %v6940
    %v7049 = vpack.c.bf16 %v6945, %v6941
    %v7050 = vpack.c.bf16 %v6950, %v6946
    %v7051 = vpack.c.bf16 %v6951, %v6947
    %v7052 = vpack.c.bf16 %v6952, %v6948
    %v7053 = vpack.c.bf16 %v6953, %v6949
    %v7054 = vpack.c.bf16 %v6958, %v6954
    %v7055 = vpack.c.bf16 %v6959, %v6955
    %v7056 = vpack.c.bf16 %v6960, %v6956
    %v7057 = vpack.c.bf16 %v6961, %v6957
    %v7058 = vpack.c.bf16 %v6966, %v6962
    %v7059 = vpack.c.bf16 %v6967, %v6963
    %v7060 = vpack.c.bf16 %v6968, %v6964
    %v7061 = vpack.c.bf16 %v6969, %v6965
    %v7062 = vpack.c.bf16 %v6974, %v6970
    %v7063 = vpack.c.bf16 %v6975, %v6971
    %v7064 = vpack.c.bf16 %v6976, %v6972
    %v7065 = vpack.c.bf16 %v6977, %v6973
    %v7066 = vpack.c.bf16 %v6982, %v6978
    %v7067 = vpack.c.bf16 %v6983, %v6979
    %v7068 = vpack.c.bf16 %v6984, %v6980
    %v7069 = vpack.c.bf16 %v6985, %v6981
    %v7070 = vpack.c.bf16 %v6990, %v6986
    %v7071 = vpack.c.bf16 %v6991, %v6987
    %v7072 = vpack.c.bf16 %v6992, %v6988
    %v7073 = vpack.c.bf16 %v6993, %v6989
    %v7074 = vpack.c.bf16 %v6998, %v6994
    %v7075 = vpack.c.bf16 %v6999, %v6995
    %v7076 = vpack.c.bf16 %v7000, %v6996
    %v7077 = vpack.c.bf16 %v7001, %v6997
    %v7078 = vpack.c.bf16 %v7006, %v7002
    %v7079 = vpack.c.bf16 %v7007, %v7003
    %v7080 = vpack.c.bf16 %v7008, %v7004
    %v7081 = vpack.c.bf16 %v7009, %v7005
    %v7082 = vpack.c.bf16 %v7014, %v7010
    %v7083 = vpack.c.bf16 %v7015, %v7011
    %v7084 = vpack.c.bf16 %v7016, %v7012
    %v7085 = vpack.c.bf16 %v7017, %v7013
    %v7086 = vpack.c.bf16 %v7022, %v7018
    %v7087 = vpack.c.bf16 %v7023, %v7019
    %v7088 = vpack.c.bf16 %v7024, %v7020
    %v7089 = vpack.c.bf16 %v7025, %v7021
    %v7090 = vld [vmem:[#allocation10] sm:$0xf]
    %v7091 = vld [vmem:[#allocation10 + $0x4] sm:$0xf]
    %v7092 = vld [vmem:[#allocation10 + $0x8] sm:$0xf]
    %v7093 = vld [vmem:[#allocation10 + $0xc] sm:$0xf]
    %v7094 = vld [vmem:[#allocation10 + $0x10] sm:$0xf]
    %v7095 = vld [vmem:[#allocation10 + $0x14] sm:$0xf]
    %v7096 = vld [vmem:[#allocation10 + $0x18] sm:$0xf]
    %v7097 = vld [vmem:[#allocation10 + $0x1c] sm:$0xf]
    %v7098 = vld [vmem:[#allocation10 + $0x20] sm:$0xf]
    %v7099 = vld [vmem:[#allocation10 + $0x24] sm:$0xf]
    %v7100 = vld [vmem:[#allocation10 + $0x28] sm:$0xf]
    %v7101 = vld [vmem:[#allocation10 + $0x2c] sm:$0xf]
    %v7102 = vld [vmem:[#allocation10 + $0x30] sm:$0xf]
    %v7103 = vld [vmem:[#allocation10 + $0x34] sm:$0xf]
    %v7104 = vld [vmem:[#allocation10 + $0x38] sm:$0xf]
    %v7105 = vld [vmem:[#allocation10 + $0x3c] sm:$0xf]
    %v7106 = vld [vmem:[#allocation10 + $0x40] sm:$0xf]
    %v7107 = vld [vmem:[#allocation10 + $0x44] sm:$0xf]
    %v7108 = vld [vmem:[#allocation10 + $0x48] sm:$0xf]
    %v7109 = vld [vmem:[#allocation10 + $0x4c] sm:$0xf]
    %v7110 = vld [vmem:[#allocation10 + $0x50] sm:$0xf]
    %v7111 = vld [vmem:[#allocation10 + $0x54] sm:$0xf]
    %v7112 = vld [vmem:[#allocation10 + $0x58] sm:$0xf]
    %v7113 = vld [vmem:[#allocation10 + $0x5c] sm:$0xf]
    %v7114 = vld [vmem:[#allocation10 + $0x60] sm:$0xf]
    %v7115 = vld [vmem:[#allocation10 + $0x64] sm:$0xf]
    %v7116 = vld [vmem:[#allocation10 + $0x68] sm:$0xf]
    %v7117 = vld [vmem:[#allocation10 + $0x6c] sm:$0xf]
    %v7118 = vld [vmem:[#allocation10 + $0x70] sm:$0xf]
    %v7119 = vld [vmem:[#allocation10 + $0x74] sm:$0xf]
    %v7120 = vld [vmem:[#allocation10 + $0x78] sm:$0xf]
    %v7121 = vld [vmem:[#allocation10 + $0x7c] sm:$0xf]
    %v7122 = vld [vmem:[#allocation10 + $0x80] sm:$0xf]
    %v7123 = vld [vmem:[#allocation10 + $0x84] sm:$0xf]
    %v7124 = vld [vmem:[#allocation10 + $0x88] sm:$0xf]
    %v7125 = vld [vmem:[#allocation10 + $0x8c] sm:$0xf]
    %v7126 = vld [vmem:[#allocation10 + $0x90] sm:$0xf]
    %v7127 = vld [vmem:[#allocation10 + $0x94] sm:$0xf]
    %v7128 = vld [vmem:[#allocation10 + $0x98] sm:$0xf]
    %v7129 = vld [vmem:[#allocation10 + $0x9c] sm:$0xf]
    %v7130 = vld [vmem:[#allocation10 + $0xa0] sm:$0xf]
    %v7131 = vld [vmem:[#allocation10 + $0xa4] sm:$0xf]
    %v7132 = vld [vmem:[#allocation10 + $0xa8] sm:$0xf]
    %v7133 = vld [vmem:[#allocation10 + $0xac] sm:$0xf]
    %v7134 = vld [vmem:[#allocation10 + $0xb0] sm:$0xf]
    %v7135 = vld [vmem:[#allocation10 + $0xb4] sm:$0xf]
    %v7136 = vld [vmem:[#allocation10 + $0xb8] sm:$0xf]
    %v7137 = vld [vmem:[#allocation10 + $0xbc] sm:$0xf]
    %v7138 = vld [vmem:[#allocation10 + $0xc0] sm:$0xf]
    %v7139 = vld [vmem:[#allocation10 + $0xc4] sm:$0xf]
    %v7140 = vld [vmem:[#allocation10 + $0xc8] sm:$0xf]
    %v7141 = vld [vmem:[#allocation10 + $0xcc] sm:$0xf]
    %v7142 = vld [vmem:[#allocation10 + $0xd0] sm:$0xf]
    %v7143 = vld [vmem:[#allocation10 + $0xd4] sm:$0xf]
    %v7144 = vld [vmem:[#allocation10 + $0xd8] sm:$0xf]
    %v7145 = vld [vmem:[#allocation10 + $0xdc] sm:$0xf]
    %v7146 = vld [vmem:[#allocation10 + $0xe0] sm:$0xf]
    %v7147 = vld [vmem:[#allocation10 + $0xe4] sm:$0xf]
    %v7148 = vld [vmem:[#allocation10 + $0xe8] sm:$0xf]
    %v7149 = vld [vmem:[#allocation10 + $0xec] sm:$0xf]
    %v7150 = vld [vmem:[#allocation10 + $0xf0] sm:$0xf]
    %v7151 = vld [vmem:[#allocation10 + $0xf4] sm:$0xf]
    %v7152 = vld [vmem:[#allocation10 + $0xf8] sm:$0xf]
    %v7153 = vld [vmem:[#allocation10 + $0xfc] sm:$0xf]
    %v7154 = vld [vmem:[%s8] sm:$0x1]
    %v7156 = vlaneseq
    %v7157 = vshrl.u32 %v7156, 7
    %v7158 = vsub.s32 0, %v7157
    %v7159 = vrot.slane %v7154, %v7158
    %v7225 = vunpack.c.l.b16 %v7090
    %v7226 = vunpack.c.l.b16 %v7091
    %v7227 = vunpack.c.l.b16 %v7092
    %v7228 = vunpack.c.l.b16 %v7093
    %v7229 = vunpack.c.l.b16 %v7094
    %v7230 = vunpack.c.l.b16 %v7095
    %v7231 = vunpack.c.l.b16 %v7096
    %v7232 = vunpack.c.l.b16 %v7097
    %v7233 = vunpack.c.l.b16 %v7098
    %v7234 = vunpack.c.l.b16 %v7099
    %v7235 = vunpack.c.l.b16 %v7100
    %v7236 = vunpack.c.l.b16 %v7101
    %v7237 = vunpack.c.l.b16 %v7102
    %v7238 = vunpack.c.l.b16 %v7103
    %v7239 = vunpack.c.l.b16 %v7104
    %v7240 = vunpack.c.l.b16 %v7105
    %v7241 = vunpack.c.l.b16 %v7106
    %v7242 = vunpack.c.l.b16 %v7107
    %v7243 = vunpack.c.l.b16 %v7108
    %v7244 = vunpack.c.l.b16 %v7109
    %v7245 = vunpack.c.l.b16 %v7110
    %v7246 = vunpack.c.l.b16 %v7111
    %v7247 = vunpack.c.l.b16 %v7112
    %v7248 = vunpack.c.l.b16 %v7113
    %v7249 = vunpack.c.l.b16 %v7114
    %v7250 = vunpack.c.l.b16 %v7115
    %v7251 = vunpack.c.l.b16 %v7116
    %v7252 = vunpack.c.l.b16 %v7117
    %v7253 = vunpack.c.l.b16 %v7118
    %v7254 = vunpack.c.l.b16 %v7119
    %v7255 = vunpack.c.l.b16 %v7120
    %v7256 = vunpack.c.l.b16 %v7121
    %v7257 = vunpack.c.l.b16 %v7122
    %v7258 = vunpack.c.l.b16 %v7123
    %v7259 = vunpack.c.l.b16 %v7124
    %v7260 = vunpack.c.l.b16 %v7125
    %v7261 = vunpack.c.l.b16 %v7126
    %v7262 = vunpack.c.l.b16 %v7127
    %v7263 = vunpack.c.l.b16 %v7128
    %v7264 = vunpack.c.l.b16 %v7129
    %v7265 = vunpack.c.l.b16 %v7130
    %v7266 = vunpack.c.l.b16 %v7131
    %v7267 = vunpack.c.l.b16 %v7132
    %v7268 = vunpack.c.l.b16 %v7133
    %v7269 = vunpack.c.l.b16 %v7134
    %v7270 = vunpack.c.l.b16 %v7135
    %v7271 = vunpack.c.l.b16 %v7136
    %v7272 = vunpack.c.l.b16 %v7137
    %v7273 = vunpack.c.l.b16 %v7138
    %v7274 = vunpack.c.l.b16 %v7139
    %v7275 = vunpack.c.l.b16 %v7140
    %v7276 = vunpack.c.l.b16 %v7141
    %v7277 = vunpack.c.l.b16 %v7142
    %v7278 = vunpack.c.l.b16 %v7143
    %v7279 = vunpack.c.l.b16 %v7144
    %v7280 = vunpack.c.l.b16 %v7145
    %v7281 = vunpack.c.l.b16 %v7146
    %v7282 = vunpack.c.l.b16 %v7147
    %v7283 = vunpack.c.l.b16 %v7148
    %v7284 = vunpack.c.l.b16 %v7149
    %v7285 = vunpack.c.l.b16 %v7150
    %v7286 = vunpack.c.l.b16 %v7151
    %v7287 = vunpack.c.l.b16 %v7152
    %v7288 = vunpack.c.l.b16 %v7153
    %v7289 = vpack.c.b16 %v7226, %v7225
    %v7290 = vpack.c.b16 %v7228, %v7227
    %v7291 = vpack.c.b16 %v7230, %v7229
    %v7292 = vpack.c.b16 %v7232, %v7231
    %v7293 = vpack.c.b16 %v7234, %v7233
    %v7294 = vpack.c.b16 %v7236, %v7235
    %v7295 = vpack.c.b16 %v7238, %v7237
    %v7296 = vpack.c.b16 %v7240, %v7239
    %v7297 = vpack.c.b16 %v7242, %v7241
    %v7298 = vpack.c.b16 %v7244, %v7243
    %v7299 = vpack.c.b16 %v7246, %v7245
    %v7300 = vpack.c.b16 %v7248, %v7247
    %v7301 = vpack.c.b16 %v7250, %v7249
    %v7302 = vpack.c.b16 %v7252, %v7251
    %v7303 = vpack.c.b16 %v7254, %v7253
    %v7304 = vpack.c.b16 %v7256, %v7255
    %v7305 = vpack.c.b16 %v7258, %v7257
    %v7306 = vpack.c.b16 %v7260, %v7259
    %v7307 = vpack.c.b16 %v7262, %v7261
    %v7308 = vpack.c.b16 %v7264, %v7263
    %v7309 = vpack.c.b16 %v7266, %v7265
    %v7310 = vpack.c.b16 %v7268, %v7267
    %v7311 = vpack.c.b16 %v7270, %v7269
    %v7312 = vpack.c.b16 %v7272, %v7271
    %v7313 = vpack.c.b16 %v7274, %v7273
    %v7314 = vpack.c.b16 %v7276, %v7275
    %v7315 = vpack.c.b16 %v7278, %v7277
    %v7316 = vpack.c.b16 %v7280, %v7279
    %v7317 = vpack.c.b16 %v7282, %v7281
    %v7318 = vpack.c.b16 %v7284, %v7283
    %v7319 = vpack.c.b16 %v7286, %v7285
    %v7320 = vpack.c.b16 %v7288, %v7287
    %7353 = vmatprep.subr.bf16.mxu0 0
    %7354 = vmatpush1.bf16.msra.mxu0 %v7289
    %7355 = vmatprep.subr.bf16.mxu0 0
    %7356 = vmatpush1.bf16.msra.mxu0 %v7290
    %7357 = vmatprep.subr.bf16.mxu0 0
    %7358 = vmatpush1.bf16.msra.mxu0 %v7291
    %7359 = vmatprep.subr.bf16.mxu0 0
    %7360 = vmatpush1.bf16.msra.mxu0 %v7292
    %7361 = vmatprep.subr.bf16.mxu0 0
    %7362 = vmatpush1.bf16.msra.mxu0 %v7293
    %7363 = vmatprep.subr.bf16.mxu0 0
    %7364 = vmatpush1.bf16.msra.mxu0 %v7294
    %7365 = vmatprep.subr.bf16.mxu0 0
    %7366 = vmatpush1.bf16.msra.mxu0 %v7295
    %7367 = vmatprep.subr.bf16.mxu0 0
    %7368 = vmatpush1.bf16.msra.mxu0 %v7296
    %7369 = vmatprep.subr.bf16.mxu0 0
    %7370 = vmatpush1.bf16.msra.mxu0 %v7297
    %7371 = vmatprep.subr.bf16.mxu0 0
    %7372 = vmatpush1.bf16.msra.mxu0 %v7298
    %7373 = vmatprep.subr.bf16.mxu0 0
    %7374 = vmatpush1.bf16.msra.mxu0 %v7299
    %7375 = vmatprep.subr.bf16.mxu0 0
    %7376 = vmatpush1.bf16.msra.mxu0 %v7300
    %7377 = vmatprep.subr.bf16.mxu0 0
    %7378 = vmatpush1.bf16.msra.mxu0 %v7301
    %7379 = vmatprep.subr.bf16.mxu0 0
    %7380 = vmatpush1.bf16.msra.mxu0 %v7302
    %7381 = vmatprep.subr.bf16.mxu0 0
    %7382 = vmatpush1.bf16.msra.mxu0 %v7303
    %7383 = vmatprep.subr.bf16.mxu0 0
    %7384 = vmatpush1.bf16.msra.mxu0 %v7304
    %7385 = vmatprep.mubr.bf16.mxu0 %v7027
    %7386 = vmatmul.mubr.bf16.gmra.mrb[0].mxu0 %v7026
    %v7387 = vpop.f32.mrb[0].mxu0
    %v7388 = vadd.f32 %v7159, %v7387
    %v7389 = vpop.f32.mrb[0].mxu0
    %v7390 = vpop.f32.mrb[0].mxu0
    %v7391 = vadd.f32 %v7159, %v7390
    %v7392 = vpop.f32.mrb[0].mxu0
    %7393 = vmatprep.mubr.bf16.mxu0 %v7031
    %7394 = vmatmul.mubr.bf16.gmra.mrb[0].mxu0 %v7030
    %v7395 = vpop.f32.mrb[0].mxu0
    %v7396 = vadd.f32 %v7159, %v7395
    %v7397 = vpop.f32.mrb[0].mxu0
    %v7398 = vpop.f32.mrb[0].mxu0
    %v7399 = vadd.f32 %v7159, %v7398
    %v7400 = vpop.f32.mrb[0].mxu0
    %7401 = vmatprep.mubr.bf16.mxu0 %v7035
    %7402 = vmatmul.mubr.bf16.gmra.mrb[0].mxu0 %v7034
    %v7403 = vpop.f32.mrb[0].mxu0
    %v7404 = vadd.f32 %v7159, %v7403
    %v7405 = vpop.f32.mrb[0].mxu0
    %v7406 = vpop.f32.mrb[0].mxu0
    %v7407 = vadd.f32 %v7159, %v7406
    %v7408 = vpop.f32.mrb[0].mxu0
    %7409 = vmatprep.mubr.bf16.mxu0 %v7039
    %7410 = vmatmul.mubr.bf16.gmra.mrb[0].mxu0 %v7038
    %v7411 = vpop.f32.mrb[0].mxu0
    %v7412 = vadd.f32 %v7159, %v7411
    %v7413 = vpop.f32.mrb[0].mxu0
    %v7414 = vpop.f32.mrb[0].mxu0
    %v7415 = vadd.f32 %v7159, %v7414
    %v7416 = vpop.f32.mrb[0].mxu0
    %7417 = vmatprep.mubr.bf16.mxu0 %v7043
    %7418 = vmatmul.mubr.bf16.gmra.mrb[0].mxu0 %v7042
    %v7419 = vpop.f32.mrb[0].mxu0
    %v7420 = vadd.f32 %v7159, %v7419
    %v7421 = vpop.f32.mrb[0].mxu0
    %v7422 = vpop.f32.mrb[0].mxu0
    %v7423 = vadd.f32 %v7159, %v7422
    %v7424 = vpop.f32.mrb[0].mxu0
    %7425 = vmatprep.mubr.bf16.mxu0 %v7047
    %7426 = vmatmul.mubr.bf16.gmra.mrb[0].mxu0 %v7046
    %v7427 = vpop.f32.mrb[0].mxu0
    %v7428 = vadd.f32 %v7159, %v7427
    %v7429 = vpop.f32.mrb[0].mxu0
    %v7430 = vpop.f32.mrb[0].mxu0
    %v7431 = vadd.f32 %v7159, %v7430
    %v7432 = vpop.f32.mrb[0].mxu0
    %7433 = vmatprep.mubr.bf16.mxu0 %v7051
    %7434 = vmatmul.mubr.bf16.gmra.mrb[0].mxu0 %v7050
    %v7435 = vpop.f32.mrb[0].mxu0
    %v7436 = vadd.f32 %v7159, %v7435
    %v7437 = vpop.f32.mrb[0].mxu0
    %v7438 = vpop.f32.mrb[0].mxu0
    %v7439 = vadd.f32 %v7159, %v7438
    %v7440 = vpop.f32.mrb[0].mxu0
    %7441 = vmatprep.mubr.bf16.mxu0 %v7055
    %7442 = vmatmul.mubr.bf16.gmra.mrb[0].mxu0 %v7054
    %v7443 = vpop.f32.mrb[0].mxu0
    %v7444 = vadd.f32 %v7159, %v7443
    %v7445 = vpop.f32.mrb[0].mxu0
    %v7446 = vpop.f32.mrb[0].mxu0
    %v7447 = vadd.f32 %v7159, %v7446
    %v7448 = vpop.f32.mrb[0].mxu0
    %7449 = vmatprep.mubr.bf16.mxu0 %v7059
    %7450 = vmatmul.mubr.bf16.gmra.mrb[0].mxu0 %v7058
    %v7451 = vpop.f32.mrb[0].mxu0
    %v7452 = vadd.f32 %v7159, %v7451
    %v7453 = vpop.f32.mrb[0].mxu0
    %v7454 = vpop.f32.mrb[0].mxu0
    %v7455 = vadd.f32 %v7159, %v7454
    %v7456 = vpop.f32.mrb[0].mxu0
    %7457 = vmatprep.mubr.bf16.mxu0 %v7063
    %7458 = vmatmul.mubr.bf16.gmra.mrb[0].mxu0 %v7062
    %v7459 = vpop.f32.mrb[0].mxu0
    %v7460 = vadd.f32 %v7159, %v7459
    %v7461 = vpop.f32.mrb[0].mxu0
    %v7462 = vpop.f32.mrb[0].mxu0
    %v7463 = vadd.f32 %v7159, %v7462
    %v7464 = vpop.f32.mrb[0].mxu0
    %7465 = vmatprep.mubr.bf16.mxu0 %v7067
    %7466 = vmatmul.mubr.bf16.gmra.mrb[0].mxu0 %v7066
    %v7467 = vpop.f32.mrb[0].mxu0
    %v7468 = vadd.f32 %v7159, %v7467
    %v7469 = vpop.f32.mrb[0].mxu0
    %v7470 = vpop.f32.mrb[0].mxu0
    %v7471 = vadd.f32 %v7159, %v7470
    %v7472 = vpop.f32.mrb[0].mxu0
    %7473 = vmatprep.mubr.bf16.mxu0 %v7071
    %7474 = vmatmul.mubr.bf16.gmra.mrb[0].mxu0 %v7070
    %v7475 = vpop.f32.mrb[0].mxu0
    %v7476 = vadd.f32 %v7159, %v7475
    %v7477 = vpop.f32.mrb[0].mxu0
    %v7478 = vpop.f32.mrb[0].mxu0
    %v7479 = vadd.f32 %v7159, %v7478
    %v7480 = vpop.f32.mrb[0].mxu0
    %7481 = vmatprep.mubr.bf16.mxu0 %v7075
    %7482 = vmatmul.mubr.bf16.gmra.mrb[0].mxu0 %v7074
    %v7483 = vpop.f32.mrb[0].mxu0
    %v7484 = vadd.f32 %v7159, %v7483
    %v7485 = vpop.f32.mrb[0].mxu0
    %v7486 = vpop.f32.mrb[0].mxu0
    %v7487 = vadd.f32 %v7159, %v7486
    %v7488 = vpop.f32.mrb[0].mxu0
    %7489 = vmatprep.mubr.bf16.mxu0 %v7079
    %7490 = vmatmul.mubr.bf16.gmra.mrb[0].mxu0 %v7078
    %v7491 = vpop.f32.mrb[0].mxu0
    %v7492 = vadd.f32 %v7159, %v7491
    %v7493 = vpop.f32.mrb[0].mxu0
    %v7494 = vpop.f32.mrb[0].mxu0
    %v7495 = vadd.f32 %v7159, %v7494
    %v7496 = vpop.f32.mrb[0].mxu0
    %7497 = vmatprep.mubr.bf16.mxu0 %v7083
    %7498 = vmatmul.mubr.bf16.gmra.mrb[0].mxu0 %v7082
    %v7499 = vpop.f32.mrb[0].mxu0
    %v7500 = vadd.f32 %v7159, %v7499
    %v7501 = vpop.f32.mrb[0].mxu0
    %v7502 = vpop.f32.mrb[0].mxu0
    %v7503 = vadd.f32 %v7159, %v7502
    %v7504 = vpop.f32.mrb[0].mxu0
    %7505 = vmatprep.mubr.bf16.mxu0 %v7087
    %7506 = vmatmul.mubr.bf16.gmra.mrb[0].mxu0 %v7086
    %v7507 = vpop.f32.mrb[0].mxu0
    %v7508 = vadd.f32 %v7159, %v7507
    %v7509 = vpop.f32.mrb[0].mxu0
    %v7510 = vpop.f32.mrb[0].mxu0
    %v7511 = vadd.f32 %v7159, %v7510
    %v7512 = vpop.f32.mrb[0].mxu0
    %7513 = vdwg.mxu0
    %7514 = vmatprep.subr.bf16.mxu0 0
    %7515 = vmatpush1.bf16.msra.mxu0 %v7305
    %7516 = vmatprep.subr.bf16.mxu0 0
    %7517 = vmatpush1.bf16.msra.mxu0 %v7306
    %7518 = vmatprep.subr.bf16.mxu0 0
    %7519 = vmatpush1.bf16.msra.mxu0 %v7307
    %7520 = vmatprep.subr.bf16.mxu0 0
    %7521 = vmatpush1.bf16.msra.mxu0 %v7308
    %7522 = vmatprep.subr.bf16.mxu0 0
    %7523 = vmatpush1.bf16.msra.mxu0 %v7309
    %7524 = vmatprep.subr.bf16.mxu0 0
    %7525 = vmatpush1.bf16.msra.mxu0 %v7310
    %7526 = vmatprep.subr.bf16.mxu0 0
    %7527 = vmatpush1.bf16.msra.mxu0 %v7311
    %7528 = vmatprep.subr.bf16.mxu0 0
    %7529 = vmatpush1.bf16.msra.mxu0 %v7312
    %7530 = vmatprep.subr.bf16.mxu0 0
    %7531 = vmatpush1.bf16.msra.mxu0 %v7313
    %7532 = vmatprep.subr.bf16.mxu0 0
    %7533 = vmatpush1.bf16.msra.mxu0 %v7314
    %7534 = vmatprep.subr.bf16.mxu0 0
    %7535 = vmatpush1.bf16.msra.mxu0 %v7315
    %7536 = vmatprep.subr.bf16.mxu0 0
    %7537 = vmatpush1.bf16.msra.mxu0 %v7316
    %7538 = vmatprep.subr.bf16.mxu0 0
    %7539 = vmatpush1.bf16.msra.mxu0 %v7317
    %7540 = vmatprep.subr.bf16.mxu0 0
    %7541 = vmatpush1.bf16.msra.mxu0 %v7318
    %7542 = vmatprep.subr.bf16.mxu0 0
    %7543 = vmatpush1.bf16.msra.mxu0 %v7319
    %7544 = vmatprep.subr.bf16.mxu0 0
    %7545 = vmatpush1.bf16.msra.mxu0 %v7320
    %7546 = vmatprep.mubr.bf16.mxu0 %v7029
    %7547 = vmatmul.mubr.bf16.gmra.mrb[0].mxu0 %v7028
    %v7548 = vpop.f32.mrb[0].mxu0
    %v7549 = vadd.f32 %v7388, %v7548
    %v7550 = vpop.f32.mrb[0].mxu0
    %v7551 = vpop.f32.mrb[0].mxu0
    %v7552 = vadd.f32 %v7391, %v7551
    %v7553 = vpop.f32.mrb[0].mxu0
    %7554 = vmatprep.mubr.bf16.mxu0 %v7033
    %7555 = vmatmul.mubr.bf16.gmra.mrb[0].mxu0 %v7032
    %v7556 = vpop.f32.mrb[0].mxu0
    %v7557 = vadd.f32 %v7396, %v7556
    %v7558 = vpop.f32.mrb[0].mxu0
    %v7559 = vpop.f32.mrb[0].mxu0
    %v7560 = vadd.f32 %v7399, %v7559
    %v7561 = vpop.f32.mrb[0].mxu0
    %7562 = vmatprep.mubr.bf16.mxu0 %v7037
    %7563 = vmatmul.mubr.bf16.gmra.mrb[0].mxu0 %v7036
    %v7564 = vpop.f32.mrb[0].mxu0
    %v7565 = vadd.f32 %v7404, %v7564
    %v7566 = vpop.f32.mrb[0].mxu0
    %v7567 = vpop.f32.mrb[0].mxu0
    %v7568 = vadd.f32 %v7407, %v7567
    %v7569 = vpop.f32.mrb[0].mxu0
    %7570 = vmatprep.mubr.bf16.mxu0 %v7041
    %7571 = vmatmul.mubr.bf16.gmra.mrb[0].mxu0 %v7040
    %v7572 = vpop.f32.mrb[0].mxu0
    %v7573 = vadd.f32 %v7412, %v7572
    %v7574 = vpop.f32.mrb[0].mxu0
    %v7575 = vpop.f32.mrb[0].mxu0
    %v7576 = vadd.f32 %v7415, %v7575
    %v7577 = vpop.f32.mrb[0].mxu0
    %7578 = vmatprep.mubr.bf16.mxu0 %v7045
    %7579 = vmatmul.mubr.bf16.gmra.mrb[0].mxu0 %v7044
    %v7580 = vpop.f32.mrb[0].mxu0
    %v7581 = vadd.f32 %v7420, %v7580
    %v7582 = vpop.f32.mrb[0].mxu0
    %v7583 = vpop.f32.mrb[0].mxu0
    %v7584 = vadd.f32 %v7423, %v7583
    %v7585 = vpop.f32.mrb[0].mxu0
    %7586 = vmatprep.mubr.bf16.mxu0 %v7049
    %7587 = vmatmul.mubr.bf16.gmra.mrb[0].mxu0 %v7048
    %v7588 = vpop.f32.mrb[0].mxu0
    %v7589 = vadd.f32 %v7428, %v7588
    %v7590 = vpop.f32.mrb[0].mxu0
    %v7591 = vpop.f32.mrb[0].mxu0
    %v7592 = vadd.f32 %v7431, %v7591
    %v7593 = vpop.f32.mrb[0].mxu0
    %7594 = vmatprep.mubr.bf16.mxu0 %v7053
    %7595 = vmatmul.mubr.bf16.gmra.mrb[0].mxu0 %v7052
    %v7596 = vpop.f32.mrb[0].mxu0
    %v7597 = vadd.f32 %v7436, %v7596
    %v7598 = vpop.f32.mrb[0].mxu0
    %v7599 = vpop.f32.mrb[0].mxu0
    %v7600 = vadd.f32 %v7439, %v7599
    %v7601 = vpop.f32.mrb[0].mxu0
    %7602 = vmatprep.mubr.bf16.mxu0 %v7057
    %7603 = vmatmul.mubr.bf16.gmra.mrb[0].mxu0 %v7056
    %v7604 = vpop.f32.mrb[0].mxu0
    %v7605 = vadd.f32 %v7444, %v7604
    %v7606 = vpop.f32.mrb[0].mxu0
    %v7607 = vpop.f32.mrb[0].mxu0
    %v7608 = vadd.f32 %v7447, %v7607
    %v7609 = vpop.f32.mrb[0].mxu0
    %7610 = vmatprep.mubr.bf16.mxu0 %v7061
    %7611 = vmatmul.mubr.bf16.gmra.mrb[0].mxu0 %v7060
    %v7612 = vpop.f32.mrb[0].mxu0
    %v7613 = vadd.f32 %v7452, %v7612
    %v7614 = vpop.f32.mrb[0].mxu0
    %v7615 = vpop.f32.mrb[0].mxu0
    %v7616 = vadd.f32 %v7455, %v7615
    %v7617 = vpop.f32.mrb[0].mxu0
    %7618 = vmatprep.mubr.bf16.mxu0 %v7065
    %7619 = vmatmul.mubr.bf16.gmra.mrb[0].mxu0 %v7064
    %v7620 = vpop.f32.mrb[0].mxu0
    %v7621 = vadd.f32 %v7460, %v7620
    %v7622 = vpop.f32.mrb[0].mxu0
    %v7623 = vpop.f32.mrb[0].mxu0
    %v7624 = vadd.f32 %v7463, %v7623
    %v7625 = vpop.f32.mrb[0].mxu0
    %7626 = vmatprep.mubr.bf16.mxu0 %v7069
    %7627 = vmatmul.mubr.bf16.gmra.mrb[0].mxu0 %v7068
    %v7628 = vpop.f32.mrb[0].mxu0
    %v7629 = vadd.f32 %v7468, %v7628
    %v7630 = vpop.f32.mrb[0].mxu0
    %v7631 = vpop.f32.mrb[0].mxu0
    %v7632 = vadd.f32 %v7471, %v7631
    %v7633 = vpop.f32.mrb[0].mxu0
    %7634 = vmatprep.mubr.bf16.mxu0 %v7073
    %7635 = vmatmul.mubr.bf16.gmra.mrb[0].mxu0 %v7072
    %v7636 = vpop.f32.mrb[0].mxu0
    %v7637 = vadd.f32 %v7476, %v7636
    %v7638 = vpop.f32.mrb[0].mxu0
    %v7639 = vpop.f32.mrb[0].mxu0
    %v7640 = vadd.f32 %v7479, %v7639
    %v7641 = vpop.f32.mrb[0].mxu0
    %7642 = vmatprep.mubr.bf16.mxu0 %v7077
    %7643 = vmatmul.mubr.bf16.gmra.mrb[0].mxu0 %v7076
    %v7644 = vpop.f32.mrb[0].mxu0
    %v7645 = vadd.f32 %v7484, %v7644
    %v7646 = vpop.f32.mrb[0].mxu0
    %v7647 = vpop.f32.mrb[0].mxu0
    %v7648 = vadd.f32 %v7487, %v7647
    %v7649 = vpop.f32.mrb[0].mxu0
    %7650 = vmatprep.mubr.bf16.mxu0 %v7081
    %7651 = vmatmul.mubr.bf16.gmra.mrb[0].mxu0 %v7080
    %v7652 = vpop.f32.mrb[0].mxu0
    %v7653 = vadd.f32 %v7492, %v7652
    %v7654 = vpop.f32.mrb[0].mxu0
    %v7655 = vpop.f32.mrb[0].mxu0
    %v7656 = vadd.f32 %v7495, %v7655
    %v7657 = vpop.f32.mrb[0].mxu0
    %7658 = vmatprep.mubr.bf16.mxu0 %v7085
    %7659 = vmatmul.mubr.bf16.gmra.mrb[0].mxu0 %v7084
    %v7660 = vpop.f32.mrb[0].mxu0
    %v7661 = vadd.f32 %v7500, %v7660
    %v7662 = vpop.f32.mrb[0].mxu0
    %v7663 = vpop.f32.mrb[0].mxu0
    %v7664 = vadd.f32 %v7503, %v7663
    %v7665 = vpop.f32.mrb[0].mxu0
    %7666 = vmatprep.mubr.bf16.mxu0 %v7089
    %7667 = vmatmul.mubr.bf16.gmra.mrb[0].mxu0 %v7088
    %v7668 = vpop.f32.mrb[0].mxu0
    %v7669 = vadd.f32 %v7508, %v7668
    %v7670 = vpop.f32.mrb[0].mxu0
    %v7671 = vpop.f32.mrb[0].mxu0
    %v7672 = vadd.f32 %v7511, %v7671
    %v7673 = vpop.f32.mrb[0].mxu0
    %7674 = vdwg.mxu0
    %v7675 = vpack.c.bf16 %v7552, %v7549
    %v7676 = vpack.c.bf16 %v7560, %v7557
    %v7677 = vpack.c.bf16 %v7568, %v7565
    %v7678 = vpack.c.bf16 %v7576, %v7573
    %v7679 = vpack.c.bf16 %v7584, %v7581
    %v7680 = vpack.c.bf16 %v7592, %v7589
    %v7681 = vpack.c.bf16 %v7600, %v7597
    %v7682 = vpack.c.bf16 %v7608, %v7605
    %v7683 = vpack.c.bf16 %v7616, %v7613
    %v7684 = vpack.c.bf16 %v7624, %v7621
    %v7685 = vpack.c.bf16 %v7632, %v7629
    %v7686 = vpack.c.bf16 %v7640, %v7637
    %v7687 = vpack.c.bf16 %v7648, %v7645
    %v7688 = vpack.c.bf16 %v7656, %v7653
    %v7689 = vpack.c.bf16 %v7664, %v7661
    %v7690 = vpack.c.bf16 %v7672, %v7669
    %v7707 = vunpack.c.l.b16 %v7675
    %v7708 = vunpack.c.h.b16 %v7675
    %v7709 = vunpack.c.l.b16 %v7676
    %v7710 = vunpack.c.h.b16 %v7676
    %v7711 = vunpack.c.l.b16 %v7677
    %v7712 = vunpack.c.h.b16 %v7677
    %v7713 = vunpack.c.l.b16 %v7678
    %v7714 = vunpack.c.h.b16 %v7678
    %v7715 = vunpack.c.l.b16 %v7679
    %v7716 = vunpack.c.h.b16 %v7679
    %v7717 = vunpack.c.l.b16 %v7680
    %v7718 = vunpack.c.h.b16 %v7680
    %v7719 = vunpack.c.l.b16 %v7681
    %v7720 = vunpack.c.h.b16 %v7681
    %v7721 = vunpack.c.l.b16 %v7682
    %v7722 = vunpack.c.h.b16 %v7682
    %v7723 = vunpack.c.l.b16 %v7683
    %v7724 = vunpack.c.h.b16 %v7683
    %v7725 = vunpack.c.l.b16 %v7684
    %v7726 = vunpack.c.h.b16 %v7684
    %v7727 = vunpack.c.l.b16 %v7685
    %v7728 = vunpack.c.h.b16 %v7685
    %v7729 = vunpack.c.l.b16 %v7686
    %v7730 = vunpack.c.h.b16 %v7686
    %v7731 = vunpack.c.l.b16 %v7687
    %v7732 = vunpack.c.h.b16 %v7687
    %v7733 = vunpack.c.l.b16 %v7688
    %v7734 = vunpack.c.h.b16 %v7688
    %v7735 = vunpack.c.l.b16 %v7689
    %v7736 = vunpack.c.h.b16 %v7689
    %v7737 = vunpack.c.l.b16 %v7690
    %v7738 = vunpack.c.h.b16 %v7690
    %v7739 = vpack.c.b16 %v7707, %v7707
    %v7740 = vpack.c.b16 %v7708, %v7708
    %v7741 = vpack.c.b16 %v7709, %v7709
    %v7742 = vpack.c.b16 %v7710, %v7710
    %v7743 = vpack.c.b16 %v7711, %v7711
    %v7744 = vpack.c.b16 %v7712, %v7712
    %v7745 = vpack.c.b16 %v7713, %v7713
    %v7746 = vpack.c.b16 %v7714, %v7714
    %v7747 = vpack.c.b16 %v7715, %v7715
    %v7748 = vpack.c.b16 %v7716, %v7716
    %v7749 = vpack.c.b16 %v7717, %v7717
    %v7750 = vpack.c.b16 %v7718, %v7718
    %v7751 = vpack.c.b16 %v7719, %v7719
    %v7752 = vpack.c.b16 %v7720, %v7720
    %v7753 = vpack.c.b16 %v7721, %v7721
    %v7754 = vpack.c.b16 %v7722, %v7722
    %v7755 = vpack.c.b16 %v7723, %v7723
    %v7756 = vpack.c.b16 %v7724, %v7724
    %v7757 = vpack.c.b16 %v7725, %v7725
    %v7758 = vpack.c.b16 %v7726, %v7726
    %v7759 = vpack.c.b16 %v7727, %v7727
    %v7760 = vpack.c.b16 %v7728, %v7728
    %v7761 = vpack.c.b16 %v7729, %v7729
    %v7762 = vpack.c.b16 %v7730, %v7730
    %v7763 = vpack.c.b16 %v7731, %v7731
    %v7764 = vpack.c.b16 %v7732, %v7732
    %v7765 = vpack.c.b16 %v7733, %v7733
    %v7766 = vpack.c.b16 %v7734, %v7734
    %v7767 = vpack.c.b16 %v7735, %v7735
    %v7768 = vpack.c.b16 %v7736, %v7736
    %v7769 = vpack.c.b16 %v7737, %v7737
    %v7770 = vpack.c.b16 %v7738, %v7738
    %7803 = vst [vmem:[#allocation11] sm:$0xf] %v7739
    %7804 = vst [vmem:[#allocation11 + $0x4] sm:$0xf] %v7740
    %7805 = vst [vmem:[#allocation11 + $0x8] sm:$0xf] %v7741
    %7806 = vst [vmem:[#allocation11 + $0xc] sm:$0xf] %v7742
    %7807 = vst [vmem:[#allocation11 + $0x10] sm:$0xf] %v7743
    %7808 = vst [vmem:[#allocation11 + $0x14] sm:$0xf] %v7744
    %7809 = vst [vmem:[#allocation11 + $0x18] sm:$0xf] %v7745
    %7810 = vst [vmem:[#allocation11 + $0x1c] sm:$0xf] %v7746
    %7811 = vst [vmem:[#allocation11 + $0x20] sm:$0xf] %v7747
    %7812 = vst [vmem:[#allocation11 + $0x24] sm:$0xf] %v7748
    %7813 = vst [vmem:[#allocation11 + $0x28] sm:$0xf] %v7749
    %7814 = vst [vmem:[#allocation11 + $0x2c] sm:$0xf] %v7750
    %7815 = vst [vmem:[#allocation11 + $0x30] sm:$0xf] %v7751
    %7816 = vst [vmem:[#allocation11 + $0x34] sm:$0xf] %v7752
    %7817 = vst [vmem:[#allocation11 + $0x38] sm:$0xf] %v7753
    %7818 = vst [vmem:[#allocation11 + $0x3c] sm:$0xf] %v7754
    %7819 = vst [vmem:[#allocation11 + $0x40] sm:$0xf] %v7755
    %7820 = vst [vmem:[#allocation11 + $0x44] sm:$0xf] %v7756
    %7821 = vst [vmem:[#allocation11 + $0x48] sm:$0xf] %v7757
    %7822 = vst [vmem:[#allocation11 + $0x4c] sm:$0xf] %v7758
    %7823 = vst [vmem:[#allocation11 + $0x50] sm:$0xf] %v7759
    %7824 = vst [vmem:[#allocation11 + $0x54] sm:$0xf] %v7760
    %7825 = vst [vmem:[#allocation11 + $0x58] sm:$0xf] %v7761
    %7826 = vst [vmem:[#allocation11 + $0x5c] sm:$0xf] %v7762
    %7827 = vst [vmem:[#allocation11 + $0x60] sm:$0xf] %v7763
    %7828 = vst [vmem:[#allocation11 + $0x64] sm:$0xf] %v7764
    %7829 = vst [vmem:[#allocation11 + $0x68] sm:$0xf] %v7765
    %7830 = vst [vmem:[#allocation11 + $0x6c] sm:$0xf] %v7766
    %7831 = vst [vmem:[#allocation11 + $0x70] sm:$0xf] %v7767
    %7832 = vst [vmem:[#allocation11 + $0x74] sm:$0xf] %v7768
    %7833 = vst [vmem:[#allocation11 + $0x78] sm:$0xf] %v7769
    %7834 = vst [vmem:[#allocation11 + $0x7c] sm:$0xf] %v7770
    // Predicated region
    $region58: #{tpu_custom_call.1} parent=1 // pred_check
      _
    $region59: #{tpu_custom_call.1} parent=1 // pred_check_branch
      %7836 = sbr.rel (0) target = $region61
    $region60: #{tpu_custom_call.1} parent=1 // pred_region
      %s7838 = ssub.s32 2048, 2048
      %7839 = vsyncadd [#allocation4], %s7838
      %s7840 = sshll.u32 [#allocation11], 4
      %s7841 = int_to_ptr.vmem [resolvable:$true] %s7840
      %7846 = dma.vmem_to_hbm [thread:$0]  %s7841, 2048, %s9, [#allocation4], 64, 64, 4
    $region61: #{tpu_custom_call.1} parent=1 // pred_fallthru
      _
    // Predicated region
    $region62: #{tpu_custom_call.1} parent=1 // pred_check
      _
    $region63: #{tpu_custom_call.1} parent=1 // pred_check_branch
      %7848 = sbr.rel (0) target = $region65
    $region64: #{tpu_custom_call.1} parent=1 // pred_region
      %7849 = dma.done [#allocation4], 2048
    $region65: #{tpu_custom_call.1} parent=1 // pred_fallthru
      _
    %7850 = vsyncpa [#allocation3], 1
    %7851 = vsyncpa [#allocation6], 1
    %7852 = vsyncpa [#allocation9], 1
    %7853 = vsyncpa [#allocation4], 1

</llo_original>
